<compile_context>
chip_gen: v5e
topology: v5e:2x2
jax: 0.10.0
libtpu: 0.0.40
codegen_flags: <defaults>
</compile_context>

<pallas_src>
import functools

import jax
import jax.numpy as jnp
import numpy as np
from jax import lax
from jax.experimental import pallas as pl
from jax.experimental.pallas import tpu as pltpu

EPS = 1e-5
_VMEM_LIMIT = 64 * 1024 * 1024  # explicit scoped-VMEM budget (fits v5e/v6e/v7x)


# ---------------------------------------------------------------------------
# Pass A: 3x3x3 conv as 27 shifted matmuls + masked partial BN statistics
# ---------------------------------------------------------------------------
def _conv_stats_kernel(xm_ref, xc_ref, xp_ref, w_ref, mask_ref,
                       conv_ref, sum_ref, sq_ref, *, H, W):
    # xm/xc/xp: (1, 1, R, C) f32  -> padded depth slices d-1, d, d+1 (R = Hp*Wp)
    # w_ref   : (27, C, Co) bf16  -> taps ordered (kd, kh, kw)
    # mask_ref: (L, 1) f32        -> 1.0 on valid rows (W-pad columns excluded)
    # conv_ref: (1, 1, L, Co) f32 -> raw conv output in padded-W row space
    # sum_ref / sq_ref: (1, 1, 1, Co) f32 -> per-block masked sum / sum-of-squares
    Wp = W + 2
    L = (H - 1) * Wp + W
    Co = conv_ref.shape[-1]

    acc = jnp.zeros((L, Co), jnp.float32)
    # Fully unrolled 27-tap loop: each tap is one contiguous row slice + matmul.
    for kd, xr in enumerate((xm_ref, xc_ref, xp_ref)):
        for kh in range(3):
            for kw in range(3):
                r0 = kh * Wp + kw                      # static offset
                patch = xr[0, 0, pl.ds(r0, L), :].astype(jnp.bfloat16)
                wk = w_ref[kd * 9 + kh * 3 + kw]        # (C, Co) bf16
                acc = acc + jnp.dot(patch, wk,
                                    preferred_element_type=jnp.float32)

    conv_ref[0, 0] = acc

    # One-pass BN partial statistics (sum & sum-of-squares), masking the
    # garbage rows that correspond to the W-halo columns.
    m = mask_ref[...]                                   # (L, 1)
    vacc = acc * m
    sum_ref[0, 0] = jnp.sum(vacc, axis=0, keepdims=True)
    sq_ref[0, 0] = jnp.sum(vacc * vacc, axis=0, keepdims=True)


def _conv_stats(x_pf, w_flat, mask, *, H, W):
    # x_pf: (N, Dp, R, C) f32,  w_flat: (27, C, Co) bf16,  mask: (L, 1) f32
    N, Dp, R, C = x_pf.shape
    D = Dp - 2
    Co = w_flat.shape[-1]
    Wp = W + 2
    L = (H - 1) * Wp + W

    kern = functools.partial(_conv_stats_kernel, H=H, W=W)
    flops = 2 * N * D * 27 * L * C * Co
    bytes_accessed = (3 * N * D * R * C * 4          # halo-replicated act reads
                      + 27 * C * Co * 2              # resident weights
                      + N * D * L * Co * 4           # conv output write
                      + 2 * N * D * Co * 4)          # partial stats

    return pl.pallas_call(
        kern,
        out_shape=(jax.ShapeDtypeStruct((N, D, L, Co), jnp.float32),
                   jax.ShapeDtypeStruct((N, D, 1, Co), jnp.float32),
                   jax.ShapeDtypeStruct((N, D, 1, Co), jnp.float32)),
        grid=(N, D),
        in_specs=[
            pl.BlockSpec((1, 1, R, C), lambda n, d: (n, d, 0, 0)),      # depth d-1
            pl.BlockSpec((1, 1, R, C), lambda n, d: (n, d + 1, 0, 0)),  # depth d
            pl.BlockSpec((1, 1, R, C), lambda n, d: (n, d + 2, 0, 0)),  # depth d+1
            pl.BlockSpec((27, C, Co), lambda n, d: (0, 0, 0)),          # weights (resident)
            pl.BlockSpec((L, 1), lambda n, d: (0, 0)),                  # valid-row mask
        ],
        out_specs=(
            pl.BlockSpec((1, 1, L, Co), lambda n, d: (n, d, 0, 0)),
            pl.BlockSpec((1, 1, 1, Co), lambda n, d: (n, d, 0, 0)),
            pl.BlockSpec((1, 1, 1, Co), lambda n, d: (n, d, 0, 0)),
        ),
        compiler_params=pltpu.CompilerParams(
            dimension_semantics=("parallel", "parallel"),
            vmem_limit_bytes=_VMEM_LIMIT,
        ),
        cost_estimate=pl.CostEstimate(flops=flops, transcendentals=0,
                                      bytes_accessed=bytes_accessed),
    )(x_pf, x_pf, x_pf, w_flat, mask)


# ---------------------------------------------------------------------------
# Pass B: normalize (global batch stats) + affine + ReLU [+ residual add]
# ---------------------------------------------------------------------------
def _bn_relu_kernel(c_ref, sc_ref, bi_ref, o_ref):
    y = c_ref[0, 0] * sc_ref[...] + bi_ref[...]
    o_ref[0, 0] = jnp.maximum(y, 0.0).astype(o_ref.dtype)


def _bn_add_relu_kernel(c_ref, sc_ref, bi_ref, r_ref, o_ref):
    y = c_ref[0, 0] * sc_ref[...] + bi_ref[...] + r_ref[0, 0]
    o_ref[0, 0] = jnp.maximum(y, 0.0).astype(o_ref.dtype)


def _bn_act(conv, scale, bias, residual=None):
    # conv: (N, D, L, Co) f32; scale/bias: (1, Co) f32; residual: (N, D, L, Co) f32
    N, D, L, Co = conv.shape
    in_specs = [
        pl.BlockSpec((1, 1, L, Co), lambda n, d: (n, d, 0, 0)),
        pl.BlockSpec((1, Co), lambda n, d: (0, 0)),
        pl.BlockSpec((1, Co), lambda n, d: (0, 0)),
    ]
    if residual is None:
        kern = _bn_relu_kernel
        args = (conv, scale, bias)
    else:
        kern = _bn_add_relu_kernel
        args = (conv, scale, bias, residual)
        in_specs.append(pl.BlockSpec((1, 1, L, Co), lambda n, d: (n, d, 0, 0)))

    return pl.pallas_call(
        kern,
        out_shape=jax.ShapeDtypeStruct((N, D, L, Co), jnp.float32),
        grid=(N, D),
        in_specs=in_specs,
        out_specs=pl.BlockSpec((1, 1, L, Co), lambda n, d: (n, d, 0, 0)),
        compiler_params=pltpu.CompilerParams(
            dimension_semantics=("parallel", "parallel"),
            vmem_limit_bytes=_VMEM_LIMIT,
        ),
    )(*args)


# ---------------------------------------------------------------------------
# Cheap layout glue (single-pass pads / reshapes / slices; no 27x expansion)
# ---------------------------------------------------------------------------
def _pad_flatten(x):
    # (N, D, H, W, C) -> zero-pad D/H/W by 1 -> (N, Dp, Hp*Wp, C)
    xp = jnp.pad(x, ((0, 0), (1, 1), (1, 1), (1, 1), (0, 0)))
    N, Dp, Hp, Wp, C = xp.shape
    return xp.reshape(N, Dp, Hp * Wp, C)


def _to_rowspace(x, W):
    # (N, D, H, W, C) -> padded-W flattened row space (N, D, L, C); row i*Wp+j == (i, j)
    N, D, H, _, C = x.shape
    Wp = W + 2
    L = (H - 1) * Wp + W
    xr = jnp.pad(x, ((0, 0), (0, 0), (0, 0), (0, 2), (0, 0)))
    return xr.reshape(N, D, H * Wp, C)[:, :, :L, :]


def _from_rowspace(y_m, H, W):
    # (N, D, L, C) padded-W row space -> clean (N, D, H, W, C)
    N, D, L, C = y_m.shape
    Wp = W + 2
    y = jnp.pad(y_m, ((0, 0), (0, 0), (0, H * Wp - L), (0, 0)))
    return y.reshape(N, D, H, Wp, C)[:, :, :, :W, :]


def _col_mask(H, W):
    # 1.0 on rows whose W coordinate is a real output column, 0.0 on halo columns.
    Wp = W + 2
    L = (H - 1) * Wp + W
    cols = np.arange(L) % Wp
    return jnp.asarray((cols < W).astype(np.float32)).reshape(L, 1)


def _bn_scale_bias(ssum, ssq, gamma, beta, count):
    # Global (batch) statistics from per-block partial sums; fold into scale/bias.
    s = jnp.sum(ssum, axis=(0, 1, 2))
    q = jnp.sum(ssq, axis=(0, 1, 2))
    mean = s / count
    var = q / count - mean * mean
    scale = gamma * lax.rsqrt(var + EPS)
    bias = beta - mean * scale
    return scale.reshape(1, -1), bias.reshape(1, -1)


# ---------------------------------------------------------------------------
# BasicBlock forward (in_planes == planes, stride=1, downsample=None)
# ---------------------------------------------------------------------------
@jax.jit
def basic_block_forward(x, params):
    # x: (N, D, H, W, C) float32
    w1, g1, b1, w2, g2, b2 = params
    N, D, H, W, C = x.shape
    P = w1.shape[-1]
    count = N * D * H * W
    mask = _col_mask(H, W)

    w1f = w1.reshape(27, C, P).astype(jnp.bfloat16)
    w2f = w2.reshape(27, P, P).astype(jnp.bfloat16)

    # ---- stage 1: conv1 + bn1 + relu --------------------------------------
    x1_pf = _pad_flatten(x)                                   # (N, Dp, R, C)
    c1, s1_sum, s1_sq = _conv_stats(x1_pf, w1f, mask, H=H, W=W)
    sc1, bi1 = _bn_scale_bias(s1_sum, s1_sq, g1, b1, count)
    h1_m = _bn_act(c1, sc1, bi1)                              # (N, D, L, P)

    # ---- stage 2: conv2 + bn2 + residual add + relu ------------------------
    h1 = _from_rowspace(h1_m, H, W)                           # (N, D, H, W, P)
    x2_pf = _pad_flatten(h1)
    c2, s2_sum, s2_sq = _conv_stats(x2_pf, w2f, mask, H=H, W=W)
    sc2, bi2 = _bn_scale_bias(s2_sum, s2_sq, g2, b2, count)
    res_m = _to_rowspace(x, W)                                # residual = x
    out_m = _bn_act(c2, sc2, bi2, residual=res_m)
    return _from_rowspace(out_m, H, W)


# ---------------------------------------------------------------------------
# Pure-JAX reference (same semantics as the PyTorch module in training mode)
# ---------------------------------------------------------------------------
def _bn_train_ref(x, gamma, beta):
    mean = jnp.mean(x, axis=(0, 1, 2, 3), keepdims=True)
    var = jnp.mean((x - mean) ** 2, axis=(0, 1, 2, 3), keepdims=True)
    g = gamma.reshape(1, 1, 1, 1, -1)
    b = beta.reshape(1, 1, 1, 1, -1)
    return (x - mean) * lax.rsqrt(var + EPS) * g + b


def ref_forward(x, params):
    w1, g1, b1, w2, g2, b2 = params
    dn = lax.conv_dimension_numbers(x.shape, w1.shape,
                                    ("NDHWC", "DHWIO", "NDHWC"))
    conv = functools.partial(
        lax.conv_general_dilated,
        window_strides=(1, 1, 1),
        padding=[(1, 1), (1, 1), (1, 1)],
        dimension_numbers=dn,
        precision=lax.Precision.HIGHEST,
    )
    h = jnp.maximum(_bn_train_ref(conv(x, w1), g1, b1), 0.0)
    h2 = _bn_train_ref(conv(h, w2), g2, b2) + x
    return jnp.maximum(h2, 0.0)


# ---------------------------------------------------------------------------
if __name__ == "__main__":
    key = jax.random.PRNGKey(0)
    N, C, D, H, W = 2, 32, 4, 16, 16          # in_planes == planes == 32
    P = C
    k = jax.random.split(key, 7)

    x = jax.random.normal(k[0], (N, D, H, W, C), jnp.float32)
    w1 = jax.random.normal(k[1], (3, 3, 3, C, P), jnp.float32) / np.sqrt(27 * C)
    w2 = jax.random.normal(k[2], (3, 3, 3, P, P), jnp.float32) / np.sqrt(27 * P)
    g1 = 1.0 + 0.1 * jax.random.normal(k[3], (P,), jnp.float32)
    b1 = 0.1 * jax.random.normal(k[4], (P,), jnp.float32)
    g2 = 1.0 + 0.1 * jax.random.normal(k[5], (P,), jnp.float32)
    b2 = 0.1 * jax.random.normal(k[6], (P,), jnp.float32)
    params = (w1, g1, b1, w2, g2, b2)

    out = jax.block_until_ready(basic_block_forward(x, params))
    ref = jax.block_until_ready(ref_forward(x, params))

    assert out.shape == (N, D, H, W, P)
    max_err = float(np.max(np.abs(np.asarray(out) - np.asarray(ref))))
    # Kernel uses bf16 MXU inputs (f32 accumulation); reference is exact f32.
    assert np.allclose(np.asarray(out), np.asarray(ref),
                       atol=5e-2, rtol=5e-2), max_err

    print("KERNEL_OK")
</pallas_src>

<mosaic_0001>
module attributes {stable_mosaic.version = 11 : i64} {
  func.func @_bn_relu_kernel(%arg0: i32, %arg1: i32, %arg2: memref<1x1x286x32xf32, #tpu.memory_space<vmem>>, %arg3: memref<1x32xf32, #tpu.memory_space<vmem>>, %arg4: memref<1x32xf32, #tpu.memory_space<vmem>>, %arg5: memref<1x1x286x32xf32, #tpu.memory_space<vmem>>) attributes {dimension_semantics = [#tpu.dimension_semantics<parallel>, #tpu.dimension_semantics<parallel>], iteration_bounds = array<i64: 2, 4>, scalar_prefetch = 0 : i64, scratch_operands = 0 : i64, tpu.core_type = #tpu.core_type<tc>, window_params = [{transform_indices = @transform_0, window_bounds = array<i64: 1, 1, 286, 32>}, {pipeline_mode = #tpu.pipeline_mode<synchronous>, transform_indices = @transform_1, window_bounds = array<i64: 1, 32>}, {pipeline_mode = #tpu.pipeline_mode<synchronous>, transform_indices = @transform_2, window_bounds = array<i64: 1, 32>}, {transform_indices = @transform_3, window_bounds = array<i64: 1, 1, 286, 32>}]} {
    %c0 = arith.constant 0 : index
    %c0_0 = arith.constant 0 : index
    %c0_1 = arith.constant 0 : index
    %c0_2 = arith.constant 0 : index
    %0 = vector.load %arg2[%c0, %c0_0, %c0_1, %c0_2] : memref<1x1x286x32xf32, #tpu.memory_space<vmem>>, vector<1x1x286x32xf32>
    %1 = vector.shape_cast %0 : vector<1x1x286x32xf32> to vector<286x32xf32>
    %c0_3 = arith.constant 0 : index
    %c0_4 = arith.constant 0 : index
    %2 = vector.load %arg3[%c0_3, %c0_4] : memref<1x32xf32, #tpu.memory_space<vmem>>, vector<1x32xf32>
    %3 = vector.broadcast %2 : vector<1x32xf32> to vector<286x32xf32>
    %4 = arith.mulf %1, %3 : vector<286x32xf32>
    %c0_5 = arith.constant 0 : index
    %c0_6 = arith.constant 0 : index
    %5 = vector.load %arg4[%c0_5, %c0_6] : memref<1x32xf32, #tpu.memory_space<vmem>>, vector<1x32xf32>
    %6 = vector.broadcast %5 : vector<1x32xf32> to vector<286x32xf32>
    %7 = arith.addf %4, %6 : vector<286x32xf32>
    %cst = arith.constant 0.000000e+00 : f32
    %8 = vector.broadcast %cst : f32 to vector<286x32xf32>
    %9 = arith.maximumf %7, %8 : vector<286x32xf32>
    %c0_7 = arith.constant 0 : index
    %c0_8 = arith.constant 0 : index
    %c0_9 = arith.constant 0 : index
    %c0_10 = arith.constant 0 : index
    %10 = vector.load %arg5[%c0_7, %c0_8, %c0_9, %c0_10] : memref<1x1x286x32xf32, #tpu.memory_space<vmem>>, vector<1x1x286x32xf32>
    %11 = vector.shape_cast %10 : vector<1x1x286x32xf32> to vector<286x32xf32>
    %12 = vector.shape_cast %9 : vector<286x32xf32> to vector<1x1x286x32xf32>
    tpu.vector_store %arg5[%c0_7, %c0_8, %c0_9, %c0_10], %12 {strides = array<i32>} : memref<1x1x286x32xf32, #tpu.memory_space<vmem>>, vector<1x1x286x32xf32>,
    return
  }
  func.func @transform_0(%arg0: i32, %arg1: i32) -> (i32, i32, i32, i32) {
    %c0_i32 = arith.constant 0 : i32
    %c0_i32_0 = arith.constant 0 : i32
    %c0_i32_1 = arith.constant 0 : i32
    return %arg0, %arg1, %c0_i32, %c0_i32_0 : i32, i32, i32, i32
  }
  func.func @transform_1(%arg0: i32, %arg1: i32) -> (i32, i32) {
    %c0_i32 = arith.constant 0 : i32
    %c0_i32_0 = arith.constant 0 : i32
    %c0_i32_1 = arith.constant 0 : i32
    return %c0_i32, %c0_i32_0 : i32, i32
  }
  func.func @transform_2(%arg0: i32, %arg1: i32) -> (i32, i32) {
    %c0_i32 = arith.constant 0 : i32
    %c0_i32_0 = arith.constant 0 : i32
    %c0_i32_1 = arith.constant 0 : i32
    return %c0_i32, %c0_i32_0 : i32, i32
  }
  func.func @transform_3(%arg0: i32, %arg1: i32) -> (i32, i32, i32, i32) {
    %c0_i32 = arith.constant 0 : i32
    %c0_i32_0 = arith.constant 0 : i32
    %c0_i32_1 = arith.constant 0 : i32
    return %arg0, %arg1, %c0_i32, %c0_i32_0 : i32, i32, i32, i32
  }
}

module attributes {stable_mosaic.version = 11 : i64} {
  func.func @_conv_stats_kernel(%arg0: i32, %arg1: i32, %arg2: memref<1x1x324x32xf32, #tpu.memory_space<vmem>>, %arg3: memref<1x1x324x32xf32, #tpu.memory_space<vmem>>, %arg4: memref<1x1x324x32xf32, #tpu.memory_space<vmem>>, %arg5: memref<27x32x32xbf16, #tpu.memory_space<vmem>>, %arg6: memref<286x1xf32, #tpu.memory_space<vmem>>, %arg7: memref<1x1x286x32xf32, #tpu.memory_space<vmem>>, %arg8: memref<1x1x1x32xf32, #tpu.memory_space<vmem>>, %arg9: memref<1x1x1x32xf32, #tpu.memory_space<vmem>>) attributes {dimension_semantics = [#tpu.dimension_semantics<parallel>, #tpu.dimension_semantics<parallel>], iteration_bounds = array<i64: 2, 4>, scalar_prefetch = 0 : i64, scratch_operands = 0 : i64, tpu.core_type = #tpu.core_type<tc>, window_params = [{transform_indices = @transform_0, window_bounds = array<i64: 1, 1, 324, 32>}, {transform_indices = @transform_1, window_bounds = array<i64: 1, 1, 324, 32>}, {transform_indices = @transform_2, window_bounds = array<i64: 1, 1, 324, 32>}, {pipeline_mode = #tpu.pipeline_mode<synchronous>, transform_indices = @transform_3, window_bounds = array<i64: 27, 32, 32>}, {pipeline_mode = #tpu.pipeline_mode<synchronous>, transform_indices = @transform_4, window_bounds = array<i64: 286, 1>}, {transform_indices = @transform_5, window_bounds = array<i64: 1, 1, 286, 32>}, {transform_indices = @transform_6, window_bounds = array<i64: 1, 1, 1, 32>}, {transform_indices = @transform_7, window_bounds = array<i64: 1, 1, 1, 32>}]} {
    %cst = arith.constant 0.000000e+00 : f32
    %0 = vector.broadcast %cst : f32 to vector<286x32xf32>
    %c0 = arith.constant 0 : index
    %c0_0 = arith.constant 0 : index
    %c0_1 = arith.constant 0 : index
    %c0_2 = arith.constant 0 : index
    %1 = vector.load %arg2[%c0, %c0_0, %c0_1, %c0_2] : memref<1x1x324x32xf32, #tpu.memory_space<vmem>>, vector<1x1x286x32xf32>
    %2 = vector.shape_cast %1 : vector<1x1x286x32xf32> to vector<286x32xf32>
    %3 = arith.truncf %2 : vector<286x32xf32> to vector<286x32xbf16>
    %c0_3 = arith.constant 0 : index
    %c0_4 = arith.constant 0 : index
    %c0_5 = arith.constant 0 : index
    %4 = vector.load %arg5[%c0_3, %c0_4, %c0_5] : memref<27x32x32xbf16, #tpu.memory_space<vmem>>, vector<1x32x32xbf16>
    %5 = vector.shape_cast %4 : vector<1x32x32xbf16> to vector<32x32xbf16>
    %cst_6 = arith.constant dense<0.000000e+00> : vector<286x32xf32>
    %6 = tpu.matmul %3, %5, %cst_6 {dimension_numbers = #tpu.dot_dimension_numbers<[1], [0], [0], [1], [0, 0, 1, 1], [], []>} : vector<286x32xbf16>, vector<32x32xbf16>, vector<286x32xf32> -> vector<286x32xf32>
    %7 = arith.addf %0, %6 : vector<286x32xf32>
    %c0_7 = arith.constant 0 : index
    %c0_8 = arith.constant 0 : index
    %c1 = arith.constant 1 : index
    %c0_9 = arith.constant 0 : index
    %8 = vector.load %arg2[%c0_7, %c0_8, %c1, %c0_9] : memref<1x1x324x32xf32, #tpu.memory_space<vmem>>, vector<1x1x286x32xf32>
    %9 = vector.shape_cast %8 : vector<1x1x286x32xf32> to vector<286x32xf32>
    %10 = arith.truncf %9 : vector<286x32xf32> to vector<286x32xbf16>
    %c1_10 = arith.constant 1 : index
    %c0_11 = arith.constant 0 : index
    %c0_12 = arith.constant 0 : index
    %11 = vector.load %arg5[%c1_10, %c0_11, %c0_12] : memref<27x32x32xbf16, #tpu.memory_space<vmem>>, vector<1x32x32xbf16>
    %12 = vector.shape_cast %11 : vector<1x32x32xbf16> to vector<32x32xbf16>
    %cst_13 = arith.constant dense<0.000000e+00> : vector<286x32xf32>
    %13 = tpu.matmul %10, %12, %cst_13 {dimension_numbers = #tpu.dot_dimension_numbers<[1], [0], [0], [1], [0, 0, 1, 1], [], []>} : vector<286x32xbf16>, vector<32x32xbf16>, vector<286x32xf32> -> vector<286x32xf32>
    %14 = arith.addf %7, %13 : vector<286x32xf32>
    %c0_14 = arith.constant 0 : index
    %c0_15 = arith.constant 0 : index
    %c2 = arith.constant 2 : index
    %c0_16 = arith.constant 0 : index
    %15 = vector.load %arg2[%c0_14, %c0_15, %c2, %c0_16] : memref<1x1x324x32xf32, #tpu.memory_space<vmem>>, vector<1x1x286x32xf32>
    %16 = vector.shape_cast %15 : vector<1x1x286x32xf32> to vector<286x32xf32>
    %17 = arith.truncf %16 : vector<286x32xf32> to vector<286x32xbf16>
    %c2_17 = arith.constant 2 : index
    %c0_18 = arith.constant 0 : index
    %c0_19 = arith.constant 0 : index
    %18 = vector.load %arg5[%c2_17, %c0_18, %c0_19] : memref<27x32x32xbf16, #tpu.memory_space<vmem>>, vector<1x32x32xbf16>
    %19 = vector.shape_cast %18 : vector<1x32x32xbf16> to vector<32x32xbf16>
    %cst_20 = arith.constant dense<0.000000e+00> : vector<286x32xf32>
    %20 = tpu.matmul %17, %19, %cst_20 {dimension_numbers = #tpu.dot_dimension_numbers<[1], [0], [0], [1], [0, 0, 1, 1], [], []>} : vector<286x32xbf16>, vector<32x32xbf16>, vector<286x32xf32> -> vector<286x32xf32>
    %21 = arith.addf %14, %20 : vector<286x32xf32>
    %c0_21 = arith.constant 0 : index
    %c0_22 = arith.constant 0 : index
    %c18 = arith.constant 18 : index
    %c0_23 = arith.constant 0 : index
    %22 = vector.load %arg2[%c0_21, %c0_22, %c18, %c0_23] : memref<1x1x324x32xf32, #tpu.memory_space<vmem>>, vector<1x1x286x32xf32>
    %23 = vector.shape_cast %22 : vector<1x1x286x32xf32> to vector<286x32xf32>
    %24 = arith.truncf %23 : vector<286x32xf32> to vector<286x32xbf16>
    %c3 = arith.constant 3 : index
    %c0_24 = arith.constant 0 : index
    %c0_25 = arith.constant 0 : index
    %25 = vector.load %arg5[%c3, %c0_24, %c0_25] : memref<27x32x32xbf16, #tpu.memory_space<vmem>>, vector<1x32x32xbf16>
    %26 = vector.shape_cast %25 : vector<1x32x32xbf16> to vector<32x32xbf16>
    %cst_26 = arith.constant dense<0.000000e+00> : vector<286x32xf32>
    %27 = tpu.matmul %24, %26, %cst_26 {dimension_numbers = #tpu.dot_dimension_numbers<[1], [0], [0], [1], [0, 0, 1, 1], [], []>} : vector<286x32xbf16>, vector<32x32xbf16>, vector<286x32xf32> -> vector<286x32xf32>
    %28 = arith.addf %21, %27 : vector<286x32xf32>
    %c0_27 = arith.constant 0 : index
    %c0_28 = arith.constant 0 : index
    %c19 = arith.constant 19 : index
    %c0_29 = arith.constant 0 : index
    %29 = vector.load %arg2[%c0_27, %c0_28, %c19, %c0_29] : memref<1x1x324x32xf32, #tpu.memory_space<vmem>>, vector<1x1x286x32xf32>
    %30 = vector.shape_cast %29 : vector<1x1x286x32xf32> to vector<286x32xf32>
    %31 = arith.truncf %30 : vector<286x32xf32> to vector<286x32xbf16>
    %c4 = arith.constant 4 : index
    %c0_30 = arith.constant 0 : index
    %c0_31 = arith.constant 0 : index
    %32 = vector.load %arg5[%c4, %c0_30, %c0_31] : memref<27x32x32xbf16, #tpu.memory_space<vmem>>, vector<1x32x32xbf16>
    %33 = vector.shape_cast %32 : vector<1x32x32xbf16> to vector<32x32xbf16>
    %cst_32 = arith.constant dense<0.000000e+00> : vector<286x32xf32>
    %34 = tpu.matmul %31, %33, %cst_32 {dimension_numbers = #tpu.dot_dimension_numbers<[1], [0], [0], [1], [0, 0, 1, 1], [], []>} : vector<286x32xbf16>, vector<32x32xbf16>, vector<286x32xf32> -> vector<286x32xf32>
    %35 = arith.addf %28, %34 : vector<286x32xf32>
    %c0_33 = arith.constant 0 : index
    %c0_34 = arith.constant 0 : index
    %c20 = arith.constant 20 : index
    %c0_35 = arith.constant 0 : index
    %36 = vector.load %arg2[%c0_33, %c0_34, %c20, %c0_35] : memref<1x1x324x32xf32, #tpu.memory_space<vmem>>, vector<1x1x286x32xf32>
    %37 = vector.shape_cast %36 : vector<1x1x286x32xf32> to vector<286x32xf32>
    %38 = arith.truncf %37 : vector<286x32xf32> to vector<286x32xbf16>
    %c5 = arith.constant 5 : index
    %c0_36 = arith.constant 0 : index
    %c0_37 = arith.constant 0 : index
    %39 = vector.load %arg5[%c5, %c0_36, %c0_37] : memref<27x32x32xbf16, #tpu.memory_space<vmem>>, vector<1x32x32xbf16>
    %40 = vector.shape_cast %39 : vector<1x32x32xbf16> to vector<32x32xbf16>
    %cst_38 = arith.constant dense<0.000000e+00> : vector<286x32xf32>
    %41 = tpu.matmul %38, %40, %cst_38 {dimension_numbers = #tpu.dot_dimension_numbers<[1], [0], [0], [1], [0, 0, 1, 1], [], []>} : vector<286x32xbf16>, vector<32x32xbf16>, vector<286x32xf32> -> vector<286x32xf32>
    %42 = arith.addf %35, %41 : vector<286x32xf32>
    %c0_39 = arith.constant 0 : index
    %c0_40 = arith.constant 0 : index
    %c36 = arith.constant 36 : index
    %c0_41 = arith.constant 0 : index
    %43 = vector.load %arg2[%c0_39, %c0_40, %c36, %c0_41] : memref<1x1x324x32xf32, #tpu.memory_space<vmem>>, vector<1x1x286x32xf32>
    %44 = vector.shape_cast %43 : vector<1x1x286x32xf32> to vector<286x32xf32>
    %45 = arith.truncf %44 : vector<286x32xf32> to vector<286x32xbf16>
    %c6 = arith.constant 6 : index
    %c0_42 = arith.constant 0 : index
    %c0_43 = arith.constant 0 : index
    %46 = vector.load %arg5[%c6, %c0_42, %c0_43] : memref<27x32x32xbf16, #tpu.memory_space<vmem>>, vector<1x32x32xbf16>
    %47 = vector.shape_cast %46 : vector<1x32x32xbf16> to vector<32x32xbf16>
    %cst_44 = arith.constant dense<0.000000e+00> : vector<286x32xf32>
    %48 = tpu.matmul %45, %47, %cst_44 {dimension_numbers = #tpu.dot_dimension_numbers<[1], [0], [0], [1], [0, 0, 1, 1], [], []>} : vector<286x32xbf16>, vector<32x32xbf16>, vector<286x32xf32> -> vector<286x32xf32>
    %49 = arith.addf %42, %48 : vector<286x32xf32>
    %c0_45 = arith.constant 0 : index
    %c0_46 = arith.constant 0 : index
    %c37 = arith.constant 37 : index
    %c0_47 = arith.constant 0 : index
    %50 = vector.load %arg2[%c0_45, %c0_46, %c37, %c0_47] : memref<1x1x324x32xf32, #tpu.memory_space<vmem>>, vector<1x1x286x32xf32>
    %51 = vector.shape_cast %50 : vector<1x1x286x32xf32> to vector<286x32xf32>
    %52 = arith.truncf %51 : vector<286x32xf32> to vector<286x32xbf16>
    %c7 = arith.constant 7 : index
    %c0_48 = arith.constant 0 : index
    %c0_49 = arith.constant 0 : index
    %53 = vector.load %arg5[%c7, %c0_48, %c0_49] : memref<27x32x32xbf16, #tpu.memory_space<vmem>>, vector<1x32x32xbf16>
    %54 = vector.shape_cast %53 : vector<1x32x32xbf16> to vector<32x32xbf16>
    %cst_50 = arith.constant dense<0.000000e+00> : vector<286x32xf32>
    %55 = tpu.matmul %52, %54, %cst_50 {dimension_numbers = #tpu.dot_dimension_numbers<[1], [0], [0], [1], [0, 0, 1, 1], [], []>} : vector<286x32xbf16>, vector<32x32xbf16>, vector<286x32xf32> -> vector<286x32xf32>
    %56 = arith.addf %49, %55 : vector<286x32xf32>
    %c0_51 = arith.constant 0 : index
    %c0_52 = arith.constant 0 : index
    %c38 = arith.constant 38 : index
    %c0_53 = arith.constant 0 : index
    %57 = vector.load %arg2[%c0_51, %c0_52, %c38, %c0_53] : memref<1x1x324x32xf32, #tpu.memory_space<vmem>>, vector<1x1x286x32xf32>
    %58 = vector.shape_cast %57 : vector<1x1x286x32xf32> to vector<286x32xf32>
    %59 = arith.truncf %58 : vector<286x32xf32> to vector<286x32xbf16>
    %c8 = arith.constant 8 : index
    %c0_54 = arith.constant 0 : index
    %c0_55 = arith.constant 0 : index
    %60 = vector.load %arg5[%c8, %c0_54, %c0_55] : memref<27x32x32xbf16, #tpu.memory_space<vmem>>, vector<1x32x32xbf16>
    %61 = vector.shape_cast %60 : vector<1x32x32xbf16> to vector<32x32xbf16>
    %cst_56 = arith.constant dense<0.000000e+00> : vector<286x32xf32>
    %62 = tpu.matmul %59, %61, %cst_56 {dimension_numbers = #tpu.dot_dimension_numbers<[1], [0], [0], [1], [0, 0, 1, 1], [], []>} : vector<286x32xbf16>, vector<32x32xbf16>, vector<286x32xf32> -> vector<286x32xf32>
    %63 = arith.addf %56, %62 : vector<286x32xf32>
    %c0_57 = arith.constant 0 : index
    %c0_58 = arith.constant 0 : index
    %c0_59 = arith.constant 0 : index
    %c0_60 = arith.constant 0 : index
    %64 = vector.load %arg3[%c0_57, %c0_58, %c0_59, %c0_60] : memref<1x1x324x32xf32, #tpu.memory_space<vmem>>, vector<1x1x286x32xf32>
    %65 = vector.shape_cast %64 : vector<1x1x286x32xf32> to vector<286x32xf32>
    %66 = arith.truncf %65 : vector<286x32xf32> to vector<286x32xbf16>
    %c9 = arith.constant 9 : index
    %c0_61 = arith.constant 0 : index
    %c0_62 = arith.constant 0 : index
    %67 = vector.load %arg5[%c9, %c0_61, %c0_62] : memref<27x32x32xbf16, #tpu.memory_space<vmem>>, vector<1x32x32xbf16>
    %68 = vector.shape_cast %67 : vector<1x32x32xbf16> to vector<32x32xbf16>
    %cst_63 = arith.constant dense<0.000000e+00> : vector<286x32xf32>
    %69 = tpu.matmul %66, %68, %cst_63 {dimension_numbers = #tpu.dot_dimension_numbers<[1], [0], [0], [1], [0, 0, 1, 1], [], []>} : vector<286x32xbf16>, vector<32x32xbf16>, vector<286x32xf32> -> vector<286x32xf32>
    %70 = arith.addf %63, %69 : vector<286x32xf32>
    %c0_64 = arith.constant 0 : index
    %c0_65 = arith.constant 0 : index
    %c1_66 = arith.constant 1 : index
    %c0_67 = arith.constant 0 : index
    %71 = vector.load %arg3[%c0_64, %c0_65, %c1_66, %c0_67] : memref<1x1x324x32xf32, #tpu.memory_space<vmem>>, vector<1x1x286x32xf32>
    %72 = vector.shape_cast %71 : vector<1x1x286x32xf32> to vector<286x32xf32>
    %73 = arith.truncf %72 : vector<286x32xf32> to vector<286x32xbf16>
    %c10 = arith.constant 10 : index
    %c0_68 = arith.constant 0 : index
    %c0_69 = arith.constant 0 : index
    %74 = vector.load %arg5[%c10, %c0_68, %c0_69] : memref<27x32x32xbf16, #tpu.memory_space<vmem>>, vector<1x32x32xbf16>
    %75 = vector.shape_cast %74 : vector<1x32x32xbf16> to vector<32x32xbf16>
    %cst_70 = arith.constant dense<0.000000e+00> : vector<286x32xf32>
    %76 = tpu.matmul %73, %75, %cst_70 {dimension_numbers = #tpu.dot_dimension_numbers<[1], [0], [0], [1], [0, 0, 1, 1], [], []>} : vector<286x32xbf16>, vector<32x32xbf16>, vector<286x32xf32> -> vector<286x32xf32>
    %77 = arith.addf %70, %76 : vector<286x32xf32>
    %c0_71 = arith.constant 0 : index
    %c0_72 = arith.constant 0 : index
    %c2_73 = arith.constant 2 : index
    %c0_74 = arith.constant 0 : index
    %78 = vector.load %arg3[%c0_71, %c0_72, %c2_73, %c0_74] : memref<1x1x324x32xf32, #tpu.memory_space<vmem>>, vector<1x1x286x32xf32>
    %79 = vector.shape_cast %78 : vector<1x1x286x32xf32> to vector<286x32xf32>
    %80 = arith.truncf %79 : vector<286x32xf32> to vector<286x32xbf16>
    %c11 = arith.constant 11 : index
    %c0_75 = arith.constant 0 : index
    %c0_76 = arith.constant 0 : index
    %81 = vector.load %arg5[%c11, %c0_75, %c0_76] : memref<27x32x32xbf16, #tpu.memory_space<vmem>>, vector<1x32x32xbf16>
    %82 = vector.shape_cast %81 : vector<1x32x32xbf16> to vector<32x32xbf16>
    %cst_77 = arith.constant dense<0.000000e+00> : vector<286x32xf32>
    %83 = tpu.matmul %80, %82, %cst_77 {dimension_numbers = #tpu.dot_dimension_numbers<[1], [0], [0], [1], [0, 0, 1, 1], [], []>} : vector<286x32xbf16>, vector<32x32xbf16>, vector<286x32xf32> -> vector<286x32xf32>
    %84 = arith.addf %77, %83 : vector<286x32xf32>
    %c0_78 = arith.constant 0 : index
    %c0_79 = arith.constant 0 : index
    %c18_80 = arith.constant 18 : index
    %c0_81 = arith.constant 0 : index
    %85 = vector.load %arg3[%c0_78, %c0_79, %c18_80, %c0_81] : memref<1x1x324x32xf32, #tpu.memory_space<vmem>>, vector<1x1x286x32xf32>
    %86 = vector.shape_cast %85 : vector<1x1x286x32xf32> to vector<286x32xf32>
    %87 = arith.truncf %86 : vector<286x32xf32> to vector<286x32xbf16>
    %c12 = arith.constant 12 : index
    %c0_82 = arith.constant 0 : index
    %c0_83 = arith.constant 0 : index
    %88 = vector.load %arg5[%c12, %c0_82, %c0_83] : memref<27x32x32xbf16, #tpu.memory_space<vmem>>, vector<1x32x32xbf16>
    %89 = vector.shape_cast %88 : vector<1x32x32xbf16> to vector<32x32xbf16>
    %cst_84 = arith.constant dense<0.000000e+00> : vector<286x32xf32>
    %90 = tpu.matmul %87, %89, %cst_84 {dimension_numbers = #tpu.dot_dimension_numbers<[1], [0], [0], [1], [0, 0, 1, 1], [], []>} : vector<286x32xbf16>, vector<32x32xbf16>, vector<286x32xf32> -> vector<286x32xf32>
    %91 = arith.addf %84, %90 : vector<286x32xf32>
    %c0_85 = arith.constant 0 : index
    %c0_86 = arith.constant 0 : index
    %c19_87 = arith.constant 19 : index
    %c0_88 = arith.constant 0 : index
    %92 = vector.load %arg3[%c0_85, %c0_86, %c19_87, %c0_88] : memref<1x1x324x32xf32, #tpu.memory_space<vmem>>, vector<1x1x286x32xf32>
    %93 = vector.shape_cast %92 : vector<1x1x286x32xf32> to vector<286x32xf32>
    %94 = arith.truncf %93 : vector<286x32xf32> to vector<286x32xbf16>
    %c13 = arith.constant 13 : index
    %c0_89 = arith.constant 0 : index
    %c0_90 = arith.constant 0 : index
    %95 = vector.load %arg5[%c13, %c0_89, %c0_90] : memref<27x32x32xbf16, #tpu.memory_space<vmem>>, vector<1x32x32xbf16>
    %96 = vector.shape_cast %95 : vector<1x32x32xbf16> to vector<32x32xbf16>
    %cst_91 = arith.constant dense<0.000000e+00> : vector<286x32xf32>
    %97 = tpu.matmul %94, %96, %cst_91 {dimension_numbers = #tpu.dot_dimension_numbers<[1], [0], [0], [1], [0, 0, 1, 1], [], []>} : vector<286x32xbf16>, vector<32x32xbf16>, vector<286x32xf32> -> vector<286x32xf32>
    %98 = arith.addf %91, %97 : vector<286x32xf32>
    %c0_92 = arith.constant 0 : index
    %c0_93 = arith.constant 0 : index
    %c20_94 = arith.constant 20 : index
    %c0_95 = arith.constant 0 : index
    %99 = vector.load %arg3[%c0_92, %c0_93, %c20_94, %c0_95] : memref<1x1x324x32xf32, #tpu.memory_space<vmem>>, vector<1x1x286x32xf32>
    %100 = vector.shape_cast %99 : vector<1x1x286x32xf32> to vector<286x32xf32>
    %101 = arith.truncf %100 : vector<286x32xf32> to vector<286x32xbf16>
    %c14 = arith.constant 14 : index
    %c0_96 = arith.constant 0 : index
    %c0_97 = arith.constant 0 : index
    %102 = vector.load %arg5[%c14, %c0_96, %c0_97] : memref<27x32x32xbf16, #tpu.memory_space<vmem>>, vector<1x32x32xbf16>
    %103 = vector.shape_cast %102 : vector<1x32x32xbf16> to vector<32x32xbf16>
    %cst_98 = arith.constant dense<0.000000e+00> : vector<286x32xf32>
    %104 = tpu.matmul %101, %103, %cst_98 {dimension_numbers = #tpu.dot_dimension_numbers<[1], [0], [0], [1], [0, 0, 1, 1], [], []>} : vector<286x32xbf16>, vector<32x32xbf16>, vector<286x32xf32> -> vector<286x32xf32>
    %105 = arith.addf %98, %104 : vector<286x32xf32>
    %c0_99 = arith.constant 0 : index
    %c0_100 = arith.constant 0 : index
    %c36_101 = arith.constant 36 : index
    %c0_102 = arith.constant 0 : index
    %106 = vector.load %arg3[%c0_99, %c0_100, %c36_101, %c0_102] : memref<1x1x324x32xf32, #tpu.memory_space<vmem>>, vector<1x1x286x32xf32>
    %107 = vector.shape_cast %106 : vector<1x1x286x32xf32> to vector<286x32xf32>
    %108 = arith.truncf %107 : vector<286x32xf32> to vector<286x32xbf16>
    %c15 = arith.constant 15 : index
    %c0_103 = arith.constant 0 : index
    %c0_104 = arith.constant 0 : index
    %109 = vector.load %arg5[%c15, %c0_103, %c0_104] : memref<27x32x32xbf16, #tpu.memory_space<vmem>>, vector<1x32x32xbf16>
    %110 = vector.shape_cast %109 : vector<1x32x32xbf16> to vector<32x32xbf16>
    %cst_105 = arith.constant dense<0.000000e+00> : vector<286x32xf32>
    %111 = tpu.matmul %108, %110, %cst_105 {dimension_numbers = #tpu.dot_dimension_numbers<[1], [0], [0], [1], [0, 0, 1, 1], [], []>} : vector<286x32xbf16>, vector<32x32xbf16>, vector<286x32xf32> -> vector<286x32xf32>
    %112 = arith.addf %105, %111 : vector<286x32xf32>
    %c0_106 = arith.constant 0 : index
    %c0_107 = arith.constant 0 : index
    %c37_108 = arith.constant 37 : index
    %c0_109 = arith.constant 0 : index
    %113 = vector.load %arg3[%c0_106, %c0_107, %c37_108, %c0_109] : memref<1x1x324x32xf32, #tpu.memory_space<vmem>>, vector<1x1x286x32xf32>
    %114 = vector.shape_cast %113 : vector<1x1x286x32xf32> to vector<286x32xf32>
    %115 = arith.truncf %114 : vector<286x32xf32> to vector<286x32xbf16>
    %c16 = arith.constant 16 : index
    %c0_110 = arith.constant 0 : index
    %c0_111 = arith.constant 0 : index
    %116 = vector.load %arg5[%c16, %c0_110, %c0_111] : memref<27x32x32xbf16, #tpu.memory_space<vmem>>, vector<1x32x32xbf16>
    %117 = vector.shape_cast %116 : vector<1x32x32xbf16> to vector<32x32xbf16>
    %cst_112 = arith.constant dense<0.000000e+00> : vector<286x32xf32>
    %118 = tpu.matmul %115, %117, %cst_112 {dimension_numbers = #tpu.dot_dimension_numbers<[1], [0], [0], [1], [0, 0, 1, 1], [], []>} : vector<286x32xbf16>, vector<32x32xbf16>, vector<286x32xf32> -> vector<286x32xf32>
    %119 = arith.addf %112, %118 : vector<286x32xf32>
    %c0_113 = arith.constant 0 : index
    %c0_114 = arith.constant 0 : index
    %c38_115 = arith.constant 38 : index
    %c0_116 = arith.constant 0 : index
    %120 = vector.load %arg3[%c0_113, %c0_114, %c38_115, %c0_116] : memref<1x1x324x32xf32, #tpu.memory_space<vmem>>, vector<1x1x286x32xf32>
    %121 = vector.shape_cast %120 : vector<1x1x286x32xf32> to vector<286x32xf32>
    %122 = arith.truncf %121 : vector<286x32xf32> to vector<286x32xbf16>
    %c17 = arith.constant 17 : index
    %c0_117 = arith.constant 0 : index
    %c0_118 = arith.constant 0 : index
    %123 = vector.load %arg5[%c17, %c0_117, %c0_118] : memref<27x32x32xbf16, #tpu.memory_space<vmem>>, vector<1x32x32xbf16>
    %124 = vector.shape_cast %123 : vector<1x32x32xbf16> to vector<32x32xbf16>
    %cst_119 = arith.constant dense<0.000000e+00> : vector<286x32xf32>
    %125 = tpu.matmul %122, %124, %cst_119 {dimension_numbers = #tpu.dot_dimension_numbers<[1], [0], [0], [1], [0, 0, 1, 1], [], []>} : vector<286x32xbf16>, vector<32x32xbf16>, vector<286x32xf32> -> vector<286x32xf32>
    %126 = arith.addf %119, %125 : vector<286x32xf32>
    %c0_120 = arith.constant 0 : index
    %c0_121 = arith.constant 0 : index
    %c0_122 = arith.constant 0 : index
    %c0_123 = arith.constant 0 : index
    %127 = vector.load %arg4[%c0_120, %c0_121, %c0_122, %c0_123] : memref<1x1x324x32xf32, #tpu.memory_space<vmem>>, vector<1x1x286x32xf32>
    %128 = vector.shape_cast %127 : vector<1x1x286x32xf32> to vector<286x32xf32>
    %129 = arith.truncf %128 : vector<286x32xf32> to vector<286x32xbf16>
    %c18_124 = arith.constant 18 : index
    %c0_125 = arith.constant 0 : index
    %c0_126 = arith.constant 0 : index
    %130 = vector.load %arg5[%c18_124, %c0_125, %c0_126] : memref<27x32x32xbf16, #tpu.memory_space<vmem>>, vector<1x32x32xbf16>
    %131 = vector.shape_cast %130 : vector<1x32x32xbf16> to vector<32x32xbf16>
    %cst_127 = arith.constant dense<0.000000e+00> : vector<286x32xf32>
    %132 = tpu.matmul %129, %131, %cst_127 {dimension_numbers = #tpu.dot_dimension_numbers<[1], [0], [0], [1], [0, 0, 1, 1], [], []>} : vector<286x32xbf16>, vector<32x32xbf16>, vector<286x32xf32> -> vector<286x32xf32>
    %133 = arith.addf %126, %132 : vector<286x32xf32>
    %c0_128 = arith.constant 0 : index
    %c0_129 = arith.constant 0 : index
    %c1_130 = arith.constant 1 : index
    %c0_131 = arith.constant 0 : index
    %134 = vector.load %arg4[%c0_128, %c0_129, %c1_130, %c0_131] : memref<1x1x324x32xf32, #tpu.memory_space<vmem>>, vector<1x1x286x32xf32>
    %135 = vector.shape_cast %134 : vector<1x1x286x32xf32> to vector<286x32xf32>
    %136 = arith.truncf %135 : vector<286x32xf32> to vector<286x32xbf16>
    %c19_132 = arith.constant 19 : index
    %c0_133 = arith.constant 0 : index
    %c0_134 = arith.constant 0 : index
    %137 = vector.load %arg5[%c19_132, %c0_133, %c0_134] : memref<27x32x32xbf16, #tpu.memory_space<vmem>>, vector<1x32x32xbf16>
    %138 = vector.shape_cast %137 : vector<1x32x32xbf16> to vector<32x32xbf16>
    %cst_135 = arith.constant dense<0.000000e+00> : vector<286x32xf32>
    %139 = tpu.matmul %136, %138, %cst_135 {dimension_numbers = #tpu.dot_dimension_numbers<[1], [0], [0], [1], [0, 0, 1, 1], [], []>} : vector<286x32xbf16>, vector<32x32xbf16>, vector<286x32xf32> -> vector<286x32xf32>
    %140 = arith.addf %133, %139 : vector<286x32xf32>
    %c0_136 = arith.constant 0 : index
    %c0_137 = arith.constant 0 : index
    %c2_138 = arith.constant 2 : index
    %c0_139 = arith.constant 0 : index
    %141 = vector.load %arg4[%c0_136, %c0_137, %c2_138, %c0_139] : memref<1x1x324x32xf32, #tpu.memory_space<vmem>>, vector<1x1x286x32xf32>
    %142 = vector.shape_cast %141 : vector<1x1x286x32xf32> to vector<286x32xf32>
    %143 = arith.truncf %142 : vector<286x32xf32> to vector<286x32xbf16>
    %c20_140 = arith.constant 20 : index
    %c0_141 = arith.constant 0 : index
    %c0_142 = arith.constant 0 : index
    %144 = vector.load %arg5[%c20_140, %c0_141, %c0_142] : memref<27x32x32xbf16, #tpu.memory_space<vmem>>, vector<1x32x32xbf16>
    %145 = vector.shape_cast %144 : vector<1x32x32xbf16> to vector<32x32xbf16>
    %cst_143 = arith.constant dense<0.000000e+00> : vector<286x32xf32>
    %146 = tpu.matmul %143, %145, %cst_143 {dimension_numbers = #tpu.dot_dimension_numbers<[1], [0], [0], [1], [0, 0, 1, 1], [], []>} : vector<286x32xbf16>, vector<32x32xbf16>, vector<286x32xf32> -> vector<286x32xf32>
    %147 = arith.addf %140, %146 : vector<286x32xf32>
    %c0_144 = arith.constant 0 : index
    %c0_145 = arith.constant 0 : index
    %c18_146 = arith.constant 18 : index
    %c0_147 = arith.constant 0 : index
    %148 = vector.load %arg4[%c0_144, %c0_145, %c18_146, %c0_147] : memref<1x1x324x32xf32, #tpu.memory_space<vmem>>, vector<1x1x286x32xf32>
    %149 = vector.shape_cast %148 : vector<1x1x286x32xf32> to vector<286x32xf32>
    %150 = arith.truncf %149 : vector<286x32xf32> to vector<286x32xbf16>
    %c21 = arith.constant 21 : index
    %c0_148 = arith.constant 0 : index
    %c0_149 = arith.constant 0 : index
    %151 = vector.load %arg5[%c21, %c0_148, %c0_149] : memref<27x32x32xbf16, #tpu.memory_space<vmem>>, vector<1x32x32xbf16>
    %152 = vector.shape_cast %151 : vector<1x32x32xbf16> to vector<32x32xbf16>
    %cst_150 = arith.constant dense<0.000000e+00> : vector<286x32xf32>
    %153 = tpu.matmul %150, %152, %cst_150 {dimension_numbers = #tpu.dot_dimension_numbers<[1], [0], [0], [1], [0, 0, 1, 1], [], []>} : vector<286x32xbf16>, vector<32x32xbf16>, vector<286x32xf32> -> vector<286x32xf32>
    %154 = arith.addf %147, %153 : vector<286x32xf32>
    %c0_151 = arith.constant 0 : index
    %c0_152 = arith.constant 0 : index
    %c19_153 = arith.constant 19 : index
    %c0_154 = arith.constant 0 : index
    %155 = vector.load %arg4[%c0_151, %c0_152, %c19_153, %c0_154] : memref<1x1x324x32xf32, #tpu.memory_space<vmem>>, vector<1x1x286x32xf32>
    %156 = vector.shape_cast %155 : vector<1x1x286x32xf32> to vector<286x32xf32>
    %157 = arith.truncf %156 : vector<286x32xf32> to vector<286x32xbf16>
    %c22 = arith.constant 22 : index
    %c0_155 = arith.constant 0 : index
    %c0_156 = arith.constant 0 : index
    %158 = vector.load %arg5[%c22, %c0_155, %c0_156] : memref<27x32x32xbf16, #tpu.memory_space<vmem>>, vector<1x32x32xbf16>
    %159 = vector.shape_cast %158 : vector<1x32x32xbf16> to vector<32x32xbf16>
    %cst_157 = arith.constant dense<0.000000e+00> : vector<286x32xf32>
    %160 = tpu.matmul %157, %159, %cst_157 {dimension_numbers = #tpu.dot_dimension_numbers<[1], [0], [0], [1], [0, 0, 1, 1], [], []>} : vector<286x32xbf16>, vector<32x32xbf16>, vector<286x32xf32> -> vector<286x32xf32>
    %161 = arith.addf %154, %160 : vector<286x32xf32>
    %c0_158 = arith.constant 0 : index
    %c0_159 = arith.constant 0 : index
    %c20_160 = arith.constant 20 : index
    %c0_161 = arith.constant 0 : index
    %162 = vector.load %arg4[%c0_158, %c0_159, %c20_160, %c0_161] : memref<1x1x324x32xf32, #tpu.memory_space<vmem>>, vector<1x1x286x32xf32>
    %163 = vector.shape_cast %162 : vector<1x1x286x32xf32> to vector<286x32xf32>
    %164 = arith.truncf %163 : vector<286x32xf32> to vector<286x32xbf16>
    %c23 = arith.constant 23 : index
    %c0_162 = arith.constant 0 : index
    %c0_163 = arith.constant 0 : index
    %165 = vector.load %arg5[%c23, %c0_162, %c0_163] : memref<27x32x32xbf16, #tpu.memory_space<vmem>>, vector<1x32x32xbf16>
    %166 = vector.shape_cast %165 : vector<1x32x32xbf16> to vector<32x32xbf16>
    %cst_164 = arith.constant dense<0.000000e+00> : vector<286x32xf32>
    %167 = tpu.matmul %164, %166, %cst_164 {dimension_numbers = #tpu.dot_dimension_numbers<[1], [0], [0], [1], [0, 0, 1, 1], [], []>} : vector<286x32xbf16>, vector<32x32xbf16>, vector<286x32xf32> -> vector<286x32xf32>
    %168 = arith.addf %161, %167 : vector<286x32xf32>
    %c0_165 = arith.constant 0 : index
    %c0_166 = arith.constant 0 : index
    %c36_167 = arith.constant 36 : index
    %c0_168 = arith.constant 0 : index
    %169 = vector.load %arg4[%c0_165, %c0_166, %c36_167, %c0_168] : memref<1x1x324x32xf32, #tpu.memory_space<vmem>>, vector<1x1x286x32xf32>
    %170 = vector.shape_cast %169 : vector<1x1x286x32xf32> to vector<286x32xf32>
    %171 = arith.truncf %170 : vector<286x32xf32> to vector<286x32xbf16>
    %c24 = arith.constant 24 : index
    %c0_169 = arith.constant 0 : index
    %c0_170 = arith.constant 0 : index
    %172 = vector.load %arg5[%c24, %c0_169, %c0_170] : memref<27x32x32xbf16, #tpu.memory_space<vmem>>, vector<1x32x32xbf16>
    %173 = vector.shape_cast %172 : vector<1x32x32xbf16> to vector<32x32xbf16>
    %cst_171 = arith.constant dense<0.000000e+00> : vector<286x32xf32>
    %174 = tpu.matmul %171, %173, %cst_171 {dimension_numbers = #tpu.dot_dimension_numbers<[1], [0], [0], [1], [0, 0, 1, 1], [], []>} : vector<286x32xbf16>, vector<32x32xbf16>, vector<286x32xf32> -> vector<286x32xf32>
    %175 = arith.addf %168, %174 : vector<286x32xf32>
    %c0_172 = arith.constant 0 : index
    %c0_173 = arith.constant 0 : index
    %c37_174 = arith.constant 37 : index
    %c0_175 = arith.constant 0 : index
    %176 = vector.load %arg4[%c0_172, %c0_173, %c37_174, %c0_175] : memref<1x1x324x32xf32, #tpu.memory_space<vmem>>, vector<1x1x286x32xf32>
    %177 = vector.shape_cast %176 : vector<1x1x286x32xf32> to vector<286x32xf32>
    %178 = arith.truncf %177 : vector<286x32xf32> to vector<286x32xbf16>
    %c25 = arith.constant 25 : index
    %c0_176 = arith.constant 0 : index
    %c0_177 = arith.constant 0 : index
    %179 = vector.load %arg5[%c25, %c0_176, %c0_177] : memref<27x32x32xbf16, #tpu.memory_space<vmem>>, vector<1x32x32xbf16>
    %180 = vector.shape_cast %179 : vector<1x32x32xbf16> to vector<32x32xbf16>
    %cst_178 = arith.constant dense<0.000000e+00> : vector<286x32xf32>
    %181 = tpu.matmul %178, %180, %cst_178 {dimension_numbers = #tpu.dot_dimension_numbers<[1], [0], [0], [1], [0, 0, 1, 1], [], []>} : vector<286x32xbf16>, vector<32x32xbf16>, vector<286x32xf32> -> vector<286x32xf32>
    %182 = arith.addf %175, %181 : vector<286x32xf32>
    %c0_179 = arith.constant 0 : index
    %c0_180 = arith.constant 0 : index
    %c38_181 = arith.constant 38 : index
    %c0_182 = arith.constant 0 : index
    %183 = vector.load %arg4[%c0_179, %c0_180, %c38_181, %c0_182] : memref<1x1x324x32xf32, #tpu.memory_space<vmem>>, vector<1x1x286x32xf32>
    %184 = vector.shape_cast %183 : vector<1x1x286x32xf32> to vector<286x32xf32>
    %185 = arith.truncf %184 : vector<286x32xf32> to vector<286x32xbf16>
    %c26 = arith.constant 26 : index
    %c0_183 = arith.constant 0 : index
    %c0_184 = arith.constant 0 : index
    %186 = vector.load %arg5[%c26, %c0_183, %c0_184] : memref<27x32x32xbf16, #tpu.memory_space<vmem>>, vector<1x32x32xbf16>
    %187 = vector.shape_cast %186 : vector<1x32x32xbf16> to vector<32x32xbf16>
    %cst_185 = arith.constant dense<0.000000e+00> : vector<286x32xf32>
    %188 = tpu.matmul %185, %187, %cst_185 {dimension_numbers = #tpu.dot_dimension_numbers<[1], [0], [0], [1], [0, 0, 1, 1], [], []>} : vector<286x32xbf16>, vector<32x32xbf16>, vector<286x32xf32> -> vector<286x32xf32>
    %189 = arith.addf %182, %188 : vector<286x32xf32>
    %c0_186 = arith.constant 0 : index
    %c0_187 = arith.constant 0 : index
    %c0_188 = arith.constant 0 : index
    %c0_189 = arith.constant 0 : index
    %190 = vector.load %arg7[%c0_186, %c0_187, %c0_188, %c0_189] : memref<1x1x286x32xf32, #tpu.memory_space<vmem>>, vector<1x1x286x32xf32>
    %191 = vector.shape_cast %190 : vector<1x1x286x32xf32> to vector<286x32xf32>
    %192 = vector.shape_cast %189 : vector<286x32xf32> to vector<1x1x286x32xf32>
    tpu.vector_store %arg7[%c0_186, %c0_187, %c0_188, %c0_189], %192 {strides = array<i32>} : memref<1x1x286x32xf32, #tpu.memory_space<vmem>>, vector<1x1x286x32xf32>,
    %c0_190 = arith.constant 0 : index
    %c0_191 = arith.constant 0 : index
    %193 = vector.load %arg6[%c0_190, %c0_191] : memref<286x1xf32, #tpu.memory_space<vmem>>, vector<286x1xf32>
    %194 = vector.broadcast %193 : vector<286x1xf32> to vector<286x32xf32>
    %195 = arith.mulf %189, %194 : vector<286x32xf32>
    %cst_192 = arith.constant dense<0.000000e+00> : vector<32xf32>
    %196 = vector.multi_reduction <add>, %195, %cst_192 [0] : vector<286x32xf32> to vector<32xf32>
    %197 = vector.shape_cast %196 : vector<32xf32> to vector<1x32xf32>
    %c0_193 = arith.constant 0 : index
    %c0_194 = arith.constant 0 : index
    %c0_195 = arith.constant 0 : index
    %c0_196 = arith.constant 0 : index
    %198 = vector.load %arg8[%c0_193, %c0_194, %c0_195, %c0_196] : memref<1x1x1x32xf32, #tpu.memory_space<vmem>>, vector<1x1x1x32xf32>
    %199 = vector.shape_cast %198 : vector<1x1x1x32xf32> to vector<1x32xf32>
    %200 = vector.shape_cast %197 : vector<1x32xf32> to vector<1x1x1x32xf32>
    tpu.vector_store %arg8[%c0_193, %c0_194, %c0_195, %c0_196], %200 {strides = array<i32>} : memref<1x1x1x32xf32, #tpu.memory_space<vmem>>, vector<1x1x1x32xf32>,
    %201 = arith.mulf %195, %195 : vector<286x32xf32>
    %cst_197 = arith.constant dense<0.000000e+00> : vector<32xf32>
    %202 = vector.multi_reduction <add>, %201, %cst_197 [0] : vector<286x32xf32> to vector<32xf32>
    %203 = vector.shape_cast %202 : vector<32xf32> to vector<1x32xf32>
    %c0_198 = arith.constant 0 : index
    %c0_199 = arith.constant 0 : index
    %c0_200 = arith.constant 0 : index
    %c0_201 = arith.constant 0 : index
    %204 = vector.load %arg9[%c0_198, %c0_199, %c0_200, %c0_201] : memref<1x1x1x32xf32, #tpu.memory_space<vmem>>, vector<1x1x1x32xf32>
    %205 = vector.shape_cast %204 : vector<1x1x1x32xf32> to vector<1x32xf32>
    %206 = vector.shape_cast %203 : vector<1x32xf32> to vector<1x1x1x32xf32>
    tpu.vector_store %arg9[%c0_198, %c0_199, %c0_200, %c0_201], %206 {strides = array<i32>} : memref<1x1x1x32xf32, #tpu.memory_space<vmem>>, vector<1x1x1x32xf32>,
    return
  }
  func.func @transform_0(%arg0: i32, %arg1: i32) -> (i32, i32, i32, i32) {
    %c0_i32 = arith.constant 0 : i32
    %c0_i32_0 = arith.constant 0 : i32
    %c0_i32_1 = arith.constant 0 : i32
    return %arg0, %arg1, %c0_i32, %c0_i32_0 : i32, i32, i32, i32
  }
  func.func @transform_1(%arg0: i32, %arg1: i32) -> (i32, i32, i32, i32) {
    %c1_i32 = arith.constant 1 : i32
    %0 = arith.addi %arg1, %c1_i32 : i32
    %c0_i32 = arith.constant 0 : i32
    %c0_i32_0 = arith.constant 0 : i32
    %c0_i32_1 = arith.constant 0 : i32
    return %arg0, %0, %c0_i32, %c0_i32_0 : i32, i32, i32, i32
  }
  func.func @transform_2(%arg0: i32, %arg1: i32) -> (i32, i32, i32, i32) {
    %c2_i32 = arith.constant 2 : i32
    %0 = arith.addi %arg1, %c2_i32 : i32
    %c0_i32 = arith.constant 0 : i32
    %c0_i32_0 = arith.constant 0 : i32
    %c0_i32_1 = arith.constant 0 : i32
    return %arg0, %0, %c0_i32, %c0_i32_0 : i32, i32, i32, i32
  }
  func.func @transform_3(%arg0: i32, %arg1: i32) -> (i32, i32, i32) {
    %c0_i32 = arith.constant 0 : i32
    %c0_i32_0 = arith.constant 0 : i32
    %c0_i32_1 = arith.constant 0 : i32
    %c0_i32_2 = arith.constant 0 : i32
    return %c0_i32, %c0_i32_0, %c0_i32_1 : i32, i32, i32
  }
  func.func @transform_4(%arg0: i32, %arg1: i32) -> (i32, i32) {
    %c0_i32 = arith.constant 0 : i32
    %c0_i32_0 = arith.constant 0 : i32
    %c0_i32_1 = arith.constant 0 : i32
    return %c0_i32, %c0_i32_0 : i32, i32
  }
  func.func @transform_5(%arg0: i32, %arg1: i32) -> (i32, i32, i32, i32) {
    %c0_i32 = arith.constant 0 : i32
    %c0_i32_0 = arith.constant 0 : i32
    %c0_i32_1 = arith.constant 0 : i32
    return %arg0, %arg1, %c0_i32, %c0_i32_0 : i32, i32, i32, i32
  }
  func.func @transform_6(%arg0: i32, %arg1: i32) -> (i32, i32, i32, i32) {
    %c0_i32 = arith.constant 0 : i32
    %c0_i32_0 = arith.constant 0 : i32
    %c0_i32_1 = arith.constant 0 : i32
    return %arg0, %arg1, %c0_i32, %c0_i32_0 : i32, i32, i32, i32
  }
  func.func @transform_7(%arg0: i32, %arg1: i32) -> (i32, i32, i32, i32) {
    %c0_i32 = arith.constant 0 : i32
    %c0_i32_0 = arith.constant 0 : i32
    %c0_i32_1 = arith.constant 0 : i32
    return %arg0, %arg1, %c0_i32, %c0_i32_0 : i32, i32, i32, i32
  }
}

module attributes {stable_mosaic.version = 11 : i64} {
  func.func @_bn_add_relu_kernel(%arg0: i32, %arg1: i32, %arg2: memref<1x1x286x32xf32, #tpu.memory_space<vmem>>, %arg3: memref<1x32xf32, #tpu.memory_space<vmem>>, %arg4: memref<1x32xf32, #tpu.memory_space<vmem>>, %arg5: memref<1x1x286x32xf32, #tpu.memory_space<vmem>>, %arg6: memref<1x1x286x32xf32, #tpu.memory_space<vmem>>) attributes {dimension_semantics = [#tpu.dimension_semantics<parallel>, #tpu.dimension_semantics<parallel>], iteration_bounds = array<i64: 2, 4>, scalar_prefetch = 0 : i64, scratch_operands = 0 : i64, tpu.core_type = #tpu.core_type<tc>, window_params = [{transform_indices = @transform_0, window_bounds = array<i64: 1, 1, 286, 32>}, {pipeline_mode = #tpu.pipeline_mode<synchronous>, transform_indices = @transform_1, window_bounds = array<i64: 1, 32>}, {pipeline_mode = #tpu.pipeline_mode<synchronous>, transform_indices = @transform_2, window_bounds = array<i64: 1, 32>}, {transform_indices = @transform_3, window_bounds = array<i64: 1, 1, 286, 32>}, {transform_indices = @transform_4, window_bounds = array<i64: 1, 1, 286, 32>}]} {
    %c0 = arith.constant 0 : index
    %c0_0 = arith.constant 0 : index
    %c0_1 = arith.constant 0 : index
    %c0_2 = arith.constant 0 : index
    %0 = vector.load %arg2[%c0, %c0_0, %c0_1, %c0_2] : memref<1x1x286x32xf32, #tpu.memory_space<vmem>>, vector<1x1x286x32xf32>
    %1 = vector.shape_cast %0 : vector<1x1x286x32xf32> to vector<286x32xf32>
    %c0_3 = arith.constant 0 : index
    %c0_4 = arith.constant 0 : index
    %2 = vector.load %arg3[%c0_3, %c0_4] : memref<1x32xf32, #tpu.memory_space<vmem>>, vector<1x32xf32>
    %3 = vector.broadcast %2 : vector<1x32xf32> to vector<286x32xf32>
    %4 = arith.mulf %1, %3 : vector<286x32xf32>
    %c0_5 = arith.constant 0 : index
    %c0_6 = arith.constant 0 : index
    %5 = vector.load %arg4[%c0_5, %c0_6] : memref<1x32xf32, #tpu.memory_space<vmem>>, vector<1x32xf32>
    %6 = vector.broadcast %5 : vector<1x32xf32> to vector<286x32xf32>
    %7 = arith.addf %4, %6 : vector<286x32xf32>
    %c0_7 = arith.constant 0 : index
    %c0_8 = arith.constant 0 : index
    %c0_9 = arith.constant 0 : index
    %c0_10 = arith.constant 0 : index
    %8 = vector.load %arg5[%c0_7, %c0_8, %c0_9, %c0_10] : memref<1x1x286x32xf32, #tpu.memory_space<vmem>>, vector<1x1x286x32xf32>
    %9 = vector.shape_cast %8 : vector<1x1x286x32xf32> to vector<286x32xf32>
    %10 = arith.addf %7, %9 : vector<286x32xf32>
    %cst = arith.constant 0.000000e+00 : f32
    %11 = vector.broadcast %cst : f32 to vector<286x32xf32>
    %12 = arith.maximumf %10, %11 : vector<286x32xf32>
    %c0_11 = arith.constant 0 : index
    %c0_12 = arith.constant 0 : index
    %c0_13 = arith.constant 0 : index
    %c0_14 = arith.constant 0 : index
    %13 = vector.load %arg6[%c0_11, %c0_12, %c0_13, %c0_14] : memref<1x1x286x32xf32, #tpu.memory_space<vmem>>, vector<1x1x286x32xf32>
    %14 = vector.shape_cast %13 : vector<1x1x286x32xf32> to vector<286x32xf32>
    %15 = vector.shape_cast %12 : vector<286x32xf32> to vector<1x1x286x32xf32>
    tpu.vector_store %arg6[%c0_11, %c0_12, %c0_13, %c0_14], %15 {strides = array<i32>} : memref<1x1x286x32xf32, #tpu.memory_space<vmem>>, vector<1x1x286x32xf32>,
    return
  }
  func.func @transform_0(%arg0: i32, %arg1: i32) -> (i32, i32, i32, i32) {
    %c0_i32 = arith.constant 0 : i32
    %c0_i32_0 = arith.constant 0 : i32
    %c0_i32_1 = arith.constant 0 : i32
    return %arg0, %arg1, %c0_i32, %c0_i32_0 : i32, i32, i32, i32
  }
  func.func @transform_1(%arg0: i32, %arg1: i32) -> (i32, i32) {
    %c0_i32 = arith.constant 0 : i32
    %c0_i32_0 = arith.constant 0 : i32
    %c0_i32_1 = arith.constant 0 : i32
    return %c0_i32, %c0_i32_0 : i32, i32
  }
  func.func @transform_2(%arg0: i32, %arg1: i32) -> (i32, i32) {
    %c0_i32 = arith.constant 0 : i32
    %c0_i32_0 = arith.constant 0 : i32
    %c0_i32_1 = arith.constant 0 : i32
    return %c0_i32, %c0_i32_0 : i32, i32
  }
  func.func @transform_3(%arg0: i32, %arg1: i32) -> (i32, i32, i32, i32) {
    %c0_i32 = arith.constant 0 : i32
    %c0_i32_0 = arith.constant 0 : i32
    %c0_i32_1 = arith.constant 0 : i32
    return %arg0, %arg1, %c0_i32, %c0_i32_0 : i32, i32, i32, i32
  }
  func.func @transform_4(%arg0: i32, %arg1: i32) -> (i32, i32, i32, i32) {
    %c0_i32 = arith.constant 0 : i32
    %c0_i32_0 = arith.constant 0 : i32
    %c0_i32_1 = arith.constant 0 : i32
    return %arg0, %arg1, %c0_i32, %c0_i32_0 : i32, i32, i32, i32
  }
}

</mosaic_0001>

<llo_original>
// kernel: basic_block_forward.5
$region0: #{basic_block_forward.5}
  #allocation0 [shape = 'u32[]', space=smem, size = 0x4, offset = 0x4, fixed_abs, tag = 'smem constant byte address 0x4 - core index']
  #allocation1 [shape = 'u32[72,128]{1,0:T(1,128)}', space=vmem, size = 0x9000, scoped, tag = 'internal scratch']
  %s0 = inlined_call_operand.vmem [shape: f32[2,4,286,32], index: 0, kind: input, shape index: {}]
  %s1 = inlined_call_operand.vmem [shape: f32[1,32], index: 1, kind: input, shape index: {}]
  %s2 = inlined_call_operand.vmem [shape: f32[1,32], index: 2, kind: input, shape index: {}]
  %s3 = inlined_call_operand.vmem [shape: f32[2,4,286,32], index: 3, kind: output, shape index: {}]
  %s4 = sld [smem:[#allocation0]]
  $region45: #{basic_block_forward.5} parent=0
    _
  %s6 = ssub.s32 1, %s4
  %s7 = scalar_select 0, %s6, %s4
  loop: start=0, step=1, limit=10
  $region2: #{basic_block_forward.5} parent=0 // loop_pre_header
    _
  $region3: #{basic_block_forward.5} parent=0 // loop_header
    %s9 = sphi 0, %s13
    %p10 = scmp.ge.s32.totalorder %s9, 10
    %s16 = sphi 0, %s28
    %s17 = sphi 0, %s24
    %s18 = sphi 0, %s16
    %s19 = sphi 0, %s17
    %s20 = sphi 0, %s18
    %s21 = sphi 0, %s19
    %s33 = sphi 0, %s35
    %s36 = sphi 0, %s33
    %s37 = sphi 0, %s36
    %s53 = sphi 0, %s37
    %s57 = sphi 0, %s57
    %s59 = sphi 0, %s57
    %s60 = sphi 0, %s59
    %s74 = sphi 0, %s60
    %s78 = sphi 0, %s78
    %s80 = sphi 0, %s78
    %s81 = sphi 0, %s80
    %s95 = sphi 0, %s81
    %s103 = sphi 0, %s105
    %s106 = sphi 0, %s103
    %s107 = sphi 0, %s106
    %s123 = sphi 0, %s107
  $region4: #{basic_block_forward.5} parent=0 // loop_header_branch
    %12 = sbr.rel (%p10) target = $region8
  $region5: #{basic_block_forward.5} parent=0 // loop_body
    %s14 = ssub.s32 %s9, 1
    %s15 = ssub.s32 %s9, 2
    %s22 = sadd.s32 1, %s17
    %p23 = scmp.ge.s32.totalorder %s22, 4
    %s24 = scalar_select %p23, 0, %s22
    %s25 = sadd.s32 1, %s16
    %s26 = scalar_select %p23, %s25, %s16
    %p27 = scmp.ge.s32.totalorder %s26, 2
    %s28 = scalar_select %p27, 0, %s26
    %s29 = ssub.s32 %s16, %s28
    %s30 = ssub.s32 %s17, %s24
    %s31 = sor.u32 %s29, %s30
    %p32 = scmp.eq.s32.totalorder %s31, 0
    %s34 = sadd.s32 %s33, 1
    %s35 = scalar_select %p32, %s33, %s34
    %p38 = pneg %p32
    %p39 = scmp.eq.s32.totalorder %s9, 7
    %p40 = por %p38, %p39
    %p41 = scmp.ne.s32.totalorder %s33, %s36
    %p42 = scmp.eq.s32.totalorder %s9, 0
    %p43 = por %p41, %p42
    %p44 = scmp.ne.s32.totalorder %s33, %s36
    %p45 = scmp.eq.s32.totalorder %s14, 7
    %p46 = por %p44, %p45
    %p47 = scmp.ne.s32.totalorder %s36, %s37
    %p48 = scmp.eq.s32.totalorder %s14, 0
    %p49 = por %p47, %p48
    %p50 = scmp.ne.s32.totalorder %s36, %s37
    %p51 = scmp.eq.s32.totalorder %s15, 7
    %p52 = por %p50, %p51
    %p54 = scmp.ne.s32.totalorder %s37, %s53
    %p55 = scmp.eq.s32.totalorder %s15, 0
    %p56 = por %p54, %p55
    %s58 = sadd.s32 %s57, 1
    %p61 = scmp.eq.s32.totalorder %s9, 7
    %p62 = scmp.ne.s32.totalorder %s57, %s59
    %p63 = scmp.eq.s32.totalorder %s9, 0
    %p64 = por %p62, %p63
    %p65 = scmp.ne.s32.totalorder %s57, %s59
    %p66 = scmp.eq.s32.totalorder %s14, 7
    %p67 = por %p65, %p66
    %p68 = scmp.ne.s32.totalorder %s59, %s60
    %p69 = scmp.eq.s32.totalorder %s14, 0
    %p70 = por %p68, %p69
    %p71 = scmp.ne.s32.totalorder %s59, %s60
    %p72 = scmp.eq.s32.totalorder %s15, 7
    %p73 = por %p71, %p72
    %p75 = scmp.ne.s32.totalorder %s60, %s74
    %p76 = scmp.eq.s32.totalorder %s15, 0
    %p77 = por %p75, %p76
    %s79 = sadd.s32 %s78, 1
    %p82 = scmp.eq.s32.totalorder %s9, 7
    %p83 = scmp.ne.s32.totalorder %s78, %s80
    %p84 = scmp.eq.s32.totalorder %s9, 0
    %p85 = por %p83, %p84
    %p86 = scmp.ne.s32.totalorder %s78, %s80
    %p87 = scmp.eq.s32.totalorder %s14, 7
    %p88 = por %p86, %p87
    %p89 = scmp.ne.s32.totalorder %s80, %s81
    %p90 = scmp.eq.s32.totalorder %s14, 0
    %p91 = por %p89, %p90
    %p92 = scmp.ne.s32.totalorder %s80, %s81
    %p93 = scmp.eq.s32.totalorder %s15, 7
    %p94 = por %p92, %p93
    %p96 = scmp.ne.s32.totalorder %s81, %s95
    %p97 = scmp.eq.s32.totalorder %s15, 0
    %p98 = por %p96, %p97
    %s99 = ssub.s32 %s16, %s28
    %s100 = ssub.s32 %s17, %s24
    %s101 = sor.u32 %s99, %s100
    %p102 = scmp.eq.s32.totalorder %s101, 0
    %s104 = sadd.s32 %s103, 1
    %s105 = scalar_select %p102, %s103, %s104
    %p108 = pneg %p102
    %p109 = scmp.eq.s32.totalorder %s9, 7
    %p110 = por %p108, %p109
    %p111 = scmp.ne.s32.totalorder %s103, %s106
    %p112 = scmp.eq.s32.totalorder %s9, 0
    %p113 = por %p111, %p112
    %p114 = scmp.ne.s32.totalorder %s103, %s106
    %p115 = scmp.eq.s32.totalorder %s14, 7
    %p116 = por %p114, %p115
    %p117 = scmp.ne.s32.totalorder %s106, %s107
    %p118 = scmp.eq.s32.totalorder %s14, 0
    %p119 = por %p117, %p118
    %p120 = scmp.ne.s32.totalorder %s106, %s107
    %p121 = scmp.eq.s32.totalorder %s15, 7
    %p122 = por %p120, %p121
    %p124 = scmp.ne.s32.totalorder %s107, %s123
    %p125 = scmp.eq.s32.totalorder %s15, 0
    %p126 = por %p124, %p125
    %p127 = scmp.le.s32.totalorder 1, %s9
    %p128 = scmp.lt.s32.totalorder %s9, 9
    %p129 = pnand %p127, %p128
    %p130 = pneg %p129
    // Predicated region
    $region9: #{basic_block_forward.5} parent=5 // pred_check
      _
    $region10: #{basic_block_forward.5} parent=5 // pred_check_branch
      %132 = sbr.rel (%p129) target = $region12
    $region11: #{basic_block_forward.5} parent=5 // pred_region
      %s133 = ssub.s32 %s9, 1
      // Predicated region
      $region13: #{basic_block_forward.5} parent=11 // pred_check
        %p134 = pneg %p70
      $region14: #{basic_block_forward.5} parent=11 // pred_check_branch
        %136 = sbr.rel (%p134) target = $region16
      $region15: #{basic_block_forward.5} parent=11 // pred_region
        _
      $region16: #{basic_block_forward.5} parent=11 // pred_fallthru
        _
      // Predicated region
      $region17: #{basic_block_forward.5} parent=11 // pred_check
        %p137 = pneg %p91
      $region18: #{basic_block_forward.5} parent=11 // pred_check_branch
        %139 = sbr.rel (%p137) target = $region20
      $region19: #{basic_block_forward.5} parent=11 // pred_region
        _
      $region20: #{basic_block_forward.5} parent=11 // pred_fallthru
        _
    $region12: #{basic_block_forward.5} parent=5 // pred_fallthru
      _
    %p140 = scmp.lt.s32.totalorder %s9, 8
    // Predicated region
    $region21: #{basic_block_forward.5} parent=5 // pred_check
      %p141 = pneg %p140
    $region22: #{basic_block_forward.5} parent=5 // pred_check_branch
      %143 = sbr.rel (%p141) target = $region24
    $region23: #{basic_block_forward.5} parent=5 // pred_region
      // Predicated region
      $region25: #{basic_block_forward.5} parent=23 // pred_check
        %p144 = pneg %p43
      $region26: #{basic_block_forward.5} parent=23 // pred_check_branch
        %146 = sbr.rel (%p144) target = $region28
      $region27: #{basic_block_forward.5} parent=23 // pred_region
        %p147 = scmp.lt.s32.totalorder %s16, 1
        %s148 = scalar_select %p147, %s16, 1
        %p149 = scmp.lt.s32.totalorder %s17, 3
        %s150 = scalar_select %p149, %s17, 3
        %s151 = smul.addr %s150, 36
        %s152 = smul.addr %s148, 144
        %s153 = sadd.s32 %s151, %s152
        %s154 = smul.addr %s153, 8
        %s155 = scalar_lea.vmem %s0, %s154
      $region28: #{basic_block_forward.5} parent=23 // pred_fallthru
        _
    $region24: #{basic_block_forward.5} parent=5 // pred_fallthru
      _
    %p156 = scmp.le.s32.totalorder 1, %s9
    %p157 = scmp.lt.s32.totalorder %s9, 9
    %p158 = pnand %p156, %p157
    %p159 = pneg %p158
    // Predicated region
    $region29: #{basic_block_forward.5} parent=5 // pred_check
      _
    $region30: #{basic_block_forward.5} parent=5 // pred_check_branch
      %161 = sbr.rel (%p158) target = $region32
    $region31: #{basic_block_forward.5} parent=5 // pred_region
      %s162 = ssub.s32 %s9, 1
      %p163 = scmp.lt.s32.totalorder %s18, 1
      %s164 = scalar_select %p163, %s18, 1
      %p165 = scmp.lt.s32.totalorder %s19, 3
      %s166 = scalar_select %p165, %s19, 3
      %s167 = smul.addr %s166, 36
      %s168 = smul.addr %s164, 144
      %s169 = sadd.s32 %s167, %s168
      %s170 = smul.addr %s169, 8
      %s171 = scalar_lea.vmem %s0, %s170
      %p172 = pneg %p49
      %p173 = pneg %p46
      %p174 = pneg %p70
      %p175 = pneg %p67
      %p176 = pneg %p91
      %p177 = pneg %p88
      %p178 = pneg %p119
      %p179 = pneg %p116
      %p180 = scmp.lt.s32.totalorder %s18, 1
      %s181 = scalar_select %p180, %s18, 1
      %p182 = scmp.lt.s32.totalorder %s19, 3
      %s183 = scalar_select %p182, %s19, 3
      %s184 = smul.addr %s183, 36
      %s185 = smul.addr %s181, 144
      %s186 = sadd.s32 %s184, %s185
      %s187 = smul.addr %s186, 8
      %s188 = scalar_lea.vmem %s3, %s187
      %p189 = scmp.lt.s32.totalorder %s18, 1
      %s190 = scalar_select %p189, %s18, 1
      %p191 = scmp.lt.s32.totalorder %s19, 3
      %s192 = scalar_select %p191, %s19, 3
      %s193 = smul.addr %s192, 36
      %s194 = smul.addr %s190, 144
      %s195 = sadd.s32 %s193, %s194
      %s196 = smul.addr %s195, 8
      %s197 = scalar_lea.vmem %s0, %s196
      %p198 = scmp.lt.s32.totalorder %s18, 1
      %s199 = scalar_select %p198, %s18, 1
      %p200 = scmp.lt.s32.totalorder %s19, 3
      %s201 = scalar_select %p200, %s19, 3
      %s202 = smul.addr %s201, 36
      %s203 = smul.addr %s199, 144
      %s204 = sadd.s32 %s202, %s203
      %s205 = smul.addr %s204, 8
      %s206 = scalar_lea.vmem %s3, %s205
      %v207 = vld [vmem:[%s197] sm:$0xff]
      %v208 = vld [vmem:[%s197 + $0x8] sm:$0xff]
      %v209 = vld [vmem:[%s197 + $0x10] sm:$0xff]
      %v210 = vld [vmem:[%s197 + $0x18] sm:$0xff]
      %v211 = vld [vmem:[%s197 + $0x20] sm:$0xff]
      %v212 = vld [vmem:[%s197 + $0x28] sm:$0xff]
      %v213 = vld [vmem:[%s197 + $0x30] sm:$0xff]
      %v214 = vld [vmem:[%s197 + $0x38] sm:$0xff]
      %v215 = vld [vmem:[%s197 + $0x40] sm:$0xff]
      %v216 = vld [vmem:[%s197 + $0x48] sm:$0xff]
      %v217 = vld [vmem:[%s197 + $0x50] sm:$0xff]
      %v218 = vld [vmem:[%s197 + $0x58] sm:$0xff]
      %v219 = vld [vmem:[%s197 + $0x60] sm:$0xff]
      %v220 = vld [vmem:[%s197 + $0x68] sm:$0xff]
      %v221 = vld [vmem:[%s197 + $0x70] sm:$0xff]
      %v222 = vld [vmem:[%s197 + $0x78] sm:$0xff]
      %v223 = vld [vmem:[%s197 + $0x80] sm:$0xff]
      %v224 = vld [vmem:[%s197 + $0x88] sm:$0xff]
      %v225 = vld [vmem:[%s197 + $0x90] sm:$0xff]
      %v226 = vld [vmem:[%s197 + $0x98] sm:$0xff]
      %v227 = vld [vmem:[%s197 + $0xa0] sm:$0xff]
      %v228 = vld [vmem:[%s197 + $0xa8] sm:$0xff]
      %v229 = vld [vmem:[%s197 + $0xb0] sm:$0xff]
      %v230 = vld [vmem:[%s197 + $0xb8] sm:$0xff]
      %v231 = vld [vmem:[%s197 + $0xc0] sm:$0xff]
      %v232 = vld [vmem:[%s197 + $0xc8] sm:$0xff]
      %v233 = vld [vmem:[%s197 + $0xd0] sm:$0xff]
      %v234 = vld [vmem:[%s197 + $0xd8] sm:$0xff]
      %v235 = vld [vmem:[%s197 + $0xe0] sm:$0xff]
      %v236 = vld [vmem:[%s197 + $0xe8] sm:$0xff]
      %v237 = vld [vmem:[%s197 + $0xf0] sm:$0xff]
      %v238 = vld [vmem:[%s197 + $0xf8] sm:$0xff]
      %v239 = vld [vmem:[%s197 + $0x100] sm:$0xff]
      %v240 = vld [vmem:[%s197 + $0x108] sm:$0xff]
      %v241 = vld [vmem:[%s197 + $0x110] sm:$0xff]
      %v242 = vld [vmem:[%s197 + $0x118] sm:$0x3f]
      %v243 = vld [vmem:[%s1] sm:$0x1]
      %v245 = vperm.slane %v243, 0
      %v247 = vmul.f32 %v207, %v245
      %v248 = vmul.f32 %v208, %v245
      %v249 = vmul.f32 %v209, %v245
      %v250 = vmul.f32 %v210, %v245
      %v251 = vmul.f32 %v211, %v245
      %v252 = vmul.f32 %v212, %v245
      %v253 = vmul.f32 %v213, %v245
      %v254 = vmul.f32 %v214, %v245
      %v255 = vmul.f32 %v215, %v245
      %v256 = vmul.f32 %v216, %v245
      %v257 = vmul.f32 %v217, %v245
      %v258 = vmul.f32 %v218, %v245
      %v259 = vmul.f32 %v219, %v245
      %v260 = vmul.f32 %v220, %v245
      %v261 = vmul.f32 %v221, %v245
      %v262 = vmul.f32 %v222, %v245
      %v263 = vmul.f32 %v223, %v245
      %v264 = vmul.f32 %v224, %v245
      %v265 = vmul.f32 %v225, %v245
      %v266 = vmul.f32 %v226, %v245
      %v267 = vmul.f32 %v227, %v245
      %v268 = vmul.f32 %v228, %v245
      %v269 = vmul.f32 %v229, %v245
      %v270 = vmul.f32 %v230, %v245
      %v271 = vmul.f32 %v231, %v245
      %v272 = vmul.f32 %v232, %v245
      %v273 = vmul.f32 %v233, %v245
      %v274 = vmul.f32 %v234, %v245
      %v275 = vmul.f32 %v235, %v245
      %v276 = vmul.f32 %v236, %v245
      %v277 = vmul.f32 %v237, %v245
      %v278 = vmul.f32 %v238, %v245
      %v279 = vmul.f32 %v239, %v245
      %v280 = vmul.f32 %v240, %v245
      %v281 = vmul.f32 %v241, %v245
      %v282 = vmul.f32 %v242, %v245
      %v283 = vld [vmem:[%s2] sm:$0x1]
      %v285 = vperm.slane %v283, 0
      %v287 = vadd.f32 %v247, %v285
      %v288 = vadd.f32 %v248, %v285
      %v289 = vadd.f32 %v249, %v285
      %v290 = vadd.f32 %v250, %v285
      %v291 = vadd.f32 %v251, %v285
      %v292 = vadd.f32 %v252, %v285
      %v293 = vadd.f32 %v253, %v285
      %v294 = vadd.f32 %v254, %v285
      %v295 = vadd.f32 %v255, %v285
      %v296 = vadd.f32 %v256, %v285
      %v297 = vadd.f32 %v257, %v285
      %v298 = vadd.f32 %v258, %v285
      %v299 = vadd.f32 %v259, %v285
      %v300 = vadd.f32 %v260, %v285
      %v301 = vadd.f32 %v261, %v285
      %v302 = vadd.f32 %v262, %v285
      %v303 = vadd.f32 %v263, %v285
      %v304 = vadd.f32 %v264, %v285
      %v305 = vadd.f32 %v265, %v285
      %v306 = vadd.f32 %v266, %v285
      %v307 = vadd.f32 %v267, %v285
      %v308 = vadd.f32 %v268, %v285
      %v309 = vadd.f32 %v269, %v285
      %v310 = vadd.f32 %v270, %v285
      %v311 = vadd.f32 %v271, %v285
      %v312 = vadd.f32 %v272, %v285
      %v313 = vadd.f32 %v273, %v285
      %v314 = vadd.f32 %v274, %v285
      %v315 = vadd.f32 %v275, %v285
      %v316 = vadd.f32 %v276, %v285
      %v317 = vadd.f32 %v277, %v285
      %v318 = vadd.f32 %v278, %v285
      %v319 = vadd.f32 %v279, %v285
      %v320 = vadd.f32 %v280, %v285
      %v321 = vadd.f32 %v281, %v285
      %v322 = vadd.f32 %v282, %v285
      %v323 = vmax.f32 %v287, 0.0
      %v324 = vmax.f32 %v288, 0.0
      %v325 = vmax.f32 %v289, 0.0
      %v326 = vmax.f32 %v290, 0.0
      %v327 = vmax.f32 %v291, 0.0
      %v328 = vmax.f32 %v292, 0.0
      %v329 = vmax.f32 %v293, 0.0
      %v330 = vmax.f32 %v294, 0.0
      %v331 = vmax.f32 %v295, 0.0
      %v332 = vmax.f32 %v296, 0.0
      %v333 = vmax.f32 %v297, 0.0
      %v334 = vmax.f32 %v298, 0.0
      %v335 = vmax.f32 %v299, 0.0
      %v336 = vmax.f32 %v300, 0.0
      %v337 = vmax.f32 %v301, 0.0
      %v338 = vmax.f32 %v302, 0.0
      %v339 = vmax.f32 %v303, 0.0
      %v340 = vmax.f32 %v304, 0.0
      %v341 = vmax.f32 %v305, 0.0
      %v342 = vmax.f32 %v306, 0.0
      %v343 = vmax.f32 %v307, 0.0
      %v344 = vmax.f32 %v308, 0.0
      %v345 = vmax.f32 %v309, 0.0
      %v346 = vmax.f32 %v310, 0.0
      %v347 = vmax.f32 %v311, 0.0
      %v348 = vmax.f32 %v312, 0.0
      %v349 = vmax.f32 %v313, 0.0
      %v350 = vmax.f32 %v314, 0.0
      %v351 = vmax.f32 %v315, 0.0
      %v352 = vmax.f32 %v316, 0.0
      %v353 = vmax.f32 %v317, 0.0
      %v354 = vmax.f32 %v318, 0.0
      %v355 = vmax.f32 %v319, 0.0
      %v356 = vmax.f32 %v320, 0.0
      %v357 = vmax.f32 %v321, 0.0
      %v358 = vmax.f32 %v322, 0.0
      %vm359 = vcmask 261120
      %360 = vst.msk [vmem:[%s206] sm:$0xff] %vm359, %v323
      %361 = vst.msk [vmem:[%s206 + $0x8] sm:$0xff] %vm359, %v324
      %362 = vst.msk [vmem:[%s206 + $0x10] sm:$0xff] %vm359, %v325
      %363 = vst.msk [vmem:[%s206 + $0x18] sm:$0xff] %vm359, %v326
      %364 = vst.msk [vmem:[%s206 + $0x20] sm:$0xff] %vm359, %v327
      %365 = vst.msk [vmem:[%s206 + $0x28] sm:$0xff] %vm359, %v328
      %366 = vst.msk [vmem:[%s206 + $0x30] sm:$0xff] %vm359, %v329
      %367 = vst.msk [vmem:[%s206 + $0x38] sm:$0xff] %vm359, %v330
      %368 = vst.msk [vmem:[%s206 + $0x40] sm:$0xff] %vm359, %v331
      %369 = vst.msk [vmem:[%s206 + $0x48] sm:$0xff] %vm359, %v332
      %370 = vst.msk [vmem:[%s206 + $0x50] sm:$0xff] %vm359, %v333
      %371 = vst.msk [vmem:[%s206 + $0x58] sm:$0xff] %vm359, %v334
      %372 = vst.msk [vmem:[%s206 + $0x60] sm:$0xff] %vm359, %v335
      %373 = vst.msk [vmem:[%s206 + $0x68] sm:$0xff] %vm359, %v336
      %374 = vst.msk [vmem:[%s206 + $0x70] sm:$0xff] %vm359, %v337
      %375 = vst.msk [vmem:[%s206 + $0x78] sm:$0xff] %vm359, %v338
      %376 = vst.msk [vmem:[%s206 + $0x80] sm:$0xff] %vm359, %v339
      %377 = vst.msk [vmem:[%s206 + $0x88] sm:$0xff] %vm359, %v340
      %378 = vst.msk [vmem:[%s206 + $0x90] sm:$0xff] %vm359, %v341
      %379 = vst.msk [vmem:[%s206 + $0x98] sm:$0xff] %vm359, %v342
      %380 = vst.msk [vmem:[%s206 + $0xa0] sm:$0xff] %vm359, %v343
      %381 = vst.msk [vmem:[%s206 + $0xa8] sm:$0xff] %vm359, %v344
      %382 = vst.msk [vmem:[%s206 + $0xb0] sm:$0xff] %vm359, %v345
      %383 = vst.msk [vmem:[%s206 + $0xb8] sm:$0xff] %vm359, %v346
      %384 = vst.msk [vmem:[%s206 + $0xc0] sm:$0xff] %vm359, %v347
      %385 = vst.msk [vmem:[%s206 + $0xc8] sm:$0xff] %vm359, %v348
      %386 = vst.msk [vmem:[%s206 + $0xd0] sm:$0xff] %vm359, %v349
      %387 = vst.msk [vmem:[%s206 + $0xd8] sm:$0xff] %vm359, %v350
      %388 = vst.msk [vmem:[%s206 + $0xe0] sm:$0xff] %vm359, %v351
      %389 = vst.msk [vmem:[%s206 + $0xe8] sm:$0xff] %vm359, %v352
      %390 = vst.msk [vmem:[%s206 + $0xf0] sm:$0xff] %vm359, %v353
      %391 = vst.msk [vmem:[%s206 + $0xf8] sm:$0xff] %vm359, %v354
      %392 = vst.msk [vmem:[%s206 + $0x100] sm:$0xff] %vm359, %v355
      %393 = vst.msk [vmem:[%s206 + $0x108] sm:$0xff] %vm359, %v356
      %394 = vst.msk [vmem:[%s206 + $0x110] sm:$0xff] %vm359, %v357
      %vm395 = vcmask 259072
      %396 = vst.msk [vmem:[%s206 + $0x118] sm:$0x3f] %vm395, %v358
      %p397 = scmp.lt.s32.totalorder %s18, 1
      %s398 = scalar_select %p397, %s18, 1
      %p399 = scmp.lt.s32.totalorder %s19, 3
      %s400 = scalar_select %p399, %s19, 3
      %s401 = smul.addr %s400, 36
      %s402 = smul.addr %s398, 144
      %s403 = sadd.s32 %s401, %s402
      %s404 = smul.addr %s403, 8
      %s405 = scalar_lea.vmem %s3, %s404
      // Predicated region
      $region33: #{basic_block_forward.5} parent=31 // pred_check
        %p406 = pneg %p116
      $region34: #{basic_block_forward.5} parent=31 // pred_check_branch
        %408 = sbr.rel (%p406) target = $region36
      $region35: #{basic_block_forward.5} parent=31 // pred_region
        _
      $region36: #{basic_block_forward.5} parent=31 // pred_fallthru
        _
    $region32: #{basic_block_forward.5} parent=5 // pred_fallthru
      _
    %p409 = scmp.le.s32.totalorder 2, %s9
    // Predicated region
    $region37: #{basic_block_forward.5} parent=5 // pred_check
      %p410 = pneg %p409
    $region38: #{basic_block_forward.5} parent=5 // pred_check_branch
      %412 = sbr.rel (%p410) target = $region40
    $region39: #{basic_block_forward.5} parent=5 // pred_region
      %s413 = ssub.s32 %s9, 2
      // Predicated region
      $region41: #{basic_block_forward.5} parent=39 // pred_check
        %p414 = pneg %p122
      $region42: #{basic_block_forward.5} parent=39 // pred_check_branch
        %416 = sbr.rel (%p414) target = $region44
      $region43: #{basic_block_forward.5} parent=39 // pred_region
        %p417 = scmp.lt.s32.totalorder %s20, 1
        %s418 = scalar_select %p417, %s20, 1
        %p419 = scmp.lt.s32.totalorder %s21, 3
        %s420 = scalar_select %p419, %s21, 3
        %s421 = smul.addr %s420, 36
        %s422 = smul.addr %s418, 144
        %s423 = sadd.s32 %s421, %s422
        %s424 = smul.addr %s423, 8
        %s425 = scalar_lea.vmem %s3, %s424
      $region44: #{basic_block_forward.5} parent=39 // pred_fallthru
        _
    $region40: #{basic_block_forward.5} parent=5 // pred_fallthru
      _
  $region6: #{basic_block_forward.5} parent=0 // loop_footer
    %s13 = sadd.s32 1, %s9
  $region7: #{basic_block_forward.5} parent=0 // loop_footer_branch
    %8 = sbr.rel target = $region3
  $region8: #{basic_block_forward.5} parent=0 // loop_exit
    _

// kernel: basic_block_forward.4
$region0: #{basic_block_forward.4}
  #allocation0 [shape = 'u32[]', space=smem, size = 0x4, offset = 0x4, fixed_abs, tag = 'smem constant byte address 0x4 - core index']
  #allocation1 [shape = 'u32[72,128]{1,0:T(1,128)}', space=vmem, size = 0x9000, scoped, tag = 'internal scratch']
  %s0 = inlined_call_operand.vmem [shape: f32[2,6,324,32], index: 0, kind: input, shape index: {}, may-alias: {0,1,2}]
  %s1 = inlined_call_operand.vmem [shape: f32[2,6,324,32], index: 1, kind: input, shape index: {}, may-alias: {0,1,2}]
  %s2 = inlined_call_operand.vmem [shape: f32[2,6,324,32], index: 2, kind: input, shape index: {}, may-alias: {0,1,2}]
  %s3 = inlined_call_operand.vmem [shape: bf16[27,32,32], index: 3, kind: input, shape index: {}]
  %s4 = inlined_call_operand.vmem [shape: f32[286,1], index: 4, kind: input, shape index: {}]
  %s5 = inlined_call_operand.vmem [shape: f32[2,4,286,32], index: 5, kind: output, shape index: {0}]
  %s6 = inlined_call_operand.vmem [shape: f32[2,4,1,32], index: 6, kind: output, shape index: {1}]
  %s7 = inlined_call_operand.vmem [shape: f32[2,4,1,32], index: 7, kind: output, shape index: {2}]
  %8 = xla_tuple %s5, %s6, %s7
  %s9 = sld [smem:[#allocation0]]
  $region69: #{basic_block_forward.4} parent=0
    _
  %s11 = ssub.s32 1, %s9
  %s12 = scalar_select 0, %s11, %s9
  loop: start=0, step=1, limit=10
  $region2: #{basic_block_forward.4} parent=0 // loop_pre_header
    _
  $region3: #{basic_block_forward.4} parent=0 // loop_header
    %s14 = sphi 0, %s18
    %p15 = scmp.ge.s32.totalorder %s14, 10
    %s21 = sphi 0, %s33
    %s22 = sphi 0, %s29
    %s23 = sphi 0, %s21
    %s24 = sphi 0, %s22
    %s25 = sphi 0, %s23
    %s26 = sphi 0, %s24
    %s38 = sphi 0, %s40
    %s41 = sphi 0, %s38
    %s42 = sphi 0, %s41
    %s58 = sphi 0, %s42
    %s68 = sphi 0, %s70
    %s71 = sphi 0, %s68
    %s72 = sphi 0, %s71
    %s88 = sphi 0, %s72
    %s98 = sphi 0, %s100
    %s101 = sphi 0, %s98
    %s102 = sphi 0, %s101
    %s118 = sphi 0, %s102
    %s122 = sphi 0, %s122
    %s124 = sphi 0, %s122
    %s125 = sphi 0, %s124
    %s139 = sphi 0, %s125
    %s143 = sphi 0, %s143
    %s145 = sphi 0, %s143
    %s146 = sphi 0, %s145
    %s160 = sphi 0, %s146
    %s168 = sphi 0, %s170
    %s171 = sphi 0, %s168
    %s172 = sphi 0, %s171
    %s188 = sphi 0, %s172
    %s196 = sphi 0, %s198
    %s199 = sphi 0, %s196
    %s200 = sphi 0, %s199
    %s216 = sphi 0, %s200
    %s224 = sphi 0, %s226
    %s227 = sphi 0, %s224
    %s228 = sphi 0, %s227
    %s244 = sphi 0, %s228
  $region4: #{basic_block_forward.4} parent=0 // loop_header_branch
    %17 = sbr.rel (%p15) target = $region8
  $region5: #{basic_block_forward.4} parent=0 // loop_body
    %s19 = ssub.s32 %s14, 1
    %s20 = ssub.s32 %s14, 2
    %s27 = sadd.s32 1, %s22
    %p28 = scmp.ge.s32.totalorder %s27, 4
    %s29 = scalar_select %p28, 0, %s27
    %s30 = sadd.s32 1, %s21
    %s31 = scalar_select %p28, %s30, %s21
    %p32 = scmp.ge.s32.totalorder %s31, 2
    %s33 = scalar_select %p32, 0, %s31
    %s34 = ssub.s32 %s21, %s33
    %s35 = ssub.s32 %s22, %s29
    %s36 = sor.u32 %s34, %s35
    %p37 = scmp.eq.s32.totalorder %s36, 0
    %s39 = sadd.s32 %s38, 1
    %s40 = scalar_select %p37, %s38, %s39
    %p43 = pneg %p37
    %p44 = scmp.eq.s32.totalorder %s14, 7
    %p45 = por %p43, %p44
    %p46 = scmp.ne.s32.totalorder %s38, %s41
    %p47 = scmp.eq.s32.totalorder %s14, 0
    %p48 = por %p46, %p47
    %p49 = scmp.ne.s32.totalorder %s38, %s41
    %p50 = scmp.eq.s32.totalorder %s19, 7
    %p51 = por %p49, %p50
    %p52 = scmp.ne.s32.totalorder %s41, %s42
    %p53 = scmp.eq.s32.totalorder %s19, 0
    %p54 = por %p52, %p53
    %p55 = scmp.ne.s32.totalorder %s41, %s42
    %p56 = scmp.eq.s32.totalorder %s20, 7
    %p57 = por %p55, %p56
    %p59 = scmp.ne.s32.totalorder %s42, %s58
    %p60 = scmp.eq.s32.totalorder %s20, 0
    %p61 = por %p59, %p60
    %s62 = sadd.s32 %s22, 1
    %s63 = sadd.s32 %s29, 1
    %s64 = ssub.s32 %s21, %s33
    %s65 = ssub.s32 %s62, %s63
    %s66 = sor.u32 %s64, %s65
    %p67 = scmp.eq.s32.totalorder %s66, 0
    %s69 = sadd.s32 %s68, 1
    %s70 = scalar_select %p67, %s68, %s69
    %p73 = pneg %p67
    %p74 = scmp.eq.s32.totalorder %s14, 7
    %p75 = por %p73, %p74
    %p76 = scmp.ne.s32.totalorder %s68, %s71
    %p77 = scmp.eq.s32.totalorder %s14, 0
    %p78 = por %p76, %p77
    %p79 = scmp.ne.s32.totalorder %s68, %s71
    %p80 = scmp.eq.s32.totalorder %s19, 7
    %p81 = por %p79, %p80
    %p82 = scmp.ne.s32.totalorder %s71, %s72
    %p83 = scmp.eq.s32.totalorder %s19, 0
    %p84 = por %p82, %p83
    %p85 = scmp.ne.s32.totalorder %s71, %s72
    %p86 = scmp.eq.s32.totalorder %s20, 7
    %p87 = por %p85, %p86
    %p89 = scmp.ne.s32.totalorder %s72, %s88
    %p90 = scmp.eq.s32.totalorder %s20, 0
    %p91 = por %p89, %p90
    %s92 = sadd.s32 %s22, 2
    %s93 = sadd.s32 %s29, 2
    %s94 = ssub.s32 %s21, %s33
    %s95 = ssub.s32 %s92, %s93
    %s96 = sor.u32 %s94, %s95
    %p97 = scmp.eq.s32.totalorder %s96, 0
    %s99 = sadd.s32 %s98, 1
    %s100 = scalar_select %p97, %s98, %s99
    %p103 = pneg %p97
    %p104 = scmp.eq.s32.totalorder %s14, 7
    %p105 = por %p103, %p104
    %p106 = scmp.ne.s32.totalorder %s98, %s101
    %p107 = scmp.eq.s32.totalorder %s14, 0
    %p108 = por %p106, %p107
    %p109 = scmp.ne.s32.totalorder %s98, %s101
    %p110 = scmp.eq.s32.totalorder %s19, 7
    %p111 = por %p109, %p110
    %p112 = scmp.ne.s32.totalorder %s101, %s102
    %p113 = scmp.eq.s32.totalorder %s19, 0
    %p114 = por %p112, %p113
    %p115 = scmp.ne.s32.totalorder %s101, %s102
    %p116 = scmp.eq.s32.totalorder %s20, 7
    %p117 = por %p115, %p116
    %p119 = scmp.ne.s32.totalorder %s102, %s118
    %p120 = scmp.eq.s32.totalorder %s20, 0
    %p121 = por %p119, %p120
    %s123 = sadd.s32 %s122, 1
    %p126 = scmp.eq.s32.totalorder %s14, 7
    %p127 = scmp.ne.s32.totalorder %s122, %s124
    %p128 = scmp.eq.s32.totalorder %s14, 0
    %p129 = por %p127, %p128
    %p130 = scmp.ne.s32.totalorder %s122, %s124
    %p131 = scmp.eq.s32.totalorder %s19, 7
    %p132 = por %p130, %p131
    %p133 = scmp.ne.s32.totalorder %s124, %s125
    %p134 = scmp.eq.s32.totalorder %s19, 0
    %p135 = por %p133, %p134
    %p136 = scmp.ne.s32.totalorder %s124, %s125
    %p137 = scmp.eq.s32.totalorder %s20, 7
    %p138 = por %p136, %p137
    %p140 = scmp.ne.s32.totalorder %s125, %s139
    %p141 = scmp.eq.s32.totalorder %s20, 0
    %p142 = por %p140, %p141
    %s144 = sadd.s32 %s143, 1
    %p147 = scmp.eq.s32.totalorder %s14, 7
    %p148 = scmp.ne.s32.totalorder %s143, %s145
    %p149 = scmp.eq.s32.totalorder %s14, 0
    %p150 = por %p148, %p149
    %p151 = scmp.ne.s32.totalorder %s143, %s145
    %p152 = scmp.eq.s32.totalorder %s19, 7
    %p153 = por %p151, %p152
    %p154 = scmp.ne.s32.totalorder %s145, %s146
    %p155 = scmp.eq.s32.totalorder %s19, 0
    %p156 = por %p154, %p155
    %p157 = scmp.ne.s32.totalorder %s145, %s146
    %p158 = scmp.eq.s32.totalorder %s20, 7
    %p159 = por %p157, %p158
    %p161 = scmp.ne.s32.totalorder %s146, %s160
    %p162 = scmp.eq.s32.totalorder %s20, 0
    %p163 = por %p161, %p162
    %s164 = ssub.s32 %s21, %s33
    %s165 = ssub.s32 %s22, %s29
    %s166 = sor.u32 %s164, %s165
    %p167 = scmp.eq.s32.totalorder %s166, 0
    %s169 = sadd.s32 %s168, 1
    %s170 = scalar_select %p167, %s168, %s169
    %p173 = pneg %p167
    %p174 = scmp.eq.s32.totalorder %s14, 7
    %p175 = por %p173, %p174
    %p176 = scmp.ne.s32.totalorder %s168, %s171
    %p177 = scmp.eq.s32.totalorder %s14, 0
    %p178 = por %p176, %p177
    %p179 = scmp.ne.s32.totalorder %s168, %s171
    %p180 = scmp.eq.s32.totalorder %s19, 7
    %p181 = por %p179, %p180
    %p182 = scmp.ne.s32.totalorder %s171, %s172
    %p183 = scmp.eq.s32.totalorder %s19, 0
    %p184 = por %p182, %p183
    %p185 = scmp.ne.s32.totalorder %s171, %s172
    %p186 = scmp.eq.s32.totalorder %s20, 7
    %p187 = por %p185, %p186
    %p189 = scmp.ne.s32.totalorder %s172, %s188
    %p190 = scmp.eq.s32.totalorder %s20, 0
    %p191 = por %p189, %p190
    %s192 = ssub.s32 %s21, %s33
    %s193 = ssub.s32 %s22, %s29
    %s194 = sor.u32 %s192, %s193
    %p195 = scmp.eq.s32.totalorder %s194, 0
    %s197 = sadd.s32 %s196, 1
    %s198 = scalar_select %p195, %s196, %s197
    %p201 = pneg %p195
    %p202 = scmp.eq.s32.totalorder %s14, 7
    %p203 = por %p201, %p202
    %p204 = scmp.ne.s32.totalorder %s196, %s199
    %p205 = scmp.eq.s32.totalorder %s14, 0
    %p206 = por %p204, %p205
    %p207 = scmp.ne.s32.totalorder %s196, %s199
    %p208 = scmp.eq.s32.totalorder %s19, 7
    %p209 = por %p207, %p208
    %p210 = scmp.ne.s32.totalorder %s199, %s200
    %p211 = scmp.eq.s32.totalorder %s19, 0
    %p212 = por %p210, %p211
    %p213 = scmp.ne.s32.totalorder %s199, %s200
    %p214 = scmp.eq.s32.totalorder %s20, 7
    %p215 = por %p213, %p214
    %p217 = scmp.ne.s32.totalorder %s200, %s216
    %p218 = scmp.eq.s32.totalorder %s20, 0
    %p219 = por %p217, %p218
    %s220 = ssub.s32 %s21, %s33
    %s221 = ssub.s32 %s22, %s29
    %s222 = sor.u32 %s220, %s221
    %p223 = scmp.eq.s32.totalorder %s222, 0
    %s225 = sadd.s32 %s224, 1
    %s226 = scalar_select %p223, %s224, %s225
    %p229 = pneg %p223
    %p230 = scmp.eq.s32.totalorder %s14, 7
    %p231 = por %p229, %p230
    %p232 = scmp.ne.s32.totalorder %s224, %s227
    %p233 = scmp.eq.s32.totalorder %s14, 0
    %p234 = por %p232, %p233
    %p235 = scmp.ne.s32.totalorder %s224, %s227
    %p236 = scmp.eq.s32.totalorder %s19, 7
    %p237 = por %p235, %p236
    %p238 = scmp.ne.s32.totalorder %s227, %s228
    %p239 = scmp.eq.s32.totalorder %s19, 0
    %p240 = por %p238, %p239
    %p241 = scmp.ne.s32.totalorder %s227, %s228
    %p242 = scmp.eq.s32.totalorder %s20, 7
    %p243 = por %p241, %p242
    %p245 = scmp.ne.s32.totalorder %s228, %s244
    %p246 = scmp.eq.s32.totalorder %s20, 0
    %p247 = por %p245, %p246
    %p248 = scmp.le.s32.totalorder 1, %s14
    %p249 = scmp.lt.s32.totalorder %s14, 9
    %p250 = pnand %p248, %p249
    %p251 = pneg %p250
    // Predicated region
    $region9: #{basic_block_forward.4} parent=5 // pred_check
      _
    $region10: #{basic_block_forward.4} parent=5 // pred_check_branch
      %253 = sbr.rel (%p250) target = $region12
    $region11: #{basic_block_forward.4} parent=5 // pred_region
      %s254 = ssub.s32 %s14, 1
      // Predicated region
      $region13: #{basic_block_forward.4} parent=11 // pred_check
        %p255 = pneg %p135
      $region14: #{basic_block_forward.4} parent=11 // pred_check_branch
        %257 = sbr.rel (%p255) target = $region16
      $region15: #{basic_block_forward.4} parent=11 // pred_region
        _
      $region16: #{basic_block_forward.4} parent=11 // pred_fallthru
        _
      // Predicated region
      $region17: #{basic_block_forward.4} parent=11 // pred_check
        %p258 = pneg %p156
      $region18: #{basic_block_forward.4} parent=11 // pred_check_branch
        %260 = sbr.rel (%p258) target = $region20
      $region19: #{basic_block_forward.4} parent=11 // pred_region
        _
      $region20: #{basic_block_forward.4} parent=11 // pred_fallthru
        _
    $region12: #{basic_block_forward.4} parent=5 // pred_fallthru
      _
    %p261 = scmp.lt.s32.totalorder %s14, 8
    // Predicated region
    $region21: #{basic_block_forward.4} parent=5 // pred_check
      %p262 = pneg %p261
    $region22: #{basic_block_forward.4} parent=5 // pred_check_branch
      %264 = sbr.rel (%p262) target = $region24
    $region23: #{basic_block_forward.4} parent=5 // pred_region
      // Predicated region
      $region25: #{basic_block_forward.4} parent=23 // pred_check
        %p265 = pneg %p48
      $region26: #{basic_block_forward.4} parent=23 // pred_check_branch
        %267 = sbr.rel (%p265) target = $region28
      $region27: #{basic_block_forward.4} parent=23 // pred_region
        %p268 = scmp.lt.s32.totalorder %s21, 1
        %s269 = scalar_select %p268, %s21, 1
        %p270 = scmp.lt.s32.totalorder %s22, 5
        %s271 = scalar_select %p270, %s22, 5
        %s272 = smul.addr %s271, 41
        %s273 = smul.addr %s269, 246
        %s274 = sadd.s32 %s272, %s273
        %s275 = smul.addr %s274, 8
        %s276 = scalar_lea.vmem %s0, %s275
      $region28: #{basic_block_forward.4} parent=23 // pred_fallthru
        _
      // Predicated region
      $region29: #{basic_block_forward.4} parent=23 // pred_check
        %p277 = pneg %p78
      $region30: #{basic_block_forward.4} parent=23 // pred_check_branch
        %279 = sbr.rel (%p277) target = $region32
      $region31: #{basic_block_forward.4} parent=23 // pred_region
        %s280 = sadd.s32 %s22, 1
        %p281 = scmp.lt.s32.totalorder %s21, 1
        %s282 = scalar_select %p281, %s21, 1
        %p283 = scmp.lt.s32.totalorder %s280, 5
        %s284 = scalar_select %p283, %s280, 5
        %s285 = smul.addr %s284, 41
        %s286 = smul.addr %s282, 246
        %s287 = sadd.s32 %s285, %s286
        %s288 = smul.addr %s287, 8
        %s289 = scalar_lea.vmem %s1, %s288
        %s290 = sadd.s32 %s22, 1
      $region32: #{basic_block_forward.4} parent=23 // pred_fallthru
        _
      // Predicated region
      $region33: #{basic_block_forward.4} parent=23 // pred_check
        %p291 = pneg %p108
      $region34: #{basic_block_forward.4} parent=23 // pred_check_branch
        %293 = sbr.rel (%p291) target = $region36
      $region35: #{basic_block_forward.4} parent=23 // pred_region
        %s294 = sadd.s32 %s22, 2
        %p295 = scmp.lt.s32.totalorder %s21, 1
        %s296 = scalar_select %p295, %s21, 1
        %p297 = scmp.lt.s32.totalorder %s294, 5
        %s298 = scalar_select %p297, %s294, 5
        %s299 = smul.addr %s298, 41
        %s300 = smul.addr %s296, 246
        %s301 = sadd.s32 %s299, %s300
        %s302 = smul.addr %s301, 8
        %s303 = scalar_lea.vmem %s2, %s302
        %s304 = sadd.s32 %s22, 2
      $region36: #{basic_block_forward.4} parent=23 // pred_fallthru
        _
    $region24: #{basic_block_forward.4} parent=5 // pred_fallthru
      _
    %p305 = scmp.le.s32.totalorder 1, %s14
    %p306 = scmp.lt.s32.totalorder %s14, 9
    %p307 = pnand %p305, %p306
    %p308 = pneg %p307
    // Predicated region
    $region37: #{basic_block_forward.4} parent=5 // pred_check
      _
    $region38: #{basic_block_forward.4} parent=5 // pred_check_branch
      %310 = sbr.rel (%p307) target = $region40
    $region39: #{basic_block_forward.4} parent=5 // pred_region
      %s311 = ssub.s32 %s14, 1
      %p312 = scmp.lt.s32.totalorder %s23, 1
      %s313 = scalar_select %p312, %s23, 1
      %p314 = scmp.lt.s32.totalorder %s24, 5
      %s315 = scalar_select %p314, %s24, 5
      %s316 = smul.addr %s315, 41
      %s317 = smul.addr %s313, 246
      %s318 = sadd.s32 %s316, %s317
      %s319 = smul.addr %s318, 8
      %s320 = scalar_lea.vmem %s0, %s319
      %p321 = pneg %p54
      %p322 = pneg %p51
      %s323 = sadd.s32 %s24, 1
      %p324 = scmp.lt.s32.totalorder %s23, 1
      %s325 = scalar_select %p324, %s23, 1
      %p326 = scmp.lt.s32.totalorder %s323, 5
      %s327 = scalar_select %p326, %s323, 5
      %s328 = smul.addr %s327, 41
      %s329 = smul.addr %s325, 246
      %s330 = sadd.s32 %s328, %s329
      %s331 = smul.addr %s330, 8
      %s332 = scalar_lea.vmem %s1, %s331
      %p333 = pneg %p84
      %p334 = pneg %p81
      %s335 = sadd.s32 %s24, 2
      %p336 = scmp.lt.s32.totalorder %s23, 1
      %s337 = scalar_select %p336, %s23, 1
      %p338 = scmp.lt.s32.totalorder %s335, 5
      %s339 = scalar_select %p338, %s335, 5
      %s340 = smul.addr %s339, 41
      %s341 = smul.addr %s337, 246
      %s342 = sadd.s32 %s340, %s341
      %s343 = smul.addr %s342, 8
      %s344 = scalar_lea.vmem %s2, %s343
      %p345 = pneg %p114
      %p346 = pneg %p111
      %p347 = pneg %p135
      %p348 = pneg %p132
      %p349 = pneg %p156
      %p350 = pneg %p153
      %p351 = pneg %p184
      %p352 = pneg %p181
      %p353 = scmp.lt.s32.totalorder %s23, 1
      %s354 = scalar_select %p353, %s23, 1
      %p355 = scmp.lt.s32.totalorder %s24, 3
      %s356 = scalar_select %p355, %s24, 3
      %s357 = smul.addr %s356, 36
      %s358 = smul.addr %s354, 144
      %s359 = sadd.s32 %s357, %s358
      %s360 = smul.addr %s359, 8
      %s361 = scalar_lea.vmem %s5, %s360
      %p362 = pneg %p212
      %p363 = pneg %p209
      %p364 = scmp.lt.s32.totalorder %s23, 1
      %s365 = scalar_select %p364, %s23, 1
      %p366 = scmp.lt.s32.totalorder %s24, 3
      %s367 = scalar_select %p366, %s24, 3
      %s368 = smul.addr %s365, 4
      %s369 = sadd.s32 %s367, %s368
      %s370 = scalar_lea.vmem %s6, %s369
      %p371 = pneg %p240
      %p372 = pneg %p237
      %p373 = scmp.lt.s32.totalorder %s23, 1
      %s374 = scalar_select %p373, %s23, 1
      %p375 = scmp.lt.s32.totalorder %s24, 3
      %s376 = scalar_select %p375, %s24, 3
      %s377 = smul.addr %s374, 4
      %s378 = sadd.s32 %s376, %s377
      %s379 = scalar_lea.vmem %s7, %s378
      %p380 = scmp.lt.s32.totalorder %s23, 1
      %s381 = scalar_select %p380, %s23, 1
      %p382 = scmp.lt.s32.totalorder %s24, 5
      %s383 = scalar_select %p382, %s24, 5
      %s384 = smul.addr %s383, 41
      %s385 = smul.addr %s381, 246
      %s386 = sadd.s32 %s384, %s385
      %s387 = smul.addr %s386, 8
      %s388 = scalar_lea.vmem %s0, %s387
      %s389 = sadd.s32 %s24, 1
      %p390 = scmp.lt.s32.totalorder %s23, 1
      %s391 = scalar_select %p390, %s23, 1
      %p392 = scmp.lt.s32.totalorder %s389, 5
      %s393 = scalar_select %p392, %s389, 5
      %s394 = smul.addr %s393, 41
      %s395 = smul.addr %s391, 246
      %s396 = sadd.s32 %s394, %s395
      %s397 = smul.addr %s396, 8
      %s398 = scalar_lea.vmem %s1, %s397
      %s399 = sadd.s32 %s24, 1
      %s400 = sadd.s32 %s24, 2
      %p401 = scmp.lt.s32.totalorder %s23, 1
      %s402 = scalar_select %p401, %s23, 1
      %p403 = scmp.lt.s32.totalorder %s400, 5
      %s404 = scalar_select %p403, %s400, 5
      %s405 = smul.addr %s404, 41
      %s406 = smul.addr %s402, 246
      %s407 = sadd.s32 %s405, %s406
      %s408 = smul.addr %s407, 8
      %s409 = scalar_lea.vmem %s2, %s408
      %s410 = sadd.s32 %s24, 2
      %p411 = scmp.lt.s32.totalorder %s23, 1
      %s412 = scalar_select %p411, %s23, 1
      %p413 = scmp.lt.s32.totalorder %s24, 3
      %s414 = scalar_select %p413, %s24, 3
      %s415 = smul.addr %s414, 36
      %s416 = smul.addr %s412, 144
      %s417 = sadd.s32 %s415, %s416
      %s418 = smul.addr %s417, 8
      %s419 = scalar_lea.vmem %s5, %s418
      %p420 = scmp.lt.s32.totalorder %s23, 1
      %s421 = scalar_select %p420, %s23, 1
      %p422 = scmp.lt.s32.totalorder %s24, 3
      %s423 = scalar_select %p422, %s24, 3
      %s424 = smul.addr %s421, 4
      %s425 = sadd.s32 %s423, %s424
      %s426 = scalar_lea.vmem %s6, %s425
      %p427 = scmp.lt.s32.totalorder %s23, 1
      %s428 = scalar_select %p427, %s23, 1
      %p429 = scmp.lt.s32.totalorder %s24, 3
      %s430 = scalar_select %p429, %s24, 3
      %s431 = smul.addr %s428, 4
      %s432 = sadd.s32 %s430, %s431
      %s433 = scalar_lea.vmem %s7, %s432
      %v435 = vld [vmem:[%s388] sm:$0xff]
      %v436 = vld [vmem:[%s388 + $0x8] sm:$0xff]
      %v437 = vld [vmem:[%s388 + $0x10] sm:$0xff]
      %v438 = vld [vmem:[%s388 + $0x18] sm:$0xff]
      %v439 = vld [vmem:[%s388 + $0x20] sm:$0xff]
      %v440 = vld [vmem:[%s388 + $0x28] sm:$0xff]
      %v441 = vld [vmem:[%s388 + $0x30] sm:$0xff]
      %v442 = vld [vmem:[%s388 + $0x38] sm:$0xff]
      %v443 = vld [vmem:[%s388 + $0x40] sm:$0xff]
      %v444 = vld [vmem:[%s388 + $0x48] sm:$0xff]
      %v445 = vld [vmem:[%s388 + $0x50] sm:$0xff]
      %v446 = vld [vmem:[%s388 + $0x58] sm:$0xff]
      %v447 = vld [vmem:[%s388 + $0x60] sm:$0xff]
      %v448 = vld [vmem:[%s388 + $0x68] sm:$0xff]
      %v449 = vld [vmem:[%s388 + $0x70] sm:$0xff]
      %v450 = vld [vmem:[%s388 + $0x78] sm:$0xff]
      %v451 = vld [vmem:[%s388 + $0x80] sm:$0xff]
      %v452 = vld [vmem:[%s388 + $0x88] sm:$0xff]
      %v453 = vld [vmem:[%s388 + $0x90] sm:$0xff]
      %v454 = vld [vmem:[%s388 + $0x98] sm:$0xff]
      %v455 = vld [vmem:[%s388 + $0xa0] sm:$0xff]
      %v456 = vld [vmem:[%s388 + $0xa8] sm:$0xff]
      %v457 = vld [vmem:[%s388 + $0xb0] sm:$0xff]
      %v458 = vld [vmem:[%s388 + $0xb8] sm:$0xff]
      %v459 = vld [vmem:[%s388 + $0xc0] sm:$0xff]
      %v460 = vld [vmem:[%s388 + $0xc8] sm:$0xff]
      %v461 = vld [vmem:[%s388 + $0xd0] sm:$0xff]
      %v462 = vld [vmem:[%s388 + $0xd8] sm:$0xff]
      %v463 = vld [vmem:[%s388 + $0xe0] sm:$0xff]
      %v464 = vld [vmem:[%s388 + $0xe8] sm:$0xff]
      %v465 = vld [vmem:[%s388 + $0xf0] sm:$0xff]
      %v466 = vld [vmem:[%s388 + $0xf8] sm:$0xff]
      %v467 = vld [vmem:[%s388 + $0x100] sm:$0xff]
      %v468 = vld [vmem:[%s388 + $0x108] sm:$0xff]
      %v469 = vld [vmem:[%s388 + $0x110] sm:$0xff]
      %v470 = vld [vmem:[%s388 + $0x118] sm:$0x3f]
      %v471 = vpack.c.bf16 %v436, %v435
      %v472 = vpack.c.bf16 %v438, %v437
      %v473 = vpack.c.bf16 %v440, %v439
      %v474 = vpack.c.bf16 %v442, %v441
      %v475 = vpack.c.bf16 %v444, %v443
      %v476 = vpack.c.bf16 %v446, %v445
      %v477 = vpack.c.bf16 %v448, %v447
      %v478 = vpack.c.bf16 %v450, %v449
      %v479 = vpack.c.bf16 %v452, %v451
      %v480 = vpack.c.bf16 %v454, %v453
      %v481 = vpack.c.bf16 %v456, %v455
      %v482 = vpack.c.bf16 %v458, %v457
      %v483 = vpack.c.bf16 %v460, %v459
      %v484 = vpack.c.bf16 %v462, %v461
      %v485 = vpack.c.bf16 %v464, %v463
      %v486 = vpack.c.bf16 %v466, %v465
      %v487 = vpack.c.bf16 %v468, %v467
      %v488 = vpack.c.bf16 %v470, %v469
      %v489 = vld [vmem:[%s3] sm:$0xf]
      %v490 = vld [vmem:[%s3 + $0x4] sm:$0xf]
      %v491 = vld [vmem:[%s3 + $0x8] sm:$0xf]
      %v492 = vld [vmem:[%s3 + $0xc] sm:$0xf]
      %v493 = vld [vmem:[%s388 + $0x1] sm:$0xff]
      %v494 = vld [vmem:[%s388 + $0x9] sm:$0xff]
      %v495 = vld [vmem:[%s388 + $0x11] sm:$0xff]
      %v496 = vld [vmem:[%s388 + $0x19] sm:$0xff]
      %v497 = vld [vmem:[%s388 + $0x21] sm:$0xff]
      %v498 = vld [vmem:[%s388 + $0x29] sm:$0xff]
      %v499 = vld [vmem:[%s388 + $0x31] sm:$0xff]
      %v500 = vld [vmem:[%s388 + $0x39] sm:$0xff]
      %v501 = vld [vmem:[%s388 + $0x41] sm:$0xff]
      %v502 = vld [vmem:[%s388 + $0x49] sm:$0xff]
      %v503 = vld [vmem:[%s388 + $0x51] sm:$0xff]
      %v504 = vld [vmem:[%s388 + $0x59] sm:$0xff]
      %v505 = vld [vmem:[%s388 + $0x61] sm:$0xff]
      %v506 = vld [vmem:[%s388 + $0x69] sm:$0xff]
      %v507 = vld [vmem:[%s388 + $0x71] sm:$0xff]
      %v508 = vld [vmem:[%s388 + $0x79] sm:$0xff]
      %v509 = vld [vmem:[%s388 + $0x81] sm:$0xff]
      %v510 = vld [vmem:[%s388 + $0x89] sm:$0xff]
      %v511 = vld [vmem:[%s388 + $0x91] sm:$0xff]
      %v512 = vld [vmem:[%s388 + $0x99] sm:$0xff]
      %v513 = vld [vmem:[%s388 + $0xa1] sm:$0xff]
      %v514 = vld [vmem:[%s388 + $0xa9] sm:$0xff]
      %v515 = vld [vmem:[%s388 + $0xb1] sm:$0xff]
      %v516 = vld [vmem:[%s388 + $0xb9] sm:$0xff]
      %v517 = vld [vmem:[%s388 + $0xc1] sm:$0xff]
      %v518 = vld [vmem:[%s388 + $0xc9] sm:$0xff]
      %v519 = vld [vmem:[%s388 + $0xd1] sm:$0xff]
      %v520 = vld [vmem:[%s388 + $0xd9] sm:$0xff]
      %v521 = vld [vmem:[%s388 + $0xe1] sm:$0xff]
      %v522 = vld [vmem:[%s388 + $0xe9] sm:$0xff]
      %v523 = vld [vmem:[%s388 + $0xf1] sm:$0xff]
      %v524 = vld [vmem:[%s388 + $0xf9] sm:$0xff]
      %v525 = vld [vmem:[%s388 + $0x101] sm:$0xff]
      %v526 = vld [vmem:[%s388 + $0x109] sm:$0xff]
      %v527 = vld [vmem:[%s388 + $0x111] sm:$0xff]
      %v528 = vld [vmem:[%s388 + $0x119] sm:$0x3f]
      %v529 = vpack.c.bf16 %v494, %v493
      %v530 = vpack.c.bf16 %v496, %v495
      %v531 = vpack.c.bf16 %v498, %v497
      %v532 = vpack.c.bf16 %v500, %v499
      %v533 = vpack.c.bf16 %v502, %v501
      %v534 = vpack.c.bf16 %v504, %v503
      %v535 = vpack.c.bf16 %v506, %v505
      %v536 = vpack.c.bf16 %v508, %v507
      %v537 = vpack.c.bf16 %v510, %v509
      %v538 = vpack.c.bf16 %v512, %v511
      %v539 = vpack.c.bf16 %v514, %v513
      %v540 = vpack.c.bf16 %v516, %v515
      %v541 = vpack.c.bf16 %v518, %v517
      %v542 = vpack.c.bf16 %v520, %v519
      %v543 = vpack.c.bf16 %v522, %v521
      %v544 = vpack.c.bf16 %v524, %v523
      %v545 = vpack.c.bf16 %v526, %v525
      %v546 = vpack.c.bf16 %v528, %v527
      %s547 = scalar_lea.vmem %s3, 16
      %v548 = vld [vmem:[%s547] sm:$0xf]
      %v549 = vld [vmem:[%s547 + $0x4] sm:$0xf]
      %v550 = vld [vmem:[%s547 + $0x8] sm:$0xf]
      %v551 = vld [vmem:[%s547 + $0xc] sm:$0xf]
      %v556 = vunpack.c.l.b16 %v548
      %v557 = vunpack.c.l.b16 %v549
      %v558 = vunpack.c.l.b16 %v550
      %v559 = vunpack.c.l.b16 %v551
      %v560 = vpack.c.b16 %v557, %v556
      %v561 = vpack.c.b16 %v559, %v558
      %vm564 = vcmask 261120
      %v566 = vsel %vm564, %v529, 0
      %v569 = vsel %vm564, %v530, 0
      %v572 = vsel %vm564, %v531, 0
      %v575 = vsel %vm564, %v532, 0
      %v578 = vsel %vm564, %v533, 0
      %v581 = vsel %vm564, %v534, 0
      %v584 = vsel %vm564, %v535, 0
      %v587 = vsel %vm564, %v536, 0
      %v590 = vsel %vm564, %v537, 0
      %v593 = vsel %vm564, %v538, 0
      %v596 = vsel %vm564, %v539, 0
      %v599 = vsel %vm564, %v540, 0
      %v602 = vsel %vm564, %v541, 0
      %v605 = vsel %vm564, %v542, 0
      %v608 = vsel %vm564, %v543, 0
      %v611 = vsel %vm564, %v544, 0
      %v614 = vsel %vm564, %v545, 0
      %v617 = vsel %vm564, %v546, 0
      %619 = vmatpush.bf16.msra.mxu0 0
      %620 = vmatpush.bf16.msra.mxu0 0
      %621 = vmatpush.bf16.msra.mxu0 0
      %622 = vmatpush.bf16.msra.mxu0 0
      %623 = vmatpush.bf16.msra.mxu0 0
      %624 = vmatpush.bf16.msra.mxu0 0
      %625 = vmatpush.bf16.msra.mxu0 %v561
      %626 = vmatpush.bf16.msra.mxu0 %v560
      %627 = vmatmul.bf16.gmra.mxu0 %v566
      %v628 = vpop.f32.mrf.mxu0
      %v629 = vadd.f32 0.0, %v628
      %v630 = vpop.f32.mrf.mxu0
      %v631 = vadd.f32 0.0, %v630
      %632 = vmatmul.bf16.gmra.mxu0 %v569
      %v633 = vpop.f32.mrf.mxu0
      %v634 = vadd.f32 0.0, %v633
      %v635 = vpop.f32.mrf.mxu0
      %v636 = vadd.f32 0.0, %v635
      %637 = vmatmul.bf16.gmra.mxu0 %v572
      %v638 = vpop.f32.mrf.mxu0
      %v639 = vadd.f32 0.0, %v638
      %v640 = vpop.f32.mrf.mxu0
      %v641 = vadd.f32 0.0, %v640
      %642 = vmatmul.bf16.gmra.mxu0 %v575
      %v643 = vpop.f32.mrf.mxu0
      %v644 = vadd.f32 0.0, %v643
      %v645 = vpop.f32.mrf.mxu0
      %v646 = vadd.f32 0.0, %v645
      %647 = vmatmul.bf16.gmra.mxu0 %v578
      %v648 = vpop.f32.mrf.mxu0
      %v649 = vadd.f32 0.0, %v648
      %v650 = vpop.f32.mrf.mxu0
      %v651 = vadd.f32 0.0, %v650
      %652 = vmatmul.bf16.gmra.mxu0 %v581
      %v653 = vpop.f32.mrf.mxu0
      %v654 = vadd.f32 0.0, %v653
      %v655 = vpop.f32.mrf.mxu0
      %v656 = vadd.f32 0.0, %v655
      %657 = vmatmul.bf16.gmra.mxu0 %v584
      %v658 = vpop.f32.mrf.mxu0
      %v659 = vadd.f32 0.0, %v658
      %v660 = vpop.f32.mrf.mxu0
      %v661 = vadd.f32 0.0, %v660
      %662 = vmatmul.bf16.gmra.mxu0 %v587
      %v663 = vpop.f32.mrf.mxu0
      %v664 = vadd.f32 0.0, %v663
      %v665 = vpop.f32.mrf.mxu0
      %v666 = vadd.f32 0.0, %v665
      %667 = vmatmul.bf16.gmra.mxu0 %v590
      %v668 = vpop.f32.mrf.mxu0
      %v669 = vadd.f32 0.0, %v668
      %v670 = vpop.f32.mrf.mxu0
      %v671 = vadd.f32 0.0, %v670
      %672 = vmatmul.bf16.gmra.mxu0 %v593
      %v673 = vpop.f32.mrf.mxu0
      %v674 = vadd.f32 0.0, %v673
      %v675 = vpop.f32.mrf.mxu0
      %v676 = vadd.f32 0.0, %v675
      %677 = vmatmul.bf16.gmra.mxu0 %v596
      %v678 = vpop.f32.mrf.mxu0
      %v679 = vadd.f32 0.0, %v678
      %v680 = vpop.f32.mrf.mxu0
      %v681 = vadd.f32 0.0, %v680
      %682 = vmatmul.bf16.gmra.mxu0 %v599
      %v683 = vpop.f32.mrf.mxu0
      %v684 = vadd.f32 0.0, %v683
      %v685 = vpop.f32.mrf.mxu0
      %v686 = vadd.f32 0.0, %v685
      %687 = vmatmul.bf16.gmra.mxu0 %v602
      %v688 = vpop.f32.mrf.mxu0
      %v689 = vadd.f32 0.0, %v688
      %v690 = vpop.f32.mrf.mxu0
      %v691 = vadd.f32 0.0, %v690
      %692 = vmatmul.bf16.gmra.mxu0 %v605
      %v693 = vpop.f32.mrf.mxu0
      %v694 = vadd.f32 0.0, %v693
      %v695 = vpop.f32.mrf.mxu0
      %v696 = vadd.f32 0.0, %v695
      %697 = vmatmul.bf16.gmra.mxu0 %v608
      %v698 = vpop.f32.mrf.mxu0
      %v699 = vadd.f32 0.0, %v698
      %v700 = vpop.f32.mrf.mxu0
      %v701 = vadd.f32 0.0, %v700
      %702 = vmatmul.bf16.gmra.mxu0 %v611
      %v703 = vpop.f32.mrf.mxu0
      %v704 = vadd.f32 0.0, %v703
      %v705 = vpop.f32.mrf.mxu0
      %v706 = vadd.f32 0.0, %v705
      %707 = vmatmul.bf16.gmra.mxu0 %v614
      %v708 = vpop.f32.mrf.mxu0
      %v709 = vadd.f32 0.0, %v708
      %v710 = vpop.f32.mrf.mxu0
      %v711 = vadd.f32 0.0, %v710
      %712 = vmatmul.bf16.gmra.mxu0 %v617
      %v713 = vpop.f32.mrf.mxu0
      %v714 = vadd.f32 0.0, %v713
      %v715 = vpop.f32.mrf.mxu0
      %v716 = vadd.f32 0.0, %v715
      %717 = vdwg.mxu0
      %v722 = vunpack.c.l.b16 %v489
      %v723 = vunpack.c.l.b16 %v490
      %v724 = vunpack.c.l.b16 %v491
      %v725 = vunpack.c.l.b16 %v492
      %v726 = vpack.c.b16 %v723, %v722
      %v727 = vpack.c.b16 %v725, %v724
      %v731 = vsel %vm564, %v471, 0
      %v734 = vsel %vm564, %v472, 0
      %v737 = vsel %vm564, %v473, 0
      %v740 = vsel %vm564, %v474, 0
      %v743 = vsel %vm564, %v475, 0
      %v746 = vsel %vm564, %v476, 0
      %v749 = vsel %vm564, %v477, 0
      %v752 = vsel %vm564, %v478, 0
      %v755 = vsel %vm564, %v479, 0
      %v758 = vsel %vm564, %v480, 0
      %v761 = vsel %vm564, %v481, 0
      %v764 = vsel %vm564, %v482, 0
      %v767 = vsel %vm564, %v483, 0
      %v770 = vsel %vm564, %v484, 0
      %v773 = vsel %vm564, %v485, 0
      %v776 = vsel %vm564, %v486, 0
      %v779 = vsel %vm564, %v487, 0
      %v782 = vsel %vm564, %v488, 0
      %784 = vmatpush.bf16.msra.mxu0 0
      %785 = vmatpush.bf16.msra.mxu0 0
      %786 = vmatpush.bf16.msra.mxu0 0
      %787 = vmatpush.bf16.msra.mxu0 0
      %788 = vmatpush.bf16.msra.mxu0 0
      %789 = vmatpush.bf16.msra.mxu0 0
      %790 = vmatpush.bf16.msra.mxu0 %v727
      %791 = vmatpush.bf16.msra.mxu0 %v726
      %792 = vmatmul.bf16.gmra.mxu0 %v731
      %v793 = vpop.f32.mrf.mxu0
      %v794 = vadd.f32 %v629, %v793
      %v795 = vpop.f32.mrf.mxu0
      %v796 = vadd.f32 %v631, %v795
      %797 = vmatmul.bf16.gmra.mxu0 %v734
      %v798 = vpop.f32.mrf.mxu0
      %v799 = vadd.f32 %v634, %v798
      %v800 = vpop.f32.mrf.mxu0
      %v801 = vadd.f32 %v636, %v800
      %802 = vmatmul.bf16.gmra.mxu0 %v737
      %v803 = vpop.f32.mrf.mxu0
      %v804 = vadd.f32 %v639, %v803
      %v805 = vpop.f32.mrf.mxu0
      %v806 = vadd.f32 %v641, %v805
      %807 = vmatmul.bf16.gmra.mxu0 %v740
      %v808 = vpop.f32.mrf.mxu0
      %v809 = vadd.f32 %v644, %v808
      %v810 = vpop.f32.mrf.mxu0
      %v811 = vadd.f32 %v646, %v810
      %812 = vmatmul.bf16.gmra.mxu0 %v743
      %v813 = vpop.f32.mrf.mxu0
      %v814 = vadd.f32 %v649, %v813
      %v815 = vpop.f32.mrf.mxu0
      %v816 = vadd.f32 %v651, %v815
      %817 = vmatmul.bf16.gmra.mxu0 %v746
      %v818 = vpop.f32.mrf.mxu0
      %v819 = vadd.f32 %v654, %v818
      %v820 = vpop.f32.mrf.mxu0
      %v821 = vadd.f32 %v656, %v820
      %822 = vmatmul.bf16.gmra.mxu0 %v749
      %v823 = vpop.f32.mrf.mxu0
      %v824 = vadd.f32 %v659, %v823
      %v825 = vpop.f32.mrf.mxu0
      %v826 = vadd.f32 %v661, %v825
      %827 = vmatmul.bf16.gmra.mxu0 %v752
      %v828 = vpop.f32.mrf.mxu0
      %v829 = vadd.f32 %v664, %v828
      %v830 = vpop.f32.mrf.mxu0
      %v831 = vadd.f32 %v666, %v830
      %832 = vmatmul.bf16.gmra.mxu0 %v755
      %v833 = vpop.f32.mrf.mxu0
      %v834 = vadd.f32 %v669, %v833
      %v835 = vpop.f32.mrf.mxu0
      %v836 = vadd.f32 %v671, %v835
      %837 = vmatmul.bf16.gmra.mxu0 %v758
      %v838 = vpop.f32.mrf.mxu0
      %v839 = vadd.f32 %v674, %v838
      %v840 = vpop.f32.mrf.mxu0
      %v841 = vadd.f32 %v676, %v840
      %842 = vmatmul.bf16.gmra.mxu0 %v761
      %v843 = vpop.f32.mrf.mxu0
      %v844 = vadd.f32 %v679, %v843
      %v845 = vpop.f32.mrf.mxu0
      %v846 = vadd.f32 %v681, %v845
      %847 = vmatmul.bf16.gmra.mxu0 %v764
      %v848 = vpop.f32.mrf.mxu0
      %v849 = vadd.f32 %v684, %v848
      %v850 = vpop.f32.mrf.mxu0
      %v851 = vadd.f32 %v686, %v850
      %852 = vmatmul.bf16.gmra.mxu0 %v767
      %v853 = vpop.f32.mrf.mxu0
      %v854 = vadd.f32 %v689, %v853
      %v855 = vpop.f32.mrf.mxu0
      %v856 = vadd.f32 %v691, %v855
      %857 = vmatmul.bf16.gmra.mxu0 %v770
      %v858 = vpop.f32.mrf.mxu0
      %v859 = vadd.f32 %v694, %v858
      %v860 = vpop.f32.mrf.mxu0
      %v861 = vadd.f32 %v696, %v860
      %862 = vmatmul.bf16.gmra.mxu0 %v773
      %v863 = vpop.f32.mrf.mxu0
      %v864 = vadd.f32 %v699, %v863
      %v865 = vpop.f32.mrf.mxu0
      %v866 = vadd.f32 %v701, %v865
      %867 = vmatmul.bf16.gmra.mxu0 %v776
      %v868 = vpop.f32.mrf.mxu0
      %v869 = vadd.f32 %v704, %v868
      %v870 = vpop.f32.mrf.mxu0
      %v871 = vadd.f32 %v706, %v870
      %872 = vmatmul.bf16.gmra.mxu0 %v779
      %v873 = vpop.f32.mrf.mxu0
      %v874 = vadd.f32 %v709, %v873
      %v875 = vpop.f32.mrf.mxu0
      %v876 = vadd.f32 %v711, %v875
      %877 = vmatmul.bf16.gmra.mxu0 %v782
      %v878 = vpop.f32.mrf.mxu0
      %v879 = vadd.f32 %v714, %v878
      %v880 = vpop.f32.mrf.mxu0
      %v881 = vadd.f32 %v716, %v880
      %882 = vdwg.mxu0
      %v883 = vld [vmem:[%s388 + $0x2] sm:$0xff]
      %v884 = vld [vmem:[%s388 + $0xa] sm:$0xff]
      %v885 = vld [vmem:[%s388 + $0x12] sm:$0xff]
      %v886 = vld [vmem:[%s388 + $0x1a] sm:$0xff]
      %v887 = vld [vmem:[%s388 + $0x22] sm:$0xff]
      %v888 = vld [vmem:[%s388 + $0x2a] sm:$0xff]
      %v889 = vld [vmem:[%s388 + $0x32] sm:$0xff]
      %v890 = vld [vmem:[%s388 + $0x3a] sm:$0xff]
      %v891 = vld [vmem:[%s388 + $0x42] sm:$0xff]
      %v892 = vld [vmem:[%s388 + $0x4a] sm:$0xff]
      %v893 = vld [vmem:[%s388 + $0x52] sm:$0xff]
      %v894 = vld [vmem:[%s388 + $0x5a] sm:$0xff]
      %v895 = vld [vmem:[%s388 + $0x62] sm:$0xff]
      %v896 = vld [vmem:[%s388 + $0x6a] sm:$0xff]
      %v897 = vld [vmem:[%s388 + $0x72] sm:$0xff]
      %v898 = vld [vmem:[%s388 + $0x7a] sm:$0xff]
      %v899 = vld [vmem:[%s388 + $0x82] sm:$0xff]
      %v900 = vld [vmem:[%s388 + $0x8a] sm:$0xff]
      %v901 = vld [vmem:[%s388 + $0x92] sm:$0xff]
      %v902 = vld [vmem:[%s388 + $0x9a] sm:$0xff]
      %v903 = vld [vmem:[%s388 + $0xa2] sm:$0xff]
      %v904 = vld [vmem:[%s388 + $0xaa] sm:$0xff]
      %v905 = vld [vmem:[%s388 + $0xb2] sm:$0xff]
      %v906 = vld [vmem:[%s388 + $0xba] sm:$0xff]
      %v907 = vld [vmem:[%s388 + $0xc2] sm:$0xff]
      %v908 = vld [vmem:[%s388 + $0xca] sm:$0xff]
      %v909 = vld [vmem:[%s388 + $0xd2] sm:$0xff]
      %v910 = vld [vmem:[%s388 + $0xda] sm:$0xff]
      %v911 = vld [vmem:[%s388 + $0xe2] sm:$0xff]
      %v912 = vld [vmem:[%s388 + $0xea] sm:$0xff]
      %v913 = vld [vmem:[%s388 + $0xf2] sm:$0xff]
      %v914 = vld [vmem:[%s388 + $0xfa] sm:$0xff]
      %v915 = vld [vmem:[%s388 + $0x102] sm:$0xff]
      %v916 = vld [vmem:[%s388 + $0x10a] sm:$0xff]
      %v917 = vld [vmem:[%s388 + $0x112] sm:$0xff]
      %v918 = vld [vmem:[%s388 + $0x11a] sm:$0x3f]
      %v919 = vpack.c.bf16 %v884, %v883
      %v920 = vpack.c.bf16 %v886, %v885
      %v921 = vpack.c.bf16 %v888, %v887
      %v922 = vpack.c.bf16 %v890, %v889
      %v923 = vpack.c.bf16 %v892, %v891
      %v924 = vpack.c.bf16 %v894, %v893
      %v925 = vpack.c.bf16 %v896, %v895
      %v926 = vpack.c.bf16 %v898, %v897
      %v927 = vpack.c.bf16 %v900, %v899
      %v928 = vpack.c.bf16 %v902, %v901
      %v929 = vpack.c.bf16 %v904, %v903
      %v930 = vpack.c.bf16 %v906, %v905
      %v931 = vpack.c.bf16 %v908, %v907
      %v932 = vpack.c.bf16 %v910, %v909
      %v933 = vpack.c.bf16 %v912, %v911
      %v934 = vpack.c.bf16 %v914, %v913
      %v935 = vpack.c.bf16 %v916, %v915
      %v936 = vpack.c.bf16 %v918, %v917
      %s937 = scalar_lea.vmem %s3, 32
      %v938 = vld [vmem:[%s937] sm:$0xf]
      %v939 = vld [vmem:[%s937 + $0x4] sm:$0xf]
      %v940 = vld [vmem:[%s937 + $0x8] sm:$0xf]
      %v941 = vld [vmem:[%s937 + $0xc] sm:$0xf]
      %v946 = vunpack.c.l.b16 %v938
      %v947 = vunpack.c.l.b16 %v939
      %v948 = vunpack.c.l.b16 %v940
      %v949 = vunpack.c.l.b16 %v941
      %v950 = vpack.c.b16 %v947, %v946
      %v951 = vpack.c.b16 %v949, %v948
      %v955 = vsel %vm564, %v919, 0
      %v958 = vsel %vm564, %v920, 0
      %v961 = vsel %vm564, %v921, 0
      %v964 = vsel %vm564, %v922, 0
      %v967 = vsel %vm564, %v923, 0
      %v970 = vsel %vm564, %v924, 0
      %v973 = vsel %vm564, %v925, 0
      %v976 = vsel %vm564, %v926, 0
      %v979 = vsel %vm564, %v927, 0
      %v982 = vsel %vm564, %v928, 0
      %v985 = vsel %vm564, %v929, 0
      %v988 = vsel %vm564, %v930, 0
      %v991 = vsel %vm564, %v931, 0
      %v994 = vsel %vm564, %v932, 0
      %v997 = vsel %vm564, %v933, 0
      %v1000 = vsel %vm564, %v934, 0
      %v1003 = vsel %vm564, %v935, 0
      %v1006 = vsel %vm564, %v936, 0
      %1008 = vmatpush.bf16.msra.mxu0 0
      %1009 = vmatpush.bf16.msra.mxu0 0
      %1010 = vmatpush.bf16.msra.mxu0 0
      %1011 = vmatpush.bf16.msra.mxu0 0
      %1012 = vmatpush.bf16.msra.mxu0 0
      %1013 = vmatpush.bf16.msra.mxu0 0
      %1014 = vmatpush.bf16.msra.mxu0 %v951
      %1015 = vmatpush.bf16.msra.mxu0 %v950
      %1016 = vmatmul.bf16.gmra.mxu0 %v955
      %v1017 = vpop.f32.mrf.mxu0
      %v1018 = vadd.f32 0.0, %v1017
      %v1019 = vpop.f32.mrf.mxu0
      %v1020 = vadd.f32 0.0, %v1019
      %1021 = vmatmul.bf16.gmra.mxu0 %v958
      %v1022 = vpop.f32.mrf.mxu0
      %v1023 = vadd.f32 0.0, %v1022
      %v1024 = vpop.f32.mrf.mxu0
      %v1025 = vadd.f32 0.0, %v1024
      %1026 = vmatmul.bf16.gmra.mxu0 %v961
      %v1027 = vpop.f32.mrf.mxu0
      %v1028 = vadd.f32 0.0, %v1027
      %v1029 = vpop.f32.mrf.mxu0
      %v1030 = vadd.f32 0.0, %v1029
      %1031 = vmatmul.bf16.gmra.mxu0 %v964
      %v1032 = vpop.f32.mrf.mxu0
      %v1033 = vadd.f32 0.0, %v1032
      %v1034 = vpop.f32.mrf.mxu0
      %v1035 = vadd.f32 0.0, %v1034
      %1036 = vmatmul.bf16.gmra.mxu0 %v967
      %v1037 = vpop.f32.mrf.mxu0
      %v1038 = vadd.f32 0.0, %v1037
      %v1039 = vpop.f32.mrf.mxu0
      %v1040 = vadd.f32 0.0, %v1039
      %1041 = vmatmul.bf16.gmra.mxu0 %v970
      %v1042 = vpop.f32.mrf.mxu0
      %v1043 = vadd.f32 0.0, %v1042
      %v1044 = vpop.f32.mrf.mxu0
      %v1045 = vadd.f32 0.0, %v1044
      %1046 = vmatmul.bf16.gmra.mxu0 %v973
      %v1047 = vpop.f32.mrf.mxu0
      %v1048 = vadd.f32 0.0, %v1047
      %v1049 = vpop.f32.mrf.mxu0
      %v1050 = vadd.f32 0.0, %v1049
      %1051 = vmatmul.bf16.gmra.mxu0 %v976
      %v1052 = vpop.f32.mrf.mxu0
      %v1053 = vadd.f32 0.0, %v1052
      %v1054 = vpop.f32.mrf.mxu0
      %v1055 = vadd.f32 0.0, %v1054
      %1056 = vmatmul.bf16.gmra.mxu0 %v979
      %v1057 = vpop.f32.mrf.mxu0
      %v1058 = vadd.f32 0.0, %v1057
      %v1059 = vpop.f32.mrf.mxu0
      %v1060 = vadd.f32 0.0, %v1059
      %1061 = vmatmul.bf16.gmra.mxu0 %v982
      %v1062 = vpop.f32.mrf.mxu0
      %v1063 = vadd.f32 0.0, %v1062
      %v1064 = vpop.f32.mrf.mxu0
      %v1065 = vadd.f32 0.0, %v1064
      %1066 = vmatmul.bf16.gmra.mxu0 %v985
      %v1067 = vpop.f32.mrf.mxu0
      %v1068 = vadd.f32 0.0, %v1067
      %v1069 = vpop.f32.mrf.mxu0
      %v1070 = vadd.f32 0.0, %v1069
      %1071 = vmatmul.bf16.gmra.mxu0 %v988
      %v1072 = vpop.f32.mrf.mxu0
      %v1073 = vadd.f32 0.0, %v1072
      %v1074 = vpop.f32.mrf.mxu0
      %v1075 = vadd.f32 0.0, %v1074
      %1076 = vmatmul.bf16.gmra.mxu0 %v991
      %v1077 = vpop.f32.mrf.mxu0
      %v1078 = vadd.f32 0.0, %v1077
      %v1079 = vpop.f32.mrf.mxu0
      %v1080 = vadd.f32 0.0, %v1079
      %1081 = vmatmul.bf16.gmra.mxu0 %v994
      %v1082 = vpop.f32.mrf.mxu0
      %v1083 = vadd.f32 0.0, %v1082
      %v1084 = vpop.f32.mrf.mxu0
      %v1085 = vadd.f32 0.0, %v1084
      %1086 = vmatmul.bf16.gmra.mxu0 %v997
      %v1087 = vpop.f32.mrf.mxu0
      %v1088 = vadd.f32 0.0, %v1087
      %v1089 = vpop.f32.mrf.mxu0
      %v1090 = vadd.f32 0.0, %v1089
      %1091 = vmatmul.bf16.gmra.mxu0 %v1000
      %v1092 = vpop.f32.mrf.mxu0
      %v1093 = vadd.f32 0.0, %v1092
      %v1094 = vpop.f32.mrf.mxu0
      %v1095 = vadd.f32 0.0, %v1094
      %1096 = vmatmul.bf16.gmra.mxu0 %v1003
      %v1097 = vpop.f32.mrf.mxu0
      %v1098 = vadd.f32 0.0, %v1097
      %v1099 = vpop.f32.mrf.mxu0
      %v1100 = vadd.f32 0.0, %v1099
      %1101 = vmatmul.bf16.gmra.mxu0 %v1006
      %v1102 = vpop.f32.mrf.mxu0
      %v1103 = vadd.f32 0.0, %v1102
      %v1104 = vpop.f32.mrf.mxu0
      %v1105 = vadd.f32 0.0, %v1104
      %1106 = vdwg.mxu0
      %v1107 = vadd.f32 %v794, %v1018
      %v1108 = vadd.f32 %v796, %v1020
      %v1109 = vadd.f32 %v799, %v1023
      %v1110 = vadd.f32 %v801, %v1025
      %v1111 = vadd.f32 %v804, %v1028
      %v1112 = vadd.f32 %v806, %v1030
      %v1113 = vadd.f32 %v809, %v1033
      %v1114 = vadd.f32 %v811, %v1035
      %v1115 = vadd.f32 %v814, %v1038
      %v1116 = vadd.f32 %v816, %v1040
      %v1117 = vadd.f32 %v819, %v1043
      %v1118 = vadd.f32 %v821, %v1045
      %v1119 = vadd.f32 %v824, %v1048
      %v1120 = vadd.f32 %v826, %v1050
      %v1121 = vadd.f32 %v829, %v1053
      %v1122 = vadd.f32 %v831, %v1055
      %v1123 = vadd.f32 %v834, %v1058
      %v1124 = vadd.f32 %v836, %v1060
      %v1125 = vadd.f32 %v839, %v1063
      %v1126 = vadd.f32 %v841, %v1065
      %v1127 = vadd.f32 %v844, %v1068
      %v1128 = vadd.f32 %v846, %v1070
      %v1129 = vadd.f32 %v849, %v1073
      %v1130 = vadd.f32 %v851, %v1075
      %v1131 = vadd.f32 %v854, %v1078
      %v1132 = vadd.f32 %v856, %v1080
      %v1133 = vadd.f32 %v859, %v1083
      %v1134 = vadd.f32 %v861, %v1085
      %v1135 = vadd.f32 %v864, %v1088
      %v1136 = vadd.f32 %v866, %v1090
      %v1137 = vadd.f32 %v869, %v1093
      %v1138 = vadd.f32 %v871, %v1095
      %v1139 = vadd.f32 %v874, %v1098
      %v1140 = vadd.f32 %v876, %v1100
      %v1141 = vadd.f32 %v879, %v1103
      %v1142 = vadd.f32 %v881, %v1105
      %v1143 = vld [vmem:[%s388 + $0x12] sm:$0xff]
      %v1144 = vld [vmem:[%s388 + $0x1a] sm:$0xff]
      %v1145 = vld [vmem:[%s388 + $0x22] sm:$0xff]
      %v1146 = vld [vmem:[%s388 + $0x2a] sm:$0xff]
      %v1147 = vld [vmem:[%s388 + $0x32] sm:$0xff]
      %v1148 = vld [vmem:[%s388 + $0x3a] sm:$0xff]
      %v1149 = vld [vmem:[%s388 + $0x42] sm:$0xff]
      %v1150 = vld [vmem:[%s388 + $0x4a] sm:$0xff]
      %v1151 = vld [vmem:[%s388 + $0x52] sm:$0xff]
      %v1152 = vld [vmem:[%s388 + $0x5a] sm:$0xff]
      %v1153 = vld [vmem:[%s388 + $0x62] sm:$0xff]
      %v1154 = vld [vmem:[%s388 + $0x6a] sm:$0xff]
      %v1155 = vld [vmem:[%s388 + $0x72] sm:$0xff]
      %v1156 = vld [vmem:[%s388 + $0x7a] sm:$0xff]
      %v1157 = vld [vmem:[%s388 + $0x82] sm:$0xff]
      %v1158 = vld [vmem:[%s388 + $0x8a] sm:$0xff]
      %v1159 = vld [vmem:[%s388 + $0x92] sm:$0xff]
      %v1160 = vld [vmem:[%s388 + $0x9a] sm:$0xff]
      %v1161 = vld [vmem:[%s388 + $0xa2] sm:$0xff]
      %v1162 = vld [vmem:[%s388 + $0xaa] sm:$0xff]
      %v1163 = vld [vmem:[%s388 + $0xb2] sm:$0xff]
      %v1164 = vld [vmem:[%s388 + $0xba] sm:$0xff]
      %v1165 = vld [vmem:[%s388 + $0xc2] sm:$0xff]
      %v1166 = vld [vmem:[%s388 + $0xca] sm:$0xff]
      %v1167 = vld [vmem:[%s388 + $0xd2] sm:$0xff]
      %v1168 = vld [vmem:[%s388 + $0xda] sm:$0xff]
      %v1169 = vld [vmem:[%s388 + $0xe2] sm:$0xff]
      %v1170 = vld [vmem:[%s388 + $0xea] sm:$0xff]
      %v1171 = vld [vmem:[%s388 + $0xf2] sm:$0xff]
      %v1172 = vld [vmem:[%s388 + $0xfa] sm:$0xff]
      %v1173 = vld [vmem:[%s388 + $0x102] sm:$0xff]
      %v1174 = vld [vmem:[%s388 + $0x10a] sm:$0xff]
      %v1175 = vld [vmem:[%s388 + $0x112] sm:$0xff]
      %v1176 = vld [vmem:[%s388 + $0x11a] sm:$0xff]
      %v1177 = vld [vmem:[%s388 + $0x122] sm:$0xff]
      %v1178 = vld [vmem:[%s388 + $0x12a] sm:$0x3f]
      %v1179 = vpack.c.bf16 %v1144, %v1143
      %v1180 = vpack.c.bf16 %v1146, %v1145
      %v1181 = vpack.c.bf16 %v1148, %v1147
      %v1182 = vpack.c.bf16 %v1150, %v1149
      %v1183 = vpack.c.bf16 %v1152, %v1151
      %v1184 = vpack.c.bf16 %v1154, %v1153
      %v1185 = vpack.c.bf16 %v1156, %v1155
      %v1186 = vpack.c.bf16 %v1158, %v1157
      %v1187 = vpack.c.bf16 %v1160, %v1159
      %v1188 = vpack.c.bf16 %v1162, %v1161
      %v1189 = vpack.c.bf16 %v1164, %v1163
      %v1190 = vpack.c.bf16 %v1166, %v1165
      %v1191 = vpack.c.bf16 %v1168, %v1167
      %v1192 = vpack.c.bf16 %v1170, %v1169
      %v1193 = vpack.c.bf16 %v1172, %v1171
      %v1194 = vpack.c.bf16 %v1174, %v1173
      %v1195 = vpack.c.bf16 %v1176, %v1175
      %v1196 = vpack.c.bf16 %v1178, %v1177
      %s1197 = scalar_lea.vmem %s3, 48
      %v1198 = vld [vmem:[%s1197] sm:$0xf]
      %v1199 = vld [vmem:[%s1197 + $0x4] sm:$0xf]
      %v1200 = vld [vmem:[%s1197 + $0x8] sm:$0xf]
      %v1201 = vld [vmem:[%s1197 + $0xc] sm:$0xf]
      %v1206 = vunpack.c.l.b16 %v1198
      %v1207 = vunpack.c.l.b16 %v1199
      %v1208 = vunpack.c.l.b16 %v1200
      %v1209 = vunpack.c.l.b16 %v1201
      %v1210 = vpack.c.b16 %v1207, %v1206
      %v1211 = vpack.c.b16 %v1209, %v1208
      %v1215 = vsel %vm564, %v1179, 0
      %v1218 = vsel %vm564, %v1180, 0
      %v1221 = vsel %vm564, %v1181, 0
      %v1224 = vsel %vm564, %v1182, 0
      %v1227 = vsel %vm564, %v1183, 0
      %v1230 = vsel %vm564, %v1184, 0
      %v1233 = vsel %vm564, %v1185, 0
      %v1236 = vsel %vm564, %v1186, 0
      %v1239 = vsel %vm564, %v1187, 0
      %v1242 = vsel %vm564, %v1188, 0
      %v1245 = vsel %vm564, %v1189, 0
      %v1248 = vsel %vm564, %v1190, 0
      %v1251 = vsel %vm564, %v1191, 0
      %v1254 = vsel %vm564, %v1192, 0
      %v1257 = vsel %vm564, %v1193, 0
      %v1260 = vsel %vm564, %v1194, 0
      %v1263 = vsel %vm564, %v1195, 0
      %v1266 = vsel %vm564, %v1196, 0
      %1268 = vmatpush.bf16.msra.mxu0 0
      %1269 = vmatpush.bf16.msra.mxu0 0
      %1270 = vmatpush.bf16.msra.mxu0 0
      %1271 = vmatpush.bf16.msra.mxu0 0
      %1272 = vmatpush.bf16.msra.mxu0 0
      %1273 = vmatpush.bf16.msra.mxu0 0
      %1274 = vmatpush.bf16.msra.mxu0 %v1211
      %1275 = vmatpush.bf16.msra.mxu0 %v1210
      %1276 = vmatmul.bf16.gmra.mxu0 %v1215
      %v1277 = vpop.f32.mrf.mxu0
      %v1278 = vadd.f32 0.0, %v1277
      %v1279 = vpop.f32.mrf.mxu0
      %v1280 = vadd.f32 0.0, %v1279
      %1281 = vmatmul.bf16.gmra.mxu0 %v1218
      %v1282 = vpop.f32.mrf.mxu0
      %v1283 = vadd.f32 0.0, %v1282
      %v1284 = vpop.f32.mrf.mxu0
      %v1285 = vadd.f32 0.0, %v1284
      %1286 = vmatmul.bf16.gmra.mxu0 %v1221
      %v1287 = vpop.f32.mrf.mxu0
      %v1288 = vadd.f32 0.0, %v1287
      %v1289 = vpop.f32.mrf.mxu0
      %v1290 = vadd.f32 0.0, %v1289
      %1291 = vmatmul.bf16.gmra.mxu0 %v1224
      %v1292 = vpop.f32.mrf.mxu0
      %v1293 = vadd.f32 0.0, %v1292
      %v1294 = vpop.f32.mrf.mxu0
      %v1295 = vadd.f32 0.0, %v1294
      %1296 = vmatmul.bf16.gmra.mxu0 %v1227
      %v1297 = vpop.f32.mrf.mxu0
      %v1298 = vadd.f32 0.0, %v1297
      %v1299 = vpop.f32.mrf.mxu0
      %v1300 = vadd.f32 0.0, %v1299
      %1301 = vmatmul.bf16.gmra.mxu0 %v1230
      %v1302 = vpop.f32.mrf.mxu0
      %v1303 = vadd.f32 0.0, %v1302
      %v1304 = vpop.f32.mrf.mxu0
      %v1305 = vadd.f32 0.0, %v1304
      %1306 = vmatmul.bf16.gmra.mxu0 %v1233
      %v1307 = vpop.f32.mrf.mxu0
      %v1308 = vadd.f32 0.0, %v1307
      %v1309 = vpop.f32.mrf.mxu0
      %v1310 = vadd.f32 0.0, %v1309
      %1311 = vmatmul.bf16.gmra.mxu0 %v1236
      %v1312 = vpop.f32.mrf.mxu0
      %v1313 = vadd.f32 0.0, %v1312
      %v1314 = vpop.f32.mrf.mxu0
      %v1315 = vadd.f32 0.0, %v1314
      %1316 = vmatmul.bf16.gmra.mxu0 %v1239
      %v1317 = vpop.f32.mrf.mxu0
      %v1318 = vadd.f32 0.0, %v1317
      %v1319 = vpop.f32.mrf.mxu0
      %v1320 = vadd.f32 0.0, %v1319
      %1321 = vmatmul.bf16.gmra.mxu0 %v1242
      %v1322 = vpop.f32.mrf.mxu0
      %v1323 = vadd.f32 0.0, %v1322
      %v1324 = vpop.f32.mrf.mxu0
      %v1325 = vadd.f32 0.0, %v1324
      %1326 = vmatmul.bf16.gmra.mxu0 %v1245
      %v1327 = vpop.f32.mrf.mxu0
      %v1328 = vadd.f32 0.0, %v1327
      %v1329 = vpop.f32.mrf.mxu0
      %v1330 = vadd.f32 0.0, %v1329
      %1331 = vmatmul.bf16.gmra.mxu0 %v1248
      %v1332 = vpop.f32.mrf.mxu0
      %v1333 = vadd.f32 0.0, %v1332
      %v1334 = vpop.f32.mrf.mxu0
      %v1335 = vadd.f32 0.0, %v1334
      %1336 = vmatmul.bf16.gmra.mxu0 %v1251
      %v1337 = vpop.f32.mrf.mxu0
      %v1338 = vadd.f32 0.0, %v1337
      %v1339 = vpop.f32.mrf.mxu0
      %v1340 = vadd.f32 0.0, %v1339
      %1341 = vmatmul.bf16.gmra.mxu0 %v1254
      %v1342 = vpop.f32.mrf.mxu0
      %v1343 = vadd.f32 0.0, %v1342
      %v1344 = vpop.f32.mrf.mxu0
      %v1345 = vadd.f32 0.0, %v1344
      %1346 = vmatmul.bf16.gmra.mxu0 %v1257
      %v1347 = vpop.f32.mrf.mxu0
      %v1348 = vadd.f32 0.0, %v1347
      %v1349 = vpop.f32.mrf.mxu0
      %v1350 = vadd.f32 0.0, %v1349
      %1351 = vmatmul.bf16.gmra.mxu0 %v1260
      %v1352 = vpop.f32.mrf.mxu0
      %v1353 = vadd.f32 0.0, %v1352
      %v1354 = vpop.f32.mrf.mxu0
      %v1355 = vadd.f32 0.0, %v1354
      %1356 = vmatmul.bf16.gmra.mxu0 %v1263
      %v1357 = vpop.f32.mrf.mxu0
      %v1358 = vadd.f32 0.0, %v1357
      %v1359 = vpop.f32.mrf.mxu0
      %v1360 = vadd.f32 0.0, %v1359
      %1361 = vmatmul.bf16.gmra.mxu0 %v1266
      %v1362 = vpop.f32.mrf.mxu0
      %v1363 = vadd.f32 0.0, %v1362
      %v1364 = vpop.f32.mrf.mxu0
      %v1365 = vadd.f32 0.0, %v1364
      %1366 = vdwg.mxu0
      %v1367 = vadd.f32 %v1107, %v1278
      %v1368 = vadd.f32 %v1108, %v1280
      %v1369 = vadd.f32 %v1109, %v1283
      %v1370 = vadd.f32 %v1110, %v1285
      %v1371 = vadd.f32 %v1111, %v1288
      %v1372 = vadd.f32 %v1112, %v1290
      %v1373 = vadd.f32 %v1113, %v1293
      %v1374 = vadd.f32 %v1114, %v1295
      %v1375 = vadd.f32 %v1115, %v1298
      %v1376 = vadd.f32 %v1116, %v1300
      %v1377 = vadd.f32 %v1117, %v1303
      %v1378 = vadd.f32 %v1118, %v1305
      %v1379 = vadd.f32 %v1119, %v1308
      %v1380 = vadd.f32 %v1120, %v1310
      %v1381 = vadd.f32 %v1121, %v1313
      %v1382 = vadd.f32 %v1122, %v1315
      %v1383 = vadd.f32 %v1123, %v1318
      %v1384 = vadd.f32 %v1124, %v1320
      %v1385 = vadd.f32 %v1125, %v1323
      %v1386 = vadd.f32 %v1126, %v1325
      %v1387 = vadd.f32 %v1127, %v1328
      %v1388 = vadd.f32 %v1128, %v1330
      %v1389 = vadd.f32 %v1129, %v1333
      %v1390 = vadd.f32 %v1130, %v1335
      %v1391 = vadd.f32 %v1131, %v1338
      %v1392 = vadd.f32 %v1132, %v1340
      %v1393 = vadd.f32 %v1133, %v1343
      %v1394 = vadd.f32 %v1134, %v1345
      %v1395 = vadd.f32 %v1135, %v1348
      %v1396 = vadd.f32 %v1136, %v1350
      %v1397 = vadd.f32 %v1137, %v1353
      %v1398 = vadd.f32 %v1138, %v1355
      %v1399 = vadd.f32 %v1139, %v1358
      %v1400 = vadd.f32 %v1140, %v1360
      %v1401 = vadd.f32 %v1141, %v1363
      %v1402 = vadd.f32 %v1142, %v1365
      %v1403 = vld [vmem:[%s388 + $0x13] sm:$0xff]
      %v1404 = vld [vmem:[%s388 + $0x1b] sm:$0xff]
      %v1405 = vld [vmem:[%s388 + $0x23] sm:$0xff]
      %v1406 = vld [vmem:[%s388 + $0x2b] sm:$0xff]
      %v1407 = vld [vmem:[%s388 + $0x33] sm:$0xff]
      %v1408 = vld [vmem:[%s388 + $0x3b] sm:$0xff]
      %v1409 = vld [vmem:[%s388 + $0x43] sm:$0xff]
      %v1410 = vld [vmem:[%s388 + $0x4b] sm:$0xff]
      %v1411 = vld [vmem:[%s388 + $0x53] sm:$0xff]
      %v1412 = vld [vmem:[%s388 + $0x5b] sm:$0xff]
      %v1413 = vld [vmem:[%s388 + $0x63] sm:$0xff]
      %v1414 = vld [vmem:[%s388 + $0x6b] sm:$0xff]
      %v1415 = vld [vmem:[%s388 + $0x73] sm:$0xff]
      %v1416 = vld [vmem:[%s388 + $0x7b] sm:$0xff]
      %v1417 = vld [vmem:[%s388 + $0x83] sm:$0xff]
      %v1418 = vld [vmem:[%s388 + $0x8b] sm:$0xff]
      %v1419 = vld [vmem:[%s388 + $0x93] sm:$0xff]
      %v1420 = vld [vmem:[%s388 + $0x9b] sm:$0xff]
      %v1421 = vld [vmem:[%s388 + $0xa3] sm:$0xff]
      %v1422 = vld [vmem:[%s388 + $0xab] sm:$0xff]
      %v1423 = vld [vmem:[%s388 + $0xb3] sm:$0xff]
      %v1424 = vld [vmem:[%s388 + $0xbb] sm:$0xff]
      %v1425 = vld [vmem:[%s388 + $0xc3] sm:$0xff]
      %v1426 = vld [vmem:[%s388 + $0xcb] sm:$0xff]
      %v1427 = vld [vmem:[%s388 + $0xd3] sm:$0xff]
      %v1428 = vld [vmem:[%s388 + $0xdb] sm:$0xff]
      %v1429 = vld [vmem:[%s388 + $0xe3] sm:$0xff]
      %v1430 = vld [vmem:[%s388 + $0xeb] sm:$0xff]
      %v1431 = vld [vmem:[%s388 + $0xf3] sm:$0xff]
      %v1432 = vld [vmem:[%s388 + $0xfb] sm:$0xff]
      %v1433 = vld [vmem:[%s388 + $0x103] sm:$0xff]
      %v1434 = vld [vmem:[%s388 + $0x10b] sm:$0xff]
      %v1435 = vld [vmem:[%s388 + $0x113] sm:$0xff]
      %v1436 = vld [vmem:[%s388 + $0x11b] sm:$0xff]
      %v1437 = vld [vmem:[%s388 + $0x123] sm:$0xff]
      %v1438 = vld [vmem:[%s388 + $0x12b] sm:$0x3f]
      %v1439 = vpack.c.bf16 %v1404, %v1403
      %v1440 = vpack.c.bf16 %v1406, %v1405
      %v1441 = vpack.c.bf16 %v1408, %v1407
      %v1442 = vpack.c.bf16 %v1410, %v1409
      %v1443 = vpack.c.bf16 %v1412, %v1411
      %v1444 = vpack.c.bf16 %v1414, %v1413
      %v1445 = vpack.c.bf16 %v1416, %v1415
      %v1446 = vpack.c.bf16 %v1418, %v1417
      %v1447 = vpack.c.bf16 %v1420, %v1419
      %v1448 = vpack.c.bf16 %v1422, %v1421
      %v1449 = vpack.c.bf16 %v1424, %v1423
      %v1450 = vpack.c.bf16 %v1426, %v1425
      %v1451 = vpack.c.bf16 %v1428, %v1427
      %v1452 = vpack.c.bf16 %v1430, %v1429
      %v1453 = vpack.c.bf16 %v1432, %v1431
      %v1454 = vpack.c.bf16 %v1434, %v1433
      %v1455 = vpack.c.bf16 %v1436, %v1435
      %v1456 = vpack.c.bf16 %v1438, %v1437
      %s1457 = scalar_lea.vmem %s3, 64
      %v1458 = vld [vmem:[%s1457] sm:$0xf]
      %v1459 = vld [vmem:[%s1457 + $0x4] sm:$0xf]
      %v1460 = vld [vmem:[%s1457 + $0x8] sm:$0xf]
      %v1461 = vld [vmem:[%s1457 + $0xc] sm:$0xf]
      %v1466 = vunpack.c.l.b16 %v1458
      %v1467 = vunpack.c.l.b16 %v1459
      %v1468 = vunpack.c.l.b16 %v1460
      %v1469 = vunpack.c.l.b16 %v1461
      %v1470 = vpack.c.b16 %v1467, %v1466
      %v1471 = vpack.c.b16 %v1469, %v1468
      %v1475 = vsel %vm564, %v1439, 0
      %v1478 = vsel %vm564, %v1440, 0
      %v1481 = vsel %vm564, %v1441, 0
      %v1484 = vsel %vm564, %v1442, 0
      %v1487 = vsel %vm564, %v1443, 0
      %v1490 = vsel %vm564, %v1444, 0
      %v1493 = vsel %vm564, %v1445, 0
      %v1496 = vsel %vm564, %v1446, 0
      %v1499 = vsel %vm564, %v1447, 0
      %v1502 = vsel %vm564, %v1448, 0
      %v1505 = vsel %vm564, %v1449, 0
      %v1508 = vsel %vm564, %v1450, 0
      %v1511 = vsel %vm564, %v1451, 0
      %v1514 = vsel %vm564, %v1452, 0
      %v1517 = vsel %vm564, %v1453, 0
      %v1520 = vsel %vm564, %v1454, 0
      %v1523 = vsel %vm564, %v1455, 0
      %v1526 = vsel %vm564, %v1456, 0
      %1528 = vmatpush.bf16.msra.mxu0 0
      %1529 = vmatpush.bf16.msra.mxu0 0
      %1530 = vmatpush.bf16.msra.mxu0 0
      %1531 = vmatpush.bf16.msra.mxu0 0
      %1532 = vmatpush.bf16.msra.mxu0 0
      %1533 = vmatpush.bf16.msra.mxu0 0
      %1534 = vmatpush.bf16.msra.mxu0 %v1471
      %1535 = vmatpush.bf16.msra.mxu0 %v1470
      %1536 = vmatmul.bf16.gmra.mxu0 %v1475
      %v1537 = vpop.f32.mrf.mxu0
      %v1538 = vadd.f32 0.0, %v1537
      %v1539 = vpop.f32.mrf.mxu0
      %v1540 = vadd.f32 0.0, %v1539
      %1541 = vmatmul.bf16.gmra.mxu0 %v1478
      %v1542 = vpop.f32.mrf.mxu0
      %v1543 = vadd.f32 0.0, %v1542
      %v1544 = vpop.f32.mrf.mxu0
      %v1545 = vadd.f32 0.0, %v1544
      %1546 = vmatmul.bf16.gmra.mxu0 %v1481
      %v1547 = vpop.f32.mrf.mxu0
      %v1548 = vadd.f32 0.0, %v1547
      %v1549 = vpop.f32.mrf.mxu0
      %v1550 = vadd.f32 0.0, %v1549
      %1551 = vmatmul.bf16.gmra.mxu0 %v1484
      %v1552 = vpop.f32.mrf.mxu0
      %v1553 = vadd.f32 0.0, %v1552
      %v1554 = vpop.f32.mrf.mxu0
      %v1555 = vadd.f32 0.0, %v1554
      %1556 = vmatmul.bf16.gmra.mxu0 %v1487
      %v1557 = vpop.f32.mrf.mxu0
      %v1558 = vadd.f32 0.0, %v1557
      %v1559 = vpop.f32.mrf.mxu0
      %v1560 = vadd.f32 0.0, %v1559
      %1561 = vmatmul.bf16.gmra.mxu0 %v1490
      %v1562 = vpop.f32.mrf.mxu0
      %v1563 = vadd.f32 0.0, %v1562
      %v1564 = vpop.f32.mrf.mxu0
      %v1565 = vadd.f32 0.0, %v1564
      %1566 = vmatmul.bf16.gmra.mxu0 %v1493
      %v1567 = vpop.f32.mrf.mxu0
      %v1568 = vadd.f32 0.0, %v1567
      %v1569 = vpop.f32.mrf.mxu0
      %v1570 = vadd.f32 0.0, %v1569
      %1571 = vmatmul.bf16.gmra.mxu0 %v1496
      %v1572 = vpop.f32.mrf.mxu0
      %v1573 = vadd.f32 0.0, %v1572
      %v1574 = vpop.f32.mrf.mxu0
      %v1575 = vadd.f32 0.0, %v1574
      %1576 = vmatmul.bf16.gmra.mxu0 %v1499
      %v1577 = vpop.f32.mrf.mxu0
      %v1578 = vadd.f32 0.0, %v1577
      %v1579 = vpop.f32.mrf.mxu0
      %v1580 = vadd.f32 0.0, %v1579
      %1581 = vmatmul.bf16.gmra.mxu0 %v1502
      %v1582 = vpop.f32.mrf.mxu0
      %v1583 = vadd.f32 0.0, %v1582
      %v1584 = vpop.f32.mrf.mxu0
      %v1585 = vadd.f32 0.0, %v1584
      %1586 = vmatmul.bf16.gmra.mxu0 %v1505
      %v1587 = vpop.f32.mrf.mxu0
      %v1588 = vadd.f32 0.0, %v1587
      %v1589 = vpop.f32.mrf.mxu0
      %v1590 = vadd.f32 0.0, %v1589
      %1591 = vmatmul.bf16.gmra.mxu0 %v1508
      %v1592 = vpop.f32.mrf.mxu0
      %v1593 = vadd.f32 0.0, %v1592
      %v1594 = vpop.f32.mrf.mxu0
      %v1595 = vadd.f32 0.0, %v1594
      %1596 = vmatmul.bf16.gmra.mxu0 %v1511
      %v1597 = vpop.f32.mrf.mxu0
      %v1598 = vadd.f32 0.0, %v1597
      %v1599 = vpop.f32.mrf.mxu0
      %v1600 = vadd.f32 0.0, %v1599
      %1601 = vmatmul.bf16.gmra.mxu0 %v1514
      %v1602 = vpop.f32.mrf.mxu0
      %v1603 = vadd.f32 0.0, %v1602
      %v1604 = vpop.f32.mrf.mxu0
      %v1605 = vadd.f32 0.0, %v1604
      %1606 = vmatmul.bf16.gmra.mxu0 %v1517
      %v1607 = vpop.f32.mrf.mxu0
      %v1608 = vadd.f32 0.0, %v1607
      %v1609 = vpop.f32.mrf.mxu0
      %v1610 = vadd.f32 0.0, %v1609
      %1611 = vmatmul.bf16.gmra.mxu0 %v1520
      %v1612 = vpop.f32.mrf.mxu0
      %v1613 = vadd.f32 0.0, %v1612
      %v1614 = vpop.f32.mrf.mxu0
      %v1615 = vadd.f32 0.0, %v1614
      %1616 = vmatmul.bf16.gmra.mxu0 %v1523
      %v1617 = vpop.f32.mrf.mxu0
      %v1618 = vadd.f32 0.0, %v1617
      %v1619 = vpop.f32.mrf.mxu0
      %v1620 = vadd.f32 0.0, %v1619
      %1621 = vmatmul.bf16.gmra.mxu0 %v1526
      %v1622 = vpop.f32.mrf.mxu0
      %v1623 = vadd.f32 0.0, %v1622
      %v1624 = vpop.f32.mrf.mxu0
      %v1625 = vadd.f32 0.0, %v1624
      %1626 = vdwg.mxu0
      %v1627 = vadd.f32 %v1367, %v1538
      %v1628 = vadd.f32 %v1368, %v1540
      %v1629 = vadd.f32 %v1369, %v1543
      %v1630 = vadd.f32 %v1370, %v1545
      %v1631 = vadd.f32 %v1371, %v1548
      %v1632 = vadd.f32 %v1372, %v1550
      %v1633 = vadd.f32 %v1373, %v1553
      %v1634 = vadd.f32 %v1374, %v1555
      %v1635 = vadd.f32 %v1375, %v1558
      %v1636 = vadd.f32 %v1376, %v1560
      %v1637 = vadd.f32 %v1377, %v1563
      %v1638 = vadd.f32 %v1378, %v1565
      %v1639 = vadd.f32 %v1379, %v1568
      %v1640 = vadd.f32 %v1380, %v1570
      %v1641 = vadd.f32 %v1381, %v1573
      %v1642 = vadd.f32 %v1382, %v1575
      %v1643 = vadd.f32 %v1383, %v1578
      %v1644 = vadd.f32 %v1384, %v1580
      %v1645 = vadd.f32 %v1385, %v1583
      %v1646 = vadd.f32 %v1386, %v1585
      %v1647 = vadd.f32 %v1387, %v1588
      %v1648 = vadd.f32 %v1388, %v1590
      %v1649 = vadd.f32 %v1389, %v1593
      %v1650 = vadd.f32 %v1390, %v1595
      %v1651 = vadd.f32 %v1391, %v1598
      %v1652 = vadd.f32 %v1392, %v1600
      %v1653 = vadd.f32 %v1393, %v1603
      %v1654 = vadd.f32 %v1394, %v1605
      %v1655 = vadd.f32 %v1395, %v1608
      %v1656 = vadd.f32 %v1396, %v1610
      %v1657 = vadd.f32 %v1397, %v1613
      %v1658 = vadd.f32 %v1398, %v1615
      %v1659 = vadd.f32 %v1399, %v1618
      %v1660 = vadd.f32 %v1400, %v1620
      %v1661 = vadd.f32 %v1401, %v1623
      %v1662 = vadd.f32 %v1402, %v1625
      %v1663 = vld [vmem:[%s388 + $0x14] sm:$0xff]
      %v1664 = vld [vmem:[%s388 + $0x1c] sm:$0xff]
      %v1665 = vld [vmem:[%s388 + $0x24] sm:$0xff]
      %v1666 = vld [vmem:[%s388 + $0x2c] sm:$0xff]
      %v1667 = vld [vmem:[%s388 + $0x34] sm:$0xff]
      %v1668 = vld [vmem:[%s388 + $0x3c] sm:$0xff]
      %v1669 = vld [vmem:[%s388 + $0x44] sm:$0xff]
      %v1670 = vld [vmem:[%s388 + $0x4c] sm:$0xff]
      %v1671 = vld [vmem:[%s388 + $0x54] sm:$0xff]
      %v1672 = vld [vmem:[%s388 + $0x5c] sm:$0xff]
      %v1673 = vld [vmem:[%s388 + $0x64] sm:$0xff]
      %v1674 = vld [vmem:[%s388 + $0x6c] sm:$0xff]
      %v1675 = vld [vmem:[%s388 + $0x74] sm:$0xff]
      %v1676 = vld [vmem:[%s388 + $0x7c] sm:$0xff]
      %v1677 = vld [vmem:[%s388 + $0x84] sm:$0xff]
      %v1678 = vld [vmem:[%s388 + $0x8c] sm:$0xff]
      %v1679 = vld [vmem:[%s388 + $0x94] sm:$0xff]
      %v1680 = vld [vmem:[%s388 + $0x9c] sm:$0xff]
      %v1681 = vld [vmem:[%s388 + $0xa4] sm:$0xff]
      %v1682 = vld [vmem:[%s388 + $0xac] sm:$0xff]
      %v1683 = vld [vmem:[%s388 + $0xb4] sm:$0xff]
      %v1684 = vld [vmem:[%s388 + $0xbc] sm:$0xff]
      %v1685 = vld [vmem:[%s388 + $0xc4] sm:$0xff]
      %v1686 = vld [vmem:[%s388 + $0xcc] sm:$0xff]
      %v1687 = vld [vmem:[%s388 + $0xd4] sm:$0xff]
      %v1688 = vld [vmem:[%s388 + $0xdc] sm:$0xff]
      %v1689 = vld [vmem:[%s388 + $0xe4] sm:$0xff]
      %v1690 = vld [vmem:[%s388 + $0xec] sm:$0xff]
      %v1691 = vld [vmem:[%s388 + $0xf4] sm:$0xff]
      %v1692 = vld [vmem:[%s388 + $0xfc] sm:$0xff]
      %v1693 = vld [vmem:[%s388 + $0x104] sm:$0xff]
      %v1694 = vld [vmem:[%s388 + $0x10c] sm:$0xff]
      %v1695 = vld [vmem:[%s388 + $0x114] sm:$0xff]
      %v1696 = vld [vmem:[%s388 + $0x11c] sm:$0xff]
      %v1697 = vld [vmem:[%s388 + $0x124] sm:$0xff]
      %v1698 = vld [vmem:[%s388 + $0x12c] sm:$0x3f]
      %v1699 = vpack.c.bf16 %v1664, %v1663
      %v1700 = vpack.c.bf16 %v1666, %v1665
      %v1701 = vpack.c.bf16 %v1668, %v1667
      %v1702 = vpack.c.bf16 %v1670, %v1669
      %v1703 = vpack.c.bf16 %v1672, %v1671
      %v1704 = vpack.c.bf16 %v1674, %v1673
      %v1705 = vpack.c.bf16 %v1676, %v1675
      %v1706 = vpack.c.bf16 %v1678, %v1677
      %v1707 = vpack.c.bf16 %v1680, %v1679
      %v1708 = vpack.c.bf16 %v1682, %v1681
      %v1709 = vpack.c.bf16 %v1684, %v1683
      %v1710 = vpack.c.bf16 %v1686, %v1685
      %v1711 = vpack.c.bf16 %v1688, %v1687
      %v1712 = vpack.c.bf16 %v1690, %v1689
      %v1713 = vpack.c.bf16 %v1692, %v1691
      %v1714 = vpack.c.bf16 %v1694, %v1693
      %v1715 = vpack.c.bf16 %v1696, %v1695
      %v1716 = vpack.c.bf16 %v1698, %v1697
      %s1717 = scalar_lea.vmem %s3, 80
      %v1718 = vld [vmem:[%s1717] sm:$0xf]
      %v1719 = vld [vmem:[%s1717 + $0x4] sm:$0xf]
      %v1720 = vld [vmem:[%s1717 + $0x8] sm:$0xf]
      %v1721 = vld [vmem:[%s1717 + $0xc] sm:$0xf]
      %v1726 = vunpack.c.l.b16 %v1718
      %v1727 = vunpack.c.l.b16 %v1719
      %v1728 = vunpack.c.l.b16 %v1720
      %v1729 = vunpack.c.l.b16 %v1721
      %v1730 = vpack.c.b16 %v1727, %v1726
      %v1731 = vpack.c.b16 %v1729, %v1728
      %v1735 = vsel %vm564, %v1699, 0
      %v1738 = vsel %vm564, %v1700, 0
      %v1741 = vsel %vm564, %v1701, 0
      %v1744 = vsel %vm564, %v1702, 0
      %v1747 = vsel %vm564, %v1703, 0
      %v1750 = vsel %vm564, %v1704, 0
      %v1753 = vsel %vm564, %v1705, 0
      %v1756 = vsel %vm564, %v1706, 0
      %v1759 = vsel %vm564, %v1707, 0
      %v1762 = vsel %vm564, %v1708, 0
      %v1765 = vsel %vm564, %v1709, 0
      %v1768 = vsel %vm564, %v1710, 0
      %v1771 = vsel %vm564, %v1711, 0
      %v1774 = vsel %vm564, %v1712, 0
      %v1777 = vsel %vm564, %v1713, 0
      %v1780 = vsel %vm564, %v1714, 0
      %v1783 = vsel %vm564, %v1715, 0
      %v1786 = vsel %vm564, %v1716, 0
      %1788 = vmatpush.bf16.msra.mxu0 0
      %1789 = vmatpush.bf16.msra.mxu0 0
      %1790 = vmatpush.bf16.msra.mxu0 0
      %1791 = vmatpush.bf16.msra.mxu0 0
      %1792 = vmatpush.bf16.msra.mxu0 0
      %1793 = vmatpush.bf16.msra.mxu0 0
      %1794 = vmatpush.bf16.msra.mxu0 %v1731
      %1795 = vmatpush.bf16.msra.mxu0 %v1730
      %1796 = vmatmul.bf16.gmra.mxu0 %v1735
      %v1797 = vpop.f32.mrf.mxu0
      %v1798 = vadd.f32 0.0, %v1797
      %v1799 = vpop.f32.mrf.mxu0
      %v1800 = vadd.f32 0.0, %v1799
      %1801 = vmatmul.bf16.gmra.mxu0 %v1738
      %v1802 = vpop.f32.mrf.mxu0
      %v1803 = vadd.f32 0.0, %v1802
      %v1804 = vpop.f32.mrf.mxu0
      %v1805 = vadd.f32 0.0, %v1804
      %1806 = vmatmul.bf16.gmra.mxu0 %v1741
      %v1807 = vpop.f32.mrf.mxu0
      %v1808 = vadd.f32 0.0, %v1807
      %v1809 = vpop.f32.mrf.mxu0
      %v1810 = vadd.f32 0.0, %v1809
      %1811 = vmatmul.bf16.gmra.mxu0 %v1744
      %v1812 = vpop.f32.mrf.mxu0
      %v1813 = vadd.f32 0.0, %v1812
      %v1814 = vpop.f32.mrf.mxu0
      %v1815 = vadd.f32 0.0, %v1814
      %1816 = vmatmul.bf16.gmra.mxu0 %v1747
      %v1817 = vpop.f32.mrf.mxu0
      %v1818 = vadd.f32 0.0, %v1817
      %v1819 = vpop.f32.mrf.mxu0
      %v1820 = vadd.f32 0.0, %v1819
      %1821 = vmatmul.bf16.gmra.mxu0 %v1750
      %v1822 = vpop.f32.mrf.mxu0
      %v1823 = vadd.f32 0.0, %v1822
      %v1824 = vpop.f32.mrf.mxu0
      %v1825 = vadd.f32 0.0, %v1824
      %1826 = vmatmul.bf16.gmra.mxu0 %v1753
      %v1827 = vpop.f32.mrf.mxu0
      %v1828 = vadd.f32 0.0, %v1827
      %v1829 = vpop.f32.mrf.mxu0
      %v1830 = vadd.f32 0.0, %v1829
      %1831 = vmatmul.bf16.gmra.mxu0 %v1756
      %v1832 = vpop.f32.mrf.mxu0
      %v1833 = vadd.f32 0.0, %v1832
      %v1834 = vpop.f32.mrf.mxu0
      %v1835 = vadd.f32 0.0, %v1834
      %1836 = vmatmul.bf16.gmra.mxu0 %v1759
      %v1837 = vpop.f32.mrf.mxu0
      %v1838 = vadd.f32 0.0, %v1837
      %v1839 = vpop.f32.mrf.mxu0
      %v1840 = vadd.f32 0.0, %v1839
      %1841 = vmatmul.bf16.gmra.mxu0 %v1762
      %v1842 = vpop.f32.mrf.mxu0
      %v1843 = vadd.f32 0.0, %v1842
      %v1844 = vpop.f32.mrf.mxu0
      %v1845 = vadd.f32 0.0, %v1844
      %1846 = vmatmul.bf16.gmra.mxu0 %v1765
      %v1847 = vpop.f32.mrf.mxu0
      %v1848 = vadd.f32 0.0, %v1847
      %v1849 = vpop.f32.mrf.mxu0
      %v1850 = vadd.f32 0.0, %v1849
      %1851 = vmatmul.bf16.gmra.mxu0 %v1768
      %v1852 = vpop.f32.mrf.mxu0
      %v1853 = vadd.f32 0.0, %v1852
      %v1854 = vpop.f32.mrf.mxu0
      %v1855 = vadd.f32 0.0, %v1854
      %1856 = vmatmul.bf16.gmra.mxu0 %v1771
      %v1857 = vpop.f32.mrf.mxu0
      %v1858 = vadd.f32 0.0, %v1857
      %v1859 = vpop.f32.mrf.mxu0
      %v1860 = vadd.f32 0.0, %v1859
      %1861 = vmatmul.bf16.gmra.mxu0 %v1774
      %v1862 = vpop.f32.mrf.mxu0
      %v1863 = vadd.f32 0.0, %v1862
      %v1864 = vpop.f32.mrf.mxu0
      %v1865 = vadd.f32 0.0, %v1864
      %1866 = vmatmul.bf16.gmra.mxu0 %v1777
      %v1867 = vpop.f32.mrf.mxu0
      %v1868 = vadd.f32 0.0, %v1867
      %v1869 = vpop.f32.mrf.mxu0
      %v1870 = vadd.f32 0.0, %v1869
      %1871 = vmatmul.bf16.gmra.mxu0 %v1780
      %v1872 = vpop.f32.mrf.mxu0
      %v1873 = vadd.f32 0.0, %v1872
      %v1874 = vpop.f32.mrf.mxu0
      %v1875 = vadd.f32 0.0, %v1874
      %1876 = vmatmul.bf16.gmra.mxu0 %v1783
      %v1877 = vpop.f32.mrf.mxu0
      %v1878 = vadd.f32 0.0, %v1877
      %v1879 = vpop.f32.mrf.mxu0
      %v1880 = vadd.f32 0.0, %v1879
      %1881 = vmatmul.bf16.gmra.mxu0 %v1786
      %v1882 = vpop.f32.mrf.mxu0
      %v1883 = vadd.f32 0.0, %v1882
      %v1884 = vpop.f32.mrf.mxu0
      %v1885 = vadd.f32 0.0, %v1884
      %1886 = vdwg.mxu0
      %v1887 = vadd.f32 %v1627, %v1798
      %v1888 = vadd.f32 %v1628, %v1800
      %v1889 = vadd.f32 %v1629, %v1803
      %v1890 = vadd.f32 %v1630, %v1805
      %v1891 = vadd.f32 %v1631, %v1808
      %v1892 = vadd.f32 %v1632, %v1810
      %v1893 = vadd.f32 %v1633, %v1813
      %v1894 = vadd.f32 %v1634, %v1815
      %v1895 = vadd.f32 %v1635, %v1818
      %v1896 = vadd.f32 %v1636, %v1820
      %v1897 = vadd.f32 %v1637, %v1823
      %v1898 = vadd.f32 %v1638, %v1825
      %v1899 = vadd.f32 %v1639, %v1828
      %v1900 = vadd.f32 %v1640, %v1830
      %v1901 = vadd.f32 %v1641, %v1833
      %v1902 = vadd.f32 %v1642, %v1835
      %v1903 = vadd.f32 %v1643, %v1838
      %v1904 = vadd.f32 %v1644, %v1840
      %v1905 = vadd.f32 %v1645, %v1843
      %v1906 = vadd.f32 %v1646, %v1845
      %v1907 = vadd.f32 %v1647, %v1848
      %v1908 = vadd.f32 %v1648, %v1850
      %v1909 = vadd.f32 %v1649, %v1853
      %v1910 = vadd.f32 %v1650, %v1855
      %v1911 = vadd.f32 %v1651, %v1858
      %v1912 = vadd.f32 %v1652, %v1860
      %v1913 = vadd.f32 %v1653, %v1863
      %v1914 = vadd.f32 %v1654, %v1865
      %v1915 = vadd.f32 %v1655, %v1868
      %v1916 = vadd.f32 %v1656, %v1870
      %v1917 = vadd.f32 %v1657, %v1873
      %v1918 = vadd.f32 %v1658, %v1875
      %v1919 = vadd.f32 %v1659, %v1878
      %v1920 = vadd.f32 %v1660, %v1880
      %v1921 = vadd.f32 %v1661, %v1883
      %v1922 = vadd.f32 %v1662, %v1885
      %v1923 = vld [vmem:[%s388 + $0x24] sm:$0xff]
      %v1924 = vld [vmem:[%s388 + $0x2c] sm:$0xff]
      %v1925 = vld [vmem:[%s388 + $0x34] sm:$0xff]
      %v1926 = vld [vmem:[%s388 + $0x3c] sm:$0xff]
      %v1927 = vld [vmem:[%s388 + $0x44] sm:$0xff]
      %v1928 = vld [vmem:[%s388 + $0x4c] sm:$0xff]
      %v1929 = vld [vmem:[%s388 + $0x54] sm:$0xff]
      %v1930 = vld [vmem:[%s388 + $0x5c] sm:$0xff]
      %v1931 = vld [vmem:[%s388 + $0x64] sm:$0xff]
      %v1932 = vld [vmem:[%s388 + $0x6c] sm:$0xff]
      %v1933 = vld [vmem:[%s388 + $0x74] sm:$0xff]
      %v1934 = vld [vmem:[%s388 + $0x7c] sm:$0xff]
      %v1935 = vld [vmem:[%s388 + $0x84] sm:$0xff]
      %v1936 = vld [vmem:[%s388 + $0x8c] sm:$0xff]
      %v1937 = vld [vmem:[%s388 + $0x94] sm:$0xff]
      %v1938 = vld [vmem:[%s388 + $0x9c] sm:$0xff]
      %v1939 = vld [vmem:[%s388 + $0xa4] sm:$0xff]
      %v1940 = vld [vmem:[%s388 + $0xac] sm:$0xff]
      %v1941 = vld [vmem:[%s388 + $0xb4] sm:$0xff]
      %v1942 = vld [vmem:[%s388 + $0xbc] sm:$0xff]
      %v1943 = vld [vmem:[%s388 + $0xc4] sm:$0xff]
      %v1944 = vld [vmem:[%s388 + $0xcc] sm:$0xff]
      %v1945 = vld [vmem:[%s388 + $0xd4] sm:$0xff]
      %v1946 = vld [vmem:[%s388 + $0xdc] sm:$0xff]
      %v1947 = vld [vmem:[%s388 + $0xe4] sm:$0xff]
      %v1948 = vld [vmem:[%s388 + $0xec] sm:$0xff]
      %v1949 = vld [vmem:[%s388 + $0xf4] sm:$0xff]
      %v1950 = vld [vmem:[%s388 + $0xfc] sm:$0xff]
      %v1951 = vld [vmem:[%s388 + $0x104] sm:$0xff]
      %v1952 = vld [vmem:[%s388 + $0x10c] sm:$0xff]
      %v1953 = vld [vmem:[%s388 + $0x114] sm:$0xff]
      %v1954 = vld [vmem:[%s388 + $0x11c] sm:$0xff]
      %v1955 = vld [vmem:[%s388 + $0x124] sm:$0xff]
      %v1956 = vld [vmem:[%s388 + $0x12c] sm:$0xff]
      %v1957 = vld [vmem:[%s388 + $0x134] sm:$0xff]
      %v1958 = vld [vmem:[%s388 + $0x13c] sm:$0x3f]
      %v1959 = vpack.c.bf16 %v1924, %v1923
      %v1960 = vpack.c.bf16 %v1926, %v1925
      %v1961 = vpack.c.bf16 %v1928, %v1927
      %v1962 = vpack.c.bf16 %v1930, %v1929
      %v1963 = vpack.c.bf16 %v1932, %v1931
      %v1964 = vpack.c.bf16 %v1934, %v1933
      %v1965 = vpack.c.bf16 %v1936, %v1935
      %v1966 = vpack.c.bf16 %v1938, %v1937
      %v1967 = vpack.c.bf16 %v1940, %v1939
      %v1968 = vpack.c.bf16 %v1942, %v1941
      %v1969 = vpack.c.bf16 %v1944, %v1943
      %v1970 = vpack.c.bf16 %v1946, %v1945
      %v1971 = vpack.c.bf16 %v1948, %v1947
      %v1972 = vpack.c.bf16 %v1950, %v1949
      %v1973 = vpack.c.bf16 %v1952, %v1951
      %v1974 = vpack.c.bf16 %v1954, %v1953
      %v1975 = vpack.c.bf16 %v1956, %v1955
      %v1976 = vpack.c.bf16 %v1958, %v1957
      %s1977 = scalar_lea.vmem %s3, 96
      %v1978 = vld [vmem:[%s1977] sm:$0xf]
      %v1979 = vld [vmem:[%s1977 + $0x4] sm:$0xf]
      %v1980 = vld [vmem:[%s1977 + $0x8] sm:$0xf]
      %v1981 = vld [vmem:[%s1977 + $0xc] sm:$0xf]
      %v1986 = vunpack.c.l.b16 %v1978
      %v1987 = vunpack.c.l.b16 %v1979
      %v1988 = vunpack.c.l.b16 %v1980
      %v1989 = vunpack.c.l.b16 %v1981
      %v1990 = vpack.c.b16 %v1987, %v1986
      %v1991 = vpack.c.b16 %v1989, %v1988
      %v1995 = vsel %vm564, %v1959, 0
      %v1998 = vsel %vm564, %v1960, 0
      %v2001 = vsel %vm564, %v1961, 0
      %v2004 = vsel %vm564, %v1962, 0
      %v2007 = vsel %vm564, %v1963, 0
      %v2010 = vsel %vm564, %v1964, 0
      %v2013 = vsel %vm564, %v1965, 0
      %v2016 = vsel %vm564, %v1966, 0
      %v2019 = vsel %vm564, %v1967, 0
      %v2022 = vsel %vm564, %v1968, 0
      %v2025 = vsel %vm564, %v1969, 0
      %v2028 = vsel %vm564, %v1970, 0
      %v2031 = vsel %vm564, %v1971, 0
      %v2034 = vsel %vm564, %v1972, 0
      %v2037 = vsel %vm564, %v1973, 0
      %v2040 = vsel %vm564, %v1974, 0
      %v2043 = vsel %vm564, %v1975, 0
      %v2046 = vsel %vm564, %v1976, 0
      %2048 = vmatpush.bf16.msra.mxu0 0
      %2049 = vmatpush.bf16.msra.mxu0 0
      %2050 = vmatpush.bf16.msra.mxu0 0
      %2051 = vmatpush.bf16.msra.mxu0 0
      %2052 = vmatpush.bf16.msra.mxu0 0
      %2053 = vmatpush.bf16.msra.mxu0 0
      %2054 = vmatpush.bf16.msra.mxu0 %v1991
      %2055 = vmatpush.bf16.msra.mxu0 %v1990
      %2056 = vmatmul.bf16.gmra.mxu0 %v1995
      %v2057 = vpop.f32.mrf.mxu0
      %v2058 = vadd.f32 0.0, %v2057
      %v2059 = vpop.f32.mrf.mxu0
      %v2060 = vadd.f32 0.0, %v2059
      %2061 = vmatmul.bf16.gmra.mxu0 %v1998
      %v2062 = vpop.f32.mrf.mxu0
      %v2063 = vadd.f32 0.0, %v2062
      %v2064 = vpop.f32.mrf.mxu0
      %v2065 = vadd.f32 0.0, %v2064
      %2066 = vmatmul.bf16.gmra.mxu0 %v2001
      %v2067 = vpop.f32.mrf.mxu0
      %v2068 = vadd.f32 0.0, %v2067
      %v2069 = vpop.f32.mrf.mxu0
      %v2070 = vadd.f32 0.0, %v2069
      %2071 = vmatmul.bf16.gmra.mxu0 %v2004
      %v2072 = vpop.f32.mrf.mxu0
      %v2073 = vadd.f32 0.0, %v2072
      %v2074 = vpop.f32.mrf.mxu0
      %v2075 = vadd.f32 0.0, %v2074
      %2076 = vmatmul.bf16.gmra.mxu0 %v2007
      %v2077 = vpop.f32.mrf.mxu0
      %v2078 = vadd.f32 0.0, %v2077
      %v2079 = vpop.f32.mrf.mxu0
      %v2080 = vadd.f32 0.0, %v2079
      %2081 = vmatmul.bf16.gmra.mxu0 %v2010
      %v2082 = vpop.f32.mrf.mxu0
      %v2083 = vadd.f32 0.0, %v2082
      %v2084 = vpop.f32.mrf.mxu0
      %v2085 = vadd.f32 0.0, %v2084
      %2086 = vmatmul.bf16.gmra.mxu0 %v2013
      %v2087 = vpop.f32.mrf.mxu0
      %v2088 = vadd.f32 0.0, %v2087
      %v2089 = vpop.f32.mrf.mxu0
      %v2090 = vadd.f32 0.0, %v2089
      %2091 = vmatmul.bf16.gmra.mxu0 %v2016
      %v2092 = vpop.f32.mrf.mxu0
      %v2093 = vadd.f32 0.0, %v2092
      %v2094 = vpop.f32.mrf.mxu0
      %v2095 = vadd.f32 0.0, %v2094
      %2096 = vmatmul.bf16.gmra.mxu0 %v2019
      %v2097 = vpop.f32.mrf.mxu0
      %v2098 = vadd.f32 0.0, %v2097
      %v2099 = vpop.f32.mrf.mxu0
      %v2100 = vadd.f32 0.0, %v2099
      %2101 = vmatmul.bf16.gmra.mxu0 %v2022
      %v2102 = vpop.f32.mrf.mxu0
      %v2103 = vadd.f32 0.0, %v2102
      %v2104 = vpop.f32.mrf.mxu0
      %v2105 = vadd.f32 0.0, %v2104
      %2106 = vmatmul.bf16.gmra.mxu0 %v2025
      %v2107 = vpop.f32.mrf.mxu0
      %v2108 = vadd.f32 0.0, %v2107
      %v2109 = vpop.f32.mrf.mxu0
      %v2110 = vadd.f32 0.0, %v2109
      %2111 = vmatmul.bf16.gmra.mxu0 %v2028
      %v2112 = vpop.f32.mrf.mxu0
      %v2113 = vadd.f32 0.0, %v2112
      %v2114 = vpop.f32.mrf.mxu0
      %v2115 = vadd.f32 0.0, %v2114
      %2116 = vmatmul.bf16.gmra.mxu0 %v2031
      %v2117 = vpop.f32.mrf.mxu0
      %v2118 = vadd.f32 0.0, %v2117
      %v2119 = vpop.f32.mrf.mxu0
      %v2120 = vadd.f32 0.0, %v2119
      %2121 = vmatmul.bf16.gmra.mxu0 %v2034
      %v2122 = vpop.f32.mrf.mxu0
      %v2123 = vadd.f32 0.0, %v2122
      %v2124 = vpop.f32.mrf.mxu0
      %v2125 = vadd.f32 0.0, %v2124
      %2126 = vmatmul.bf16.gmra.mxu0 %v2037
      %v2127 = vpop.f32.mrf.mxu0
      %v2128 = vadd.f32 0.0, %v2127
      %v2129 = vpop.f32.mrf.mxu0
      %v2130 = vadd.f32 0.0, %v2129
      %2131 = vmatmul.bf16.gmra.mxu0 %v2040
      %v2132 = vpop.f32.mrf.mxu0
      %v2133 = vadd.f32 0.0, %v2132
      %v2134 = vpop.f32.mrf.mxu0
      %v2135 = vadd.f32 0.0, %v2134
      %2136 = vmatmul.bf16.gmra.mxu0 %v2043
      %v2137 = vpop.f32.mrf.mxu0
      %v2138 = vadd.f32 0.0, %v2137
      %v2139 = vpop.f32.mrf.mxu0
      %v2140 = vadd.f32 0.0, %v2139
      %2141 = vmatmul.bf16.gmra.mxu0 %v2046
      %v2142 = vpop.f32.mrf.mxu0
      %v2143 = vadd.f32 0.0, %v2142
      %v2144 = vpop.f32.mrf.mxu0
      %v2145 = vadd.f32 0.0, %v2144
      %2146 = vdwg.mxu0
      %v2147 = vadd.f32 %v1887, %v2058
      %v2148 = vadd.f32 %v1888, %v2060
      %v2149 = vadd.f32 %v1889, %v2063
      %v2150 = vadd.f32 %v1890, %v2065
      %v2151 = vadd.f32 %v1891, %v2068
      %v2152 = vadd.f32 %v1892, %v2070
      %v2153 = vadd.f32 %v1893, %v2073
      %v2154 = vadd.f32 %v1894, %v2075
      %v2155 = vadd.f32 %v1895, %v2078
      %v2156 = vadd.f32 %v1896, %v2080
      %v2157 = vadd.f32 %v1897, %v2083
      %v2158 = vadd.f32 %v1898, %v2085
      %v2159 = vadd.f32 %v1899, %v2088
      %v2160 = vadd.f32 %v1900, %v2090
      %v2161 = vadd.f32 %v1901, %v2093
      %v2162 = vadd.f32 %v1902, %v2095
      %v2163 = vadd.f32 %v1903, %v2098
      %v2164 = vadd.f32 %v1904, %v2100
      %v2165 = vadd.f32 %v1905, %v2103
      %v2166 = vadd.f32 %v1906, %v2105
      %v2167 = vadd.f32 %v1907, %v2108
      %v2168 = vadd.f32 %v1908, %v2110
      %v2169 = vadd.f32 %v1909, %v2113
      %v2170 = vadd.f32 %v1910, %v2115
      %v2171 = vadd.f32 %v1911, %v2118
      %v2172 = vadd.f32 %v1912, %v2120
      %v2173 = vadd.f32 %v1913, %v2123
      %v2174 = vadd.f32 %v1914, %v2125
      %v2175 = vadd.f32 %v1915, %v2128
      %v2176 = vadd.f32 %v1916, %v2130
      %v2177 = vadd.f32 %v1917, %v2133
      %v2178 = vadd.f32 %v1918, %v2135
      %v2179 = vadd.f32 %v1919, %v2138
      %v2180 = vadd.f32 %v1920, %v2140
      %v2181 = vadd.f32 %v1921, %v2143
      %v2182 = vadd.f32 %v1922, %v2145
      %v2183 = vld [vmem:[%s388 + $0x25] sm:$0xff]
      %v2184 = vld [vmem:[%s388 + $0x2d] sm:$0xff]
      %v2185 = vld [vmem:[%s388 + $0x35] sm:$0xff]
      %v2186 = vld [vmem:[%s388 + $0x3d] sm:$0xff]
      %v2187 = vld [vmem:[%s388 + $0x45] sm:$0xff]
      %v2188 = vld [vmem:[%s388 + $0x4d] sm:$0xff]
      %v2189 = vld [vmem:[%s388 + $0x55] sm:$0xff]
      %v2190 = vld [vmem:[%s388 + $0x5d] sm:$0xff]
      %v2191 = vld [vmem:[%s388 + $0x65] sm:$0xff]
      %v2192 = vld [vmem:[%s388 + $0x6d] sm:$0xff]
      %v2193 = vld [vmem:[%s388 + $0x75] sm:$0xff]
      %v2194 = vld [vmem:[%s388 + $0x7d] sm:$0xff]
      %v2195 = vld [vmem:[%s388 + $0x85] sm:$0xff]
      %v2196 = vld [vmem:[%s388 + $0x8d] sm:$0xff]
      %v2197 = vld [vmem:[%s388 + $0x95] sm:$0xff]
      %v2198 = vld [vmem:[%s388 + $0x9d] sm:$0xff]
      %v2199 = vld [vmem:[%s388 + $0xa5] sm:$0xff]
      %v2200 = vld [vmem:[%s388 + $0xad] sm:$0xff]
      %v2201 = vld [vmem:[%s388 + $0xb5] sm:$0xff]
      %v2202 = vld [vmem:[%s388 + $0xbd] sm:$0xff]
      %v2203 = vld [vmem:[%s388 + $0xc5] sm:$0xff]
      %v2204 = vld [vmem:[%s388 + $0xcd] sm:$0xff]
      %v2205 = vld [vmem:[%s388 + $0xd5] sm:$0xff]
      %v2206 = vld [vmem:[%s388 + $0xdd] sm:$0xff]
      %v2207 = vld [vmem:[%s388 + $0xe5] sm:$0xff]
      %v2208 = vld [vmem:[%s388 + $0xed] sm:$0xff]
      %v2209 = vld [vmem:[%s388 + $0xf5] sm:$0xff]
      %v2210 = vld [vmem:[%s388 + $0xfd] sm:$0xff]
      %v2211 = vld [vmem:[%s388 + $0x105] sm:$0xff]
      %v2212 = vld [vmem:[%s388 + $0x10d] sm:$0xff]
      %v2213 = vld [vmem:[%s388 + $0x115] sm:$0xff]
      %v2214 = vld [vmem:[%s388 + $0x11d] sm:$0xff]
      %v2215 = vld [vmem:[%s388 + $0x125] sm:$0xff]
      %v2216 = vld [vmem:[%s388 + $0x12d] sm:$0xff]
      %v2217 = vld [vmem:[%s388 + $0x135] sm:$0xff]
      %v2218 = vld [vmem:[%s388 + $0x13d] sm:$0x3f]
      %v2219 = vpack.c.bf16 %v2184, %v2183
      %v2220 = vpack.c.bf16 %v2186, %v2185
      %v2221 = vpack.c.bf16 %v2188, %v2187
      %v2222 = vpack.c.bf16 %v2190, %v2189
      %v2223 = vpack.c.bf16 %v2192, %v2191
      %v2224 = vpack.c.bf16 %v2194, %v2193
      %v2225 = vpack.c.bf16 %v2196, %v2195
      %v2226 = vpack.c.bf16 %v2198, %v2197
      %v2227 = vpack.c.bf16 %v2200, %v2199
      %v2228 = vpack.c.bf16 %v2202, %v2201
      %v2229 = vpack.c.bf16 %v2204, %v2203
      %v2230 = vpack.c.bf16 %v2206, %v2205
      %v2231 = vpack.c.bf16 %v2208, %v2207
      %v2232 = vpack.c.bf16 %v2210, %v2209
      %v2233 = vpack.c.bf16 %v2212, %v2211
      %v2234 = vpack.c.bf16 %v2214, %v2213
      %v2235 = vpack.c.bf16 %v2216, %v2215
      %v2236 = vpack.c.bf16 %v2218, %v2217
      %s2237 = scalar_lea.vmem %s3, 112
      %v2238 = vld [vmem:[%s2237] sm:$0xf]
      %v2239 = vld [vmem:[%s2237 + $0x4] sm:$0xf]
      %v2240 = vld [vmem:[%s2237 + $0x8] sm:$0xf]
      %v2241 = vld [vmem:[%s2237 + $0xc] sm:$0xf]
      %v2246 = vunpack.c.l.b16 %v2238
      %v2247 = vunpack.c.l.b16 %v2239
      %v2248 = vunpack.c.l.b16 %v2240
      %v2249 = vunpack.c.l.b16 %v2241
      %v2250 = vpack.c.b16 %v2247, %v2246
      %v2251 = vpack.c.b16 %v2249, %v2248
      %v2255 = vsel %vm564, %v2219, 0
      %v2258 = vsel %vm564, %v2220, 0
      %v2261 = vsel %vm564, %v2221, 0
      %v2264 = vsel %vm564, %v2222, 0
      %v2267 = vsel %vm564, %v2223, 0
      %v2270 = vsel %vm564, %v2224, 0
      %v2273 = vsel %vm564, %v2225, 0
      %v2276 = vsel %vm564, %v2226, 0
      %v2279 = vsel %vm564, %v2227, 0
      %v2282 = vsel %vm564, %v2228, 0
      %v2285 = vsel %vm564, %v2229, 0
      %v2288 = vsel %vm564, %v2230, 0
      %v2291 = vsel %vm564, %v2231, 0
      %v2294 = vsel %vm564, %v2232, 0
      %v2297 = vsel %vm564, %v2233, 0
      %v2300 = vsel %vm564, %v2234, 0
      %v2303 = vsel %vm564, %v2235, 0
      %v2306 = vsel %vm564, %v2236, 0
      %2308 = vmatpush.bf16.msra.mxu0 0
      %2309 = vmatpush.bf16.msra.mxu0 0
      %2310 = vmatpush.bf16.msra.mxu0 0
      %2311 = vmatpush.bf16.msra.mxu0 0
      %2312 = vmatpush.bf16.msra.mxu0 0
      %2313 = vmatpush.bf16.msra.mxu0 0
      %2314 = vmatpush.bf16.msra.mxu0 %v2251
      %2315 = vmatpush.bf16.msra.mxu0 %v2250
      %2316 = vmatmul.bf16.gmra.mxu0 %v2255
      %v2317 = vpop.f32.mrf.mxu0
      %v2318 = vadd.f32 0.0, %v2317
      %v2319 = vpop.f32.mrf.mxu0
      %v2320 = vadd.f32 0.0, %v2319
      %2321 = vmatmul.bf16.gmra.mxu0 %v2258
      %v2322 = vpop.f32.mrf.mxu0
      %v2323 = vadd.f32 0.0, %v2322
      %v2324 = vpop.f32.mrf.mxu0
      %v2325 = vadd.f32 0.0, %v2324
      %2326 = vmatmul.bf16.gmra.mxu0 %v2261
      %v2327 = vpop.f32.mrf.mxu0
      %v2328 = vadd.f32 0.0, %v2327
      %v2329 = vpop.f32.mrf.mxu0
      %v2330 = vadd.f32 0.0, %v2329
      %2331 = vmatmul.bf16.gmra.mxu0 %v2264
      %v2332 = vpop.f32.mrf.mxu0
      %v2333 = vadd.f32 0.0, %v2332
      %v2334 = vpop.f32.mrf.mxu0
      %v2335 = vadd.f32 0.0, %v2334
      %2336 = vmatmul.bf16.gmra.mxu0 %v2267
      %v2337 = vpop.f32.mrf.mxu0
      %v2338 = vadd.f32 0.0, %v2337
      %v2339 = vpop.f32.mrf.mxu0
      %v2340 = vadd.f32 0.0, %v2339
      %2341 = vmatmul.bf16.gmra.mxu0 %v2270
      %v2342 = vpop.f32.mrf.mxu0
      %v2343 = vadd.f32 0.0, %v2342
      %v2344 = vpop.f32.mrf.mxu0
      %v2345 = vadd.f32 0.0, %v2344
      %2346 = vmatmul.bf16.gmra.mxu0 %v2273
      %v2347 = vpop.f32.mrf.mxu0
      %v2348 = vadd.f32 0.0, %v2347
      %v2349 = vpop.f32.mrf.mxu0
      %v2350 = vadd.f32 0.0, %v2349
      %2351 = vmatmul.bf16.gmra.mxu0 %v2276
      %v2352 = vpop.f32.mrf.mxu0
      %v2353 = vadd.f32 0.0, %v2352
      %v2354 = vpop.f32.mrf.mxu0
      %v2355 = vadd.f32 0.0, %v2354
      %2356 = vmatmul.bf16.gmra.mxu0 %v2279
      %v2357 = vpop.f32.mrf.mxu0
      %v2358 = vadd.f32 0.0, %v2357
      %v2359 = vpop.f32.mrf.mxu0
      %v2360 = vadd.f32 0.0, %v2359
      %2361 = vmatmul.bf16.gmra.mxu0 %v2282
      %v2362 = vpop.f32.mrf.mxu0
      %v2363 = vadd.f32 0.0, %v2362
      %v2364 = vpop.f32.mrf.mxu0
      %v2365 = vadd.f32 0.0, %v2364
      %2366 = vmatmul.bf16.gmra.mxu0 %v2285
      %v2367 = vpop.f32.mrf.mxu0
      %v2368 = vadd.f32 0.0, %v2367
      %v2369 = vpop.f32.mrf.mxu0
      %v2370 = vadd.f32 0.0, %v2369
      %2371 = vmatmul.bf16.gmra.mxu0 %v2288
      %v2372 = vpop.f32.mrf.mxu0
      %v2373 = vadd.f32 0.0, %v2372
      %v2374 = vpop.f32.mrf.mxu0
      %v2375 = vadd.f32 0.0, %v2374
      %2376 = vmatmul.bf16.gmra.mxu0 %v2291
      %v2377 = vpop.f32.mrf.mxu0
      %v2378 = vadd.f32 0.0, %v2377
      %v2379 = vpop.f32.mrf.mxu0
      %v2380 = vadd.f32 0.0, %v2379
      %2381 = vmatmul.bf16.gmra.mxu0 %v2294
      %v2382 = vpop.f32.mrf.mxu0
      %v2383 = vadd.f32 0.0, %v2382
      %v2384 = vpop.f32.mrf.mxu0
      %v2385 = vadd.f32 0.0, %v2384
      %2386 = vmatmul.bf16.gmra.mxu0 %v2297
      %v2387 = vpop.f32.mrf.mxu0
      %v2388 = vadd.f32 0.0, %v2387
      %v2389 = vpop.f32.mrf.mxu0
      %v2390 = vadd.f32 0.0, %v2389
      %2391 = vmatmul.bf16.gmra.mxu0 %v2300
      %v2392 = vpop.f32.mrf.mxu0
      %v2393 = vadd.f32 0.0, %v2392
      %v2394 = vpop.f32.mrf.mxu0
      %v2395 = vadd.f32 0.0, %v2394
      %2396 = vmatmul.bf16.gmra.mxu0 %v2303
      %v2397 = vpop.f32.mrf.mxu0
      %v2398 = vadd.f32 0.0, %v2397
      %v2399 = vpop.f32.mrf.mxu0
      %v2400 = vadd.f32 0.0, %v2399
      %2401 = vmatmul.bf16.gmra.mxu0 %v2306
      %v2402 = vpop.f32.mrf.mxu0
      %v2403 = vadd.f32 0.0, %v2402
      %v2404 = vpop.f32.mrf.mxu0
      %v2405 = vadd.f32 0.0, %v2404
      %2406 = vdwg.mxu0
      %v2407 = vadd.f32 %v2147, %v2318
      %v2408 = vadd.f32 %v2148, %v2320
      %v2409 = vadd.f32 %v2149, %v2323
      %v2410 = vadd.f32 %v2150, %v2325
      %v2411 = vadd.f32 %v2151, %v2328
      %v2412 = vadd.f32 %v2152, %v2330
      %v2413 = vadd.f32 %v2153, %v2333
      %v2414 = vadd.f32 %v2154, %v2335
      %v2415 = vadd.f32 %v2155, %v2338
      %v2416 = vadd.f32 %v2156, %v2340
      %v2417 = vadd.f32 %v2157, %v2343
      %v2418 = vadd.f32 %v2158, %v2345
      %v2419 = vadd.f32 %v2159, %v2348
      %v2420 = vadd.f32 %v2160, %v2350
      %v2421 = vadd.f32 %v2161, %v2353
      %v2422 = vadd.f32 %v2162, %v2355
      %v2423 = vadd.f32 %v2163, %v2358
      %v2424 = vadd.f32 %v2164, %v2360
      %v2425 = vadd.f32 %v2165, %v2363
      %v2426 = vadd.f32 %v2166, %v2365
      %v2427 = vadd.f32 %v2167, %v2368
      %v2428 = vadd.f32 %v2168, %v2370
      %v2429 = vadd.f32 %v2169, %v2373
      %v2430 = vadd.f32 %v2170, %v2375
      %v2431 = vadd.f32 %v2171, %v2378
      %v2432 = vadd.f32 %v2172, %v2380
      %v2433 = vadd.f32 %v2173, %v2383
      %v2434 = vadd.f32 %v2174, %v2385
      %v2435 = vadd.f32 %v2175, %v2388
      %v2436 = vadd.f32 %v2176, %v2390
      %v2437 = vadd.f32 %v2177, %v2393
      %v2438 = vadd.f32 %v2178, %v2395
      %v2439 = vadd.f32 %v2179, %v2398
      %v2440 = vadd.f32 %v2180, %v2400
      %v2441 = vadd.f32 %v2181, %v2403
      %v2442 = vadd.f32 %v2182, %v2405
      %v2443 = vld [vmem:[%s388 + $0x26] sm:$0xff]
      %v2444 = vld [vmem:[%s388 + $0x2e] sm:$0xff]
      %v2445 = vld [vmem:[%s388 + $0x36] sm:$0xff]
      %v2446 = vld [vmem:[%s388 + $0x3e] sm:$0xff]
      %v2447 = vld [vmem:[%s388 + $0x46] sm:$0xff]
      %v2448 = vld [vmem:[%s388 + $0x4e] sm:$0xff]
      %v2449 = vld [vmem:[%s388 + $0x56] sm:$0xff]
      %v2450 = vld [vmem:[%s388 + $0x5e] sm:$0xff]
      %v2451 = vld [vmem:[%s388 + $0x66] sm:$0xff]
      %v2452 = vld [vmem:[%s388 + $0x6e] sm:$0xff]
      %v2453 = vld [vmem:[%s388 + $0x76] sm:$0xff]
      %v2454 = vld [vmem:[%s388 + $0x7e] sm:$0xff]
      %v2455 = vld [vmem:[%s388 + $0x86] sm:$0xff]
      %v2456 = vld [vmem:[%s388 + $0x8e] sm:$0xff]
      %v2457 = vld [vmem:[%s388 + $0x96] sm:$0xff]
      %v2458 = vld [vmem:[%s388 + $0x9e] sm:$0xff]
      %v2459 = vld [vmem:[%s388 + $0xa6] sm:$0xff]
      %v2460 = vld [vmem:[%s388 + $0xae] sm:$0xff]
      %v2461 = vld [vmem:[%s388 + $0xb6] sm:$0xff]
      %v2462 = vld [vmem:[%s388 + $0xbe] sm:$0xff]
      %v2463 = vld [vmem:[%s388 + $0xc6] sm:$0xff]
      %v2464 = vld [vmem:[%s388 + $0xce] sm:$0xff]
      %v2465 = vld [vmem:[%s388 + $0xd6] sm:$0xff]
      %v2466 = vld [vmem:[%s388 + $0xde] sm:$0xff]
      %v2467 = vld [vmem:[%s388 + $0xe6] sm:$0xff]
      %v2468 = vld [vmem:[%s388 + $0xee] sm:$0xff]
      %v2469 = vld [vmem:[%s388 + $0xf6] sm:$0xff]
      %v2470 = vld [vmem:[%s388 + $0xfe] sm:$0xff]
      %v2471 = vld [vmem:[%s388 + $0x106] sm:$0xff]
      %v2472 = vld [vmem:[%s388 + $0x10e] sm:$0xff]
      %v2473 = vld [vmem:[%s388 + $0x116] sm:$0xff]
      %v2474 = vld [vmem:[%s388 + $0x11e] sm:$0xff]
      %v2475 = vld [vmem:[%s388 + $0x126] sm:$0xff]
      %v2476 = vld [vmem:[%s388 + $0x12e] sm:$0xff]
      %v2477 = vld [vmem:[%s388 + $0x136] sm:$0xff]
      %v2478 = vld [vmem:[%s388 + $0x13e] sm:$0x3f]
      %v2479 = vpack.c.bf16 %v2444, %v2443
      %v2480 = vpack.c.bf16 %v2446, %v2445
      %v2481 = vpack.c.bf16 %v2448, %v2447
      %v2482 = vpack.c.bf16 %v2450, %v2449
      %v2483 = vpack.c.bf16 %v2452, %v2451
      %v2484 = vpack.c.bf16 %v2454, %v2453
      %v2485 = vpack.c.bf16 %v2456, %v2455
      %v2486 = vpack.c.bf16 %v2458, %v2457
      %v2487 = vpack.c.bf16 %v2460, %v2459
      %v2488 = vpack.c.bf16 %v2462, %v2461
      %v2489 = vpack.c.bf16 %v2464, %v2463
      %v2490 = vpack.c.bf16 %v2466, %v2465
      %v2491 = vpack.c.bf16 %v2468, %v2467
      %v2492 = vpack.c.bf16 %v2470, %v2469
      %v2493 = vpack.c.bf16 %v2472, %v2471
      %v2494 = vpack.c.bf16 %v2474, %v2473
      %v2495 = vpack.c.bf16 %v2476, %v2475
      %v2496 = vpack.c.bf16 %v2478, %v2477
      %s2497 = scalar_lea.vmem %s3, 128
      %v2498 = vld [vmem:[%s2497] sm:$0xf]
      %v2499 = vld [vmem:[%s2497 + $0x4] sm:$0xf]
      %v2500 = vld [vmem:[%s2497 + $0x8] sm:$0xf]
      %v2501 = vld [vmem:[%s2497 + $0xc] sm:$0xf]
      %v2506 = vunpack.c.l.b16 %v2498
      %v2507 = vunpack.c.l.b16 %v2499
      %v2508 = vunpack.c.l.b16 %v2500
      %v2509 = vunpack.c.l.b16 %v2501
      %v2510 = vpack.c.b16 %v2507, %v2506
      %v2511 = vpack.c.b16 %v2509, %v2508
      %v2515 = vsel %vm564, %v2479, 0
      %v2518 = vsel %vm564, %v2480, 0
      %v2521 = vsel %vm564, %v2481, 0
      %v2524 = vsel %vm564, %v2482, 0
      %v2527 = vsel %vm564, %v2483, 0
      %v2530 = vsel %vm564, %v2484, 0
      %v2533 = vsel %vm564, %v2485, 0
      %v2536 = vsel %vm564, %v2486, 0
      %v2539 = vsel %vm564, %v2487, 0
      %v2542 = vsel %vm564, %v2488, 0
      %v2545 = vsel %vm564, %v2489, 0
      %v2548 = vsel %vm564, %v2490, 0
      %v2551 = vsel %vm564, %v2491, 0
      %v2554 = vsel %vm564, %v2492, 0
      %v2557 = vsel %vm564, %v2493, 0
      %v2560 = vsel %vm564, %v2494, 0
      %v2563 = vsel %vm564, %v2495, 0
      %v2566 = vsel %vm564, %v2496, 0
      %2568 = vmatpush.bf16.msra.mxu0 0
      %2569 = vmatpush.bf16.msra.mxu0 0
      %2570 = vmatpush.bf16.msra.mxu0 0
      %2571 = vmatpush.bf16.msra.mxu0 0
      %2572 = vmatpush.bf16.msra.mxu0 0
      %2573 = vmatpush.bf16.msra.mxu0 0
      %2574 = vmatpush.bf16.msra.mxu0 %v2511
      %2575 = vmatpush.bf16.msra.mxu0 %v2510
      %2576 = vmatmul.bf16.gmra.mxu0 %v2515
      %v2577 = vpop.f32.mrf.mxu0
      %v2578 = vadd.f32 0.0, %v2577
      %v2579 = vpop.f32.mrf.mxu0
      %v2580 = vadd.f32 0.0, %v2579
      %2581 = vmatmul.bf16.gmra.mxu0 %v2518
      %v2582 = vpop.f32.mrf.mxu0
      %v2583 = vadd.f32 0.0, %v2582
      %v2584 = vpop.f32.mrf.mxu0
      %v2585 = vadd.f32 0.0, %v2584
      %2586 = vmatmul.bf16.gmra.mxu0 %v2521
      %v2587 = vpop.f32.mrf.mxu0
      %v2588 = vadd.f32 0.0, %v2587
      %v2589 = vpop.f32.mrf.mxu0
      %v2590 = vadd.f32 0.0, %v2589
      %2591 = vmatmul.bf16.gmra.mxu0 %v2524
      %v2592 = vpop.f32.mrf.mxu0
      %v2593 = vadd.f32 0.0, %v2592
      %v2594 = vpop.f32.mrf.mxu0
      %v2595 = vadd.f32 0.0, %v2594
      %2596 = vmatmul.bf16.gmra.mxu0 %v2527
      %v2597 = vpop.f32.mrf.mxu0
      %v2598 = vadd.f32 0.0, %v2597
      %v2599 = vpop.f32.mrf.mxu0
      %v2600 = vadd.f32 0.0, %v2599
      %2601 = vmatmul.bf16.gmra.mxu0 %v2530
      %v2602 = vpop.f32.mrf.mxu0
      %v2603 = vadd.f32 0.0, %v2602
      %v2604 = vpop.f32.mrf.mxu0
      %v2605 = vadd.f32 0.0, %v2604
      %2606 = vmatmul.bf16.gmra.mxu0 %v2533
      %v2607 = vpop.f32.mrf.mxu0
      %v2608 = vadd.f32 0.0, %v2607
      %v2609 = vpop.f32.mrf.mxu0
      %v2610 = vadd.f32 0.0, %v2609
      %2611 = vmatmul.bf16.gmra.mxu0 %v2536
      %v2612 = vpop.f32.mrf.mxu0
      %v2613 = vadd.f32 0.0, %v2612
      %v2614 = vpop.f32.mrf.mxu0
      %v2615 = vadd.f32 0.0, %v2614
      %2616 = vmatmul.bf16.gmra.mxu0 %v2539
      %v2617 = vpop.f32.mrf.mxu0
      %v2618 = vadd.f32 0.0, %v2617
      %v2619 = vpop.f32.mrf.mxu0
      %v2620 = vadd.f32 0.0, %v2619
      %2621 = vmatmul.bf16.gmra.mxu0 %v2542
      %v2622 = vpop.f32.mrf.mxu0
      %v2623 = vadd.f32 0.0, %v2622
      %v2624 = vpop.f32.mrf.mxu0
      %v2625 = vadd.f32 0.0, %v2624
      %2626 = vmatmul.bf16.gmra.mxu0 %v2545
      %v2627 = vpop.f32.mrf.mxu0
      %v2628 = vadd.f32 0.0, %v2627
      %v2629 = vpop.f32.mrf.mxu0
      %v2630 = vadd.f32 0.0, %v2629
      %2631 = vmatmul.bf16.gmra.mxu0 %v2548
      %v2632 = vpop.f32.mrf.mxu0
      %v2633 = vadd.f32 0.0, %v2632
      %v2634 = vpop.f32.mrf.mxu0
      %v2635 = vadd.f32 0.0, %v2634
      %2636 = vmatmul.bf16.gmra.mxu0 %v2551
      %v2637 = vpop.f32.mrf.mxu0
      %v2638 = vadd.f32 0.0, %v2637
      %v2639 = vpop.f32.mrf.mxu0
      %v2640 = vadd.f32 0.0, %v2639
      %2641 = vmatmul.bf16.gmra.mxu0 %v2554
      %v2642 = vpop.f32.mrf.mxu0
      %v2643 = vadd.f32 0.0, %v2642
      %v2644 = vpop.f32.mrf.mxu0
      %v2645 = vadd.f32 0.0, %v2644
      %2646 = vmatmul.bf16.gmra.mxu0 %v2557
      %v2647 = vpop.f32.mrf.mxu0
      %v2648 = vadd.f32 0.0, %v2647
      %v2649 = vpop.f32.mrf.mxu0
      %v2650 = vadd.f32 0.0, %v2649
      %2651 = vmatmul.bf16.gmra.mxu0 %v2560
      %v2652 = vpop.f32.mrf.mxu0
      %v2653 = vadd.f32 0.0, %v2652
      %v2654 = vpop.f32.mrf.mxu0
      %v2655 = vadd.f32 0.0, %v2654
      %2656 = vmatmul.bf16.gmra.mxu0 %v2563
      %v2657 = vpop.f32.mrf.mxu0
      %v2658 = vadd.f32 0.0, %v2657
      %v2659 = vpop.f32.mrf.mxu0
      %v2660 = vadd.f32 0.0, %v2659
      %2661 = vmatmul.bf16.gmra.mxu0 %v2566
      %v2662 = vpop.f32.mrf.mxu0
      %v2663 = vadd.f32 0.0, %v2662
      %v2664 = vpop.f32.mrf.mxu0
      %v2665 = vadd.f32 0.0, %v2664
      %2666 = vdwg.mxu0
      %v2667 = vadd.f32 %v2407, %v2578
      %v2668 = vadd.f32 %v2408, %v2580
      %v2669 = vadd.f32 %v2409, %v2583
      %v2670 = vadd.f32 %v2410, %v2585
      %v2671 = vadd.f32 %v2411, %v2588
      %v2672 = vadd.f32 %v2412, %v2590
      %v2673 = vadd.f32 %v2413, %v2593
      %v2674 = vadd.f32 %v2414, %v2595
      %v2675 = vadd.f32 %v2415, %v2598
      %v2676 = vadd.f32 %v2416, %v2600
      %v2677 = vadd.f32 %v2417, %v2603
      %v2678 = vadd.f32 %v2418, %v2605
      %v2679 = vadd.f32 %v2419, %v2608
      %v2680 = vadd.f32 %v2420, %v2610
      %v2681 = vadd.f32 %v2421, %v2613
      %v2682 = vadd.f32 %v2422, %v2615
      %v2683 = vadd.f32 %v2423, %v2618
      %v2684 = vadd.f32 %v2424, %v2620
      %v2685 = vadd.f32 %v2425, %v2623
      %v2686 = vadd.f32 %v2426, %v2625
      %v2687 = vadd.f32 %v2427, %v2628
      %v2688 = vadd.f32 %v2428, %v2630
      %v2689 = vadd.f32 %v2429, %v2633
      %v2690 = vadd.f32 %v2430, %v2635
      %v2691 = vadd.f32 %v2431, %v2638
      %v2692 = vadd.f32 %v2432, %v2640
      %v2693 = vadd.f32 %v2433, %v2643
      %v2694 = vadd.f32 %v2434, %v2645
      %v2695 = vadd.f32 %v2435, %v2648
      %v2696 = vadd.f32 %v2436, %v2650
      %v2697 = vadd.f32 %v2437, %v2653
      %v2698 = vadd.f32 %v2438, %v2655
      %v2699 = vadd.f32 %v2439, %v2658
      %v2700 = vadd.f32 %v2440, %v2660
      %v2701 = vadd.f32 %v2441, %v2663
      %v2702 = vadd.f32 %v2442, %v2665
      %v2703 = vld [vmem:[%s398] sm:$0xff]
      %v2704 = vld [vmem:[%s398 + $0x8] sm:$0xff]
      %v2705 = vld [vmem:[%s398 + $0x10] sm:$0xff]
      %v2706 = vld [vmem:[%s398 + $0x18] sm:$0xff]
      %v2707 = vld [vmem:[%s398 + $0x20] sm:$0xff]
      %v2708 = vld [vmem:[%s398 + $0x28] sm:$0xff]
      %v2709 = vld [vmem:[%s398 + $0x30] sm:$0xff]
      %v2710 = vld [vmem:[%s398 + $0x38] sm:$0xff]
      %v2711 = vld [vmem:[%s398 + $0x40] sm:$0xff]
      %v2712 = vld [vmem:[%s398 + $0x48] sm:$0xff]
      %v2713 = vld [vmem:[%s398 + $0x50] sm:$0xff]
      %v2714 = vld [vmem:[%s398 + $0x58] sm:$0xff]
      %v2715 = vld [vmem:[%s398 + $0x60] sm:$0xff]
      %v2716 = vld [vmem:[%s398 + $0x68] sm:$0xff]
      %v2717 = vld [vmem:[%s398 + $0x70] sm:$0xff]
      %v2718 = vld [vmem:[%s398 + $0x78] sm:$0xff]
      %v2719 = vld [vmem:[%s398 + $0x80] sm:$0xff]
      %v2720 = vld [vmem:[%s398 + $0x88] sm:$0xff]
      %v2721 = vld [vmem:[%s398 + $0x90] sm:$0xff]
      %v2722 = vld [vmem:[%s398 + $0x98] sm:$0xff]
      %v2723 = vld [vmem:[%s398 + $0xa0] sm:$0xff]
      %v2724 = vld [vmem:[%s398 + $0xa8] sm:$0xff]
      %v2725 = vld [vmem:[%s398 + $0xb0] sm:$0xff]
      %v2726 = vld [vmem:[%s398 + $0xb8] sm:$0xff]
      %v2727 = vld [vmem:[%s398 + $0xc0] sm:$0xff]
      %v2728 = vld [vmem:[%s398 + $0xc8] sm:$0xff]
      %v2729 = vld [vmem:[%s398 + $0xd0] sm:$0xff]
      %v2730 = vld [vmem:[%s398 + $0xd8] sm:$0xff]
      %v2731 = vld [vmem:[%s398 + $0xe0] sm:$0xff]
      %v2732 = vld [vmem:[%s398 + $0xe8] sm:$0xff]
      %v2733 = vld [vmem:[%s398 + $0xf0] sm:$0xff]
      %v2734 = vld [vmem:[%s398 + $0xf8] sm:$0xff]
      %v2735 = vld [vmem:[%s398 + $0x100] sm:$0xff]
      %v2736 = vld [vmem:[%s398 + $0x108] sm:$0xff]
      %v2737 = vld [vmem:[%s398 + $0x110] sm:$0xff]
      %v2738 = vld [vmem:[%s398 + $0x118] sm:$0x3f]
      %v2739 = vpack.c.bf16 %v2704, %v2703
      %v2740 = vpack.c.bf16 %v2706, %v2705
      %v2741 = vpack.c.bf16 %v2708, %v2707
      %v2742 = vpack.c.bf16 %v2710, %v2709
      %v2743 = vpack.c.bf16 %v2712, %v2711
      %v2744 = vpack.c.bf16 %v2714, %v2713
      %v2745 = vpack.c.bf16 %v2716, %v2715
      %v2746 = vpack.c.bf16 %v2718, %v2717
      %v2747 = vpack.c.bf16 %v2720, %v2719
      %v2748 = vpack.c.bf16 %v2722, %v2721
      %v2749 = vpack.c.bf16 %v2724, %v2723
      %v2750 = vpack.c.bf16 %v2726, %v2725
      %v2751 = vpack.c.bf16 %v2728, %v2727
      %v2752 = vpack.c.bf16 %v2730, %v2729
      %v2753 = vpack.c.bf16 %v2732, %v2731
      %v2754 = vpack.c.bf16 %v2734, %v2733
      %v2755 = vpack.c.bf16 %v2736, %v2735
      %v2756 = vpack.c.bf16 %v2738, %v2737
      %s2757 = scalar_lea.vmem %s3, 144
      %v2758 = vld [vmem:[%s2757] sm:$0xf]
      %v2759 = vld [vmem:[%s2757 + $0x4] sm:$0xf]
      %v2760 = vld [vmem:[%s2757 + $0x8] sm:$0xf]
      %v2761 = vld [vmem:[%s2757 + $0xc] sm:$0xf]
      %v2766 = vunpack.c.l.b16 %v2758
      %v2767 = vunpack.c.l.b16 %v2759
      %v2768 = vunpack.c.l.b16 %v2760
      %v2769 = vunpack.c.l.b16 %v2761
      %v2770 = vpack.c.b16 %v2767, %v2766
      %v2771 = vpack.c.b16 %v2769, %v2768
      %v2775 = vsel %vm564, %v2739, 0
      %v2778 = vsel %vm564, %v2740, 0
      %v2781 = vsel %vm564, %v2741, 0
      %v2784 = vsel %vm564, %v2742, 0
      %v2787 = vsel %vm564, %v2743, 0
      %v2790 = vsel %vm564, %v2744, 0
      %v2793 = vsel %vm564, %v2745, 0
      %v2796 = vsel %vm564, %v2746, 0
      %v2799 = vsel %vm564, %v2747, 0
      %v2802 = vsel %vm564, %v2748, 0
      %v2805 = vsel %vm564, %v2749, 0
      %v2808 = vsel %vm564, %v2750, 0
      %v2811 = vsel %vm564, %v2751, 0
      %v2814 = vsel %vm564, %v2752, 0
      %v2817 = vsel %vm564, %v2753, 0
      %v2820 = vsel %vm564, %v2754, 0
      %v2823 = vsel %vm564, %v2755, 0
      %v2826 = vsel %vm564, %v2756, 0
      %2828 = vmatpush.bf16.msra.mxu0 0
      %2829 = vmatpush.bf16.msra.mxu0 0
      %2830 = vmatpush.bf16.msra.mxu0 0
      %2831 = vmatpush.bf16.msra.mxu0 0
      %2832 = vmatpush.bf16.msra.mxu0 0
      %2833 = vmatpush.bf16.msra.mxu0 0
      %2834 = vmatpush.bf16.msra.mxu0 %v2771
      %2835 = vmatpush.bf16.msra.mxu0 %v2770
      %2836 = vmatmul.bf16.gmra.mxu0 %v2775
      %v2837 = vpop.f32.mrf.mxu0
      %v2838 = vadd.f32 0.0, %v2837
      %v2839 = vpop.f32.mrf.mxu0
      %v2840 = vadd.f32 0.0, %v2839
      %2841 = vmatmul.bf16.gmra.mxu0 %v2778
      %v2842 = vpop.f32.mrf.mxu0
      %v2843 = vadd.f32 0.0, %v2842
      %v2844 = vpop.f32.mrf.mxu0
      %v2845 = vadd.f32 0.0, %v2844
      %2846 = vmatmul.bf16.gmra.mxu0 %v2781
      %v2847 = vpop.f32.mrf.mxu0
      %v2848 = vadd.f32 0.0, %v2847
      %v2849 = vpop.f32.mrf.mxu0
      %v2850 = vadd.f32 0.0, %v2849
      %2851 = vmatmul.bf16.gmra.mxu0 %v2784
      %v2852 = vpop.f32.mrf.mxu0
      %v2853 = vadd.f32 0.0, %v2852
      %v2854 = vpop.f32.mrf.mxu0
      %v2855 = vadd.f32 0.0, %v2854
      %2856 = vmatmul.bf16.gmra.mxu0 %v2787
      %v2857 = vpop.f32.mrf.mxu0
      %v2858 = vadd.f32 0.0, %v2857
      %v2859 = vpop.f32.mrf.mxu0
      %v2860 = vadd.f32 0.0, %v2859
      %2861 = vmatmul.bf16.gmra.mxu0 %v2790
      %v2862 = vpop.f32.mrf.mxu0
      %v2863 = vadd.f32 0.0, %v2862
      %v2864 = vpop.f32.mrf.mxu0
      %v2865 = vadd.f32 0.0, %v2864
      %2866 = vmatmul.bf16.gmra.mxu0 %v2793
      %v2867 = vpop.f32.mrf.mxu0
      %v2868 = vadd.f32 0.0, %v2867
      %v2869 = vpop.f32.mrf.mxu0
      %v2870 = vadd.f32 0.0, %v2869
      %2871 = vmatmul.bf16.gmra.mxu0 %v2796
      %v2872 = vpop.f32.mrf.mxu0
      %v2873 = vadd.f32 0.0, %v2872
      %v2874 = vpop.f32.mrf.mxu0
      %v2875 = vadd.f32 0.0, %v2874
      %2876 = vmatmul.bf16.gmra.mxu0 %v2799
      %v2877 = vpop.f32.mrf.mxu0
      %v2878 = vadd.f32 0.0, %v2877
      %v2879 = vpop.f32.mrf.mxu0
      %v2880 = vadd.f32 0.0, %v2879
      %2881 = vmatmul.bf16.gmra.mxu0 %v2802
      %v2882 = vpop.f32.mrf.mxu0
      %v2883 = vadd.f32 0.0, %v2882
      %v2884 = vpop.f32.mrf.mxu0
      %v2885 = vadd.f32 0.0, %v2884
      %2886 = vmatmul.bf16.gmra.mxu0 %v2805
      %v2887 = vpop.f32.mrf.mxu0
      %v2888 = vadd.f32 0.0, %v2887
      %v2889 = vpop.f32.mrf.mxu0
      %v2890 = vadd.f32 0.0, %v2889
      %2891 = vmatmul.bf16.gmra.mxu0 %v2808
      %v2892 = vpop.f32.mrf.mxu0
      %v2893 = vadd.f32 0.0, %v2892
      %v2894 = vpop.f32.mrf.mxu0
      %v2895 = vadd.f32 0.0, %v2894
      %2896 = vmatmul.bf16.gmra.mxu0 %v2811
      %v2897 = vpop.f32.mrf.mxu0
      %v2898 = vadd.f32 0.0, %v2897
      %v2899 = vpop.f32.mrf.mxu0
      %v2900 = vadd.f32 0.0, %v2899
      %2901 = vmatmul.bf16.gmra.mxu0 %v2814
      %v2902 = vpop.f32.mrf.mxu0
      %v2903 = vadd.f32 0.0, %v2902
      %v2904 = vpop.f32.mrf.mxu0
      %v2905 = vadd.f32 0.0, %v2904
      %2906 = vmatmul.bf16.gmra.mxu0 %v2817
      %v2907 = vpop.f32.mrf.mxu0
      %v2908 = vadd.f32 0.0, %v2907
      %v2909 = vpop.f32.mrf.mxu0
      %v2910 = vadd.f32 0.0, %v2909
      %2911 = vmatmul.bf16.gmra.mxu0 %v2820
      %v2912 = vpop.f32.mrf.mxu0
      %v2913 = vadd.f32 0.0, %v2912
      %v2914 = vpop.f32.mrf.mxu0
      %v2915 = vadd.f32 0.0, %v2914
      %2916 = vmatmul.bf16.gmra.mxu0 %v2823
      %v2917 = vpop.f32.mrf.mxu0
      %v2918 = vadd.f32 0.0, %v2917
      %v2919 = vpop.f32.mrf.mxu0
      %v2920 = vadd.f32 0.0, %v2919
      %2921 = vmatmul.bf16.gmra.mxu0 %v2826
      %v2922 = vpop.f32.mrf.mxu0
      %v2923 = vadd.f32 0.0, %v2922
      %v2924 = vpop.f32.mrf.mxu0
      %v2925 = vadd.f32 0.0, %v2924
      %2926 = vdwg.mxu0
      %v2927 = vadd.f32 %v2667, %v2838
      %v2928 = vadd.f32 %v2668, %v2840
      %v2929 = vadd.f32 %v2669, %v2843
      %v2930 = vadd.f32 %v2670, %v2845
      %v2931 = vadd.f32 %v2671, %v2848
      %v2932 = vadd.f32 %v2672, %v2850
      %v2933 = vadd.f32 %v2673, %v2853
      %v2934 = vadd.f32 %v2674, %v2855
      %v2935 = vadd.f32 %v2675, %v2858
      %v2936 = vadd.f32 %v2676, %v2860
      %v2937 = vadd.f32 %v2677, %v2863
      %v2938 = vadd.f32 %v2678, %v2865
      %v2939 = vadd.f32 %v2679, %v2868
      %v2940 = vadd.f32 %v2680, %v2870
      %v2941 = vadd.f32 %v2681, %v2873
      %v2942 = vadd.f32 %v2682, %v2875
      %v2943 = vadd.f32 %v2683, %v2878
      %v2944 = vadd.f32 %v2684, %v2880
      %v2945 = vadd.f32 %v2685, %v2883
      %v2946 = vadd.f32 %v2686, %v2885
      %v2947 = vadd.f32 %v2687, %v2888
      %v2948 = vadd.f32 %v2688, %v2890
      %v2949 = vadd.f32 %v2689, %v2893
      %v2950 = vadd.f32 %v2690, %v2895
      %v2951 = vadd.f32 %v2691, %v2898
      %v2952 = vadd.f32 %v2692, %v2900
      %v2953 = vadd.f32 %v2693, %v2903
      %v2954 = vadd.f32 %v2694, %v2905
      %v2955 = vadd.f32 %v2695, %v2908
      %v2956 = vadd.f32 %v2696, %v2910
      %v2957 = vadd.f32 %v2697, %v2913
      %v2958 = vadd.f32 %v2698, %v2915
      %v2959 = vadd.f32 %v2699, %v2918
      %v2960 = vadd.f32 %v2700, %v2920
      %v2961 = vadd.f32 %v2701, %v2923
      %v2962 = vadd.f32 %v2702, %v2925
      %v2963 = vld [vmem:[%s398 + $0x1] sm:$0xff]
      %v2964 = vld [vmem:[%s398 + $0x9] sm:$0xff]
      %v2965 = vld [vmem:[%s398 + $0x11] sm:$0xff]
      %v2966 = vld [vmem:[%s398 + $0x19] sm:$0xff]
      %v2967 = vld [vmem:[%s398 + $0x21] sm:$0xff]
      %v2968 = vld [vmem:[%s398 + $0x29] sm:$0xff]
      %v2969 = vld [vmem:[%s398 + $0x31] sm:$0xff]
      %v2970 = vld [vmem:[%s398 + $0x39] sm:$0xff]
      %v2971 = vld [vmem:[%s398 + $0x41] sm:$0xff]
      %v2972 = vld [vmem:[%s398 + $0x49] sm:$0xff]
      %v2973 = vld [vmem:[%s398 + $0x51] sm:$0xff]
      %v2974 = vld [vmem:[%s398 + $0x59] sm:$0xff]
      %v2975 = vld [vmem:[%s398 + $0x61] sm:$0xff]
      %v2976 = vld [vmem:[%s398 + $0x69] sm:$0xff]
      %v2977 = vld [vmem:[%s398 + $0x71] sm:$0xff]
      %v2978 = vld [vmem:[%s398 + $0x79] sm:$0xff]
      %v2979 = vld [vmem:[%s398 + $0x81] sm:$0xff]
      %v2980 = vld [vmem:[%s398 + $0x89] sm:$0xff]
      %v2981 = vld [vmem:[%s398 + $0x91] sm:$0xff]
      %v2982 = vld [vmem:[%s398 + $0x99] sm:$0xff]
      %v2983 = vld [vmem:[%s398 + $0xa1] sm:$0xff]
      %v2984 = vld [vmem:[%s398 + $0xa9] sm:$0xff]
      %v2985 = vld [vmem:[%s398 + $0xb1] sm:$0xff]
      %v2986 = vld [vmem:[%s398 + $0xb9] sm:$0xff]
      %v2987 = vld [vmem:[%s398 + $0xc1] sm:$0xff]
      %v2988 = vld [vmem:[%s398 + $0xc9] sm:$0xff]
      %v2989 = vld [vmem:[%s398 + $0xd1] sm:$0xff]
      %v2990 = vld [vmem:[%s398 + $0xd9] sm:$0xff]
      %v2991 = vld [vmem:[%s398 + $0xe1] sm:$0xff]
      %v2992 = vld [vmem:[%s398 + $0xe9] sm:$0xff]
      %v2993 = vld [vmem:[%s398 + $0xf1] sm:$0xff]
      %v2994 = vld [vmem:[%s398 + $0xf9] sm:$0xff]
      %v2995 = vld [vmem:[%s398 + $0x101] sm:$0xff]
      %v2996 = vld [vmem:[%s398 + $0x109] sm:$0xff]
      %v2997 = vld [vmem:[%s398 + $0x111] sm:$0xff]
      %v2998 = vld [vmem:[%s398 + $0x119] sm:$0x3f]
      %v2999 = vpack.c.bf16 %v2964, %v2963
      %v3000 = vpack.c.bf16 %v2966, %v2965
      %v3001 = vpack.c.bf16 %v2968, %v2967
      %v3002 = vpack.c.bf16 %v2970, %v2969
      %v3003 = vpack.c.bf16 %v2972, %v2971
      %v3004 = vpack.c.bf16 %v2974, %v2973
      %v3005 = vpack.c.bf16 %v2976, %v2975
      %v3006 = vpack.c.bf16 %v2978, %v2977
      %v3007 = vpack.c.bf16 %v2980, %v2979
      %v3008 = vpack.c.bf16 %v2982, %v2981
      %v3009 = vpack.c.bf16 %v2984, %v2983
      %v3010 = vpack.c.bf16 %v2986, %v2985
      %v3011 = vpack.c.bf16 %v2988, %v2987
      %v3012 = vpack.c.bf16 %v2990, %v2989
      %v3013 = vpack.c.bf16 %v2992, %v2991
      %v3014 = vpack.c.bf16 %v2994, %v2993
      %v3015 = vpack.c.bf16 %v2996, %v2995
      %v3016 = vpack.c.bf16 %v2998, %v2997
      %s3017 = scalar_lea.vmem %s3, 160
      %v3018 = vld [vmem:[%s3017] sm:$0xf]
      %v3019 = vld [vmem:[%s3017 + $0x4] sm:$0xf]
      %v3020 = vld [vmem:[%s3017 + $0x8] sm:$0xf]
      %v3021 = vld [vmem:[%s3017 + $0xc] sm:$0xf]
      %v3026 = vunpack.c.l.b16 %v3018
      %v3027 = vunpack.c.l.b16 %v3019
      %v3028 = vunpack.c.l.b16 %v3020
      %v3029 = vunpack.c.l.b16 %v3021
      %v3030 = vpack.c.b16 %v3027, %v3026
      %v3031 = vpack.c.b16 %v3029, %v3028
      %v3035 = vsel %vm564, %v2999, 0
      %v3038 = vsel %vm564, %v3000, 0
      %v3041 = vsel %vm564, %v3001, 0
      %v3044 = vsel %vm564, %v3002, 0
      %v3047 = vsel %vm564, %v3003, 0
      %v3050 = vsel %vm564, %v3004, 0
      %v3053 = vsel %vm564, %v3005, 0
      %v3056 = vsel %vm564, %v3006, 0
      %v3059 = vsel %vm564, %v3007, 0
      %v3062 = vsel %vm564, %v3008, 0
      %v3065 = vsel %vm564, %v3009, 0
      %v3068 = vsel %vm564, %v3010, 0
      %v3071 = vsel %vm564, %v3011, 0
      %v3074 = vsel %vm564, %v3012, 0
      %v3077 = vsel %vm564, %v3013, 0
      %v3080 = vsel %vm564, %v3014, 0
      %v3083 = vsel %vm564, %v3015, 0
      %v3086 = vsel %vm564, %v3016, 0
      %3088 = vmatpush.bf16.msra.mxu0 0
      %3089 = vmatpush.bf16.msra.mxu0 0
      %3090 = vmatpush.bf16.msra.mxu0 0
      %3091 = vmatpush.bf16.msra.mxu0 0
      %3092 = vmatpush.bf16.msra.mxu0 0
      %3093 = vmatpush.bf16.msra.mxu0 0
      %3094 = vmatpush.bf16.msra.mxu0 %v3031
      %3095 = vmatpush.bf16.msra.mxu0 %v3030
      %3096 = vmatmul.bf16.gmra.mxu0 %v3035
      %v3097 = vpop.f32.mrf.mxu0
      %v3098 = vadd.f32 0.0, %v3097
      %v3099 = vpop.f32.mrf.mxu0
      %v3100 = vadd.f32 0.0, %v3099
      %3101 = vmatmul.bf16.gmra.mxu0 %v3038
      %v3102 = vpop.f32.mrf.mxu0
      %v3103 = vadd.f32 0.0, %v3102
      %v3104 = vpop.f32.mrf.mxu0
      %v3105 = vadd.f32 0.0, %v3104
      %3106 = vmatmul.bf16.gmra.mxu0 %v3041
      %v3107 = vpop.f32.mrf.mxu0
      %v3108 = vadd.f32 0.0, %v3107
      %v3109 = vpop.f32.mrf.mxu0
      %v3110 = vadd.f32 0.0, %v3109
      %3111 = vmatmul.bf16.gmra.mxu0 %v3044
      %v3112 = vpop.f32.mrf.mxu0
      %v3113 = vadd.f32 0.0, %v3112
      %v3114 = vpop.f32.mrf.mxu0
      %v3115 = vadd.f32 0.0, %v3114
      %3116 = vmatmul.bf16.gmra.mxu0 %v3047
      %v3117 = vpop.f32.mrf.mxu0
      %v3118 = vadd.f32 0.0, %v3117
      %v3119 = vpop.f32.mrf.mxu0
      %v3120 = vadd.f32 0.0, %v3119
      %3121 = vmatmul.bf16.gmra.mxu0 %v3050
      %v3122 = vpop.f32.mrf.mxu0
      %v3123 = vadd.f32 0.0, %v3122
      %v3124 = vpop.f32.mrf.mxu0
      %v3125 = vadd.f32 0.0, %v3124
      %3126 = vmatmul.bf16.gmra.mxu0 %v3053
      %v3127 = vpop.f32.mrf.mxu0
      %v3128 = vadd.f32 0.0, %v3127
      %v3129 = vpop.f32.mrf.mxu0
      %v3130 = vadd.f32 0.0, %v3129
      %3131 = vmatmul.bf16.gmra.mxu0 %v3056
      %v3132 = vpop.f32.mrf.mxu0
      %v3133 = vadd.f32 0.0, %v3132
      %v3134 = vpop.f32.mrf.mxu0
      %v3135 = vadd.f32 0.0, %v3134
      %3136 = vmatmul.bf16.gmra.mxu0 %v3059
      %v3137 = vpop.f32.mrf.mxu0
      %v3138 = vadd.f32 0.0, %v3137
      %v3139 = vpop.f32.mrf.mxu0
      %v3140 = vadd.f32 0.0, %v3139
      %3141 = vmatmul.bf16.gmra.mxu0 %v3062
      %v3142 = vpop.f32.mrf.mxu0
      %v3143 = vadd.f32 0.0, %v3142
      %v3144 = vpop.f32.mrf.mxu0
      %v3145 = vadd.f32 0.0, %v3144
      %3146 = vmatmul.bf16.gmra.mxu0 %v3065
      %v3147 = vpop.f32.mrf.mxu0
      %v3148 = vadd.f32 0.0, %v3147
      %v3149 = vpop.f32.mrf.mxu0
      %v3150 = vadd.f32 0.0, %v3149
      %3151 = vmatmul.bf16.gmra.mxu0 %v3068
      %v3152 = vpop.f32.mrf.mxu0
      %v3153 = vadd.f32 0.0, %v3152
      %v3154 = vpop.f32.mrf.mxu0
      %v3155 = vadd.f32 0.0, %v3154
      %3156 = vmatmul.bf16.gmra.mxu0 %v3071
      %v3157 = vpop.f32.mrf.mxu0
      %v3158 = vadd.f32 0.0, %v3157
      %v3159 = vpop.f32.mrf.mxu0
      %v3160 = vadd.f32 0.0, %v3159
      %3161 = vmatmul.bf16.gmra.mxu0 %v3074
      %v3162 = vpop.f32.mrf.mxu0
      %v3163 = vadd.f32 0.0, %v3162
      %v3164 = vpop.f32.mrf.mxu0
      %v3165 = vadd.f32 0.0, %v3164
      %3166 = vmatmul.bf16.gmra.mxu0 %v3077
      %v3167 = vpop.f32.mrf.mxu0
      %v3168 = vadd.f32 0.0, %v3167
      %v3169 = vpop.f32.mrf.mxu0
      %v3170 = vadd.f32 0.0, %v3169
      %3171 = vmatmul.bf16.gmra.mxu0 %v3080
      %v3172 = vpop.f32.mrf.mxu0
      %v3173 = vadd.f32 0.0, %v3172
      %v3174 = vpop.f32.mrf.mxu0
      %v3175 = vadd.f32 0.0, %v3174
      %3176 = vmatmul.bf16.gmra.mxu0 %v3083
      %v3177 = vpop.f32.mrf.mxu0
      %v3178 = vadd.f32 0.0, %v3177
      %v3179 = vpop.f32.mrf.mxu0
      %v3180 = vadd.f32 0.0, %v3179
      %3181 = vmatmul.bf16.gmra.mxu0 %v3086
      %v3182 = vpop.f32.mrf.mxu0
      %v3183 = vadd.f32 0.0, %v3182
      %v3184 = vpop.f32.mrf.mxu0
      %v3185 = vadd.f32 0.0, %v3184
      %3186 = vdwg.mxu0
      %v3187 = vadd.f32 %v2927, %v3098
      %v3188 = vadd.f32 %v2928, %v3100
      %v3189 = vadd.f32 %v2929, %v3103
      %v3190 = vadd.f32 %v2930, %v3105
      %v3191 = vadd.f32 %v2931, %v3108
      %v3192 = vadd.f32 %v2932, %v3110
      %v3193 = vadd.f32 %v2933, %v3113
      %v3194 = vadd.f32 %v2934, %v3115
      %v3195 = vadd.f32 %v2935, %v3118
      %v3196 = vadd.f32 %v2936, %v3120
      %v3197 = vadd.f32 %v2937, %v3123
      %v3198 = vadd.f32 %v2938, %v3125
      %v3199 = vadd.f32 %v2939, %v3128
      %v3200 = vadd.f32 %v2940, %v3130
      %v3201 = vadd.f32 %v2941, %v3133
      %v3202 = vadd.f32 %v2942, %v3135
      %v3203 = vadd.f32 %v2943, %v3138
      %v3204 = vadd.f32 %v2944, %v3140
      %v3205 = vadd.f32 %v2945, %v3143
      %v3206 = vadd.f32 %v2946, %v3145
      %v3207 = vadd.f32 %v2947, %v3148
      %v3208 = vadd.f32 %v2948, %v3150
      %v3209 = vadd.f32 %v2949, %v3153
      %v3210 = vadd.f32 %v2950, %v3155
      %v3211 = vadd.f32 %v2951, %v3158
      %v3212 = vadd.f32 %v2952, %v3160
      %v3213 = vadd.f32 %v2953, %v3163
      %v3214 = vadd.f32 %v2954, %v3165
      %v3215 = vadd.f32 %v2955, %v3168
      %v3216 = vadd.f32 %v2956, %v3170
      %v3217 = vadd.f32 %v2957, %v3173
      %v3218 = vadd.f32 %v2958, %v3175
      %v3219 = vadd.f32 %v2959, %v3178
      %v3220 = vadd.f32 %v2960, %v3180
      %v3221 = vadd.f32 %v2961, %v3183
      %v3222 = vadd.f32 %v2962, %v3185
      %v3223 = vld [vmem:[%s398 + $0x2] sm:$0xff]
      %v3224 = vld [vmem:[%s398 + $0xa] sm:$0xff]
      %v3225 = vld [vmem:[%s398 + $0x12] sm:$0xff]
      %v3226 = vld [vmem:[%s398 + $0x1a] sm:$0xff]
      %v3227 = vld [vmem:[%s398 + $0x22] sm:$0xff]
      %v3228 = vld [vmem:[%s398 + $0x2a] sm:$0xff]
      %v3229 = vld [vmem:[%s398 + $0x32] sm:$0xff]
      %v3230 = vld [vmem:[%s398 + $0x3a] sm:$0xff]
      %v3231 = vld [vmem:[%s398 + $0x42] sm:$0xff]
      %v3232 = vld [vmem:[%s398 + $0x4a] sm:$0xff]
      %v3233 = vld [vmem:[%s398 + $0x52] sm:$0xff]
      %v3234 = vld [vmem:[%s398 + $0x5a] sm:$0xff]
      %v3235 = vld [vmem:[%s398 + $0x62] sm:$0xff]
      %v3236 = vld [vmem:[%s398 + $0x6a] sm:$0xff]
      %v3237 = vld [vmem:[%s398 + $0x72] sm:$0xff]
      %v3238 = vld [vmem:[%s398 + $0x7a] sm:$0xff]
      %v3239 = vld [vmem:[%s398 + $0x82] sm:$0xff]
      %v3240 = vld [vmem:[%s398 + $0x8a] sm:$0xff]
      %v3241 = vld [vmem:[%s398 + $0x92] sm:$0xff]
      %v3242 = vld [vmem:[%s398 + $0x9a] sm:$0xff]
      %v3243 = vld [vmem:[%s398 + $0xa2] sm:$0xff]
      %v3244 = vld [vmem:[%s398 + $0xaa] sm:$0xff]
      %v3245 = vld [vmem:[%s398 + $0xb2] sm:$0xff]
      %v3246 = vld [vmem:[%s398 + $0xba] sm:$0xff]
      %v3247 = vld [vmem:[%s398 + $0xc2] sm:$0xff]
      %v3248 = vld [vmem:[%s398 + $0xca] sm:$0xff]
      %v3249 = vld [vmem:[%s398 + $0xd2] sm:$0xff]
      %v3250 = vld [vmem:[%s398 + $0xda] sm:$0xff]
      %v3251 = vld [vmem:[%s398 + $0xe2] sm:$0xff]
      %v3252 = vld [vmem:[%s398 + $0xea] sm:$0xff]
      %v3253 = vld [vmem:[%s398 + $0xf2] sm:$0xff]
      %v3254 = vld [vmem:[%s398 + $0xfa] sm:$0xff]
      %v3255 = vld [vmem:[%s398 + $0x102] sm:$0xff]
      %v3256 = vld [vmem:[%s398 + $0x10a] sm:$0xff]
      %v3257 = vld [vmem:[%s398 + $0x112] sm:$0xff]
      %v3258 = vld [vmem:[%s398 + $0x11a] sm:$0x3f]
      %v3259 = vpack.c.bf16 %v3224, %v3223
      %v3260 = vpack.c.bf16 %v3226, %v3225
      %v3261 = vpack.c.bf16 %v3228, %v3227
      %v3262 = vpack.c.bf16 %v3230, %v3229
      %v3263 = vpack.c.bf16 %v3232, %v3231
      %v3264 = vpack.c.bf16 %v3234, %v3233
      %v3265 = vpack.c.bf16 %v3236, %v3235
      %v3266 = vpack.c.bf16 %v3238, %v3237
      %v3267 = vpack.c.bf16 %v3240, %v3239
      %v3268 = vpack.c.bf16 %v3242, %v3241
      %v3269 = vpack.c.bf16 %v3244, %v3243
      %v3270 = vpack.c.bf16 %v3246, %v3245
      %v3271 = vpack.c.bf16 %v3248, %v3247
      %v3272 = vpack.c.bf16 %v3250, %v3249
      %v3273 = vpack.c.bf16 %v3252, %v3251
      %v3274 = vpack.c.bf16 %v3254, %v3253
      %v3275 = vpack.c.bf16 %v3256, %v3255
      %v3276 = vpack.c.bf16 %v3258, %v3257
      %s3277 = scalar_lea.vmem %s3, 176
      %v3278 = vld [vmem:[%s3277] sm:$0xf]
      %v3279 = vld [vmem:[%s3277 + $0x4] sm:$0xf]
      %v3280 = vld [vmem:[%s3277 + $0x8] sm:$0xf]
      %v3281 = vld [vmem:[%s3277 + $0xc] sm:$0xf]
      %v3286 = vunpack.c.l.b16 %v3278
      %v3287 = vunpack.c.l.b16 %v3279
      %v3288 = vunpack.c.l.b16 %v3280
      %v3289 = vunpack.c.l.b16 %v3281
      %v3290 = vpack.c.b16 %v3287, %v3286
      %v3291 = vpack.c.b16 %v3289, %v3288
      %v3295 = vsel %vm564, %v3259, 0
      %v3298 = vsel %vm564, %v3260, 0
      %v3301 = vsel %vm564, %v3261, 0
      %v3304 = vsel %vm564, %v3262, 0
      %v3307 = vsel %vm564, %v3263, 0
      %v3310 = vsel %vm564, %v3264, 0
      %v3313 = vsel %vm564, %v3265, 0
      %v3316 = vsel %vm564, %v3266, 0
      %v3319 = vsel %vm564, %v3267, 0
      %v3322 = vsel %vm564, %v3268, 0
      %v3325 = vsel %vm564, %v3269, 0
      %v3328 = vsel %vm564, %v3270, 0
      %v3331 = vsel %vm564, %v3271, 0
      %v3334 = vsel %vm564, %v3272, 0
      %v3337 = vsel %vm564, %v3273, 0
      %v3340 = vsel %vm564, %v3274, 0
      %v3343 = vsel %vm564, %v3275, 0
      %v3346 = vsel %vm564, %v3276, 0
      %3348 = vmatpush.bf16.msra.mxu0 0
      %3349 = vmatpush.bf16.msra.mxu0 0
      %3350 = vmatpush.bf16.msra.mxu0 0
      %3351 = vmatpush.bf16.msra.mxu0 0
      %3352 = vmatpush.bf16.msra.mxu0 0
      %3353 = vmatpush.bf16.msra.mxu0 0
      %3354 = vmatpush.bf16.msra.mxu0 %v3291
      %3355 = vmatpush.bf16.msra.mxu0 %v3290
      %3356 = vmatmul.bf16.gmra.mxu0 %v3295
      %v3357 = vpop.f32.mrf.mxu0
      %v3358 = vadd.f32 0.0, %v3357
      %v3359 = vpop.f32.mrf.mxu0
      %v3360 = vadd.f32 0.0, %v3359
      %3361 = vmatmul.bf16.gmra.mxu0 %v3298
      %v3362 = vpop.f32.mrf.mxu0
      %v3363 = vadd.f32 0.0, %v3362
      %v3364 = vpop.f32.mrf.mxu0
      %v3365 = vadd.f32 0.0, %v3364
      %3366 = vmatmul.bf16.gmra.mxu0 %v3301
      %v3367 = vpop.f32.mrf.mxu0
      %v3368 = vadd.f32 0.0, %v3367
      %v3369 = vpop.f32.mrf.mxu0
      %v3370 = vadd.f32 0.0, %v3369
      %3371 = vmatmul.bf16.gmra.mxu0 %v3304
      %v3372 = vpop.f32.mrf.mxu0
      %v3373 = vadd.f32 0.0, %v3372
      %v3374 = vpop.f32.mrf.mxu0
      %v3375 = vadd.f32 0.0, %v3374
      %3376 = vmatmul.bf16.gmra.mxu0 %v3307
      %v3377 = vpop.f32.mrf.mxu0
      %v3378 = vadd.f32 0.0, %v3377
      %v3379 = vpop.f32.mrf.mxu0
      %v3380 = vadd.f32 0.0, %v3379
      %3381 = vmatmul.bf16.gmra.mxu0 %v3310
      %v3382 = vpop.f32.mrf.mxu0
      %v3383 = vadd.f32 0.0, %v3382
      %v3384 = vpop.f32.mrf.mxu0
      %v3385 = vadd.f32 0.0, %v3384
      %3386 = vmatmul.bf16.gmra.mxu0 %v3313
      %v3387 = vpop.f32.mrf.mxu0
      %v3388 = vadd.f32 0.0, %v3387
      %v3389 = vpop.f32.mrf.mxu0
      %v3390 = vadd.f32 0.0, %v3389
      %3391 = vmatmul.bf16.gmra.mxu0 %v3316
      %v3392 = vpop.f32.mrf.mxu0
      %v3393 = vadd.f32 0.0, %v3392
      %v3394 = vpop.f32.mrf.mxu0
      %v3395 = vadd.f32 0.0, %v3394
      %3396 = vmatmul.bf16.gmra.mxu0 %v3319
      %v3397 = vpop.f32.mrf.mxu0
      %v3398 = vadd.f32 0.0, %v3397
      %v3399 = vpop.f32.mrf.mxu0
      %v3400 = vadd.f32 0.0, %v3399
      %3401 = vmatmul.bf16.gmra.mxu0 %v3322
      %v3402 = vpop.f32.mrf.mxu0
      %v3403 = vadd.f32 0.0, %v3402
      %v3404 = vpop.f32.mrf.mxu0
      %v3405 = vadd.f32 0.0, %v3404
      %3406 = vmatmul.bf16.gmra.mxu0 %v3325
      %v3407 = vpop.f32.mrf.mxu0
      %v3408 = vadd.f32 0.0, %v3407
      %v3409 = vpop.f32.mrf.mxu0
      %v3410 = vadd.f32 0.0, %v3409
      %3411 = vmatmul.bf16.gmra.mxu0 %v3328
      %v3412 = vpop.f32.mrf.mxu0
      %v3413 = vadd.f32 0.0, %v3412
      %v3414 = vpop.f32.mrf.mxu0
      %v3415 = vadd.f32 0.0, %v3414
      %3416 = vmatmul.bf16.gmra.mxu0 %v3331
      %v3417 = vpop.f32.mrf.mxu0
      %v3418 = vadd.f32 0.0, %v3417
      %v3419 = vpop.f32.mrf.mxu0
      %v3420 = vadd.f32 0.0, %v3419
      %3421 = vmatmul.bf16.gmra.mxu0 %v3334
      %v3422 = vpop.f32.mrf.mxu0
      %v3423 = vadd.f32 0.0, %v3422
      %v3424 = vpop.f32.mrf.mxu0
      %v3425 = vadd.f32 0.0, %v3424
      %3426 = vmatmul.bf16.gmra.mxu0 %v3337
      %v3427 = vpop.f32.mrf.mxu0
      %v3428 = vadd.f32 0.0, %v3427
      %v3429 = vpop.f32.mrf.mxu0
      %v3430 = vadd.f32 0.0, %v3429
      %3431 = vmatmul.bf16.gmra.mxu0 %v3340
      %v3432 = vpop.f32.mrf.mxu0
      %v3433 = vadd.f32 0.0, %v3432
      %v3434 = vpop.f32.mrf.mxu0
      %v3435 = vadd.f32 0.0, %v3434
      %3436 = vmatmul.bf16.gmra.mxu0 %v3343
      %v3437 = vpop.f32.mrf.mxu0
      %v3438 = vadd.f32 0.0, %v3437
      %v3439 = vpop.f32.mrf.mxu0
      %v3440 = vadd.f32 0.0, %v3439
      %3441 = vmatmul.bf16.gmra.mxu0 %v3346
      %v3442 = vpop.f32.mrf.mxu0
      %v3443 = vadd.f32 0.0, %v3442
      %v3444 = vpop.f32.mrf.mxu0
      %v3445 = vadd.f32 0.0, %v3444
      %3446 = vdwg.mxu0
      %v3447 = vadd.f32 %v3187, %v3358
      %v3448 = vadd.f32 %v3188, %v3360
      %v3449 = vadd.f32 %v3189, %v3363
      %v3450 = vadd.f32 %v3190, %v3365
      %v3451 = vadd.f32 %v3191, %v3368
      %v3452 = vadd.f32 %v3192, %v3370
      %v3453 = vadd.f32 %v3193, %v3373
      %v3454 = vadd.f32 %v3194, %v3375
      %v3455 = vadd.f32 %v3195, %v3378
      %v3456 = vadd.f32 %v3196, %v3380
      %v3457 = vadd.f32 %v3197, %v3383
      %v3458 = vadd.f32 %v3198, %v3385
      %v3459 = vadd.f32 %v3199, %v3388
      %v3460 = vadd.f32 %v3200, %v3390
      %v3461 = vadd.f32 %v3201, %v3393
      %v3462 = vadd.f32 %v3202, %v3395
      %v3463 = vadd.f32 %v3203, %v3398
      %v3464 = vadd.f32 %v3204, %v3400
      %v3465 = vadd.f32 %v3205, %v3403
      %v3466 = vadd.f32 %v3206, %v3405
      %v3467 = vadd.f32 %v3207, %v3408
      %v3468 = vadd.f32 %v3208, %v3410
      %v3469 = vadd.f32 %v3209, %v3413
      %v3470 = vadd.f32 %v3210, %v3415
      %v3471 = vadd.f32 %v3211, %v3418
      %v3472 = vadd.f32 %v3212, %v3420
      %v3473 = vadd.f32 %v3213, %v3423
      %v3474 = vadd.f32 %v3214, %v3425
      %v3475 = vadd.f32 %v3215, %v3428
      %v3476 = vadd.f32 %v3216, %v3430
      %v3477 = vadd.f32 %v3217, %v3433
      %v3478 = vadd.f32 %v3218, %v3435
      %v3479 = vadd.f32 %v3219, %v3438
      %v3480 = vadd.f32 %v3220, %v3440
      %v3481 = vadd.f32 %v3221, %v3443
      %v3482 = vadd.f32 %v3222, %v3445
      %v3483 = vld [vmem:[%s398 + $0x12] sm:$0xff]
      %v3484 = vld [vmem:[%s398 + $0x1a] sm:$0xff]
      %v3485 = vld [vmem:[%s398 + $0x22] sm:$0xff]
      %v3486 = vld [vmem:[%s398 + $0x2a] sm:$0xff]
      %v3487 = vld [vmem:[%s398 + $0x32] sm:$0xff]
      %v3488 = vld [vmem:[%s398 + $0x3a] sm:$0xff]
      %v3489 = vld [vmem:[%s398 + $0x42] sm:$0xff]
      %v3490 = vld [vmem:[%s398 + $0x4a] sm:$0xff]
      %v3491 = vld [vmem:[%s398 + $0x52] sm:$0xff]
      %v3492 = vld [vmem:[%s398 + $0x5a] sm:$0xff]
      %v3493 = vld [vmem:[%s398 + $0x62] sm:$0xff]
      %v3494 = vld [vmem:[%s398 + $0x6a] sm:$0xff]
      %v3495 = vld [vmem:[%s398 + $0x72] sm:$0xff]
      %v3496 = vld [vmem:[%s398 + $0x7a] sm:$0xff]
      %v3497 = vld [vmem:[%s398 + $0x82] sm:$0xff]
      %v3498 = vld [vmem:[%s398 + $0x8a] sm:$0xff]
      %v3499 = vld [vmem:[%s398 + $0x92] sm:$0xff]
      %v3500 = vld [vmem:[%s398 + $0x9a] sm:$0xff]
      %v3501 = vld [vmem:[%s398 + $0xa2] sm:$0xff]
      %v3502 = vld [vmem:[%s398 + $0xaa] sm:$0xff]
      %v3503 = vld [vmem:[%s398 + $0xb2] sm:$0xff]
      %v3504 = vld [vmem:[%s398 + $0xba] sm:$0xff]
      %v3505 = vld [vmem:[%s398 + $0xc2] sm:$0xff]
      %v3506 = vld [vmem:[%s398 + $0xca] sm:$0xff]
      %v3507 = vld [vmem:[%s398 + $0xd2] sm:$0xff]
      %v3508 = vld [vmem:[%s398 + $0xda] sm:$0xff]
      %v3509 = vld [vmem:[%s398 + $0xe2] sm:$0xff]
      %v3510 = vld [vmem:[%s398 + $0xea] sm:$0xff]
      %v3511 = vld [vmem:[%s398 + $0xf2] sm:$0xff]
      %v3512 = vld [vmem:[%s398 + $0xfa] sm:$0xff]
      %v3513 = vld [vmem:[%s398 + $0x102] sm:$0xff]
      %v3514 = vld [vmem:[%s398 + $0x10a] sm:$0xff]
      %v3515 = vld [vmem:[%s398 + $0x112] sm:$0xff]
      %v3516 = vld [vmem:[%s398 + $0x11a] sm:$0xff]
      %v3517 = vld [vmem:[%s398 + $0x122] sm:$0xff]
      %v3518 = vld [vmem:[%s398 + $0x12a] sm:$0x3f]
      %v3519 = vpack.c.bf16 %v3484, %v3483
      %v3520 = vpack.c.bf16 %v3486, %v3485
      %v3521 = vpack.c.bf16 %v3488, %v3487
      %v3522 = vpack.c.bf16 %v3490, %v3489
      %v3523 = vpack.c.bf16 %v3492, %v3491
      %v3524 = vpack.c.bf16 %v3494, %v3493
      %v3525 = vpack.c.bf16 %v3496, %v3495
      %v3526 = vpack.c.bf16 %v3498, %v3497
      %v3527 = vpack.c.bf16 %v3500, %v3499
      %v3528 = vpack.c.bf16 %v3502, %v3501
      %v3529 = vpack.c.bf16 %v3504, %v3503
      %v3530 = vpack.c.bf16 %v3506, %v3505
      %v3531 = vpack.c.bf16 %v3508, %v3507
      %v3532 = vpack.c.bf16 %v3510, %v3509
      %v3533 = vpack.c.bf16 %v3512, %v3511
      %v3534 = vpack.c.bf16 %v3514, %v3513
      %v3535 = vpack.c.bf16 %v3516, %v3515
      %v3536 = vpack.c.bf16 %v3518, %v3517
      %s3537 = scalar_lea.vmem %s3, 192
      %v3538 = vld [vmem:[%s3537] sm:$0xf]
      %v3539 = vld [vmem:[%s3537 + $0x4] sm:$0xf]
      %v3540 = vld [vmem:[%s3537 + $0x8] sm:$0xf]
      %v3541 = vld [vmem:[%s3537 + $0xc] sm:$0xf]
      %v3546 = vunpack.c.l.b16 %v3538
      %v3547 = vunpack.c.l.b16 %v3539
      %v3548 = vunpack.c.l.b16 %v3540
      %v3549 = vunpack.c.l.b16 %v3541
      %v3550 = vpack.c.b16 %v3547, %v3546
      %v3551 = vpack.c.b16 %v3549, %v3548
      %v3555 = vsel %vm564, %v3519, 0
      %v3558 = vsel %vm564, %v3520, 0
      %v3561 = vsel %vm564, %v3521, 0
      %v3564 = vsel %vm564, %v3522, 0
      %v3567 = vsel %vm564, %v3523, 0
      %v3570 = vsel %vm564, %v3524, 0
      %v3573 = vsel %vm564, %v3525, 0
      %v3576 = vsel %vm564, %v3526, 0
      %v3579 = vsel %vm564, %v3527, 0
      %v3582 = vsel %vm564, %v3528, 0
      %v3585 = vsel %vm564, %v3529, 0
      %v3588 = vsel %vm564, %v3530, 0
      %v3591 = vsel %vm564, %v3531, 0
      %v3594 = vsel %vm564, %v3532, 0
      %v3597 = vsel %vm564, %v3533, 0
      %v3600 = vsel %vm564, %v3534, 0
      %v3603 = vsel %vm564, %v3535, 0
      %v3606 = vsel %vm564, %v3536, 0
      %3608 = vmatpush.bf16.msra.mxu0 0
      %3609 = vmatpush.bf16.msra.mxu0 0
      %3610 = vmatpush.bf16.msra.mxu0 0
      %3611 = vmatpush.bf16.msra.mxu0 0
      %3612 = vmatpush.bf16.msra.mxu0 0
      %3613 = vmatpush.bf16.msra.mxu0 0
      %3614 = vmatpush.bf16.msra.mxu0 %v3551
      %3615 = vmatpush.bf16.msra.mxu0 %v3550
      %3616 = vmatmul.bf16.gmra.mxu0 %v3555
      %v3617 = vpop.f32.mrf.mxu0
      %v3618 = vadd.f32 0.0, %v3617
      %v3619 = vpop.f32.mrf.mxu0
      %v3620 = vadd.f32 0.0, %v3619
      %3621 = vmatmul.bf16.gmra.mxu0 %v3558
      %v3622 = vpop.f32.mrf.mxu0
      %v3623 = vadd.f32 0.0, %v3622
      %v3624 = vpop.f32.mrf.mxu0
      %v3625 = vadd.f32 0.0, %v3624
      %3626 = vmatmul.bf16.gmra.mxu0 %v3561
      %v3627 = vpop.f32.mrf.mxu0
      %v3628 = vadd.f32 0.0, %v3627
      %v3629 = vpop.f32.mrf.mxu0
      %v3630 = vadd.f32 0.0, %v3629
      %3631 = vmatmul.bf16.gmra.mxu0 %v3564
      %v3632 = vpop.f32.mrf.mxu0
      %v3633 = vadd.f32 0.0, %v3632
      %v3634 = vpop.f32.mrf.mxu0
      %v3635 = vadd.f32 0.0, %v3634
      %3636 = vmatmul.bf16.gmra.mxu0 %v3567
      %v3637 = vpop.f32.mrf.mxu0
      %v3638 = vadd.f32 0.0, %v3637
      %v3639 = vpop.f32.mrf.mxu0
      %v3640 = vadd.f32 0.0, %v3639
      %3641 = vmatmul.bf16.gmra.mxu0 %v3570
      %v3642 = vpop.f32.mrf.mxu0
      %v3643 = vadd.f32 0.0, %v3642
      %v3644 = vpop.f32.mrf.mxu0
      %v3645 = vadd.f32 0.0, %v3644
      %3646 = vmatmul.bf16.gmra.mxu0 %v3573
      %v3647 = vpop.f32.mrf.mxu0
      %v3648 = vadd.f32 0.0, %v3647
      %v3649 = vpop.f32.mrf.mxu0
      %v3650 = vadd.f32 0.0, %v3649
      %3651 = vmatmul.bf16.gmra.mxu0 %v3576
      %v3652 = vpop.f32.mrf.mxu0
      %v3653 = vadd.f32 0.0, %v3652
      %v3654 = vpop.f32.mrf.mxu0
      %v3655 = vadd.f32 0.0, %v3654
      %3656 = vmatmul.bf16.gmra.mxu0 %v3579
      %v3657 = vpop.f32.mrf.mxu0
      %v3658 = vadd.f32 0.0, %v3657
      %v3659 = vpop.f32.mrf.mxu0
      %v3660 = vadd.f32 0.0, %v3659
      %3661 = vmatmul.bf16.gmra.mxu0 %v3582
      %v3662 = vpop.f32.mrf.mxu0
      %v3663 = vadd.f32 0.0, %v3662
      %v3664 = vpop.f32.mrf.mxu0
      %v3665 = vadd.f32 0.0, %v3664
      %3666 = vmatmul.bf16.gmra.mxu0 %v3585
      %v3667 = vpop.f32.mrf.mxu0
      %v3668 = vadd.f32 0.0, %v3667
      %v3669 = vpop.f32.mrf.mxu0
      %v3670 = vadd.f32 0.0, %v3669
      %3671 = vmatmul.bf16.gmra.mxu0 %v3588
      %v3672 = vpop.f32.mrf.mxu0
      %v3673 = vadd.f32 0.0, %v3672
      %v3674 = vpop.f32.mrf.mxu0
      %v3675 = vadd.f32 0.0, %v3674
      %3676 = vmatmul.bf16.gmra.mxu0 %v3591
      %v3677 = vpop.f32.mrf.mxu0
      %v3678 = vadd.f32 0.0, %v3677
      %v3679 = vpop.f32.mrf.mxu0
      %v3680 = vadd.f32 0.0, %v3679
      %3681 = vmatmul.bf16.gmra.mxu0 %v3594
      %v3682 = vpop.f32.mrf.mxu0
      %v3683 = vadd.f32 0.0, %v3682
      %v3684 = vpop.f32.mrf.mxu0
      %v3685 = vadd.f32 0.0, %v3684
      %3686 = vmatmul.bf16.gmra.mxu0 %v3597
      %v3687 = vpop.f32.mrf.mxu0
      %v3688 = vadd.f32 0.0, %v3687
      %v3689 = vpop.f32.mrf.mxu0
      %v3690 = vadd.f32 0.0, %v3689
      %3691 = vmatmul.bf16.gmra.mxu0 %v3600
      %v3692 = vpop.f32.mrf.mxu0
      %v3693 = vadd.f32 0.0, %v3692
      %v3694 = vpop.f32.mrf.mxu0
      %v3695 = vadd.f32 0.0, %v3694
      %3696 = vmatmul.bf16.gmra.mxu0 %v3603
      %v3697 = vpop.f32.mrf.mxu0
      %v3698 = vadd.f32 0.0, %v3697
      %v3699 = vpop.f32.mrf.mxu0
      %v3700 = vadd.f32 0.0, %v3699
      %3701 = vmatmul.bf16.gmra.mxu0 %v3606
      %v3702 = vpop.f32.mrf.mxu0
      %v3703 = vadd.f32 0.0, %v3702
      %v3704 = vpop.f32.mrf.mxu0
      %v3705 = vadd.f32 0.0, %v3704
      %3706 = vdwg.mxu0
      %v3707 = vadd.f32 %v3447, %v3618
      %v3708 = vadd.f32 %v3448, %v3620
      %v3709 = vadd.f32 %v3449, %v3623
      %v3710 = vadd.f32 %v3450, %v3625
      %v3711 = vadd.f32 %v3451, %v3628
      %v3712 = vadd.f32 %v3452, %v3630
      %v3713 = vadd.f32 %v3453, %v3633
      %v3714 = vadd.f32 %v3454, %v3635
      %v3715 = vadd.f32 %v3455, %v3638
      %v3716 = vadd.f32 %v3456, %v3640
      %v3717 = vadd.f32 %v3457, %v3643
      %v3718 = vadd.f32 %v3458, %v3645
      %v3719 = vadd.f32 %v3459, %v3648
      %v3720 = vadd.f32 %v3460, %v3650
      %v3721 = vadd.f32 %v3461, %v3653
      %v3722 = vadd.f32 %v3462, %v3655
      %v3723 = vadd.f32 %v3463, %v3658
      %v3724 = vadd.f32 %v3464, %v3660
      %v3725 = vadd.f32 %v3465, %v3663
      %v3726 = vadd.f32 %v3466, %v3665
      %v3727 = vadd.f32 %v3467, %v3668
      %v3728 = vadd.f32 %v3468, %v3670
      %v3729 = vadd.f32 %v3469, %v3673
      %v3730 = vadd.f32 %v3470, %v3675
      %v3731 = vadd.f32 %v3471, %v3678
      %v3732 = vadd.f32 %v3472, %v3680
      %v3733 = vadd.f32 %v3473, %v3683
      %v3734 = vadd.f32 %v3474, %v3685
      %v3735 = vadd.f32 %v3475, %v3688
      %v3736 = vadd.f32 %v3476, %v3690
      %v3737 = vadd.f32 %v3477, %v3693
      %v3738 = vadd.f32 %v3478, %v3695
      %v3739 = vadd.f32 %v3479, %v3698
      %v3740 = vadd.f32 %v3480, %v3700
      %v3741 = vadd.f32 %v3481, %v3703
      %v3742 = vadd.f32 %v3482, %v3705
      %v3743 = vld [vmem:[%s398 + $0x13] sm:$0xff]
      %v3744 = vld [vmem:[%s398 + $0x1b] sm:$0xff]
      %v3745 = vld [vmem:[%s398 + $0x23] sm:$0xff]
      %v3746 = vld [vmem:[%s398 + $0x2b] sm:$0xff]
      %v3747 = vld [vmem:[%s398 + $0x33] sm:$0xff]
      %v3748 = vld [vmem:[%s398 + $0x3b] sm:$0xff]
      %v3749 = vld [vmem:[%s398 + $0x43] sm:$0xff]
      %v3750 = vld [vmem:[%s398 + $0x4b] sm:$0xff]
      %v3751 = vld [vmem:[%s398 + $0x53] sm:$0xff]
      %v3752 = vld [vmem:[%s398 + $0x5b] sm:$0xff]
      %v3753 = vld [vmem:[%s398 + $0x63] sm:$0xff]
      %v3754 = vld [vmem:[%s398 + $0x6b] sm:$0xff]
      %v3755 = vld [vmem:[%s398 + $0x73] sm:$0xff]
      %v3756 = vld [vmem:[%s398 + $0x7b] sm:$0xff]
      %v3757 = vld [vmem:[%s398 + $0x83] sm:$0xff]
      %v3758 = vld [vmem:[%s398 + $0x8b] sm:$0xff]
      %v3759 = vld [vmem:[%s398 + $0x93] sm:$0xff]
      %v3760 = vld [vmem:[%s398 + $0x9b] sm:$0xff]
      %v3761 = vld [vmem:[%s398 + $0xa3] sm:$0xff]
      %v3762 = vld [vmem:[%s398 + $0xab] sm:$0xff]
      %v3763 = vld [vmem:[%s398 + $0xb3] sm:$0xff]
      %v3764 = vld [vmem:[%s398 + $0xbb] sm:$0xff]
      %v3765 = vld [vmem:[%s398 + $0xc3] sm:$0xff]
      %v3766 = vld [vmem:[%s398 + $0xcb] sm:$0xff]
      %v3767 = vld [vmem:[%s398 + $0xd3] sm:$0xff]
      %v3768 = vld [vmem:[%s398 + $0xdb] sm:$0xff]
      %v3769 = vld [vmem:[%s398 + $0xe3] sm:$0xff]
      %v3770 = vld [vmem:[%s398 + $0xeb] sm:$0xff]
      %v3771 = vld [vmem:[%s398 + $0xf3] sm:$0xff]
      %v3772 = vld [vmem:[%s398 + $0xfb] sm:$0xff]
      %v3773 = vld [vmem:[%s398 + $0x103] sm:$0xff]
      %v3774 = vld [vmem:[%s398 + $0x10b] sm:$0xff]
      %v3775 = vld [vmem:[%s398 + $0x113] sm:$0xff]
      %v3776 = vld [vmem:[%s398 + $0x11b] sm:$0xff]
      %v3777 = vld [vmem:[%s398 + $0x123] sm:$0xff]
      %v3778 = vld [vmem:[%s398 + $0x12b] sm:$0x3f]
      %v3779 = vpack.c.bf16 %v3744, %v3743
      %v3780 = vpack.c.bf16 %v3746, %v3745
      %v3781 = vpack.c.bf16 %v3748, %v3747
      %v3782 = vpack.c.bf16 %v3750, %v3749
      %v3783 = vpack.c.bf16 %v3752, %v3751
      %v3784 = vpack.c.bf16 %v3754, %v3753
      %v3785 = vpack.c.bf16 %v3756, %v3755
      %v3786 = vpack.c.bf16 %v3758, %v3757
      %v3787 = vpack.c.bf16 %v3760, %v3759
      %v3788 = vpack.c.bf16 %v3762, %v3761
      %v3789 = vpack.c.bf16 %v3764, %v3763
      %v3790 = vpack.c.bf16 %v3766, %v3765
      %v3791 = vpack.c.bf16 %v3768, %v3767
      %v3792 = vpack.c.bf16 %v3770, %v3769
      %v3793 = vpack.c.bf16 %v3772, %v3771
      %v3794 = vpack.c.bf16 %v3774, %v3773
      %v3795 = vpack.c.bf16 %v3776, %v3775
      %v3796 = vpack.c.bf16 %v3778, %v3777
      %s3797 = scalar_lea.vmem %s3, 208
      %v3798 = vld [vmem:[%s3797] sm:$0xf]
      %v3799 = vld [vmem:[%s3797 + $0x4] sm:$0xf]
      %v3800 = vld [vmem:[%s3797 + $0x8] sm:$0xf]
      %v3801 = vld [vmem:[%s3797 + $0xc] sm:$0xf]
      %v3806 = vunpack.c.l.b16 %v3798
      %v3807 = vunpack.c.l.b16 %v3799
      %v3808 = vunpack.c.l.b16 %v3800
      %v3809 = vunpack.c.l.b16 %v3801
      %v3810 = vpack.c.b16 %v3807, %v3806
      %v3811 = vpack.c.b16 %v3809, %v3808
      %v3815 = vsel %vm564, %v3779, 0
      %v3818 = vsel %vm564, %v3780, 0
      %v3821 = vsel %vm564, %v3781, 0
      %v3824 = vsel %vm564, %v3782, 0
      %v3827 = vsel %vm564, %v3783, 0
      %v3830 = vsel %vm564, %v3784, 0
      %v3833 = vsel %vm564, %v3785, 0
      %v3836 = vsel %vm564, %v3786, 0
      %v3839 = vsel %vm564, %v3787, 0
      %v3842 = vsel %vm564, %v3788, 0
      %v3845 = vsel %vm564, %v3789, 0
      %v3848 = vsel %vm564, %v3790, 0
      %v3851 = vsel %vm564, %v3791, 0
      %v3854 = vsel %vm564, %v3792, 0
      %v3857 = vsel %vm564, %v3793, 0
      %v3860 = vsel %vm564, %v3794, 0
      %v3863 = vsel %vm564, %v3795, 0
      %v3866 = vsel %vm564, %v3796, 0
      %3868 = vmatpush.bf16.msra.mxu0 0
      %3869 = vmatpush.bf16.msra.mxu0 0
      %3870 = vmatpush.bf16.msra.mxu0 0
      %3871 = vmatpush.bf16.msra.mxu0 0
      %3872 = vmatpush.bf16.msra.mxu0 0
      %3873 = vmatpush.bf16.msra.mxu0 0
      %3874 = vmatpush.bf16.msra.mxu0 %v3811
      %3875 = vmatpush.bf16.msra.mxu0 %v3810
      %3876 = vmatmul.bf16.gmra.mxu0 %v3815
      %v3877 = vpop.f32.mrf.mxu0
      %v3878 = vadd.f32 0.0, %v3877
      %v3879 = vpop.f32.mrf.mxu0
      %v3880 = vadd.f32 0.0, %v3879
      %3881 = vmatmul.bf16.gmra.mxu0 %v3818
      %v3882 = vpop.f32.mrf.mxu0
      %v3883 = vadd.f32 0.0, %v3882
      %v3884 = vpop.f32.mrf.mxu0
      %v3885 = vadd.f32 0.0, %v3884
      %3886 = vmatmul.bf16.gmra.mxu0 %v3821
      %v3887 = vpop.f32.mrf.mxu0
      %v3888 = vadd.f32 0.0, %v3887
      %v3889 = vpop.f32.mrf.mxu0
      %v3890 = vadd.f32 0.0, %v3889
      %3891 = vmatmul.bf16.gmra.mxu0 %v3824
      %v3892 = vpop.f32.mrf.mxu0
      %v3893 = vadd.f32 0.0, %v3892
      %v3894 = vpop.f32.mrf.mxu0
      %v3895 = vadd.f32 0.0, %v3894
      %3896 = vmatmul.bf16.gmra.mxu0 %v3827
      %v3897 = vpop.f32.mrf.mxu0
      %v3898 = vadd.f32 0.0, %v3897
      %v3899 = vpop.f32.mrf.mxu0
      %v3900 = vadd.f32 0.0, %v3899
      %3901 = vmatmul.bf16.gmra.mxu0 %v3830
      %v3902 = vpop.f32.mrf.mxu0
      %v3903 = vadd.f32 0.0, %v3902
      %v3904 = vpop.f32.mrf.mxu0
      %v3905 = vadd.f32 0.0, %v3904
      %3906 = vmatmul.bf16.gmra.mxu0 %v3833
      %v3907 = vpop.f32.mrf.mxu0
      %v3908 = vadd.f32 0.0, %v3907
      %v3909 = vpop.f32.mrf.mxu0
      %v3910 = vadd.f32 0.0, %v3909
      %3911 = vmatmul.bf16.gmra.mxu0 %v3836
      %v3912 = vpop.f32.mrf.mxu0
      %v3913 = vadd.f32 0.0, %v3912
      %v3914 = vpop.f32.mrf.mxu0
      %v3915 = vadd.f32 0.0, %v3914
      %3916 = vmatmul.bf16.gmra.mxu0 %v3839
      %v3917 = vpop.f32.mrf.mxu0
      %v3918 = vadd.f32 0.0, %v3917
      %v3919 = vpop.f32.mrf.mxu0
      %v3920 = vadd.f32 0.0, %v3919
      %3921 = vmatmul.bf16.gmra.mxu0 %v3842
      %v3922 = vpop.f32.mrf.mxu0
      %v3923 = vadd.f32 0.0, %v3922
      %v3924 = vpop.f32.mrf.mxu0
      %v3925 = vadd.f32 0.0, %v3924
      %3926 = vmatmul.bf16.gmra.mxu0 %v3845
      %v3927 = vpop.f32.mrf.mxu0
      %v3928 = vadd.f32 0.0, %v3927
      %v3929 = vpop.f32.mrf.mxu0
      %v3930 = vadd.f32 0.0, %v3929
      %3931 = vmatmul.bf16.gmra.mxu0 %v3848
      %v3932 = vpop.f32.mrf.mxu0
      %v3933 = vadd.f32 0.0, %v3932
      %v3934 = vpop.f32.mrf.mxu0
      %v3935 = vadd.f32 0.0, %v3934
      %3936 = vmatmul.bf16.gmra.mxu0 %v3851
      %v3937 = vpop.f32.mrf.mxu0
      %v3938 = vadd.f32 0.0, %v3937
      %v3939 = vpop.f32.mrf.mxu0
      %v3940 = vadd.f32 0.0, %v3939
      %3941 = vmatmul.bf16.gmra.mxu0 %v3854
      %v3942 = vpop.f32.mrf.mxu0
      %v3943 = vadd.f32 0.0, %v3942
      %v3944 = vpop.f32.mrf.mxu0
      %v3945 = vadd.f32 0.0, %v3944
      %3946 = vmatmul.bf16.gmra.mxu0 %v3857
      %v3947 = vpop.f32.mrf.mxu0
      %v3948 = vadd.f32 0.0, %v3947
      %v3949 = vpop.f32.mrf.mxu0
      %v3950 = vadd.f32 0.0, %v3949
      %3951 = vmatmul.bf16.gmra.mxu0 %v3860
      %v3952 = vpop.f32.mrf.mxu0
      %v3953 = vadd.f32 0.0, %v3952
      %v3954 = vpop.f32.mrf.mxu0
      %v3955 = vadd.f32 0.0, %v3954
      %3956 = vmatmul.bf16.gmra.mxu0 %v3863
      %v3957 = vpop.f32.mrf.mxu0
      %v3958 = vadd.f32 0.0, %v3957
      %v3959 = vpop.f32.mrf.mxu0
      %v3960 = vadd.f32 0.0, %v3959
      %3961 = vmatmul.bf16.gmra.mxu0 %v3866
      %v3962 = vpop.f32.mrf.mxu0
      %v3963 = vadd.f32 0.0, %v3962
      %v3964 = vpop.f32.mrf.mxu0
      %v3965 = vadd.f32 0.0, %v3964
      %3966 = vdwg.mxu0
      %v3967 = vadd.f32 %v3707, %v3878
      %v3968 = vadd.f32 %v3708, %v3880
      %v3969 = vadd.f32 %v3709, %v3883
      %v3970 = vadd.f32 %v3710, %v3885
      %v3971 = vadd.f32 %v3711, %v3888
      %v3972 = vadd.f32 %v3712, %v3890
      %v3973 = vadd.f32 %v3713, %v3893
      %v3974 = vadd.f32 %v3714, %v3895
      %v3975 = vadd.f32 %v3715, %v3898
      %v3976 = vadd.f32 %v3716, %v3900
      %v3977 = vadd.f32 %v3717, %v3903
      %v3978 = vadd.f32 %v3718, %v3905
      %v3979 = vadd.f32 %v3719, %v3908
      %v3980 = vadd.f32 %v3720, %v3910
      %v3981 = vadd.f32 %v3721, %v3913
      %v3982 = vadd.f32 %v3722, %v3915
      %v3983 = vadd.f32 %v3723, %v3918
      %v3984 = vadd.f32 %v3724, %v3920
      %v3985 = vadd.f32 %v3725, %v3923
      %v3986 = vadd.f32 %v3726, %v3925
      %v3987 = vadd.f32 %v3727, %v3928
      %v3988 = vadd.f32 %v3728, %v3930
      %v3989 = vadd.f32 %v3729, %v3933
      %v3990 = vadd.f32 %v3730, %v3935
      %v3991 = vadd.f32 %v3731, %v3938
      %v3992 = vadd.f32 %v3732, %v3940
      %v3993 = vadd.f32 %v3733, %v3943
      %v3994 = vadd.f32 %v3734, %v3945
      %v3995 = vadd.f32 %v3735, %v3948
      %v3996 = vadd.f32 %v3736, %v3950
      %v3997 = vadd.f32 %v3737, %v3953
      %v3998 = vadd.f32 %v3738, %v3955
      %v3999 = vadd.f32 %v3739, %v3958
      %v4000 = vadd.f32 %v3740, %v3960
      %v4001 = vadd.f32 %v3741, %v3963
      %v4002 = vadd.f32 %v3742, %v3965
      %v4003 = vld [vmem:[%s398 + $0x14] sm:$0xff]
      %v4004 = vld [vmem:[%s398 + $0x1c] sm:$0xff]
      %v4005 = vld [vmem:[%s398 + $0x24] sm:$0xff]
      %v4006 = vld [vmem:[%s398 + $0x2c] sm:$0xff]
      %v4007 = vld [vmem:[%s398 + $0x34] sm:$0xff]
      %v4008 = vld [vmem:[%s398 + $0x3c] sm:$0xff]
      %v4009 = vld [vmem:[%s398 + $0x44] sm:$0xff]
      %v4010 = vld [vmem:[%s398 + $0x4c] sm:$0xff]
      %v4011 = vld [vmem:[%s398 + $0x54] sm:$0xff]
      %v4012 = vld [vmem:[%s398 + $0x5c] sm:$0xff]
      %v4013 = vld [vmem:[%s398 + $0x64] sm:$0xff]
      %v4014 = vld [vmem:[%s398 + $0x6c] sm:$0xff]
      %v4015 = vld [vmem:[%s398 + $0x74] sm:$0xff]
      %v4016 = vld [vmem:[%s398 + $0x7c] sm:$0xff]
      %v4017 = vld [vmem:[%s398 + $0x84] sm:$0xff]
      %v4018 = vld [vmem:[%s398 + $0x8c] sm:$0xff]
      %v4019 = vld [vmem:[%s398 + $0x94] sm:$0xff]
      %v4020 = vld [vmem:[%s398 + $0x9c] sm:$0xff]
      %v4021 = vld [vmem:[%s398 + $0xa4] sm:$0xff]
      %v4022 = vld [vmem:[%s398 + $0xac] sm:$0xff]
      %v4023 = vld [vmem:[%s398 + $0xb4] sm:$0xff]
      %v4024 = vld [vmem:[%s398 + $0xbc] sm:$0xff]
      %v4025 = vld [vmem:[%s398 + $0xc4] sm:$0xff]
      %v4026 = vld [vmem:[%s398 + $0xcc] sm:$0xff]
      %v4027 = vld [vmem:[%s398 + $0xd4] sm:$0xff]
      %v4028 = vld [vmem:[%s398 + $0xdc] sm:$0xff]
      %v4029 = vld [vmem:[%s398 + $0xe4] sm:$0xff]
      %v4030 = vld [vmem:[%s398 + $0xec] sm:$0xff]
      %v4031 = vld [vmem:[%s398 + $0xf4] sm:$0xff]
      %v4032 = vld [vmem:[%s398 + $0xfc] sm:$0xff]
      %v4033 = vld [vmem:[%s398 + $0x104] sm:$0xff]
      %v4034 = vld [vmem:[%s398 + $0x10c] sm:$0xff]
      %v4035 = vld [vmem:[%s398 + $0x114] sm:$0xff]
      %v4036 = vld [vmem:[%s398 + $0x11c] sm:$0xff]
      %v4037 = vld [vmem:[%s398 + $0x124] sm:$0xff]
      %v4038 = vld [vmem:[%s398 + $0x12c] sm:$0x3f]
      %v4039 = vpack.c.bf16 %v4004, %v4003
      %v4040 = vpack.c.bf16 %v4006, %v4005
      %v4041 = vpack.c.bf16 %v4008, %v4007
      %v4042 = vpack.c.bf16 %v4010, %v4009
      %v4043 = vpack.c.bf16 %v4012, %v4011
      %v4044 = vpack.c.bf16 %v4014, %v4013
      %v4045 = vpack.c.bf16 %v4016, %v4015
      %v4046 = vpack.c.bf16 %v4018, %v4017
      %v4047 = vpack.c.bf16 %v4020, %v4019
      %v4048 = vpack.c.bf16 %v4022, %v4021
      %v4049 = vpack.c.bf16 %v4024, %v4023
      %v4050 = vpack.c.bf16 %v4026, %v4025
      %v4051 = vpack.c.bf16 %v4028, %v4027
      %v4052 = vpack.c.bf16 %v4030, %v4029
      %v4053 = vpack.c.bf16 %v4032, %v4031
      %v4054 = vpack.c.bf16 %v4034, %v4033
      %v4055 = vpack.c.bf16 %v4036, %v4035
      %v4056 = vpack.c.bf16 %v4038, %v4037
      %s4057 = scalar_lea.vmem %s3, 224
      %v4058 = vld [vmem:[%s4057] sm:$0xf]
      %v4059 = vld [vmem:[%s4057 + $0x4] sm:$0xf]
      %v4060 = vld [vmem:[%s4057 + $0x8] sm:$0xf]
      %v4061 = vld [vmem:[%s4057 + $0xc] sm:$0xf]
      %v4066 = vunpack.c.l.b16 %v4058
      %v4067 = vunpack.c.l.b16 %v4059
      %v4068 = vunpack.c.l.b16 %v4060
      %v4069 = vunpack.c.l.b16 %v4061
      %v4070 = vpack.c.b16 %v4067, %v4066
      %v4071 = vpack.c.b16 %v4069, %v4068
      %v4075 = vsel %vm564, %v4039, 0
      %v4078 = vsel %vm564, %v4040, 0
      %v4081 = vsel %vm564, %v4041, 0
      %v4084 = vsel %vm564, %v4042, 0
      %v4087 = vsel %vm564, %v4043, 0
      %v4090 = vsel %vm564, %v4044, 0
      %v4093 = vsel %vm564, %v4045, 0
      %v4096 = vsel %vm564, %v4046, 0
      %v4099 = vsel %vm564, %v4047, 0
      %v4102 = vsel %vm564, %v4048, 0
      %v4105 = vsel %vm564, %v4049, 0
      %v4108 = vsel %vm564, %v4050, 0
      %v4111 = vsel %vm564, %v4051, 0
      %v4114 = vsel %vm564, %v4052, 0
      %v4117 = vsel %vm564, %v4053, 0
      %v4120 = vsel %vm564, %v4054, 0
      %v4123 = vsel %vm564, %v4055, 0
      %v4126 = vsel %vm564, %v4056, 0
      %4128 = vmatpush.bf16.msra.mxu0 0
      %4129 = vmatpush.bf16.msra.mxu0 0
      %4130 = vmatpush.bf16.msra.mxu0 0
      %4131 = vmatpush.bf16.msra.mxu0 0
      %4132 = vmatpush.bf16.msra.mxu0 0
      %4133 = vmatpush.bf16.msra.mxu0 0
      %4134 = vmatpush.bf16.msra.mxu0 %v4071
      %4135 = vmatpush.bf16.msra.mxu0 %v4070
      %4136 = vmatmul.bf16.gmra.mxu0 %v4075
      %v4137 = vpop.f32.mrf.mxu0
      %v4138 = vadd.f32 0.0, %v4137
      %v4139 = vpop.f32.mrf.mxu0
      %v4140 = vadd.f32 0.0, %v4139
      %4141 = vmatmul.bf16.gmra.mxu0 %v4078
      %v4142 = vpop.f32.mrf.mxu0
      %v4143 = vadd.f32 0.0, %v4142
      %v4144 = vpop.f32.mrf.mxu0
      %v4145 = vadd.f32 0.0, %v4144
      %4146 = vmatmul.bf16.gmra.mxu0 %v4081
      %v4147 = vpop.f32.mrf.mxu0
      %v4148 = vadd.f32 0.0, %v4147
      %v4149 = vpop.f32.mrf.mxu0
      %v4150 = vadd.f32 0.0, %v4149
      %4151 = vmatmul.bf16.gmra.mxu0 %v4084
      %v4152 = vpop.f32.mrf.mxu0
      %v4153 = vadd.f32 0.0, %v4152
      %v4154 = vpop.f32.mrf.mxu0
      %v4155 = vadd.f32 0.0, %v4154
      %4156 = vmatmul.bf16.gmra.mxu0 %v4087
      %v4157 = vpop.f32.mrf.mxu0
      %v4158 = vadd.f32 0.0, %v4157
      %v4159 = vpop.f32.mrf.mxu0
      %v4160 = vadd.f32 0.0, %v4159
      %4161 = vmatmul.bf16.gmra.mxu0 %v4090
      %v4162 = vpop.f32.mrf.mxu0
      %v4163 = vadd.f32 0.0, %v4162
      %v4164 = vpop.f32.mrf.mxu0
      %v4165 = vadd.f32 0.0, %v4164
      %4166 = vmatmul.bf16.gmra.mxu0 %v4093
      %v4167 = vpop.f32.mrf.mxu0
      %v4168 = vadd.f32 0.0, %v4167
      %v4169 = vpop.f32.mrf.mxu0
      %v4170 = vadd.f32 0.0, %v4169
      %4171 = vmatmul.bf16.gmra.mxu0 %v4096
      %v4172 = vpop.f32.mrf.mxu0
      %v4173 = vadd.f32 0.0, %v4172
      %v4174 = vpop.f32.mrf.mxu0
      %v4175 = vadd.f32 0.0, %v4174
      %4176 = vmatmul.bf16.gmra.mxu0 %v4099
      %v4177 = vpop.f32.mrf.mxu0
      %v4178 = vadd.f32 0.0, %v4177
      %v4179 = vpop.f32.mrf.mxu0
      %v4180 = vadd.f32 0.0, %v4179
      %4181 = vmatmul.bf16.gmra.mxu0 %v4102
      %v4182 = vpop.f32.mrf.mxu0
      %v4183 = vadd.f32 0.0, %v4182
      %v4184 = vpop.f32.mrf.mxu0
      %v4185 = vadd.f32 0.0, %v4184
      %4186 = vmatmul.bf16.gmra.mxu0 %v4105
      %v4187 = vpop.f32.mrf.mxu0
      %v4188 = vadd.f32 0.0, %v4187
      %v4189 = vpop.f32.mrf.mxu0
      %v4190 = vadd.f32 0.0, %v4189
      %4191 = vmatmul.bf16.gmra.mxu0 %v4108
      %v4192 = vpop.f32.mrf.mxu0
      %v4193 = vadd.f32 0.0, %v4192
      %v4194 = vpop.f32.mrf.mxu0
      %v4195 = vadd.f32 0.0, %v4194
      %4196 = vmatmul.bf16.gmra.mxu0 %v4111
      %v4197 = vpop.f32.mrf.mxu0
      %v4198 = vadd.f32 0.0, %v4197
      %v4199 = vpop.f32.mrf.mxu0
      %v4200 = vadd.f32 0.0, %v4199
      %4201 = vmatmul.bf16.gmra.mxu0 %v4114
      %v4202 = vpop.f32.mrf.mxu0
      %v4203 = vadd.f32 0.0, %v4202
      %v4204 = vpop.f32.mrf.mxu0
      %v4205 = vadd.f32 0.0, %v4204
      %4206 = vmatmul.bf16.gmra.mxu0 %v4117
      %v4207 = vpop.f32.mrf.mxu0
      %v4208 = vadd.f32 0.0, %v4207
      %v4209 = vpop.f32.mrf.mxu0
      %v4210 = vadd.f32 0.0, %v4209
      %4211 = vmatmul.bf16.gmra.mxu0 %v4120
      %v4212 = vpop.f32.mrf.mxu0
      %v4213 = vadd.f32 0.0, %v4212
      %v4214 = vpop.f32.mrf.mxu0
      %v4215 = vadd.f32 0.0, %v4214
      %4216 = vmatmul.bf16.gmra.mxu0 %v4123
      %v4217 = vpop.f32.mrf.mxu0
      %v4218 = vadd.f32 0.0, %v4217
      %v4219 = vpop.f32.mrf.mxu0
      %v4220 = vadd.f32 0.0, %v4219
      %4221 = vmatmul.bf16.gmra.mxu0 %v4126
      %v4222 = vpop.f32.mrf.mxu0
      %v4223 = vadd.f32 0.0, %v4222
      %v4224 = vpop.f32.mrf.mxu0
      %v4225 = vadd.f32 0.0, %v4224
      %4226 = vdwg.mxu0
      %v4227 = vadd.f32 %v3967, %v4138
      %v4228 = vadd.f32 %v3968, %v4140
      %v4229 = vadd.f32 %v3969, %v4143
      %v4230 = vadd.f32 %v3970, %v4145
      %v4231 = vadd.f32 %v3971, %v4148
      %v4232 = vadd.f32 %v3972, %v4150
      %v4233 = vadd.f32 %v3973, %v4153
      %v4234 = vadd.f32 %v3974, %v4155
      %v4235 = vadd.f32 %v3975, %v4158
      %v4236 = vadd.f32 %v3976, %v4160
      %v4237 = vadd.f32 %v3977, %v4163
      %v4238 = vadd.f32 %v3978, %v4165
      %v4239 = vadd.f32 %v3979, %v4168
      %v4240 = vadd.f32 %v3980, %v4170
      %v4241 = vadd.f32 %v3981, %v4173
      %v4242 = vadd.f32 %v3982, %v4175
      %v4243 = vadd.f32 %v3983, %v4178
      %v4244 = vadd.f32 %v3984, %v4180
      %v4245 = vadd.f32 %v3985, %v4183
      %v4246 = vadd.f32 %v3986, %v4185
      %v4247 = vadd.f32 %v3987, %v4188
      %v4248 = vadd.f32 %v3988, %v4190
      %v4249 = vadd.f32 %v3989, %v4193
      %v4250 = vadd.f32 %v3990, %v4195
      %v4251 = vadd.f32 %v3991, %v4198
      %v4252 = vadd.f32 %v3992, %v4200
      %v4253 = vadd.f32 %v3993, %v4203
      %v4254 = vadd.f32 %v3994, %v4205
      %v4255 = vadd.f32 %v3995, %v4208
      %v4256 = vadd.f32 %v3996, %v4210
      %v4257 = vadd.f32 %v3997, %v4213
      %v4258 = vadd.f32 %v3998, %v4215
      %v4259 = vadd.f32 %v3999, %v4218
      %v4260 = vadd.f32 %v4000, %v4220
      %v4261 = vadd.f32 %v4001, %v4223
      %v4262 = vadd.f32 %v4002, %v4225
      %v4263 = vld [vmem:[%s398 + $0x24] sm:$0xff]
      %v4264 = vld [vmem:[%s398 + $0x2c] sm:$0xff]
      %v4265 = vld [vmem:[%s398 + $0x34] sm:$0xff]
      %v4266 = vld [vmem:[%s398 + $0x3c] sm:$0xff]
      %v4267 = vld [vmem:[%s398 + $0x44] sm:$0xff]
      %v4268 = vld [vmem:[%s398 + $0x4c] sm:$0xff]
      %v4269 = vld [vmem:[%s398 + $0x54] sm:$0xff]
      %v4270 = vld [vmem:[%s398 + $0x5c] sm:$0xff]
      %v4271 = vld [vmem:[%s398 + $0x64] sm:$0xff]
      %v4272 = vld [vmem:[%s398 + $0x6c] sm:$0xff]
      %v4273 = vld [vmem:[%s398 + $0x74] sm:$0xff]
      %v4274 = vld [vmem:[%s398 + $0x7c] sm:$0xff]
      %v4275 = vld [vmem:[%s398 + $0x84] sm:$0xff]
      %v4276 = vld [vmem:[%s398 + $0x8c] sm:$0xff]
      %v4277 = vld [vmem:[%s398 + $0x94] sm:$0xff]
      %v4278 = vld [vmem:[%s398 + $0x9c] sm:$0xff]
      %v4279 = vld [vmem:[%s398 + $0xa4] sm:$0xff]
      %v4280 = vld [vmem:[%s398 + $0xac] sm:$0xff]
      %v4281 = vld [vmem:[%s398 + $0xb4] sm:$0xff]
      %v4282 = vld [vmem:[%s398 + $0xbc] sm:$0xff]
      %v4283 = vld [vmem:[%s398 + $0xc4] sm:$0xff]
      %v4284 = vld [vmem:[%s398 + $0xcc] sm:$0xff]
      %v4285 = vld [vmem:[%s398 + $0xd4] sm:$0xff]
      %v4286 = vld [vmem:[%s398 + $0xdc] sm:$0xff]
      %v4287 = vld [vmem:[%s398 + $0xe4] sm:$0xff]
      %v4288 = vld [vmem:[%s398 + $0xec] sm:$0xff]
      %v4289 = vld [vmem:[%s398 + $0xf4] sm:$0xff]
      %v4290 = vld [vmem:[%s398 + $0xfc] sm:$0xff]
      %v4291 = vld [vmem:[%s398 + $0x104] sm:$0xff]
      %v4292 = vld [vmem:[%s398 + $0x10c] sm:$0xff]
      %v4293 = vld [vmem:[%s398 + $0x114] sm:$0xff]
      %v4294 = vld [vmem:[%s398 + $0x11c] sm:$0xff]
      %v4295 = vld [vmem:[%s398 + $0x124] sm:$0xff]
      %v4296 = vld [vmem:[%s398 + $0x12c] sm:$0xff]
      %v4297 = vld [vmem:[%s398 + $0x134] sm:$0xff]
      %v4298 = vld [vmem:[%s398 + $0x13c] sm:$0x3f]
      %v4299 = vpack.c.bf16 %v4264, %v4263
      %v4300 = vpack.c.bf16 %v4266, %v4265
      %v4301 = vpack.c.bf16 %v4268, %v4267
      %v4302 = vpack.c.bf16 %v4270, %v4269
      %v4303 = vpack.c.bf16 %v4272, %v4271
      %v4304 = vpack.c.bf16 %v4274, %v4273
      %v4305 = vpack.c.bf16 %v4276, %v4275
      %v4306 = vpack.c.bf16 %v4278, %v4277
      %v4307 = vpack.c.bf16 %v4280, %v4279
      %v4308 = vpack.c.bf16 %v4282, %v4281
      %v4309 = vpack.c.bf16 %v4284, %v4283
      %v4310 = vpack.c.bf16 %v4286, %v4285
      %v4311 = vpack.c.bf16 %v4288, %v4287
      %v4312 = vpack.c.bf16 %v4290, %v4289
      %v4313 = vpack.c.bf16 %v4292, %v4291
      %v4314 = vpack.c.bf16 %v4294, %v4293
      %v4315 = vpack.c.bf16 %v4296, %v4295
      %v4316 = vpack.c.bf16 %v4298, %v4297
      %s4317 = scalar_lea.vmem %s3, 240
      %v4318 = vld [vmem:[%s4317] sm:$0xf]
      %v4319 = vld [vmem:[%s4317 + $0x4] sm:$0xf]
      %v4320 = vld [vmem:[%s4317 + $0x8] sm:$0xf]
      %v4321 = vld [vmem:[%s4317 + $0xc] sm:$0xf]
      %v4326 = vunpack.c.l.b16 %v4318
      %v4327 = vunpack.c.l.b16 %v4319
      %v4328 = vunpack.c.l.b16 %v4320
      %v4329 = vunpack.c.l.b16 %v4321
      %v4330 = vpack.c.b16 %v4327, %v4326
      %v4331 = vpack.c.b16 %v4329, %v4328
      %v4335 = vsel %vm564, %v4299, 0
      %v4338 = vsel %vm564, %v4300, 0
      %v4341 = vsel %vm564, %v4301, 0
      %v4344 = vsel %vm564, %v4302, 0
      %v4347 = vsel %vm564, %v4303, 0
      %v4350 = vsel %vm564, %v4304, 0
      %v4353 = vsel %vm564, %v4305, 0
      %v4356 = vsel %vm564, %v4306, 0
      %v4359 = vsel %vm564, %v4307, 0
      %v4362 = vsel %vm564, %v4308, 0
      %v4365 = vsel %vm564, %v4309, 0
      %v4368 = vsel %vm564, %v4310, 0
      %v4371 = vsel %vm564, %v4311, 0
      %v4374 = vsel %vm564, %v4312, 0
      %v4377 = vsel %vm564, %v4313, 0
      %v4380 = vsel %vm564, %v4314, 0
      %v4383 = vsel %vm564, %v4315, 0
      %v4386 = vsel %vm564, %v4316, 0
      %4388 = vmatpush.bf16.msra.mxu0 0
      %4389 = vmatpush.bf16.msra.mxu0 0
      %4390 = vmatpush.bf16.msra.mxu0 0
      %4391 = vmatpush.bf16.msra.mxu0 0
      %4392 = vmatpush.bf16.msra.mxu0 0
      %4393 = vmatpush.bf16.msra.mxu0 0
      %4394 = vmatpush.bf16.msra.mxu0 %v4331
      %4395 = vmatpush.bf16.msra.mxu0 %v4330
      %4396 = vmatmul.bf16.gmra.mxu0 %v4335
      %v4397 = vpop.f32.mrf.mxu0
      %v4398 = vadd.f32 0.0, %v4397
      %v4399 = vpop.f32.mrf.mxu0
      %v4400 = vadd.f32 0.0, %v4399
      %4401 = vmatmul.bf16.gmra.mxu0 %v4338
      %v4402 = vpop.f32.mrf.mxu0
      %v4403 = vadd.f32 0.0, %v4402
      %v4404 = vpop.f32.mrf.mxu0
      %v4405 = vadd.f32 0.0, %v4404
      %4406 = vmatmul.bf16.gmra.mxu0 %v4341
      %v4407 = vpop.f32.mrf.mxu0
      %v4408 = vadd.f32 0.0, %v4407
      %v4409 = vpop.f32.mrf.mxu0
      %v4410 = vadd.f32 0.0, %v4409
      %4411 = vmatmul.bf16.gmra.mxu0 %v4344
      %v4412 = vpop.f32.mrf.mxu0
      %v4413 = vadd.f32 0.0, %v4412
      %v4414 = vpop.f32.mrf.mxu0
      %v4415 = vadd.f32 0.0, %v4414
      %4416 = vmatmul.bf16.gmra.mxu0 %v4347
      %v4417 = vpop.f32.mrf.mxu0
      %v4418 = vadd.f32 0.0, %v4417
      %v4419 = vpop.f32.mrf.mxu0
      %v4420 = vadd.f32 0.0, %v4419
      %4421 = vmatmul.bf16.gmra.mxu0 %v4350
      %v4422 = vpop.f32.mrf.mxu0
      %v4423 = vadd.f32 0.0, %v4422
      %v4424 = vpop.f32.mrf.mxu0
      %v4425 = vadd.f32 0.0, %v4424
      %4426 = vmatmul.bf16.gmra.mxu0 %v4353
      %v4427 = vpop.f32.mrf.mxu0
      %v4428 = vadd.f32 0.0, %v4427
      %v4429 = vpop.f32.mrf.mxu0
      %v4430 = vadd.f32 0.0, %v4429
      %4431 = vmatmul.bf16.gmra.mxu0 %v4356
      %v4432 = vpop.f32.mrf.mxu0
      %v4433 = vadd.f32 0.0, %v4432
      %v4434 = vpop.f32.mrf.mxu0
      %v4435 = vadd.f32 0.0, %v4434
      %4436 = vmatmul.bf16.gmra.mxu0 %v4359
      %v4437 = vpop.f32.mrf.mxu0
      %v4438 = vadd.f32 0.0, %v4437
      %v4439 = vpop.f32.mrf.mxu0
      %v4440 = vadd.f32 0.0, %v4439
      %4441 = vmatmul.bf16.gmra.mxu0 %v4362
      %v4442 = vpop.f32.mrf.mxu0
      %v4443 = vadd.f32 0.0, %v4442
      %v4444 = vpop.f32.mrf.mxu0
      %v4445 = vadd.f32 0.0, %v4444
      %4446 = vmatmul.bf16.gmra.mxu0 %v4365
      %v4447 = vpop.f32.mrf.mxu0
      %v4448 = vadd.f32 0.0, %v4447
      %v4449 = vpop.f32.mrf.mxu0
      %v4450 = vadd.f32 0.0, %v4449
      %4451 = vmatmul.bf16.gmra.mxu0 %v4368
      %v4452 = vpop.f32.mrf.mxu0
      %v4453 = vadd.f32 0.0, %v4452
      %v4454 = vpop.f32.mrf.mxu0
      %v4455 = vadd.f32 0.0, %v4454
      %4456 = vmatmul.bf16.gmra.mxu0 %v4371
      %v4457 = vpop.f32.mrf.mxu0
      %v4458 = vadd.f32 0.0, %v4457
      %v4459 = vpop.f32.mrf.mxu0
      %v4460 = vadd.f32 0.0, %v4459
      %4461 = vmatmul.bf16.gmra.mxu0 %v4374
      %v4462 = vpop.f32.mrf.mxu0
      %v4463 = vadd.f32 0.0, %v4462
      %v4464 = vpop.f32.mrf.mxu0
      %v4465 = vadd.f32 0.0, %v4464
      %4466 = vmatmul.bf16.gmra.mxu0 %v4377
      %v4467 = vpop.f32.mrf.mxu0
      %v4468 = vadd.f32 0.0, %v4467
      %v4469 = vpop.f32.mrf.mxu0
      %v4470 = vadd.f32 0.0, %v4469
      %4471 = vmatmul.bf16.gmra.mxu0 %v4380
      %v4472 = vpop.f32.mrf.mxu0
      %v4473 = vadd.f32 0.0, %v4472
      %v4474 = vpop.f32.mrf.mxu0
      %v4475 = vadd.f32 0.0, %v4474
      %4476 = vmatmul.bf16.gmra.mxu0 %v4383
      %v4477 = vpop.f32.mrf.mxu0
      %v4478 = vadd.f32 0.0, %v4477
      %v4479 = vpop.f32.mrf.mxu0
      %v4480 = vadd.f32 0.0, %v4479
      %4481 = vmatmul.bf16.gmra.mxu0 %v4386
      %v4482 = vpop.f32.mrf.mxu0
      %v4483 = vadd.f32 0.0, %v4482
      %v4484 = vpop.f32.mrf.mxu0
      %v4485 = vadd.f32 0.0, %v4484
      %4486 = vdwg.mxu0
      %v4487 = vadd.f32 %v4227, %v4398
      %v4488 = vadd.f32 %v4228, %v4400
      %v4489 = vadd.f32 %v4229, %v4403
      %v4490 = vadd.f32 %v4230, %v4405
      %v4491 = vadd.f32 %v4231, %v4408
      %v4492 = vadd.f32 %v4232, %v4410
      %v4493 = vadd.f32 %v4233, %v4413
      %v4494 = vadd.f32 %v4234, %v4415
      %v4495 = vadd.f32 %v4235, %v4418
      %v4496 = vadd.f32 %v4236, %v4420
      %v4497 = vadd.f32 %v4237, %v4423
      %v4498 = vadd.f32 %v4238, %v4425
      %v4499 = vadd.f32 %v4239, %v4428
      %v4500 = vadd.f32 %v4240, %v4430
      %v4501 = vadd.f32 %v4241, %v4433
      %v4502 = vadd.f32 %v4242, %v4435
      %v4503 = vadd.f32 %v4243, %v4438
      %v4504 = vadd.f32 %v4244, %v4440
      %v4505 = vadd.f32 %v4245, %v4443
      %v4506 = vadd.f32 %v4246, %v4445
      %v4507 = vadd.f32 %v4247, %v4448
      %v4508 = vadd.f32 %v4248, %v4450
      %v4509 = vadd.f32 %v4249, %v4453
      %v4510 = vadd.f32 %v4250, %v4455
      %v4511 = vadd.f32 %v4251, %v4458
      %v4512 = vadd.f32 %v4252, %v4460
      %v4513 = vadd.f32 %v4253, %v4463
      %v4514 = vadd.f32 %v4254, %v4465
      %v4515 = vadd.f32 %v4255, %v4468
      %v4516 = vadd.f32 %v4256, %v4470
      %v4517 = vadd.f32 %v4257, %v4473
      %v4518 = vadd.f32 %v4258, %v4475
      %v4519 = vadd.f32 %v4259, %v4478
      %v4520 = vadd.f32 %v4260, %v4480
      %v4521 = vadd.f32 %v4261, %v4483
      %v4522 = vadd.f32 %v4262, %v4485
      %v4523 = vld [vmem:[%s398 + $0x25] sm:$0xff]
      %v4524 = vld [vmem:[%s398 + $0x2d] sm:$0xff]
      %v4525 = vld [vmem:[%s398 + $0x35] sm:$0xff]
      %v4526 = vld [vmem:[%s398 + $0x3d] sm:$0xff]
      %v4527 = vld [vmem:[%s398 + $0x45] sm:$0xff]
      %v4528 = vld [vmem:[%s398 + $0x4d] sm:$0xff]
      %v4529 = vld [vmem:[%s398 + $0x55] sm:$0xff]
      %v4530 = vld [vmem:[%s398 + $0x5d] sm:$0xff]
      %v4531 = vld [vmem:[%s398 + $0x65] sm:$0xff]
      %v4532 = vld [vmem:[%s398 + $0x6d] sm:$0xff]
      %v4533 = vld [vmem:[%s398 + $0x75] sm:$0xff]
      %v4534 = vld [vmem:[%s398 + $0x7d] sm:$0xff]
      %v4535 = vld [vmem:[%s398 + $0x85] sm:$0xff]
      %v4536 = vld [vmem:[%s398 + $0x8d] sm:$0xff]
      %v4537 = vld [vmem:[%s398 + $0x95] sm:$0xff]
      %v4538 = vld [vmem:[%s398 + $0x9d] sm:$0xff]
      %v4539 = vld [vmem:[%s398 + $0xa5] sm:$0xff]
      %v4540 = vld [vmem:[%s398 + $0xad] sm:$0xff]
      %v4541 = vld [vmem:[%s398 + $0xb5] sm:$0xff]
      %v4542 = vld [vmem:[%s398 + $0xbd] sm:$0xff]
      %v4543 = vld [vmem:[%s398 + $0xc5] sm:$0xff]
      %v4544 = vld [vmem:[%s398 + $0xcd] sm:$0xff]
      %v4545 = vld [vmem:[%s398 + $0xd5] sm:$0xff]
      %v4546 = vld [vmem:[%s398 + $0xdd] sm:$0xff]
      %v4547 = vld [vmem:[%s398 + $0xe5] sm:$0xff]
      %v4548 = vld [vmem:[%s398 + $0xed] sm:$0xff]
      %v4549 = vld [vmem:[%s398 + $0xf5] sm:$0xff]
      %v4550 = vld [vmem:[%s398 + $0xfd] sm:$0xff]
      %v4551 = vld [vmem:[%s398 + $0x105] sm:$0xff]
      %v4552 = vld [vmem:[%s398 + $0x10d] sm:$0xff]
      %v4553 = vld [vmem:[%s398 + $0x115] sm:$0xff]
      %v4554 = vld [vmem:[%s398 + $0x11d] sm:$0xff]
      %v4555 = vld [vmem:[%s398 + $0x125] sm:$0xff]
      %v4556 = vld [vmem:[%s398 + $0x12d] sm:$0xff]
      %v4557 = vld [vmem:[%s398 + $0x135] sm:$0xff]
      %v4558 = vld [vmem:[%s398 + $0x13d] sm:$0x3f]
      %v4559 = vpack.c.bf16 %v4524, %v4523
      %v4560 = vpack.c.bf16 %v4526, %v4525
      %v4561 = vpack.c.bf16 %v4528, %v4527
      %v4562 = vpack.c.bf16 %v4530, %v4529
      %v4563 = vpack.c.bf16 %v4532, %v4531
      %v4564 = vpack.c.bf16 %v4534, %v4533
      %v4565 = vpack.c.bf16 %v4536, %v4535
      %v4566 = vpack.c.bf16 %v4538, %v4537
      %v4567 = vpack.c.bf16 %v4540, %v4539
      %v4568 = vpack.c.bf16 %v4542, %v4541
      %v4569 = vpack.c.bf16 %v4544, %v4543
      %v4570 = vpack.c.bf16 %v4546, %v4545
      %v4571 = vpack.c.bf16 %v4548, %v4547
      %v4572 = vpack.c.bf16 %v4550, %v4549
      %v4573 = vpack.c.bf16 %v4552, %v4551
      %v4574 = vpack.c.bf16 %v4554, %v4553
      %v4575 = vpack.c.bf16 %v4556, %v4555
      %v4576 = vpack.c.bf16 %v4558, %v4557
      %s4577 = scalar_lea.vmem %s3, 256
      %v4578 = vld [vmem:[%s4577] sm:$0xf]
      %v4579 = vld [vmem:[%s4577 + $0x4] sm:$0xf]
      %v4580 = vld [vmem:[%s4577 + $0x8] sm:$0xf]
      %v4581 = vld [vmem:[%s4577 + $0xc] sm:$0xf]
      %v4586 = vunpack.c.l.b16 %v4578
      %v4587 = vunpack.c.l.b16 %v4579
      %v4588 = vunpack.c.l.b16 %v4580
      %v4589 = vunpack.c.l.b16 %v4581
      %v4590 = vpack.c.b16 %v4587, %v4586
      %v4591 = vpack.c.b16 %v4589, %v4588
      %v4595 = vsel %vm564, %v4559, 0
      %v4598 = vsel %vm564, %v4560, 0
      %v4601 = vsel %vm564, %v4561, 0
      %v4604 = vsel %vm564, %v4562, 0
      %v4607 = vsel %vm564, %v4563, 0
      %v4610 = vsel %vm564, %v4564, 0
      %v4613 = vsel %vm564, %v4565, 0
      %v4616 = vsel %vm564, %v4566, 0
      %v4619 = vsel %vm564, %v4567, 0
      %v4622 = vsel %vm564, %v4568, 0
      %v4625 = vsel %vm564, %v4569, 0
      %v4628 = vsel %vm564, %v4570, 0
      %v4631 = vsel %vm564, %v4571, 0
      %v4634 = vsel %vm564, %v4572, 0
      %v4637 = vsel %vm564, %v4573, 0
      %v4640 = vsel %vm564, %v4574, 0
      %v4643 = vsel %vm564, %v4575, 0
      %v4646 = vsel %vm564, %v4576, 0
      %4648 = vmatpush.bf16.msra.mxu0 0
      %4649 = vmatpush.bf16.msra.mxu0 0
      %4650 = vmatpush.bf16.msra.mxu0 0
      %4651 = vmatpush.bf16.msra.mxu0 0
      %4652 = vmatpush.bf16.msra.mxu0 0
      %4653 = vmatpush.bf16.msra.mxu0 0
      %4654 = vmatpush.bf16.msra.mxu0 %v4591
      %4655 = vmatpush.bf16.msra.mxu0 %v4590
      %4656 = vmatmul.bf16.gmra.mxu0 %v4595
      %v4657 = vpop.f32.mrf.mxu0
      %v4658 = vadd.f32 0.0, %v4657
      %v4659 = vpop.f32.mrf.mxu0
      %v4660 = vadd.f32 0.0, %v4659
      %4661 = vmatmul.bf16.gmra.mxu0 %v4598
      %v4662 = vpop.f32.mrf.mxu0
      %v4663 = vadd.f32 0.0, %v4662
      %v4664 = vpop.f32.mrf.mxu0
      %v4665 = vadd.f32 0.0, %v4664
      %4666 = vmatmul.bf16.gmra.mxu0 %v4601
      %v4667 = vpop.f32.mrf.mxu0
      %v4668 = vadd.f32 0.0, %v4667
      %v4669 = vpop.f32.mrf.mxu0
      %v4670 = vadd.f32 0.0, %v4669
      %4671 = vmatmul.bf16.gmra.mxu0 %v4604
      %v4672 = vpop.f32.mrf.mxu0
      %v4673 = vadd.f32 0.0, %v4672
      %v4674 = vpop.f32.mrf.mxu0
      %v4675 = vadd.f32 0.0, %v4674
      %4676 = vmatmul.bf16.gmra.mxu0 %v4607
      %v4677 = vpop.f32.mrf.mxu0
      %v4678 = vadd.f32 0.0, %v4677
      %v4679 = vpop.f32.mrf.mxu0
      %v4680 = vadd.f32 0.0, %v4679
      %4681 = vmatmul.bf16.gmra.mxu0 %v4610
      %v4682 = vpop.f32.mrf.mxu0
      %v4683 = vadd.f32 0.0, %v4682
      %v4684 = vpop.f32.mrf.mxu0
      %v4685 = vadd.f32 0.0, %v4684
      %4686 = vmatmul.bf16.gmra.mxu0 %v4613
      %v4687 = vpop.f32.mrf.mxu0
      %v4688 = vadd.f32 0.0, %v4687
      %v4689 = vpop.f32.mrf.mxu0
      %v4690 = vadd.f32 0.0, %v4689
      %4691 = vmatmul.bf16.gmra.mxu0 %v4616
      %v4692 = vpop.f32.mrf.mxu0
      %v4693 = vadd.f32 0.0, %v4692
      %v4694 = vpop.f32.mrf.mxu0
      %v4695 = vadd.f32 0.0, %v4694
      %4696 = vmatmul.bf16.gmra.mxu0 %v4619
      %v4697 = vpop.f32.mrf.mxu0
      %v4698 = vadd.f32 0.0, %v4697
      %v4699 = vpop.f32.mrf.mxu0
      %v4700 = vadd.f32 0.0, %v4699
      %4701 = vmatmul.bf16.gmra.mxu0 %v4622
      %v4702 = vpop.f32.mrf.mxu0
      %v4703 = vadd.f32 0.0, %v4702
      %v4704 = vpop.f32.mrf.mxu0
      %v4705 = vadd.f32 0.0, %v4704
      %4706 = vmatmul.bf16.gmra.mxu0 %v4625
      %v4707 = vpop.f32.mrf.mxu0
      %v4708 = vadd.f32 0.0, %v4707
      %v4709 = vpop.f32.mrf.mxu0
      %v4710 = vadd.f32 0.0, %v4709
      %4711 = vmatmul.bf16.gmra.mxu0 %v4628
      %v4712 = vpop.f32.mrf.mxu0
      %v4713 = vadd.f32 0.0, %v4712
      %v4714 = vpop.f32.mrf.mxu0
      %v4715 = vadd.f32 0.0, %v4714
      %4716 = vmatmul.bf16.gmra.mxu0 %v4631
      %v4717 = vpop.f32.mrf.mxu0
      %v4718 = vadd.f32 0.0, %v4717
      %v4719 = vpop.f32.mrf.mxu0
      %v4720 = vadd.f32 0.0, %v4719
      %4721 = vmatmul.bf16.gmra.mxu0 %v4634
      %v4722 = vpop.f32.mrf.mxu0
      %v4723 = vadd.f32 0.0, %v4722
      %v4724 = vpop.f32.mrf.mxu0
      %v4725 = vadd.f32 0.0, %v4724
      %4726 = vmatmul.bf16.gmra.mxu0 %v4637
      %v4727 = vpop.f32.mrf.mxu0
      %v4728 = vadd.f32 0.0, %v4727
      %v4729 = vpop.f32.mrf.mxu0
      %v4730 = vadd.f32 0.0, %v4729
      %4731 = vmatmul.bf16.gmra.mxu0 %v4640
      %v4732 = vpop.f32.mrf.mxu0
      %v4733 = vadd.f32 0.0, %v4732
      %v4734 = vpop.f32.mrf.mxu0
      %v4735 = vadd.f32 0.0, %v4734
      %4736 = vmatmul.bf16.gmra.mxu0 %v4643
      %v4737 = vpop.f32.mrf.mxu0
      %v4738 = vadd.f32 0.0, %v4737
      %v4739 = vpop.f32.mrf.mxu0
      %v4740 = vadd.f32 0.0, %v4739
      %4741 = vmatmul.bf16.gmra.mxu0 %v4646
      %v4742 = vpop.f32.mrf.mxu0
      %v4743 = vadd.f32 0.0, %v4742
      %v4744 = vpop.f32.mrf.mxu0
      %v4745 = vadd.f32 0.0, %v4744
      %4746 = vdwg.mxu0
      %v4747 = vadd.f32 %v4487, %v4658
      %v4748 = vadd.f32 %v4488, %v4660
      %v4749 = vadd.f32 %v4489, %v4663
      %v4750 = vadd.f32 %v4490, %v4665
      %v4751 = vadd.f32 %v4491, %v4668
      %v4752 = vadd.f32 %v4492, %v4670
      %v4753 = vadd.f32 %v4493, %v4673
      %v4754 = vadd.f32 %v4494, %v4675
      %v4755 = vadd.f32 %v4495, %v4678
      %v4756 = vadd.f32 %v4496, %v4680
      %v4757 = vadd.f32 %v4497, %v4683
      %v4758 = vadd.f32 %v4498, %v4685
      %v4759 = vadd.f32 %v4499, %v4688
      %v4760 = vadd.f32 %v4500, %v4690
      %v4761 = vadd.f32 %v4501, %v4693
      %v4762 = vadd.f32 %v4502, %v4695
      %v4763 = vadd.f32 %v4503, %v4698
      %v4764 = vadd.f32 %v4504, %v4700
      %v4765 = vadd.f32 %v4505, %v4703
      %v4766 = vadd.f32 %v4506, %v4705
      %v4767 = vadd.f32 %v4507, %v4708
      %v4768 = vadd.f32 %v4508, %v4710
      %v4769 = vadd.f32 %v4509, %v4713
      %v4770 = vadd.f32 %v4510, %v4715
      %v4771 = vadd.f32 %v4511, %v4718
      %v4772 = vadd.f32 %v4512, %v4720
      %v4773 = vadd.f32 %v4513, %v4723
      %v4774 = vadd.f32 %v4514, %v4725
      %v4775 = vadd.f32 %v4515, %v4728
      %v4776 = vadd.f32 %v4516, %v4730
      %v4777 = vadd.f32 %v4517, %v4733
      %v4778 = vadd.f32 %v4518, %v4735
      %v4779 = vadd.f32 %v4519, %v4738
      %v4780 = vadd.f32 %v4520, %v4740
      %v4781 = vadd.f32 %v4521, %v4743
      %v4782 = vadd.f32 %v4522, %v4745
      %v4783 = vld [vmem:[%s398 + $0x26] sm:$0xff]
      %v4784 = vld [vmem:[%s398 + $0x2e] sm:$0xff]
      %v4785 = vld [vmem:[%s398 + $0x36] sm:$0xff]
      %v4786 = vld [vmem:[%s398 + $0x3e] sm:$0xff]
      %v4787 = vld [vmem:[%s398 + $0x46] sm:$0xff]
      %v4788 = vld [vmem:[%s398 + $0x4e] sm:$0xff]
      %v4789 = vld [vmem:[%s398 + $0x56] sm:$0xff]
      %v4790 = vld [vmem:[%s398 + $0x5e] sm:$0xff]
      %v4791 = vld [vmem:[%s398 + $0x66] sm:$0xff]
      %v4792 = vld [vmem:[%s398 + $0x6e] sm:$0xff]
      %v4793 = vld [vmem:[%s398 + $0x76] sm:$0xff]
      %v4794 = vld [vmem:[%s398 + $0x7e] sm:$0xff]
      %v4795 = vld [vmem:[%s398 + $0x86] sm:$0xff]
      %v4796 = vld [vmem:[%s398 + $0x8e] sm:$0xff]
      %v4797 = vld [vmem:[%s398 + $0x96] sm:$0xff]
      %v4798 = vld [vmem:[%s398 + $0x9e] sm:$0xff]
      %v4799 = vld [vmem:[%s398 + $0xa6] sm:$0xff]
      %v4800 = vld [vmem:[%s398 + $0xae] sm:$0xff]
      %v4801 = vld [vmem:[%s398 + $0xb6] sm:$0xff]
      %v4802 = vld [vmem:[%s398 + $0xbe] sm:$0xff]
      %v4803 = vld [vmem:[%s398 + $0xc6] sm:$0xff]
      %v4804 = vld [vmem:[%s398 + $0xce] sm:$0xff]
      %v4805 = vld [vmem:[%s398 + $0xd6] sm:$0xff]
      %v4806 = vld [vmem:[%s398 + $0xde] sm:$0xff]
      %v4807 = vld [vmem:[%s398 + $0xe6] sm:$0xff]
      %v4808 = vld [vmem:[%s398 + $0xee] sm:$0xff]
      %v4809 = vld [vmem:[%s398 + $0xf6] sm:$0xff]
      %v4810 = vld [vmem:[%s398 + $0xfe] sm:$0xff]
      %v4811 = vld [vmem:[%s398 + $0x106] sm:$0xff]
      %v4812 = vld [vmem:[%s398 + $0x10e] sm:$0xff]
      %v4813 = vld [vmem:[%s398 + $0x116] sm:$0xff]
      %v4814 = vld [vmem:[%s398 + $0x11e] sm:$0xff]
      %v4815 = vld [vmem:[%s398 + $0x126] sm:$0xff]
      %v4816 = vld [vmem:[%s398 + $0x12e] sm:$0xff]
      %v4817 = vld [vmem:[%s398 + $0x136] sm:$0xff]
      %v4818 = vld [vmem:[%s398 + $0x13e] sm:$0x3f]
      %v4819 = vpack.c.bf16 %v4784, %v4783
      %v4820 = vpack.c.bf16 %v4786, %v4785
      %v4821 = vpack.c.bf16 %v4788, %v4787
      %v4822 = vpack.c.bf16 %v4790, %v4789
      %v4823 = vpack.c.bf16 %v4792, %v4791
      %v4824 = vpack.c.bf16 %v4794, %v4793
      %v4825 = vpack.c.bf16 %v4796, %v4795
      %v4826 = vpack.c.bf16 %v4798, %v4797
      %v4827 = vpack.c.bf16 %v4800, %v4799
      %v4828 = vpack.c.bf16 %v4802, %v4801
      %v4829 = vpack.c.bf16 %v4804, %v4803
      %v4830 = vpack.c.bf16 %v4806, %v4805
      %v4831 = vpack.c.bf16 %v4808, %v4807
      %v4832 = vpack.c.bf16 %v4810, %v4809
      %v4833 = vpack.c.bf16 %v4812, %v4811
      %v4834 = vpack.c.bf16 %v4814, %v4813
      %v4835 = vpack.c.bf16 %v4816, %v4815
      %v4836 = vpack.c.bf16 %v4818, %v4817
      %s4837 = scalar_lea.vmem %s3, 272
      %v4838 = vld [vmem:[%s4837] sm:$0xf]
      %v4839 = vld [vmem:[%s4837 + $0x4] sm:$0xf]
      %v4840 = vld [vmem:[%s4837 + $0x8] sm:$0xf]
      %v4841 = vld [vmem:[%s4837 + $0xc] sm:$0xf]
      %v4846 = vunpack.c.l.b16 %v4838
      %v4847 = vunpack.c.l.b16 %v4839
      %v4848 = vunpack.c.l.b16 %v4840
      %v4849 = vunpack.c.l.b16 %v4841
      %v4850 = vpack.c.b16 %v4847, %v4846
      %v4851 = vpack.c.b16 %v4849, %v4848
      %v4855 = vsel %vm564, %v4819, 0
      %v4858 = vsel %vm564, %v4820, 0
      %v4861 = vsel %vm564, %v4821, 0
      %v4864 = vsel %vm564, %v4822, 0
      %v4867 = vsel %vm564, %v4823, 0
      %v4870 = vsel %vm564, %v4824, 0
      %v4873 = vsel %vm564, %v4825, 0
      %v4876 = vsel %vm564, %v4826, 0
      %v4879 = vsel %vm564, %v4827, 0
      %v4882 = vsel %vm564, %v4828, 0
      %v4885 = vsel %vm564, %v4829, 0
      %v4888 = vsel %vm564, %v4830, 0
      %v4891 = vsel %vm564, %v4831, 0
      %v4894 = vsel %vm564, %v4832, 0
      %v4897 = vsel %vm564, %v4833, 0
      %v4900 = vsel %vm564, %v4834, 0
      %v4903 = vsel %vm564, %v4835, 0
      %v4906 = vsel %vm564, %v4836, 0
      %4908 = vmatpush.bf16.msra.mxu0 0
      %4909 = vmatpush.bf16.msra.mxu0 0
      %4910 = vmatpush.bf16.msra.mxu0 0
      %4911 = vmatpush.bf16.msra.mxu0 0
      %4912 = vmatpush.bf16.msra.mxu0 0
      %4913 = vmatpush.bf16.msra.mxu0 0
      %4914 = vmatpush.bf16.msra.mxu0 %v4851
      %4915 = vmatpush.bf16.msra.mxu0 %v4850
      %4916 = vmatmul.bf16.gmra.mxu0 %v4855
      %v4917 = vpop.f32.mrf.mxu0
      %v4918 = vadd.f32 0.0, %v4917
      %v4919 = vpop.f32.mrf.mxu0
      %v4920 = vadd.f32 0.0, %v4919
      %4921 = vmatmul.bf16.gmra.mxu0 %v4858
      %v4922 = vpop.f32.mrf.mxu0
      %v4923 = vadd.f32 0.0, %v4922
      %v4924 = vpop.f32.mrf.mxu0
      %v4925 = vadd.f32 0.0, %v4924
      %4926 = vmatmul.bf16.gmra.mxu0 %v4861
      %v4927 = vpop.f32.mrf.mxu0
      %v4928 = vadd.f32 0.0, %v4927
      %v4929 = vpop.f32.mrf.mxu0
      %v4930 = vadd.f32 0.0, %v4929
      %4931 = vmatmul.bf16.gmra.mxu0 %v4864
      %v4932 = vpop.f32.mrf.mxu0
      %v4933 = vadd.f32 0.0, %v4932
      %v4934 = vpop.f32.mrf.mxu0
      %v4935 = vadd.f32 0.0, %v4934
      %4936 = vmatmul.bf16.gmra.mxu0 %v4867
      %v4937 = vpop.f32.mrf.mxu0
      %v4938 = vadd.f32 0.0, %v4937
      %v4939 = vpop.f32.mrf.mxu0
      %v4940 = vadd.f32 0.0, %v4939
      %4941 = vmatmul.bf16.gmra.mxu0 %v4870
      %v4942 = vpop.f32.mrf.mxu0
      %v4943 = vadd.f32 0.0, %v4942
      %v4944 = vpop.f32.mrf.mxu0
      %v4945 = vadd.f32 0.0, %v4944
      %4946 = vmatmul.bf16.gmra.mxu0 %v4873
      %v4947 = vpop.f32.mrf.mxu0
      %v4948 = vadd.f32 0.0, %v4947
      %v4949 = vpop.f32.mrf.mxu0
      %v4950 = vadd.f32 0.0, %v4949
      %4951 = vmatmul.bf16.gmra.mxu0 %v4876
      %v4952 = vpop.f32.mrf.mxu0
      %v4953 = vadd.f32 0.0, %v4952
      %v4954 = vpop.f32.mrf.mxu0
      %v4955 = vadd.f32 0.0, %v4954
      %4956 = vmatmul.bf16.gmra.mxu0 %v4879
      %v4957 = vpop.f32.mrf.mxu0
      %v4958 = vadd.f32 0.0, %v4957
      %v4959 = vpop.f32.mrf.mxu0
      %v4960 = vadd.f32 0.0, %v4959
      %4961 = vmatmul.bf16.gmra.mxu0 %v4882
      %v4962 = vpop.f32.mrf.mxu0
      %v4963 = vadd.f32 0.0, %v4962
      %v4964 = vpop.f32.mrf.mxu0
      %v4965 = vadd.f32 0.0, %v4964
      %4966 = vmatmul.bf16.gmra.mxu0 %v4885
      %v4967 = vpop.f32.mrf.mxu0
      %v4968 = vadd.f32 0.0, %v4967
      %v4969 = vpop.f32.mrf.mxu0
      %v4970 = vadd.f32 0.0, %v4969
      %4971 = vmatmul.bf16.gmra.mxu0 %v4888
      %v4972 = vpop.f32.mrf.mxu0
      %v4973 = vadd.f32 0.0, %v4972
      %v4974 = vpop.f32.mrf.mxu0
      %v4975 = vadd.f32 0.0, %v4974
      %4976 = vmatmul.bf16.gmra.mxu0 %v4891
      %v4977 = vpop.f32.mrf.mxu0
      %v4978 = vadd.f32 0.0, %v4977
      %v4979 = vpop.f32.mrf.mxu0
      %v4980 = vadd.f32 0.0, %v4979
      %4981 = vmatmul.bf16.gmra.mxu0 %v4894
      %v4982 = vpop.f32.mrf.mxu0
      %v4983 = vadd.f32 0.0, %v4982
      %v4984 = vpop.f32.mrf.mxu0
      %v4985 = vadd.f32 0.0, %v4984
      %4986 = vmatmul.bf16.gmra.mxu0 %v4897
      %v4987 = vpop.f32.mrf.mxu0
      %v4988 = vadd.f32 0.0, %v4987
      %v4989 = vpop.f32.mrf.mxu0
      %v4990 = vadd.f32 0.0, %v4989
      %4991 = vmatmul.bf16.gmra.mxu0 %v4900
      %v4992 = vpop.f32.mrf.mxu0
      %v4993 = vadd.f32 0.0, %v4992
      %v4994 = vpop.f32.mrf.mxu0
      %v4995 = vadd.f32 0.0, %v4994
      %4996 = vmatmul.bf16.gmra.mxu0 %v4903
      %v4997 = vpop.f32.mrf.mxu0
      %v4998 = vadd.f32 0.0, %v4997
      %v4999 = vpop.f32.mrf.mxu0
      %v5000 = vadd.f32 0.0, %v4999
      %5001 = vmatmul.bf16.gmra.mxu0 %v4906
      %v5002 = vpop.f32.mrf.mxu0
      %v5003 = vadd.f32 0.0, %v5002
      %v5004 = vpop.f32.mrf.mxu0
      %v5005 = vadd.f32 0.0, %v5004
      %5006 = vdwg.mxu0
      %v5007 = vadd.f32 %v4747, %v4918
      %v5008 = vadd.f32 %v4748, %v4920
      %v5009 = vadd.f32 %v4749, %v4923
      %v5010 = vadd.f32 %v4750, %v4925
      %v5011 = vadd.f32 %v4751, %v4928
      %v5012 = vadd.f32 %v4752, %v4930
      %v5013 = vadd.f32 %v4753, %v4933
      %v5014 = vadd.f32 %v4754, %v4935
      %v5015 = vadd.f32 %v4755, %v4938
      %v5016 = vadd.f32 %v4756, %v4940
      %v5017 = vadd.f32 %v4757, %v4943
      %v5018 = vadd.f32 %v4758, %v4945
      %v5019 = vadd.f32 %v4759, %v4948
      %v5020 = vadd.f32 %v4760, %v4950
      %v5021 = vadd.f32 %v4761, %v4953
      %v5022 = vadd.f32 %v4762, %v4955
      %v5023 = vadd.f32 %v4763, %v4958
      %v5024 = vadd.f32 %v4764, %v4960
      %v5025 = vadd.f32 %v4765, %v4963
      %v5026 = vadd.f32 %v4766, %v4965
      %v5027 = vadd.f32 %v4767, %v4968
      %v5028 = vadd.f32 %v4768, %v4970
      %v5029 = vadd.f32 %v4769, %v4973
      %v5030 = vadd.f32 %v4770, %v4975
      %v5031 = vadd.f32 %v4771, %v4978
      %v5032 = vadd.f32 %v4772, %v4980
      %v5033 = vadd.f32 %v4773, %v4983
      %v5034 = vadd.f32 %v4774, %v4985
      %v5035 = vadd.f32 %v4775, %v4988
      %v5036 = vadd.f32 %v4776, %v4990
      %v5037 = vadd.f32 %v4777, %v4993
      %v5038 = vadd.f32 %v4778, %v4995
      %v5039 = vadd.f32 %v4779, %v4998
      %v5040 = vadd.f32 %v4780, %v5000
      %v5041 = vadd.f32 %v4781, %v5003
      %v5042 = vadd.f32 %v4782, %v5005
      %v5043 = vld [vmem:[%s409] sm:$0xff]
      %v5044 = vld [vmem:[%s409 + $0x8] sm:$0xff]
      %v5045 = vld [vmem:[%s409 + $0x10] sm:$0xff]
      %v5046 = vld [vmem:[%s409 + $0x18] sm:$0xff]
      %v5047 = vld [vmem:[%s409 + $0x20] sm:$0xff]
      %v5048 = vld [vmem:[%s409 + $0x28] sm:$0xff]
      %v5049 = vld [vmem:[%s409 + $0x30] sm:$0xff]
      %v5050 = vld [vmem:[%s409 + $0x38] sm:$0xff]
      %v5051 = vld [vmem:[%s409 + $0x40] sm:$0xff]
      %v5052 = vld [vmem:[%s409 + $0x48] sm:$0xff]
      %v5053 = vld [vmem:[%s409 + $0x50] sm:$0xff]
      %v5054 = vld [vmem:[%s409 + $0x58] sm:$0xff]
      %v5055 = vld [vmem:[%s409 + $0x60] sm:$0xff]
      %v5056 = vld [vmem:[%s409 + $0x68] sm:$0xff]
      %v5057 = vld [vmem:[%s409 + $0x70] sm:$0xff]
      %v5058 = vld [vmem:[%s409 + $0x78] sm:$0xff]
      %v5059 = vld [vmem:[%s409 + $0x80] sm:$0xff]
      %v5060 = vld [vmem:[%s409 + $0x88] sm:$0xff]
      %v5061 = vld [vmem:[%s409 + $0x90] sm:$0xff]
      %v5062 = vld [vmem:[%s409 + $0x98] sm:$0xff]
      %v5063 = vld [vmem:[%s409 + $0xa0] sm:$0xff]
      %v5064 = vld [vmem:[%s409 + $0xa8] sm:$0xff]
      %v5065 = vld [vmem:[%s409 + $0xb0] sm:$0xff]
      %v5066 = vld [vmem:[%s409 + $0xb8] sm:$0xff]
      %v5067 = vld [vmem:[%s409 + $0xc0] sm:$0xff]
      %v5068 = vld [vmem:[%s409 + $0xc8] sm:$0xff]
      %v5069 = vld [vmem:[%s409 + $0xd0] sm:$0xff]
      %v5070 = vld [vmem:[%s409 + $0xd8] sm:$0xff]
      %v5071 = vld [vmem:[%s409 + $0xe0] sm:$0xff]
      %v5072 = vld [vmem:[%s409 + $0xe8] sm:$0xff]
      %v5073 = vld [vmem:[%s409 + $0xf0] sm:$0xff]
      %v5074 = vld [vmem:[%s409 + $0xf8] sm:$0xff]
      %v5075 = vld [vmem:[%s409 + $0x100] sm:$0xff]
      %v5076 = vld [vmem:[%s409 + $0x108] sm:$0xff]
      %v5077 = vld [vmem:[%s409 + $0x110] sm:$0xff]
      %v5078 = vld [vmem:[%s409 + $0x118] sm:$0x3f]
      %v5079 = vpack.c.bf16 %v5044, %v5043
      %v5080 = vpack.c.bf16 %v5046, %v5045
      %v5081 = vpack.c.bf16 %v5048, %v5047
      %v5082 = vpack.c.bf16 %v5050, %v5049
      %v5083 = vpack.c.bf16 %v5052, %v5051
      %v5084 = vpack.c.bf16 %v5054, %v5053
      %v5085 = vpack.c.bf16 %v5056, %v5055
      %v5086 = vpack.c.bf16 %v5058, %v5057
      %v5087 = vpack.c.bf16 %v5060, %v5059
      %v5088 = vpack.c.bf16 %v5062, %v5061
      %v5089 = vpack.c.bf16 %v5064, %v5063
      %v5090 = vpack.c.bf16 %v5066, %v5065
      %v5091 = vpack.c.bf16 %v5068, %v5067
      %v5092 = vpack.c.bf16 %v5070, %v5069
      %v5093 = vpack.c.bf16 %v5072, %v5071
      %v5094 = vpack.c.bf16 %v5074, %v5073
      %v5095 = vpack.c.bf16 %v5076, %v5075
      %v5096 = vpack.c.bf16 %v5078, %v5077
      %s5097 = scalar_lea.vmem %s3, 288
      %v5098 = vld [vmem:[%s5097] sm:$0xf]
      %v5099 = vld [vmem:[%s5097 + $0x4] sm:$0xf]
      %v5100 = vld [vmem:[%s5097 + $0x8] sm:$0xf]
      %v5101 = vld [vmem:[%s5097 + $0xc] sm:$0xf]
      %v5106 = vunpack.c.l.b16 %v5098
      %v5107 = vunpack.c.l.b16 %v5099
      %v5108 = vunpack.c.l.b16 %v5100
      %v5109 = vunpack.c.l.b16 %v5101
      %v5110 = vpack.c.b16 %v5107, %v5106
      %v5111 = vpack.c.b16 %v5109, %v5108
      %v5115 = vsel %vm564, %v5079, 0
      %v5118 = vsel %vm564, %v5080, 0
      %v5121 = vsel %vm564, %v5081, 0
      %v5124 = vsel %vm564, %v5082, 0
      %v5127 = vsel %vm564, %v5083, 0
      %v5130 = vsel %vm564, %v5084, 0
      %v5133 = vsel %vm564, %v5085, 0
      %v5136 = vsel %vm564, %v5086, 0
      %v5139 = vsel %vm564, %v5087, 0
      %v5142 = vsel %vm564, %v5088, 0
      %v5145 = vsel %vm564, %v5089, 0
      %v5148 = vsel %vm564, %v5090, 0
      %v5151 = vsel %vm564, %v5091, 0
      %v5154 = vsel %vm564, %v5092, 0
      %v5157 = vsel %vm564, %v5093, 0
      %v5160 = vsel %vm564, %v5094, 0
      %v5163 = vsel %vm564, %v5095, 0
      %v5166 = vsel %vm564, %v5096, 0
      %5168 = vmatpush.bf16.msra.mxu0 0
      %5169 = vmatpush.bf16.msra.mxu0 0
      %5170 = vmatpush.bf16.msra.mxu0 0
      %5171 = vmatpush.bf16.msra.mxu0 0
      %5172 = vmatpush.bf16.msra.mxu0 0
      %5173 = vmatpush.bf16.msra.mxu0 0
      %5174 = vmatpush.bf16.msra.mxu0 %v5111
      %5175 = vmatpush.bf16.msra.mxu0 %v5110
      %5176 = vmatmul.bf16.gmra.mxu0 %v5115
      %v5177 = vpop.f32.mrf.mxu0
      %v5178 = vadd.f32 0.0, %v5177
      %v5179 = vpop.f32.mrf.mxu0
      %v5180 = vadd.f32 0.0, %v5179
      %5181 = vmatmul.bf16.gmra.mxu0 %v5118
      %v5182 = vpop.f32.mrf.mxu0
      %v5183 = vadd.f32 0.0, %v5182
      %v5184 = vpop.f32.mrf.mxu0
      %v5185 = vadd.f32 0.0, %v5184
      %5186 = vmatmul.bf16.gmra.mxu0 %v5121
      %v5187 = vpop.f32.mrf.mxu0
      %v5188 = vadd.f32 0.0, %v5187
      %v5189 = vpop.f32.mrf.mxu0
      %v5190 = vadd.f32 0.0, %v5189
      %5191 = vmatmul.bf16.gmra.mxu0 %v5124
      %v5192 = vpop.f32.mrf.mxu0
      %v5193 = vadd.f32 0.0, %v5192
      %v5194 = vpop.f32.mrf.mxu0
      %v5195 = vadd.f32 0.0, %v5194
      %5196 = vmatmul.bf16.gmra.mxu0 %v5127
      %v5197 = vpop.f32.mrf.mxu0
      %v5198 = vadd.f32 0.0, %v5197
      %v5199 = vpop.f32.mrf.mxu0
      %v5200 = vadd.f32 0.0, %v5199
      %5201 = vmatmul.bf16.gmra.mxu0 %v5130
      %v5202 = vpop.f32.mrf.mxu0
      %v5203 = vadd.f32 0.0, %v5202
      %v5204 = vpop.f32.mrf.mxu0
      %v5205 = vadd.f32 0.0, %v5204
      %5206 = vmatmul.bf16.gmra.mxu0 %v5133
      %v5207 = vpop.f32.mrf.mxu0
      %v5208 = vadd.f32 0.0, %v5207
      %v5209 = vpop.f32.mrf.mxu0
      %v5210 = vadd.f32 0.0, %v5209
      %5211 = vmatmul.bf16.gmra.mxu0 %v5136
      %v5212 = vpop.f32.mrf.mxu0
      %v5213 = vadd.f32 0.0, %v5212
      %v5214 = vpop.f32.mrf.mxu0
      %v5215 = vadd.f32 0.0, %v5214
      %5216 = vmatmul.bf16.gmra.mxu0 %v5139
      %v5217 = vpop.f32.mrf.mxu0
      %v5218 = vadd.f32 0.0, %v5217
      %v5219 = vpop.f32.mrf.mxu0
      %v5220 = vadd.f32 0.0, %v5219
      %5221 = vmatmul.bf16.gmra.mxu0 %v5142
      %v5222 = vpop.f32.mrf.mxu0
      %v5223 = vadd.f32 0.0, %v5222
      %v5224 = vpop.f32.mrf.mxu0
      %v5225 = vadd.f32 0.0, %v5224
      %5226 = vmatmul.bf16.gmra.mxu0 %v5145
      %v5227 = vpop.f32.mrf.mxu0
      %v5228 = vadd.f32 0.0, %v5227
      %v5229 = vpop.f32.mrf.mxu0
      %v5230 = vadd.f32 0.0, %v5229
      %5231 = vmatmul.bf16.gmra.mxu0 %v5148
      %v5232 = vpop.f32.mrf.mxu0
      %v5233 = vadd.f32 0.0, %v5232
      %v5234 = vpop.f32.mrf.mxu0
      %v5235 = vadd.f32 0.0, %v5234
      %5236 = vmatmul.bf16.gmra.mxu0 %v5151
      %v5237 = vpop.f32.mrf.mxu0
      %v5238 = vadd.f32 0.0, %v5237
      %v5239 = vpop.f32.mrf.mxu0
      %v5240 = vadd.f32 0.0, %v5239
      %5241 = vmatmul.bf16.gmra.mxu0 %v5154
      %v5242 = vpop.f32.mrf.mxu0
      %v5243 = vadd.f32 0.0, %v5242
      %v5244 = vpop.f32.mrf.mxu0
      %v5245 = vadd.f32 0.0, %v5244
      %5246 = vmatmul.bf16.gmra.mxu0 %v5157
      %v5247 = vpop.f32.mrf.mxu0
      %v5248 = vadd.f32 0.0, %v5247
      %v5249 = vpop.f32.mrf.mxu0
      %v5250 = vadd.f32 0.0, %v5249
      %5251 = vmatmul.bf16.gmra.mxu0 %v5160
      %v5252 = vpop.f32.mrf.mxu0
      %v5253 = vadd.f32 0.0, %v5252
      %v5254 = vpop.f32.mrf.mxu0
      %v5255 = vadd.f32 0.0, %v5254
      %5256 = vmatmul.bf16.gmra.mxu0 %v5163
      %v5257 = vpop.f32.mrf.mxu0
      %v5258 = vadd.f32 0.0, %v5257
      %v5259 = vpop.f32.mrf.mxu0
      %v5260 = vadd.f32 0.0, %v5259
      %5261 = vmatmul.bf16.gmra.mxu0 %v5166
      %v5262 = vpop.f32.mrf.mxu0
      %v5263 = vadd.f32 0.0, %v5262
      %v5264 = vpop.f32.mrf.mxu0
      %v5265 = vadd.f32 0.0, %v5264
      %5266 = vdwg.mxu0
      %v5267 = vadd.f32 %v5007, %v5178
      %v5268 = vadd.f32 %v5008, %v5180
      %v5269 = vadd.f32 %v5009, %v5183
      %v5270 = vadd.f32 %v5010, %v5185
      %v5271 = vadd.f32 %v5011, %v5188
      %v5272 = vadd.f32 %v5012, %v5190
      %v5273 = vadd.f32 %v5013, %v5193
      %v5274 = vadd.f32 %v5014, %v5195
      %v5275 = vadd.f32 %v5015, %v5198
      %v5276 = vadd.f32 %v5016, %v5200
      %v5277 = vadd.f32 %v5017, %v5203
      %v5278 = vadd.f32 %v5018, %v5205
      %v5279 = vadd.f32 %v5019, %v5208
      %v5280 = vadd.f32 %v5020, %v5210
      %v5281 = vadd.f32 %v5021, %v5213
      %v5282 = vadd.f32 %v5022, %v5215
      %v5283 = vadd.f32 %v5023, %v5218
      %v5284 = vadd.f32 %v5024, %v5220
      %v5285 = vadd.f32 %v5025, %v5223
      %v5286 = vadd.f32 %v5026, %v5225
      %v5287 = vadd.f32 %v5027, %v5228
      %v5288 = vadd.f32 %v5028, %v5230
      %v5289 = vadd.f32 %v5029, %v5233
      %v5290 = vadd.f32 %v5030, %v5235
      %v5291 = vadd.f32 %v5031, %v5238
      %v5292 = vadd.f32 %v5032, %v5240
      %v5293 = vadd.f32 %v5033, %v5243
      %v5294 = vadd.f32 %v5034, %v5245
      %v5295 = vadd.f32 %v5035, %v5248
      %v5296 = vadd.f32 %v5036, %v5250
      %v5297 = vadd.f32 %v5037, %v5253
      %v5298 = vadd.f32 %v5038, %v5255
      %v5299 = vadd.f32 %v5039, %v5258
      %v5300 = vadd.f32 %v5040, %v5260
      %v5301 = vadd.f32 %v5041, %v5263
      %v5302 = vadd.f32 %v5042, %v5265
      %v5303 = vld [vmem:[%s409 + $0x1] sm:$0xff]
      %v5304 = vld [vmem:[%s409 + $0x9] sm:$0xff]
      %v5305 = vld [vmem:[%s409 + $0x11] sm:$0xff]
      %v5306 = vld [vmem:[%s409 + $0x19] sm:$0xff]
      %v5307 = vld [vmem:[%s409 + $0x21] sm:$0xff]
      %v5308 = vld [vmem:[%s409 + $0x29] sm:$0xff]
      %v5309 = vld [vmem:[%s409 + $0x31] sm:$0xff]
      %v5310 = vld [vmem:[%s409 + $0x39] sm:$0xff]
      %v5311 = vld [vmem:[%s409 + $0x41] sm:$0xff]
      %v5312 = vld [vmem:[%s409 + $0x49] sm:$0xff]
      %v5313 = vld [vmem:[%s409 + $0x51] sm:$0xff]
      %v5314 = vld [vmem:[%s409 + $0x59] sm:$0xff]
      %v5315 = vld [vmem:[%s409 + $0x61] sm:$0xff]
      %v5316 = vld [vmem:[%s409 + $0x69] sm:$0xff]
      %v5317 = vld [vmem:[%s409 + $0x71] sm:$0xff]
      %v5318 = vld [vmem:[%s409 + $0x79] sm:$0xff]
      %v5319 = vld [vmem:[%s409 + $0x81] sm:$0xff]
      %v5320 = vld [vmem:[%s409 + $0x89] sm:$0xff]
      %v5321 = vld [vmem:[%s409 + $0x91] sm:$0xff]
      %v5322 = vld [vmem:[%s409 + $0x99] sm:$0xff]
      %v5323 = vld [vmem:[%s409 + $0xa1] sm:$0xff]
      %v5324 = vld [vmem:[%s409 + $0xa9] sm:$0xff]
      %v5325 = vld [vmem:[%s409 + $0xb1] sm:$0xff]
      %v5326 = vld [vmem:[%s409 + $0xb9] sm:$0xff]
      %v5327 = vld [vmem:[%s409 + $0xc1] sm:$0xff]
      %v5328 = vld [vmem:[%s409 + $0xc9] sm:$0xff]
      %v5329 = vld [vmem:[%s409 + $0xd1] sm:$0xff]
      %v5330 = vld [vmem:[%s409 + $0xd9] sm:$0xff]
      %v5331 = vld [vmem:[%s409 + $0xe1] sm:$0xff]
      %v5332 = vld [vmem:[%s409 + $0xe9] sm:$0xff]
      %v5333 = vld [vmem:[%s409 + $0xf1] sm:$0xff]
      %v5334 = vld [vmem:[%s409 + $0xf9] sm:$0xff]
      %v5335 = vld [vmem:[%s409 + $0x101] sm:$0xff]
      %v5336 = vld [vmem:[%s409 + $0x109] sm:$0xff]
      %v5337 = vld [vmem:[%s409 + $0x111] sm:$0xff]
      %v5338 = vld [vmem:[%s409 + $0x119] sm:$0x3f]
      %v5339 = vpack.c.bf16 %v5304, %v5303
      %v5340 = vpack.c.bf16 %v5306, %v5305
      %v5341 = vpack.c.bf16 %v5308, %v5307
      %v5342 = vpack.c.bf16 %v5310, %v5309
      %v5343 = vpack.c.bf16 %v5312, %v5311
      %v5344 = vpack.c.bf16 %v5314, %v5313
      %v5345 = vpack.c.bf16 %v5316, %v5315
      %v5346 = vpack.c.bf16 %v5318, %v5317
      %v5347 = vpack.c.bf16 %v5320, %v5319
      %v5348 = vpack.c.bf16 %v5322, %v5321
      %v5349 = vpack.c.bf16 %v5324, %v5323
      %v5350 = vpack.c.bf16 %v5326, %v5325
      %v5351 = vpack.c.bf16 %v5328, %v5327
      %v5352 = vpack.c.bf16 %v5330, %v5329
      %v5353 = vpack.c.bf16 %v5332, %v5331
      %v5354 = vpack.c.bf16 %v5334, %v5333
      %v5355 = vpack.c.bf16 %v5336, %v5335
      %v5356 = vpack.c.bf16 %v5338, %v5337
      %s5357 = scalar_lea.vmem %s3, 304
      %v5358 = vld [vmem:[%s5357] sm:$0xf]
      %v5359 = vld [vmem:[%s5357 + $0x4] sm:$0xf]
      %v5360 = vld [vmem:[%s5357 + $0x8] sm:$0xf]
      %v5361 = vld [vmem:[%s5357 + $0xc] sm:$0xf]
      %v5366 = vunpack.c.l.b16 %v5358
      %v5367 = vunpack.c.l.b16 %v5359
      %v5368 = vunpack.c.l.b16 %v5360
      %v5369 = vunpack.c.l.b16 %v5361
      %v5370 = vpack.c.b16 %v5367, %v5366
      %v5371 = vpack.c.b16 %v5369, %v5368
      %v5375 = vsel %vm564, %v5339, 0
      %v5378 = vsel %vm564, %v5340, 0
      %v5381 = vsel %vm564, %v5341, 0
      %v5384 = vsel %vm564, %v5342, 0
      %v5387 = vsel %vm564, %v5343, 0
      %v5390 = vsel %vm564, %v5344, 0
      %v5393 = vsel %vm564, %v5345, 0
      %v5396 = vsel %vm564, %v5346, 0
      %v5399 = vsel %vm564, %v5347, 0
      %v5402 = vsel %vm564, %v5348, 0
      %v5405 = vsel %vm564, %v5349, 0
      %v5408 = vsel %vm564, %v5350, 0
      %v5411 = vsel %vm564, %v5351, 0
      %v5414 = vsel %vm564, %v5352, 0
      %v5417 = vsel %vm564, %v5353, 0
      %v5420 = vsel %vm564, %v5354, 0
      %v5423 = vsel %vm564, %v5355, 0
      %v5426 = vsel %vm564, %v5356, 0
      %5428 = vmatpush.bf16.msra.mxu0 0
      %5429 = vmatpush.bf16.msra.mxu0 0
      %5430 = vmatpush.bf16.msra.mxu0 0
      %5431 = vmatpush.bf16.msra.mxu0 0
      %5432 = vmatpush.bf16.msra.mxu0 0
      %5433 = vmatpush.bf16.msra.mxu0 0
      %5434 = vmatpush.bf16.msra.mxu0 %v5371
      %5435 = vmatpush.bf16.msra.mxu0 %v5370
      %5436 = vmatmul.bf16.gmra.mxu0 %v5375
      %v5437 = vpop.f32.mrf.mxu0
      %v5438 = vadd.f32 0.0, %v5437
      %v5439 = vpop.f32.mrf.mxu0
      %v5440 = vadd.f32 0.0, %v5439
      %5441 = vmatmul.bf16.gmra.mxu0 %v5378
      %v5442 = vpop.f32.mrf.mxu0
      %v5443 = vadd.f32 0.0, %v5442
      %v5444 = vpop.f32.mrf.mxu0
      %v5445 = vadd.f32 0.0, %v5444
      %5446 = vmatmul.bf16.gmra.mxu0 %v5381
      %v5447 = vpop.f32.mrf.mxu0
      %v5448 = vadd.f32 0.0, %v5447
      %v5449 = vpop.f32.mrf.mxu0
      %v5450 = vadd.f32 0.0, %v5449
      %5451 = vmatmul.bf16.gmra.mxu0 %v5384
      %v5452 = vpop.f32.mrf.mxu0
      %v5453 = vadd.f32 0.0, %v5452
      %v5454 = vpop.f32.mrf.mxu0
      %v5455 = vadd.f32 0.0, %v5454
      %5456 = vmatmul.bf16.gmra.mxu0 %v5387
      %v5457 = vpop.f32.mrf.mxu0
      %v5458 = vadd.f32 0.0, %v5457
      %v5459 = vpop.f32.mrf.mxu0
      %v5460 = vadd.f32 0.0, %v5459
      %5461 = vmatmul.bf16.gmra.mxu0 %v5390
      %v5462 = vpop.f32.mrf.mxu0
      %v5463 = vadd.f32 0.0, %v5462
      %v5464 = vpop.f32.mrf.mxu0
      %v5465 = vadd.f32 0.0, %v5464
      %5466 = vmatmul.bf16.gmra.mxu0 %v5393
      %v5467 = vpop.f32.mrf.mxu0
      %v5468 = vadd.f32 0.0, %v5467
      %v5469 = vpop.f32.mrf.mxu0
      %v5470 = vadd.f32 0.0, %v5469
      %5471 = vmatmul.bf16.gmra.mxu0 %v5396
      %v5472 = vpop.f32.mrf.mxu0
      %v5473 = vadd.f32 0.0, %v5472
      %v5474 = vpop.f32.mrf.mxu0
      %v5475 = vadd.f32 0.0, %v5474
      %5476 = vmatmul.bf16.gmra.mxu0 %v5399
      %v5477 = vpop.f32.mrf.mxu0
      %v5478 = vadd.f32 0.0, %v5477
      %v5479 = vpop.f32.mrf.mxu0
      %v5480 = vadd.f32 0.0, %v5479
      %5481 = vmatmul.bf16.gmra.mxu0 %v5402
      %v5482 = vpop.f32.mrf.mxu0
      %v5483 = vadd.f32 0.0, %v5482
      %v5484 = vpop.f32.mrf.mxu0
      %v5485 = vadd.f32 0.0, %v5484
      %5486 = vmatmul.bf16.gmra.mxu0 %v5405
      %v5487 = vpop.f32.mrf.mxu0
      %v5488 = vadd.f32 0.0, %v5487
      %v5489 = vpop.f32.mrf.mxu0
      %v5490 = vadd.f32 0.0, %v5489
      %5491 = vmatmul.bf16.gmra.mxu0 %v5408
      %v5492 = vpop.f32.mrf.mxu0
      %v5493 = vadd.f32 0.0, %v5492
      %v5494 = vpop.f32.mrf.mxu0
      %v5495 = vadd.f32 0.0, %v5494
      %5496 = vmatmul.bf16.gmra.mxu0 %v5411
      %v5497 = vpop.f32.mrf.mxu0
      %v5498 = vadd.f32 0.0, %v5497
      %v5499 = vpop.f32.mrf.mxu0
      %v5500 = vadd.f32 0.0, %v5499
      %5501 = vmatmul.bf16.gmra.mxu0 %v5414
      %v5502 = vpop.f32.mrf.mxu0
      %v5503 = vadd.f32 0.0, %v5502
      %v5504 = vpop.f32.mrf.mxu0
      %v5505 = vadd.f32 0.0, %v5504
      %5506 = vmatmul.bf16.gmra.mxu0 %v5417
      %v5507 = vpop.f32.mrf.mxu0
      %v5508 = vadd.f32 0.0, %v5507
      %v5509 = vpop.f32.mrf.mxu0
      %v5510 = vadd.f32 0.0, %v5509
      %5511 = vmatmul.bf16.gmra.mxu0 %v5420
      %v5512 = vpop.f32.mrf.mxu0
      %v5513 = vadd.f32 0.0, %v5512
      %v5514 = vpop.f32.mrf.mxu0
      %v5515 = vadd.f32 0.0, %v5514
      %5516 = vmatmul.bf16.gmra.mxu0 %v5423
      %v5517 = vpop.f32.mrf.mxu0
      %v5518 = vadd.f32 0.0, %v5517
      %v5519 = vpop.f32.mrf.mxu0
      %v5520 = vadd.f32 0.0, %v5519
      %5521 = vmatmul.bf16.gmra.mxu0 %v5426
      %v5522 = vpop.f32.mrf.mxu0
      %v5523 = vadd.f32 0.0, %v5522
      %v5524 = vpop.f32.mrf.mxu0
      %v5525 = vadd.f32 0.0, %v5524
      %5526 = vdwg.mxu0
      %v5527 = vadd.f32 %v5267, %v5438
      %v5528 = vadd.f32 %v5268, %v5440
      %v5529 = vadd.f32 %v5269, %v5443
      %v5530 = vadd.f32 %v5270, %v5445
      %v5531 = vadd.f32 %v5271, %v5448
      %v5532 = vadd.f32 %v5272, %v5450
      %v5533 = vadd.f32 %v5273, %v5453
      %v5534 = vadd.f32 %v5274, %v5455
      %v5535 = vadd.f32 %v5275, %v5458
      %v5536 = vadd.f32 %v5276, %v5460
      %v5537 = vadd.f32 %v5277, %v5463
      %v5538 = vadd.f32 %v5278, %v5465
      %v5539 = vadd.f32 %v5279, %v5468
      %v5540 = vadd.f32 %v5280, %v5470
      %v5541 = vadd.f32 %v5281, %v5473
      %v5542 = vadd.f32 %v5282, %v5475
      %v5543 = vadd.f32 %v5283, %v5478
      %v5544 = vadd.f32 %v5284, %v5480
      %v5545 = vadd.f32 %v5285, %v5483
      %v5546 = vadd.f32 %v5286, %v5485
      %v5547 = vadd.f32 %v5287, %v5488
      %v5548 = vadd.f32 %v5288, %v5490
      %v5549 = vadd.f32 %v5289, %v5493
      %v5550 = vadd.f32 %v5290, %v5495
      %v5551 = vadd.f32 %v5291, %v5498
      %v5552 = vadd.f32 %v5292, %v5500
      %v5553 = vadd.f32 %v5293, %v5503
      %v5554 = vadd.f32 %v5294, %v5505
      %v5555 = vadd.f32 %v5295, %v5508
      %v5556 = vadd.f32 %v5296, %v5510
      %v5557 = vadd.f32 %v5297, %v5513
      %v5558 = vadd.f32 %v5298, %v5515
      %v5559 = vadd.f32 %v5299, %v5518
      %v5560 = vadd.f32 %v5300, %v5520
      %v5561 = vadd.f32 %v5301, %v5523
      %v5562 = vadd.f32 %v5302, %v5525
      %v5563 = vld [vmem:[%s409 + $0x2] sm:$0xff]
      %v5564 = vld [vmem:[%s409 + $0xa] sm:$0xff]
      %v5565 = vld [vmem:[%s409 + $0x12] sm:$0xff]
      %v5566 = vld [vmem:[%s409 + $0x1a] sm:$0xff]
      %v5567 = vld [vmem:[%s409 + $0x22] sm:$0xff]
      %v5568 = vld [vmem:[%s409 + $0x2a] sm:$0xff]
      %v5569 = vld [vmem:[%s409 + $0x32] sm:$0xff]
      %v5570 = vld [vmem:[%s409 + $0x3a] sm:$0xff]
      %v5571 = vld [vmem:[%s409 + $0x42] sm:$0xff]
      %v5572 = vld [vmem:[%s409 + $0x4a] sm:$0xff]
      %v5573 = vld [vmem:[%s409 + $0x52] sm:$0xff]
      %v5574 = vld [vmem:[%s409 + $0x5a] sm:$0xff]
      %v5575 = vld [vmem:[%s409 + $0x62] sm:$0xff]
      %v5576 = vld [vmem:[%s409 + $0x6a] sm:$0xff]
      %v5577 = vld [vmem:[%s409 + $0x72] sm:$0xff]
      %v5578 = vld [vmem:[%s409 + $0x7a] sm:$0xff]
      %v5579 = vld [vmem:[%s409 + $0x82] sm:$0xff]
      %v5580 = vld [vmem:[%s409 + $0x8a] sm:$0xff]
      %v5581 = vld [vmem:[%s409 + $0x92] sm:$0xff]
      %v5582 = vld [vmem:[%s409 + $0x9a] sm:$0xff]
      %v5583 = vld [vmem:[%s409 + $0xa2] sm:$0xff]
      %v5584 = vld [vmem:[%s409 + $0xaa] sm:$0xff]
      %v5585 = vld [vmem:[%s409 + $0xb2] sm:$0xff]
      %v5586 = vld [vmem:[%s409 + $0xba] sm:$0xff]
      %v5587 = vld [vmem:[%s409 + $0xc2] sm:$0xff]
      %v5588 = vld [vmem:[%s409 + $0xca] sm:$0xff]
      %v5589 = vld [vmem:[%s409 + $0xd2] sm:$0xff]
      %v5590 = vld [vmem:[%s409 + $0xda] sm:$0xff]
      %v5591 = vld [vmem:[%s409 + $0xe2] sm:$0xff]
      %v5592 = vld [vmem:[%s409 + $0xea] sm:$0xff]
      %v5593 = vld [vmem:[%s409 + $0xf2] sm:$0xff]
      %v5594 = vld [vmem:[%s409 + $0xfa] sm:$0xff]
      %v5595 = vld [vmem:[%s409 + $0x102] sm:$0xff]
      %v5596 = vld [vmem:[%s409 + $0x10a] sm:$0xff]
      %v5597 = vld [vmem:[%s409 + $0x112] sm:$0xff]
      %v5598 = vld [vmem:[%s409 + $0x11a] sm:$0x3f]
      %v5599 = vpack.c.bf16 %v5564, %v5563
      %v5600 = vpack.c.bf16 %v5566, %v5565
      %v5601 = vpack.c.bf16 %v5568, %v5567
      %v5602 = vpack.c.bf16 %v5570, %v5569
      %v5603 = vpack.c.bf16 %v5572, %v5571
      %v5604 = vpack.c.bf16 %v5574, %v5573
      %v5605 = vpack.c.bf16 %v5576, %v5575
      %v5606 = vpack.c.bf16 %v5578, %v5577
      %v5607 = vpack.c.bf16 %v5580, %v5579
      %v5608 = vpack.c.bf16 %v5582, %v5581
      %v5609 = vpack.c.bf16 %v5584, %v5583
      %v5610 = vpack.c.bf16 %v5586, %v5585
      %v5611 = vpack.c.bf16 %v5588, %v5587
      %v5612 = vpack.c.bf16 %v5590, %v5589
      %v5613 = vpack.c.bf16 %v5592, %v5591
      %v5614 = vpack.c.bf16 %v5594, %v5593
      %v5615 = vpack.c.bf16 %v5596, %v5595
      %v5616 = vpack.c.bf16 %v5598, %v5597
      %s5617 = scalar_lea.vmem %s3, 320
      %v5618 = vld [vmem:[%s5617] sm:$0xf]
      %v5619 = vld [vmem:[%s5617 + $0x4] sm:$0xf]
      %v5620 = vld [vmem:[%s5617 + $0x8] sm:$0xf]
      %v5621 = vld [vmem:[%s5617 + $0xc] sm:$0xf]
      %v5626 = vunpack.c.l.b16 %v5618
      %v5627 = vunpack.c.l.b16 %v5619
      %v5628 = vunpack.c.l.b16 %v5620
      %v5629 = vunpack.c.l.b16 %v5621
      %v5630 = vpack.c.b16 %v5627, %v5626
      %v5631 = vpack.c.b16 %v5629, %v5628
      %v5635 = vsel %vm564, %v5599, 0
      %v5638 = vsel %vm564, %v5600, 0
      %v5641 = vsel %vm564, %v5601, 0
      %v5644 = vsel %vm564, %v5602, 0
      %v5647 = vsel %vm564, %v5603, 0
      %v5650 = vsel %vm564, %v5604, 0
      %v5653 = vsel %vm564, %v5605, 0
      %v5656 = vsel %vm564, %v5606, 0
      %v5659 = vsel %vm564, %v5607, 0
      %v5662 = vsel %vm564, %v5608, 0
      %v5665 = vsel %vm564, %v5609, 0
      %v5668 = vsel %vm564, %v5610, 0
      %v5671 = vsel %vm564, %v5611, 0
      %v5674 = vsel %vm564, %v5612, 0
      %v5677 = vsel %vm564, %v5613, 0
      %v5680 = vsel %vm564, %v5614, 0
      %v5683 = vsel %vm564, %v5615, 0
      %v5686 = vsel %vm564, %v5616, 0
      %5688 = vmatpush.bf16.msra.mxu0 0
      %5689 = vmatpush.bf16.msra.mxu0 0
      %5690 = vmatpush.bf16.msra.mxu0 0
      %5691 = vmatpush.bf16.msra.mxu0 0
      %5692 = vmatpush.bf16.msra.mxu0 0
      %5693 = vmatpush.bf16.msra.mxu0 0
      %5694 = vmatpush.bf16.msra.mxu0 %v5631
      %5695 = vmatpush.bf16.msra.mxu0 %v5630
      %5696 = vmatmul.bf16.gmra.mxu0 %v5635
      %v5697 = vpop.f32.mrf.mxu0
      %v5698 = vadd.f32 0.0, %v5697
      %v5699 = vpop.f32.mrf.mxu0
      %v5700 = vadd.f32 0.0, %v5699
      %5701 = vmatmul.bf16.gmra.mxu0 %v5638
      %v5702 = vpop.f32.mrf.mxu0
      %v5703 = vadd.f32 0.0, %v5702
      %v5704 = vpop.f32.mrf.mxu0
      %v5705 = vadd.f32 0.0, %v5704
      %5706 = vmatmul.bf16.gmra.mxu0 %v5641
      %v5707 = vpop.f32.mrf.mxu0
      %v5708 = vadd.f32 0.0, %v5707
      %v5709 = vpop.f32.mrf.mxu0
      %v5710 = vadd.f32 0.0, %v5709
      %5711 = vmatmul.bf16.gmra.mxu0 %v5644
      %v5712 = vpop.f32.mrf.mxu0
      %v5713 = vadd.f32 0.0, %v5712
      %v5714 = vpop.f32.mrf.mxu0
      %v5715 = vadd.f32 0.0, %v5714
      %5716 = vmatmul.bf16.gmra.mxu0 %v5647
      %v5717 = vpop.f32.mrf.mxu0
      %v5718 = vadd.f32 0.0, %v5717
      %v5719 = vpop.f32.mrf.mxu0
      %v5720 = vadd.f32 0.0, %v5719
      %5721 = vmatmul.bf16.gmra.mxu0 %v5650
      %v5722 = vpop.f32.mrf.mxu0
      %v5723 = vadd.f32 0.0, %v5722
      %v5724 = vpop.f32.mrf.mxu0
      %v5725 = vadd.f32 0.0, %v5724
      %5726 = vmatmul.bf16.gmra.mxu0 %v5653
      %v5727 = vpop.f32.mrf.mxu0
      %v5728 = vadd.f32 0.0, %v5727
      %v5729 = vpop.f32.mrf.mxu0
      %v5730 = vadd.f32 0.0, %v5729
      %5731 = vmatmul.bf16.gmra.mxu0 %v5656
      %v5732 = vpop.f32.mrf.mxu0
      %v5733 = vadd.f32 0.0, %v5732
      %v5734 = vpop.f32.mrf.mxu0
      %v5735 = vadd.f32 0.0, %v5734
      %5736 = vmatmul.bf16.gmra.mxu0 %v5659
      %v5737 = vpop.f32.mrf.mxu0
      %v5738 = vadd.f32 0.0, %v5737
      %v5739 = vpop.f32.mrf.mxu0
      %v5740 = vadd.f32 0.0, %v5739
      %5741 = vmatmul.bf16.gmra.mxu0 %v5662
      %v5742 = vpop.f32.mrf.mxu0
      %v5743 = vadd.f32 0.0, %v5742
      %v5744 = vpop.f32.mrf.mxu0
      %v5745 = vadd.f32 0.0, %v5744
      %5746 = vmatmul.bf16.gmra.mxu0 %v5665
      %v5747 = vpop.f32.mrf.mxu0
      %v5748 = vadd.f32 0.0, %v5747
      %v5749 = vpop.f32.mrf.mxu0
      %v5750 = vadd.f32 0.0, %v5749
      %5751 = vmatmul.bf16.gmra.mxu0 %v5668
      %v5752 = vpop.f32.mrf.mxu0
      %v5753 = vadd.f32 0.0, %v5752
      %v5754 = vpop.f32.mrf.mxu0
      %v5755 = vadd.f32 0.0, %v5754
      %5756 = vmatmul.bf16.gmra.mxu0 %v5671
      %v5757 = vpop.f32.mrf.mxu0
      %v5758 = vadd.f32 0.0, %v5757
      %v5759 = vpop.f32.mrf.mxu0
      %v5760 = vadd.f32 0.0, %v5759
      %5761 = vmatmul.bf16.gmra.mxu0 %v5674
      %v5762 = vpop.f32.mrf.mxu0
      %v5763 = vadd.f32 0.0, %v5762
      %v5764 = vpop.f32.mrf.mxu0
      %v5765 = vadd.f32 0.0, %v5764
      %5766 = vmatmul.bf16.gmra.mxu0 %v5677
      %v5767 = vpop.f32.mrf.mxu0
      %v5768 = vadd.f32 0.0, %v5767
      %v5769 = vpop.f32.mrf.mxu0
      %v5770 = vadd.f32 0.0, %v5769
      %5771 = vmatmul.bf16.gmra.mxu0 %v5680
      %v5772 = vpop.f32.mrf.mxu0
      %v5773 = vadd.f32 0.0, %v5772
      %v5774 = vpop.f32.mrf.mxu0
      %v5775 = vadd.f32 0.0, %v5774
      %5776 = vmatmul.bf16.gmra.mxu0 %v5683
      %v5777 = vpop.f32.mrf.mxu0
      %v5778 = vadd.f32 0.0, %v5777
      %v5779 = vpop.f32.mrf.mxu0
      %v5780 = vadd.f32 0.0, %v5779
      %5781 = vmatmul.bf16.gmra.mxu0 %v5686
      %v5782 = vpop.f32.mrf.mxu0
      %v5783 = vadd.f32 0.0, %v5782
      %v5784 = vpop.f32.mrf.mxu0
      %v5785 = vadd.f32 0.0, %v5784
      %5786 = vdwg.mxu0
      %v5787 = vadd.f32 %v5527, %v5698
      %v5788 = vadd.f32 %v5528, %v5700
      %v5789 = vadd.f32 %v5529, %v5703
      %v5790 = vadd.f32 %v5530, %v5705
      %v5791 = vadd.f32 %v5531, %v5708
      %v5792 = vadd.f32 %v5532, %v5710
      %v5793 = vadd.f32 %v5533, %v5713
      %v5794 = vadd.f32 %v5534, %v5715
      %v5795 = vadd.f32 %v5535, %v5718
      %v5796 = vadd.f32 %v5536, %v5720
      %v5797 = vadd.f32 %v5537, %v5723
      %v5798 = vadd.f32 %v5538, %v5725
      %v5799 = vadd.f32 %v5539, %v5728
      %v5800 = vadd.f32 %v5540, %v5730
      %v5801 = vadd.f32 %v5541, %v5733
      %v5802 = vadd.f32 %v5542, %v5735
      %v5803 = vadd.f32 %v5543, %v5738
      %v5804 = vadd.f32 %v5544, %v5740
      %v5805 = vadd.f32 %v5545, %v5743
      %v5806 = vadd.f32 %v5546, %v5745
      %v5807 = vadd.f32 %v5547, %v5748
      %v5808 = vadd.f32 %v5548, %v5750
      %v5809 = vadd.f32 %v5549, %v5753
      %v5810 = vadd.f32 %v5550, %v5755
      %v5811 = vadd.f32 %v5551, %v5758
      %v5812 = vadd.f32 %v5552, %v5760
      %v5813 = vadd.f32 %v5553, %v5763
      %v5814 = vadd.f32 %v5554, %v5765
      %v5815 = vadd.f32 %v5555, %v5768
      %v5816 = vadd.f32 %v5556, %v5770
      %v5817 = vadd.f32 %v5557, %v5773
      %v5818 = vadd.f32 %v5558, %v5775
      %v5819 = vadd.f32 %v5559, %v5778
      %v5820 = vadd.f32 %v5560, %v5780
      %v5821 = vadd.f32 %v5561, %v5783
      %v5822 = vadd.f32 %v5562, %v5785
      %v5823 = vld [vmem:[%s409 + $0x12] sm:$0xff]
      %v5824 = vld [vmem:[%s409 + $0x1a] sm:$0xff]
      %v5825 = vld [vmem:[%s409 + $0x22] sm:$0xff]
      %v5826 = vld [vmem:[%s409 + $0x2a] sm:$0xff]
      %v5827 = vld [vmem:[%s409 + $0x32] sm:$0xff]
      %v5828 = vld [vmem:[%s409 + $0x3a] sm:$0xff]
      %v5829 = vld [vmem:[%s409 + $0x42] sm:$0xff]
      %v5830 = vld [vmem:[%s409 + $0x4a] sm:$0xff]
      %v5831 = vld [vmem:[%s409 + $0x52] sm:$0xff]
      %v5832 = vld [vmem:[%s409 + $0x5a] sm:$0xff]
      %v5833 = vld [vmem:[%s409 + $0x62] sm:$0xff]
      %v5834 = vld [vmem:[%s409 + $0x6a] sm:$0xff]
      %v5835 = vld [vmem:[%s409 + $0x72] sm:$0xff]
      %v5836 = vld [vmem:[%s409 + $0x7a] sm:$0xff]
      %v5837 = vld [vmem:[%s409 + $0x82] sm:$0xff]
      %v5838 = vld [vmem:[%s409 + $0x8a] sm:$0xff]
      %v5839 = vld [vmem:[%s409 + $0x92] sm:$0xff]
      %v5840 = vld [vmem:[%s409 + $0x9a] sm:$0xff]
      %v5841 = vld [vmem:[%s409 + $0xa2] sm:$0xff]
      %v5842 = vld [vmem:[%s409 + $0xaa] sm:$0xff]
      %v5843 = vld [vmem:[%s409 + $0xb2] sm:$0xff]
      %v5844 = vld [vmem:[%s409 + $0xba] sm:$0xff]
      %v5845 = vld [vmem:[%s409 + $0xc2] sm:$0xff]
      %v5846 = vld [vmem:[%s409 + $0xca] sm:$0xff]
      %v5847 = vld [vmem:[%s409 + $0xd2] sm:$0xff]
      %v5848 = vld [vmem:[%s409 + $0xda] sm:$0xff]
      %v5849 = vld [vmem:[%s409 + $0xe2] sm:$0xff]
      %v5850 = vld [vmem:[%s409 + $0xea] sm:$0xff]
      %v5851 = vld [vmem:[%s409 + $0xf2] sm:$0xff]
      %v5852 = vld [vmem:[%s409 + $0xfa] sm:$0xff]
      %v5853 = vld [vmem:[%s409 + $0x102] sm:$0xff]
      %v5854 = vld [vmem:[%s409 + $0x10a] sm:$0xff]
      %v5855 = vld [vmem:[%s409 + $0x112] sm:$0xff]
      %v5856 = vld [vmem:[%s409 + $0x11a] sm:$0xff]
      %v5857 = vld [vmem:[%s409 + $0x122] sm:$0xff]
      %v5858 = vld [vmem:[%s409 + $0x12a] sm:$0x3f]
      %v5859 = vpack.c.bf16 %v5824, %v5823
      %v5860 = vpack.c.bf16 %v5826, %v5825
      %v5861 = vpack.c.bf16 %v5828, %v5827
      %v5862 = vpack.c.bf16 %v5830, %v5829
      %v5863 = vpack.c.bf16 %v5832, %v5831
      %v5864 = vpack.c.bf16 %v5834, %v5833
      %v5865 = vpack.c.bf16 %v5836, %v5835
      %v5866 = vpack.c.bf16 %v5838, %v5837
      %v5867 = vpack.c.bf16 %v5840, %v5839
      %v5868 = vpack.c.bf16 %v5842, %v5841
      %v5869 = vpack.c.bf16 %v5844, %v5843
      %v5870 = vpack.c.bf16 %v5846, %v5845
      %v5871 = vpack.c.bf16 %v5848, %v5847
      %v5872 = vpack.c.bf16 %v5850, %v5849
      %v5873 = vpack.c.bf16 %v5852, %v5851
      %v5874 = vpack.c.bf16 %v5854, %v5853
      %v5875 = vpack.c.bf16 %v5856, %v5855
      %v5876 = vpack.c.bf16 %v5858, %v5857
      %s5877 = scalar_lea.vmem %s3, 336
      %v5878 = vld [vmem:[%s5877] sm:$0xf]
      %v5879 = vld [vmem:[%s5877 + $0x4] sm:$0xf]
      %v5880 = vld [vmem:[%s5877 + $0x8] sm:$0xf]
      %v5881 = vld [vmem:[%s5877 + $0xc] sm:$0xf]
      %v5886 = vunpack.c.l.b16 %v5878
      %v5887 = vunpack.c.l.b16 %v5879
      %v5888 = vunpack.c.l.b16 %v5880
      %v5889 = vunpack.c.l.b16 %v5881
      %v5890 = vpack.c.b16 %v5887, %v5886
      %v5891 = vpack.c.b16 %v5889, %v5888
      %v5895 = vsel %vm564, %v5859, 0
      %v5898 = vsel %vm564, %v5860, 0
      %v5901 = vsel %vm564, %v5861, 0
      %v5904 = vsel %vm564, %v5862, 0
      %v5907 = vsel %vm564, %v5863, 0
      %v5910 = vsel %vm564, %v5864, 0
      %v5913 = vsel %vm564, %v5865, 0
      %v5916 = vsel %vm564, %v5866, 0
      %v5919 = vsel %vm564, %v5867, 0
      %v5922 = vsel %vm564, %v5868, 0
      %v5925 = vsel %vm564, %v5869, 0
      %v5928 = vsel %vm564, %v5870, 0
      %v5931 = vsel %vm564, %v5871, 0
      %v5934 = vsel %vm564, %v5872, 0
      %v5937 = vsel %vm564, %v5873, 0
      %v5940 = vsel %vm564, %v5874, 0
      %v5943 = vsel %vm564, %v5875, 0
      %v5946 = vsel %vm564, %v5876, 0
      %5948 = vmatpush.bf16.msra.mxu0 0
      %5949 = vmatpush.bf16.msra.mxu0 0
      %5950 = vmatpush.bf16.msra.mxu0 0
      %5951 = vmatpush.bf16.msra.mxu0 0
      %5952 = vmatpush.bf16.msra.mxu0 0
      %5953 = vmatpush.bf16.msra.mxu0 0
      %5954 = vmatpush.bf16.msra.mxu0 %v5891
      %5955 = vmatpush.bf16.msra.mxu0 %v5890
      %5956 = vmatmul.bf16.gmra.mxu0 %v5895
      %v5957 = vpop.f32.mrf.mxu0
      %v5958 = vadd.f32 0.0, %v5957
      %v5959 = vpop.f32.mrf.mxu0
      %v5960 = vadd.f32 0.0, %v5959
      %5961 = vmatmul.bf16.gmra.mxu0 %v5898
      %v5962 = vpop.f32.mrf.mxu0
      %v5963 = vadd.f32 0.0, %v5962
      %v5964 = vpop.f32.mrf.mxu0
      %v5965 = vadd.f32 0.0, %v5964
      %5966 = vmatmul.bf16.gmra.mxu0 %v5901
      %v5967 = vpop.f32.mrf.mxu0
      %v5968 = vadd.f32 0.0, %v5967
      %v5969 = vpop.f32.mrf.mxu0
      %v5970 = vadd.f32 0.0, %v5969
      %5971 = vmatmul.bf16.gmra.mxu0 %v5904
      %v5972 = vpop.f32.mrf.mxu0
      %v5973 = vadd.f32 0.0, %v5972
      %v5974 = vpop.f32.mrf.mxu0
      %v5975 = vadd.f32 0.0, %v5974
      %5976 = vmatmul.bf16.gmra.mxu0 %v5907
      %v5977 = vpop.f32.mrf.mxu0
      %v5978 = vadd.f32 0.0, %v5977
      %v5979 = vpop.f32.mrf.mxu0
      %v5980 = vadd.f32 0.0, %v5979
      %5981 = vmatmul.bf16.gmra.mxu0 %v5910
      %v5982 = vpop.f32.mrf.mxu0
      %v5983 = vadd.f32 0.0, %v5982
      %v5984 = vpop.f32.mrf.mxu0
      %v5985 = vadd.f32 0.0, %v5984
      %5986 = vmatmul.bf16.gmra.mxu0 %v5913
      %v5987 = vpop.f32.mrf.mxu0
      %v5988 = vadd.f32 0.0, %v5987
      %v5989 = vpop.f32.mrf.mxu0
      %v5990 = vadd.f32 0.0, %v5989
      %5991 = vmatmul.bf16.gmra.mxu0 %v5916
      %v5992 = vpop.f32.mrf.mxu0
      %v5993 = vadd.f32 0.0, %v5992
      %v5994 = vpop.f32.mrf.mxu0
      %v5995 = vadd.f32 0.0, %v5994
      %5996 = vmatmul.bf16.gmra.mxu0 %v5919
      %v5997 = vpop.f32.mrf.mxu0
      %v5998 = vadd.f32 0.0, %v5997
      %v5999 = vpop.f32.mrf.mxu0
      %v6000 = vadd.f32 0.0, %v5999
      %6001 = vmatmul.bf16.gmra.mxu0 %v5922
      %v6002 = vpop.f32.mrf.mxu0
      %v6003 = vadd.f32 0.0, %v6002
      %v6004 = vpop.f32.mrf.mxu0
      %v6005 = vadd.f32 0.0, %v6004
      %6006 = vmatmul.bf16.gmra.mxu0 %v5925
      %v6007 = vpop.f32.mrf.mxu0
      %v6008 = vadd.f32 0.0, %v6007
      %v6009 = vpop.f32.mrf.mxu0
      %v6010 = vadd.f32 0.0, %v6009
      %6011 = vmatmul.bf16.gmra.mxu0 %v5928
      %v6012 = vpop.f32.mrf.mxu0
      %v6013 = vadd.f32 0.0, %v6012
      %v6014 = vpop.f32.mrf.mxu0
      %v6015 = vadd.f32 0.0, %v6014
      %6016 = vmatmul.bf16.gmra.mxu0 %v5931
      %v6017 = vpop.f32.mrf.mxu0
      %v6018 = vadd.f32 0.0, %v6017
      %v6019 = vpop.f32.mrf.mxu0
      %v6020 = vadd.f32 0.0, %v6019
      %6021 = vmatmul.bf16.gmra.mxu0 %v5934
      %v6022 = vpop.f32.mrf.mxu0
      %v6023 = vadd.f32 0.0, %v6022
      %v6024 = vpop.f32.mrf.mxu0
      %v6025 = vadd.f32 0.0, %v6024
      %6026 = vmatmul.bf16.gmra.mxu0 %v5937
      %v6027 = vpop.f32.mrf.mxu0
      %v6028 = vadd.f32 0.0, %v6027
      %v6029 = vpop.f32.mrf.mxu0
      %v6030 = vadd.f32 0.0, %v6029
      %6031 = vmatmul.bf16.gmra.mxu0 %v5940
      %v6032 = vpop.f32.mrf.mxu0
      %v6033 = vadd.f32 0.0, %v6032
      %v6034 = vpop.f32.mrf.mxu0
      %v6035 = vadd.f32 0.0, %v6034
      %6036 = vmatmul.bf16.gmra.mxu0 %v5943
      %v6037 = vpop.f32.mrf.mxu0
      %v6038 = vadd.f32 0.0, %v6037
      %v6039 = vpop.f32.mrf.mxu0
      %v6040 = vadd.f32 0.0, %v6039
      %6041 = vmatmul.bf16.gmra.mxu0 %v5946
      %v6042 = vpop.f32.mrf.mxu0
      %v6043 = vadd.f32 0.0, %v6042
      %v6044 = vpop.f32.mrf.mxu0
      %v6045 = vadd.f32 0.0, %v6044
      %6046 = vdwg.mxu0
      %v6047 = vadd.f32 %v5787, %v5958
      %v6048 = vadd.f32 %v5788, %v5960
      %v6049 = vadd.f32 %v5789, %v5963
      %v6050 = vadd.f32 %v5790, %v5965
      %v6051 = vadd.f32 %v5791, %v5968
      %v6052 = vadd.f32 %v5792, %v5970
      %v6053 = vadd.f32 %v5793, %v5973
      %v6054 = vadd.f32 %v5794, %v5975
      %v6055 = vadd.f32 %v5795, %v5978
      %v6056 = vadd.f32 %v5796, %v5980
      %v6057 = vadd.f32 %v5797, %v5983
      %v6058 = vadd.f32 %v5798, %v5985
      %v6059 = vadd.f32 %v5799, %v5988
      %v6060 = vadd.f32 %v5800, %v5990
      %v6061 = vadd.f32 %v5801, %v5993
      %v6062 = vadd.f32 %v5802, %v5995
      %v6063 = vadd.f32 %v5803, %v5998
      %v6064 = vadd.f32 %v5804, %v6000
      %v6065 = vadd.f32 %v5805, %v6003
      %v6066 = vadd.f32 %v5806, %v6005
      %v6067 = vadd.f32 %v5807, %v6008
      %v6068 = vadd.f32 %v5808, %v6010
      %v6069 = vadd.f32 %v5809, %v6013
      %v6070 = vadd.f32 %v5810, %v6015
      %v6071 = vadd.f32 %v5811, %v6018
      %v6072 = vadd.f32 %v5812, %v6020
      %v6073 = vadd.f32 %v5813, %v6023
      %v6074 = vadd.f32 %v5814, %v6025
      %v6075 = vadd.f32 %v5815, %v6028
      %v6076 = vadd.f32 %v5816, %v6030
      %v6077 = vadd.f32 %v5817, %v6033
      %v6078 = vadd.f32 %v5818, %v6035
      %v6079 = vadd.f32 %v5819, %v6038
      %v6080 = vadd.f32 %v5820, %v6040
      %v6081 = vadd.f32 %v5821, %v6043
      %v6082 = vadd.f32 %v5822, %v6045
      %v6083 = vld [vmem:[%s409 + $0x13] sm:$0xff]
      %v6084 = vld [vmem:[%s409 + $0x1b] sm:$0xff]
      %v6085 = vld [vmem:[%s409 + $0x23] sm:$0xff]
      %v6086 = vld [vmem:[%s409 + $0x2b] sm:$0xff]
      %v6087 = vld [vmem:[%s409 + $0x33] sm:$0xff]
      %v6088 = vld [vmem:[%s409 + $0x3b] sm:$0xff]
      %v6089 = vld [vmem:[%s409 + $0x43] sm:$0xff]
      %v6090 = vld [vmem:[%s409 + $0x4b] sm:$0xff]
      %v6091 = vld [vmem:[%s409 + $0x53] sm:$0xff]
      %v6092 = vld [vmem:[%s409 + $0x5b] sm:$0xff]
      %v6093 = vld [vmem:[%s409 + $0x63] sm:$0xff]
      %v6094 = vld [vmem:[%s409 + $0x6b] sm:$0xff]
      %v6095 = vld [vmem:[%s409 + $0x73] sm:$0xff]
      %v6096 = vld [vmem:[%s409 + $0x7b] sm:$0xff]
      %v6097 = vld [vmem:[%s409 + $0x83] sm:$0xff]
      %v6098 = vld [vmem:[%s409 + $0x8b] sm:$0xff]
      %v6099 = vld [vmem:[%s409 + $0x93] sm:$0xff]
      %v6100 = vld [vmem:[%s409 + $0x9b] sm:$0xff]
      %v6101 = vld [vmem:[%s409 + $0xa3] sm:$0xff]
      %v6102 = vld [vmem:[%s409 + $0xab] sm:$0xff]
      %v6103 = vld [vmem:[%s409 + $0xb3] sm:$0xff]
      %v6104 = vld [vmem:[%s409 + $0xbb] sm:$0xff]
      %v6105 = vld [vmem:[%s409 + $0xc3] sm:$0xff]
      %v6106 = vld [vmem:[%s409 + $0xcb] sm:$0xff]
      %v6107 = vld [vmem:[%s409 + $0xd3] sm:$0xff]
      %v6108 = vld [vmem:[%s409 + $0xdb] sm:$0xff]
      %v6109 = vld [vmem:[%s409 + $0xe3] sm:$0xff]
      %v6110 = vld [vmem:[%s409 + $0xeb] sm:$0xff]
      %v6111 = vld [vmem:[%s409 + $0xf3] sm:$0xff]
      %v6112 = vld [vmem:[%s409 + $0xfb] sm:$0xff]
      %v6113 = vld [vmem:[%s409 + $0x103] sm:$0xff]
      %v6114 = vld [vmem:[%s409 + $0x10b] sm:$0xff]
      %v6115 = vld [vmem:[%s409 + $0x113] sm:$0xff]
      %v6116 = vld [vmem:[%s409 + $0x11b] sm:$0xff]
      %v6117 = vld [vmem:[%s409 + $0x123] sm:$0xff]
      %v6118 = vld [vmem:[%s409 + $0x12b] sm:$0x3f]
      %v6119 = vpack.c.bf16 %v6084, %v6083
      %v6120 = vpack.c.bf16 %v6086, %v6085
      %v6121 = vpack.c.bf16 %v6088, %v6087
      %v6122 = vpack.c.bf16 %v6090, %v6089
      %v6123 = vpack.c.bf16 %v6092, %v6091
      %v6124 = vpack.c.bf16 %v6094, %v6093
      %v6125 = vpack.c.bf16 %v6096, %v6095
      %v6126 = vpack.c.bf16 %v6098, %v6097
      %v6127 = vpack.c.bf16 %v6100, %v6099
      %v6128 = vpack.c.bf16 %v6102, %v6101
      %v6129 = vpack.c.bf16 %v6104, %v6103
      %v6130 = vpack.c.bf16 %v6106, %v6105
      %v6131 = vpack.c.bf16 %v6108, %v6107
      %v6132 = vpack.c.bf16 %v6110, %v6109
      %v6133 = vpack.c.bf16 %v6112, %v6111
      %v6134 = vpack.c.bf16 %v6114, %v6113
      %v6135 = vpack.c.bf16 %v6116, %v6115
      %v6136 = vpack.c.bf16 %v6118, %v6117
      %s6137 = scalar_lea.vmem %s3, 352
      %v6138 = vld [vmem:[%s6137] sm:$0xf]
      %v6139 = vld [vmem:[%s6137 + $0x4] sm:$0xf]
      %v6140 = vld [vmem:[%s6137 + $0x8] sm:$0xf]
      %v6141 = vld [vmem:[%s6137 + $0xc] sm:$0xf]
      %v6146 = vunpack.c.l.b16 %v6138
      %v6147 = vunpack.c.l.b16 %v6139
      %v6148 = vunpack.c.l.b16 %v6140
      %v6149 = vunpack.c.l.b16 %v6141
      %v6150 = vpack.c.b16 %v6147, %v6146
      %v6151 = vpack.c.b16 %v6149, %v6148
      %v6155 = vsel %vm564, %v6119, 0
      %v6158 = vsel %vm564, %v6120, 0
      %v6161 = vsel %vm564, %v6121, 0
      %v6164 = vsel %vm564, %v6122, 0
      %v6167 = vsel %vm564, %v6123, 0
      %v6170 = vsel %vm564, %v6124, 0
      %v6173 = vsel %vm564, %v6125, 0
      %v6176 = vsel %vm564, %v6126, 0
      %v6179 = vsel %vm564, %v6127, 0
      %v6182 = vsel %vm564, %v6128, 0
      %v6185 = vsel %vm564, %v6129, 0
      %v6188 = vsel %vm564, %v6130, 0
      %v6191 = vsel %vm564, %v6131, 0
      %v6194 = vsel %vm564, %v6132, 0
      %v6197 = vsel %vm564, %v6133, 0
      %v6200 = vsel %vm564, %v6134, 0
      %v6203 = vsel %vm564, %v6135, 0
      %v6206 = vsel %vm564, %v6136, 0
      %6208 = vmatpush.bf16.msra.mxu0 0
      %6209 = vmatpush.bf16.msra.mxu0 0
      %6210 = vmatpush.bf16.msra.mxu0 0
      %6211 = vmatpush.bf16.msra.mxu0 0
      %6212 = vmatpush.bf16.msra.mxu0 0
      %6213 = vmatpush.bf16.msra.mxu0 0
      %6214 = vmatpush.bf16.msra.mxu0 %v6151
      %6215 = vmatpush.bf16.msra.mxu0 %v6150
      %6216 = vmatmul.bf16.gmra.mxu0 %v6155
      %v6217 = vpop.f32.mrf.mxu0
      %v6218 = vadd.f32 0.0, %v6217
      %v6219 = vpop.f32.mrf.mxu0
      %v6220 = vadd.f32 0.0, %v6219
      %6221 = vmatmul.bf16.gmra.mxu0 %v6158
      %v6222 = vpop.f32.mrf.mxu0
      %v6223 = vadd.f32 0.0, %v6222
      %v6224 = vpop.f32.mrf.mxu0
      %v6225 = vadd.f32 0.0, %v6224
      %6226 = vmatmul.bf16.gmra.mxu0 %v6161
      %v6227 = vpop.f32.mrf.mxu0
      %v6228 = vadd.f32 0.0, %v6227
      %v6229 = vpop.f32.mrf.mxu0
      %v6230 = vadd.f32 0.0, %v6229
      %6231 = vmatmul.bf16.gmra.mxu0 %v6164
      %v6232 = vpop.f32.mrf.mxu0
      %v6233 = vadd.f32 0.0, %v6232
      %v6234 = vpop.f32.mrf.mxu0
      %v6235 = vadd.f32 0.0, %v6234
      %6236 = vmatmul.bf16.gmra.mxu0 %v6167
      %v6237 = vpop.f32.mrf.mxu0
      %v6238 = vadd.f32 0.0, %v6237
      %v6239 = vpop.f32.mrf.mxu0
      %v6240 = vadd.f32 0.0, %v6239
      %6241 = vmatmul.bf16.gmra.mxu0 %v6170
      %v6242 = vpop.f32.mrf.mxu0
      %v6243 = vadd.f32 0.0, %v6242
      %v6244 = vpop.f32.mrf.mxu0
      %v6245 = vadd.f32 0.0, %v6244
      %6246 = vmatmul.bf16.gmra.mxu0 %v6173
      %v6247 = vpop.f32.mrf.mxu0
      %v6248 = vadd.f32 0.0, %v6247
      %v6249 = vpop.f32.mrf.mxu0
      %v6250 = vadd.f32 0.0, %v6249
      %6251 = vmatmul.bf16.gmra.mxu0 %v6176
      %v6252 = vpop.f32.mrf.mxu0
      %v6253 = vadd.f32 0.0, %v6252
      %v6254 = vpop.f32.mrf.mxu0
      %v6255 = vadd.f32 0.0, %v6254
      %6256 = vmatmul.bf16.gmra.mxu0 %v6179
      %v6257 = vpop.f32.mrf.mxu0
      %v6258 = vadd.f32 0.0, %v6257
      %v6259 = vpop.f32.mrf.mxu0
      %v6260 = vadd.f32 0.0, %v6259
      %6261 = vmatmul.bf16.gmra.mxu0 %v6182
      %v6262 = vpop.f32.mrf.mxu0
      %v6263 = vadd.f32 0.0, %v6262
      %v6264 = vpop.f32.mrf.mxu0
      %v6265 = vadd.f32 0.0, %v6264
      %6266 = vmatmul.bf16.gmra.mxu0 %v6185
      %v6267 = vpop.f32.mrf.mxu0
      %v6268 = vadd.f32 0.0, %v6267
      %v6269 = vpop.f32.mrf.mxu0
      %v6270 = vadd.f32 0.0, %v6269
      %6271 = vmatmul.bf16.gmra.mxu0 %v6188
      %v6272 = vpop.f32.mrf.mxu0
      %v6273 = vadd.f32 0.0, %v6272
      %v6274 = vpop.f32.mrf.mxu0
      %v6275 = vadd.f32 0.0, %v6274
      %6276 = vmatmul.bf16.gmra.mxu0 %v6191
      %v6277 = vpop.f32.mrf.mxu0
      %v6278 = vadd.f32 0.0, %v6277
      %v6279 = vpop.f32.mrf.mxu0
      %v6280 = vadd.f32 0.0, %v6279
      %6281 = vmatmul.bf16.gmra.mxu0 %v6194
      %v6282 = vpop.f32.mrf.mxu0
      %v6283 = vadd.f32 0.0, %v6282
      %v6284 = vpop.f32.mrf.mxu0
      %v6285 = vadd.f32 0.0, %v6284
      %6286 = vmatmul.bf16.gmra.mxu0 %v6197
      %v6287 = vpop.f32.mrf.mxu0
      %v6288 = vadd.f32 0.0, %v6287
      %v6289 = vpop.f32.mrf.mxu0
      %v6290 = vadd.f32 0.0, %v6289
      %6291 = vmatmul.bf16.gmra.mxu0 %v6200
      %v6292 = vpop.f32.mrf.mxu0
      %v6293 = vadd.f32 0.0, %v6292
      %v6294 = vpop.f32.mrf.mxu0
      %v6295 = vadd.f32 0.0, %v6294
      %6296 = vmatmul.bf16.gmra.mxu0 %v6203
      %v6297 = vpop.f32.mrf.mxu0
      %v6298 = vadd.f32 0.0, %v6297
      %v6299 = vpop.f32.mrf.mxu0
      %v6300 = vadd.f32 0.0, %v6299
      %6301 = vmatmul.bf16.gmra.mxu0 %v6206
      %v6302 = vpop.f32.mrf.mxu0
      %v6303 = vadd.f32 0.0, %v6302
      %v6304 = vpop.f32.mrf.mxu0
      %v6305 = vadd.f32 0.0, %v6304
      %6306 = vdwg.mxu0
      %v6307 = vadd.f32 %v6047, %v6218
      %v6308 = vadd.f32 %v6048, %v6220
      %v6309 = vadd.f32 %v6049, %v6223
      %v6310 = vadd.f32 %v6050, %v6225
      %v6311 = vadd.f32 %v6051, %v6228
      %v6312 = vadd.f32 %v6052, %v6230
      %v6313 = vadd.f32 %v6053, %v6233
      %v6314 = vadd.f32 %v6054, %v6235
      %v6315 = vadd.f32 %v6055, %v6238
      %v6316 = vadd.f32 %v6056, %v6240
      %v6317 = vadd.f32 %v6057, %v6243
      %v6318 = vadd.f32 %v6058, %v6245
      %v6319 = vadd.f32 %v6059, %v6248
      %v6320 = vadd.f32 %v6060, %v6250
      %v6321 = vadd.f32 %v6061, %v6253
      %v6322 = vadd.f32 %v6062, %v6255
      %v6323 = vadd.f32 %v6063, %v6258
      %v6324 = vadd.f32 %v6064, %v6260
      %v6325 = vadd.f32 %v6065, %v6263
      %v6326 = vadd.f32 %v6066, %v6265
      %v6327 = vadd.f32 %v6067, %v6268
      %v6328 = vadd.f32 %v6068, %v6270
      %v6329 = vadd.f32 %v6069, %v6273
      %v6330 = vadd.f32 %v6070, %v6275
      %v6331 = vadd.f32 %v6071, %v6278
      %v6332 = vadd.f32 %v6072, %v6280
      %v6333 = vadd.f32 %v6073, %v6283
      %v6334 = vadd.f32 %v6074, %v6285
      %v6335 = vadd.f32 %v6075, %v6288
      %v6336 = vadd.f32 %v6076, %v6290
      %v6337 = vadd.f32 %v6077, %v6293
      %v6338 = vadd.f32 %v6078, %v6295
      %v6339 = vadd.f32 %v6079, %v6298
      %v6340 = vadd.f32 %v6080, %v6300
      %v6341 = vadd.f32 %v6081, %v6303
      %v6342 = vadd.f32 %v6082, %v6305
      %v6343 = vld [vmem:[%s409 + $0x14] sm:$0xff]
      %v6344 = vld [vmem:[%s409 + $0x1c] sm:$0xff]
      %v6345 = vld [vmem:[%s409 + $0x24] sm:$0xff]
      %v6346 = vld [vmem:[%s409 + $0x2c] sm:$0xff]
      %v6347 = vld [vmem:[%s409 + $0x34] sm:$0xff]
      %v6348 = vld [vmem:[%s409 + $0x3c] sm:$0xff]
      %v6349 = vld [vmem:[%s409 + $0x44] sm:$0xff]
      %v6350 = vld [vmem:[%s409 + $0x4c] sm:$0xff]
      %v6351 = vld [vmem:[%s409 + $0x54] sm:$0xff]
      %v6352 = vld [vmem:[%s409 + $0x5c] sm:$0xff]
      %v6353 = vld [vmem:[%s409 + $0x64] sm:$0xff]
      %v6354 = vld [vmem:[%s409 + $0x6c] sm:$0xff]
      %v6355 = vld [vmem:[%s409 + $0x74] sm:$0xff]
      %v6356 = vld [vmem:[%s409 + $0x7c] sm:$0xff]
      %v6357 = vld [vmem:[%s409 + $0x84] sm:$0xff]
      %v6358 = vld [vmem:[%s409 + $0x8c] sm:$0xff]
      %v6359 = vld [vmem:[%s409 + $0x94] sm:$0xff]
      %v6360 = vld [vmem:[%s409 + $0x9c] sm:$0xff]
      %v6361 = vld [vmem:[%s409 + $0xa4] sm:$0xff]
      %v6362 = vld [vmem:[%s409 + $0xac] sm:$0xff]
      %v6363 = vld [vmem:[%s409 + $0xb4] sm:$0xff]
      %v6364 = vld [vmem:[%s409 + $0xbc] sm:$0xff]
      %v6365 = vld [vmem:[%s409 + $0xc4] sm:$0xff]
      %v6366 = vld [vmem:[%s409 + $0xcc] sm:$0xff]
      %v6367 = vld [vmem:[%s409 + $0xd4] sm:$0xff]
      %v6368 = vld [vmem:[%s409 + $0xdc] sm:$0xff]
      %v6369 = vld [vmem:[%s409 + $0xe4] sm:$0xff]
      %v6370 = vld [vmem:[%s409 + $0xec] sm:$0xff]
      %v6371 = vld [vmem:[%s409 + $0xf4] sm:$0xff]
      %v6372 = vld [vmem:[%s409 + $0xfc] sm:$0xff]
      %v6373 = vld [vmem:[%s409 + $0x104] sm:$0xff]
      %v6374 = vld [vmem:[%s409 + $0x10c] sm:$0xff]
      %v6375 = vld [vmem:[%s409 + $0x114] sm:$0xff]
      %v6376 = vld [vmem:[%s409 + $0x11c] sm:$0xff]
      %v6377 = vld [vmem:[%s409 + $0x124] sm:$0xff]
      %v6378 = vld [vmem:[%s409 + $0x12c] sm:$0x3f]
      %v6379 = vpack.c.bf16 %v6344, %v6343
      %v6380 = vpack.c.bf16 %v6346, %v6345
      %v6381 = vpack.c.bf16 %v6348, %v6347
      %v6382 = vpack.c.bf16 %v6350, %v6349
      %v6383 = vpack.c.bf16 %v6352, %v6351
      %v6384 = vpack.c.bf16 %v6354, %v6353
      %v6385 = vpack.c.bf16 %v6356, %v6355
      %v6386 = vpack.c.bf16 %v6358, %v6357
      %v6387 = vpack.c.bf16 %v6360, %v6359
      %v6388 = vpack.c.bf16 %v6362, %v6361
      %v6389 = vpack.c.bf16 %v6364, %v6363
      %v6390 = vpack.c.bf16 %v6366, %v6365
      %v6391 = vpack.c.bf16 %v6368, %v6367
      %v6392 = vpack.c.bf16 %v6370, %v6369
      %v6393 = vpack.c.bf16 %v6372, %v6371
      %v6394 = vpack.c.bf16 %v6374, %v6373
      %v6395 = vpack.c.bf16 %v6376, %v6375
      %v6396 = vpack.c.bf16 %v6378, %v6377
      %s6397 = scalar_lea.vmem %s3, 368
      %v6398 = vld [vmem:[%s6397] sm:$0xf]
      %v6399 = vld [vmem:[%s6397 + $0x4] sm:$0xf]
      %v6400 = vld [vmem:[%s6397 + $0x8] sm:$0xf]
      %v6401 = vld [vmem:[%s6397 + $0xc] sm:$0xf]
      %v6406 = vunpack.c.l.b16 %v6398
      %v6407 = vunpack.c.l.b16 %v6399
      %v6408 = vunpack.c.l.b16 %v6400
      %v6409 = vunpack.c.l.b16 %v6401
      %v6410 = vpack.c.b16 %v6407, %v6406
      %v6411 = vpack.c.b16 %v6409, %v6408
      %v6415 = vsel %vm564, %v6379, 0
      %v6418 = vsel %vm564, %v6380, 0
      %v6421 = vsel %vm564, %v6381, 0
      %v6424 = vsel %vm564, %v6382, 0
      %v6427 = vsel %vm564, %v6383, 0
      %v6430 = vsel %vm564, %v6384, 0
      %v6433 = vsel %vm564, %v6385, 0
      %v6436 = vsel %vm564, %v6386, 0
      %v6439 = vsel %vm564, %v6387, 0
      %v6442 = vsel %vm564, %v6388, 0
      %v6445 = vsel %vm564, %v6389, 0
      %v6448 = vsel %vm564, %v6390, 0
      %v6451 = vsel %vm564, %v6391, 0
      %v6454 = vsel %vm564, %v6392, 0
      %v6457 = vsel %vm564, %v6393, 0
      %v6460 = vsel %vm564, %v6394, 0
      %v6463 = vsel %vm564, %v6395, 0
      %v6466 = vsel %vm564, %v6396, 0
      %6468 = vmatpush.bf16.msra.mxu0 0
      %6469 = vmatpush.bf16.msra.mxu0 0
      %6470 = vmatpush.bf16.msra.mxu0 0
      %6471 = vmatpush.bf16.msra.mxu0 0
      %6472 = vmatpush.bf16.msra.mxu0 0
      %6473 = vmatpush.bf16.msra.mxu0 0
      %6474 = vmatpush.bf16.msra.mxu0 %v6411
      %6475 = vmatpush.bf16.msra.mxu0 %v6410
      %6476 = vmatmul.bf16.gmra.mxu0 %v6415
      %v6477 = vpop.f32.mrf.mxu0
      %v6478 = vadd.f32 0.0, %v6477
      %v6479 = vpop.f32.mrf.mxu0
      %v6480 = vadd.f32 0.0, %v6479
      %6481 = vmatmul.bf16.gmra.mxu0 %v6418
      %v6482 = vpop.f32.mrf.mxu0
      %v6483 = vadd.f32 0.0, %v6482
      %v6484 = vpop.f32.mrf.mxu0
      %v6485 = vadd.f32 0.0, %v6484
      %6486 = vmatmul.bf16.gmra.mxu0 %v6421
      %v6487 = vpop.f32.mrf.mxu0
      %v6488 = vadd.f32 0.0, %v6487
      %v6489 = vpop.f32.mrf.mxu0
      %v6490 = vadd.f32 0.0, %v6489
      %6491 = vmatmul.bf16.gmra.mxu0 %v6424
      %v6492 = vpop.f32.mrf.mxu0
      %v6493 = vadd.f32 0.0, %v6492
      %v6494 = vpop.f32.mrf.mxu0
      %v6495 = vadd.f32 0.0, %v6494
      %6496 = vmatmul.bf16.gmra.mxu0 %v6427
      %v6497 = vpop.f32.mrf.mxu0
      %v6498 = vadd.f32 0.0, %v6497
      %v6499 = vpop.f32.mrf.mxu0
      %v6500 = vadd.f32 0.0, %v6499
      %6501 = vmatmul.bf16.gmra.mxu0 %v6430
      %v6502 = vpop.f32.mrf.mxu0
      %v6503 = vadd.f32 0.0, %v6502
      %v6504 = vpop.f32.mrf.mxu0
      %v6505 = vadd.f32 0.0, %v6504
      %6506 = vmatmul.bf16.gmra.mxu0 %v6433
      %v6507 = vpop.f32.mrf.mxu0
      %v6508 = vadd.f32 0.0, %v6507
      %v6509 = vpop.f32.mrf.mxu0
      %v6510 = vadd.f32 0.0, %v6509
      %6511 = vmatmul.bf16.gmra.mxu0 %v6436
      %v6512 = vpop.f32.mrf.mxu0
      %v6513 = vadd.f32 0.0, %v6512
      %v6514 = vpop.f32.mrf.mxu0
      %v6515 = vadd.f32 0.0, %v6514
      %6516 = vmatmul.bf16.gmra.mxu0 %v6439
      %v6517 = vpop.f32.mrf.mxu0
      %v6518 = vadd.f32 0.0, %v6517
      %v6519 = vpop.f32.mrf.mxu0
      %v6520 = vadd.f32 0.0, %v6519
      %6521 = vmatmul.bf16.gmra.mxu0 %v6442
      %v6522 = vpop.f32.mrf.mxu0
      %v6523 = vadd.f32 0.0, %v6522
      %v6524 = vpop.f32.mrf.mxu0
      %v6525 = vadd.f32 0.0, %v6524
      %6526 = vmatmul.bf16.gmra.mxu0 %v6445
      %v6527 = vpop.f32.mrf.mxu0
      %v6528 = vadd.f32 0.0, %v6527
      %v6529 = vpop.f32.mrf.mxu0
      %v6530 = vadd.f32 0.0, %v6529
      %6531 = vmatmul.bf16.gmra.mxu0 %v6448
      %v6532 = vpop.f32.mrf.mxu0
      %v6533 = vadd.f32 0.0, %v6532
      %v6534 = vpop.f32.mrf.mxu0
      %v6535 = vadd.f32 0.0, %v6534
      %6536 = vmatmul.bf16.gmra.mxu0 %v6451
      %v6537 = vpop.f32.mrf.mxu0
      %v6538 = vadd.f32 0.0, %v6537
      %v6539 = vpop.f32.mrf.mxu0
      %v6540 = vadd.f32 0.0, %v6539
      %6541 = vmatmul.bf16.gmra.mxu0 %v6454
      %v6542 = vpop.f32.mrf.mxu0
      %v6543 = vadd.f32 0.0, %v6542
      %v6544 = vpop.f32.mrf.mxu0
      %v6545 = vadd.f32 0.0, %v6544
      %6546 = vmatmul.bf16.gmra.mxu0 %v6457
      %v6547 = vpop.f32.mrf.mxu0
      %v6548 = vadd.f32 0.0, %v6547
      %v6549 = vpop.f32.mrf.mxu0
      %v6550 = vadd.f32 0.0, %v6549
      %6551 = vmatmul.bf16.gmra.mxu0 %v6460
      %v6552 = vpop.f32.mrf.mxu0
      %v6553 = vadd.f32 0.0, %v6552
      %v6554 = vpop.f32.mrf.mxu0
      %v6555 = vadd.f32 0.0, %v6554
      %6556 = vmatmul.bf16.gmra.mxu0 %v6463
      %v6557 = vpop.f32.mrf.mxu0
      %v6558 = vadd.f32 0.0, %v6557
      %v6559 = vpop.f32.mrf.mxu0
      %v6560 = vadd.f32 0.0, %v6559
      %6561 = vmatmul.bf16.gmra.mxu0 %v6466
      %v6562 = vpop.f32.mrf.mxu0
      %v6563 = vadd.f32 0.0, %v6562
      %v6564 = vpop.f32.mrf.mxu0
      %v6565 = vadd.f32 0.0, %v6564
      %6566 = vdwg.mxu0
      %v6567 = vadd.f32 %v6307, %v6478
      %v6568 = vadd.f32 %v6308, %v6480
      %v6569 = vadd.f32 %v6309, %v6483
      %v6570 = vadd.f32 %v6310, %v6485
      %v6571 = vadd.f32 %v6311, %v6488
      %v6572 = vadd.f32 %v6312, %v6490
      %v6573 = vadd.f32 %v6313, %v6493
      %v6574 = vadd.f32 %v6314, %v6495
      %v6575 = vadd.f32 %v6315, %v6498
      %v6576 = vadd.f32 %v6316, %v6500
      %v6577 = vadd.f32 %v6317, %v6503
      %v6578 = vadd.f32 %v6318, %v6505
      %v6579 = vadd.f32 %v6319, %v6508
      %v6580 = vadd.f32 %v6320, %v6510
      %v6581 = vadd.f32 %v6321, %v6513
      %v6582 = vadd.f32 %v6322, %v6515
      %v6583 = vadd.f32 %v6323, %v6518
      %v6584 = vadd.f32 %v6324, %v6520
      %v6585 = vadd.f32 %v6325, %v6523
      %v6586 = vadd.f32 %v6326, %v6525
      %v6587 = vadd.f32 %v6327, %v6528
      %v6588 = vadd.f32 %v6328, %v6530
      %v6589 = vadd.f32 %v6329, %v6533
      %v6590 = vadd.f32 %v6330, %v6535
      %v6591 = vadd.f32 %v6331, %v6538
      %v6592 = vadd.f32 %v6332, %v6540
      %v6593 = vadd.f32 %v6333, %v6543
      %v6594 = vadd.f32 %v6334, %v6545
      %v6595 = vadd.f32 %v6335, %v6548
      %v6596 = vadd.f32 %v6336, %v6550
      %v6597 = vadd.f32 %v6337, %v6553
      %v6598 = vadd.f32 %v6338, %v6555
      %v6599 = vadd.f32 %v6339, %v6558
      %v6600 = vadd.f32 %v6340, %v6560
      %v6601 = vadd.f32 %v6341, %v6563
      %v6602 = vadd.f32 %v6342, %v6565
      %v6603 = vld [vmem:[%s409 + $0x24] sm:$0xff]
      %v6604 = vld [vmem:[%s409 + $0x2c] sm:$0xff]
      %v6605 = vld [vmem:[%s409 + $0x34] sm:$0xff]
      %v6606 = vld [vmem:[%s409 + $0x3c] sm:$0xff]
      %v6607 = vld [vmem:[%s409 + $0x44] sm:$0xff]
      %v6608 = vld [vmem:[%s409 + $0x4c] sm:$0xff]
      %v6609 = vld [vmem:[%s409 + $0x54] sm:$0xff]
      %v6610 = vld [vmem:[%s409 + $0x5c] sm:$0xff]
      %v6611 = vld [vmem:[%s409 + $0x64] sm:$0xff]
      %v6612 = vld [vmem:[%s409 + $0x6c] sm:$0xff]
      %v6613 = vld [vmem:[%s409 + $0x74] sm:$0xff]
      %v6614 = vld [vmem:[%s409 + $0x7c] sm:$0xff]
      %v6615 = vld [vmem:[%s409 + $0x84] sm:$0xff]
      %v6616 = vld [vmem:[%s409 + $0x8c] sm:$0xff]
      %v6617 = vld [vmem:[%s409 + $0x94] sm:$0xff]
      %v6618 = vld [vmem:[%s409 + $0x9c] sm:$0xff]
      %v6619 = vld [vmem:[%s409 + $0xa4] sm:$0xff]
      %v6620 = vld [vmem:[%s409 + $0xac] sm:$0xff]
      %v6621 = vld [vmem:[%s409 + $0xb4] sm:$0xff]
      %v6622 = vld [vmem:[%s409 + $0xbc] sm:$0xff]
      %v6623 = vld [vmem:[%s409 + $0xc4] sm:$0xff]
      %v6624 = vld [vmem:[%s409 + $0xcc] sm:$0xff]
      %v6625 = vld [vmem:[%s409 + $0xd4] sm:$0xff]
      %v6626 = vld [vmem:[%s409 + $0xdc] sm:$0xff]
      %v6627 = vld [vmem:[%s409 + $0xe4] sm:$0xff]
      %v6628 = vld [vmem:[%s409 + $0xec] sm:$0xff]
      %v6629 = vld [vmem:[%s409 + $0xf4] sm:$0xff]
      %v6630 = vld [vmem:[%s409 + $0xfc] sm:$0xff]
      %v6631 = vld [vmem:[%s409 + $0x104] sm:$0xff]
      %v6632 = vld [vmem:[%s409 + $0x10c] sm:$0xff]
      %v6633 = vld [vmem:[%s409 + $0x114] sm:$0xff]
      %v6634 = vld [vmem:[%s409 + $0x11c] sm:$0xff]
      %v6635 = vld [vmem:[%s409 + $0x124] sm:$0xff]
      %v6636 = vld [vmem:[%s409 + $0x12c] sm:$0xff]
      %v6637 = vld [vmem:[%s409 + $0x134] sm:$0xff]
      %v6638 = vld [vmem:[%s409 + $0x13c] sm:$0x3f]
      %v6639 = vpack.c.bf16 %v6604, %v6603
      %v6640 = vpack.c.bf16 %v6606, %v6605
      %v6641 = vpack.c.bf16 %v6608, %v6607
      %v6642 = vpack.c.bf16 %v6610, %v6609
      %v6643 = vpack.c.bf16 %v6612, %v6611
      %v6644 = vpack.c.bf16 %v6614, %v6613
      %v6645 = vpack.c.bf16 %v6616, %v6615
      %v6646 = vpack.c.bf16 %v6618, %v6617
      %v6647 = vpack.c.bf16 %v6620, %v6619
      %v6648 = vpack.c.bf16 %v6622, %v6621
      %v6649 = vpack.c.bf16 %v6624, %v6623
      %v6650 = vpack.c.bf16 %v6626, %v6625
      %v6651 = vpack.c.bf16 %v6628, %v6627
      %v6652 = vpack.c.bf16 %v6630, %v6629
      %v6653 = vpack.c.bf16 %v6632, %v6631
      %v6654 = vpack.c.bf16 %v6634, %v6633
      %v6655 = vpack.c.bf16 %v6636, %v6635
      %v6656 = vpack.c.bf16 %v6638, %v6637
      %s6657 = scalar_lea.vmem %s3, 384
      %v6658 = vld [vmem:[%s6657] sm:$0xf]
      %v6659 = vld [vmem:[%s6657 + $0x4] sm:$0xf]
      %v6660 = vld [vmem:[%s6657 + $0x8] sm:$0xf]
      %v6661 = vld [vmem:[%s6657 + $0xc] sm:$0xf]
      %v6666 = vunpack.c.l.b16 %v6658
      %v6667 = vunpack.c.l.b16 %v6659
      %v6668 = vunpack.c.l.b16 %v6660
      %v6669 = vunpack.c.l.b16 %v6661
      %v6670 = vpack.c.b16 %v6667, %v6666
      %v6671 = vpack.c.b16 %v6669, %v6668
      %v6675 = vsel %vm564, %v6639, 0
      %v6678 = vsel %vm564, %v6640, 0
      %v6681 = vsel %vm564, %v6641, 0
      %v6684 = vsel %vm564, %v6642, 0
      %v6687 = vsel %vm564, %v6643, 0
      %v6690 = vsel %vm564, %v6644, 0
      %v6693 = vsel %vm564, %v6645, 0
      %v6696 = vsel %vm564, %v6646, 0
      %v6699 = vsel %vm564, %v6647, 0
      %v6702 = vsel %vm564, %v6648, 0
      %v6705 = vsel %vm564, %v6649, 0
      %v6708 = vsel %vm564, %v6650, 0
      %v6711 = vsel %vm564, %v6651, 0
      %v6714 = vsel %vm564, %v6652, 0
      %v6717 = vsel %vm564, %v6653, 0
      %v6720 = vsel %vm564, %v6654, 0
      %v6723 = vsel %vm564, %v6655, 0
      %v6726 = vsel %vm564, %v6656, 0
      %6728 = vmatpush.bf16.msra.mxu0 0
      %6729 = vmatpush.bf16.msra.mxu0 0
      %6730 = vmatpush.bf16.msra.mxu0 0
      %6731 = vmatpush.bf16.msra.mxu0 0
      %6732 = vmatpush.bf16.msra.mxu0 0
      %6733 = vmatpush.bf16.msra.mxu0 0
      %6734 = vmatpush.bf16.msra.mxu0 %v6671
      %6735 = vmatpush.bf16.msra.mxu0 %v6670
      %6736 = vmatmul.bf16.gmra.mxu0 %v6675
      %v6737 = vpop.f32.mrf.mxu0
      %v6738 = vadd.f32 0.0, %v6737
      %v6739 = vpop.f32.mrf.mxu0
      %v6740 = vadd.f32 0.0, %v6739
      %6741 = vmatmul.bf16.gmra.mxu0 %v6678
      %v6742 = vpop.f32.mrf.mxu0
      %v6743 = vadd.f32 0.0, %v6742
      %v6744 = vpop.f32.mrf.mxu0
      %v6745 = vadd.f32 0.0, %v6744
      %6746 = vmatmul.bf16.gmra.mxu0 %v6681
      %v6747 = vpop.f32.mrf.mxu0
      %v6748 = vadd.f32 0.0, %v6747
      %v6749 = vpop.f32.mrf.mxu0
      %v6750 = vadd.f32 0.0, %v6749
      %6751 = vmatmul.bf16.gmra.mxu0 %v6684
      %v6752 = vpop.f32.mrf.mxu0
      %v6753 = vadd.f32 0.0, %v6752
      %v6754 = vpop.f32.mrf.mxu0
      %v6755 = vadd.f32 0.0, %v6754
      %6756 = vmatmul.bf16.gmra.mxu0 %v6687
      %v6757 = vpop.f32.mrf.mxu0
      %v6758 = vadd.f32 0.0, %v6757
      %v6759 = vpop.f32.mrf.mxu0
      %v6760 = vadd.f32 0.0, %v6759
      %6761 = vmatmul.bf16.gmra.mxu0 %v6690
      %v6762 = vpop.f32.mrf.mxu0
      %v6763 = vadd.f32 0.0, %v6762
      %v6764 = vpop.f32.mrf.mxu0
      %v6765 = vadd.f32 0.0, %v6764
      %6766 = vmatmul.bf16.gmra.mxu0 %v6693
      %v6767 = vpop.f32.mrf.mxu0
      %v6768 = vadd.f32 0.0, %v6767
      %v6769 = vpop.f32.mrf.mxu0
      %v6770 = vadd.f32 0.0, %v6769
      %6771 = vmatmul.bf16.gmra.mxu0 %v6696
      %v6772 = vpop.f32.mrf.mxu0
      %v6773 = vadd.f32 0.0, %v6772
      %v6774 = vpop.f32.mrf.mxu0
      %v6775 = vadd.f32 0.0, %v6774
      %6776 = vmatmul.bf16.gmra.mxu0 %v6699
      %v6777 = vpop.f32.mrf.mxu0
      %v6778 = vadd.f32 0.0, %v6777
      %v6779 = vpop.f32.mrf.mxu0
      %v6780 = vadd.f32 0.0, %v6779
      %6781 = vmatmul.bf16.gmra.mxu0 %v6702
      %v6782 = vpop.f32.mrf.mxu0
      %v6783 = vadd.f32 0.0, %v6782
      %v6784 = vpop.f32.mrf.mxu0
      %v6785 = vadd.f32 0.0, %v6784
      %6786 = vmatmul.bf16.gmra.mxu0 %v6705
      %v6787 = vpop.f32.mrf.mxu0
      %v6788 = vadd.f32 0.0, %v6787
      %v6789 = vpop.f32.mrf.mxu0
      %v6790 = vadd.f32 0.0, %v6789
      %6791 = vmatmul.bf16.gmra.mxu0 %v6708
      %v6792 = vpop.f32.mrf.mxu0
      %v6793 = vadd.f32 0.0, %v6792
      %v6794 = vpop.f32.mrf.mxu0
      %v6795 = vadd.f32 0.0, %v6794
      %6796 = vmatmul.bf16.gmra.mxu0 %v6711
      %v6797 = vpop.f32.mrf.mxu0
      %v6798 = vadd.f32 0.0, %v6797
      %v6799 = vpop.f32.mrf.mxu0
      %v6800 = vadd.f32 0.0, %v6799
      %6801 = vmatmul.bf16.gmra.mxu0 %v6714
      %v6802 = vpop.f32.mrf.mxu0
      %v6803 = vadd.f32 0.0, %v6802
      %v6804 = vpop.f32.mrf.mxu0
      %v6805 = vadd.f32 0.0, %v6804
      %6806 = vmatmul.bf16.gmra.mxu0 %v6717
      %v6807 = vpop.f32.mrf.mxu0
      %v6808 = vadd.f32 0.0, %v6807
      %v6809 = vpop.f32.mrf.mxu0
      %v6810 = vadd.f32 0.0, %v6809
      %6811 = vmatmul.bf16.gmra.mxu0 %v6720
      %v6812 = vpop.f32.mrf.mxu0
      %v6813 = vadd.f32 0.0, %v6812
      %v6814 = vpop.f32.mrf.mxu0
      %v6815 = vadd.f32 0.0, %v6814
      %6816 = vmatmul.bf16.gmra.mxu0 %v6723
      %v6817 = vpop.f32.mrf.mxu0
      %v6818 = vadd.f32 0.0, %v6817
      %v6819 = vpop.f32.mrf.mxu0
      %v6820 = vadd.f32 0.0, %v6819
      %6821 = vmatmul.bf16.gmra.mxu0 %v6726
      %v6822 = vpop.f32.mrf.mxu0
      %v6823 = vadd.f32 0.0, %v6822
      %v6824 = vpop.f32.mrf.mxu0
      %v6825 = vadd.f32 0.0, %v6824
      %6826 = vdwg.mxu0
      %v6827 = vadd.f32 %v6567, %v6738
      %v6828 = vadd.f32 %v6568, %v6740
      %v6829 = vadd.f32 %v6569, %v6743
      %v6830 = vadd.f32 %v6570, %v6745
      %v6831 = vadd.f32 %v6571, %v6748
      %v6832 = vadd.f32 %v6572, %v6750
      %v6833 = vadd.f32 %v6573, %v6753
      %v6834 = vadd.f32 %v6574, %v6755
      %v6835 = vadd.f32 %v6575, %v6758
      %v6836 = vadd.f32 %v6576, %v6760
      %v6837 = vadd.f32 %v6577, %v6763
      %v6838 = vadd.f32 %v6578, %v6765
      %v6839 = vadd.f32 %v6579, %v6768
      %v6840 = vadd.f32 %v6580, %v6770
      %v6841 = vadd.f32 %v6581, %v6773
      %v6842 = vadd.f32 %v6582, %v6775
      %v6843 = vadd.f32 %v6583, %v6778
      %v6844 = vadd.f32 %v6584, %v6780
      %v6845 = vadd.f32 %v6585, %v6783
      %v6846 = vadd.f32 %v6586, %v6785
      %v6847 = vadd.f32 %v6587, %v6788
      %v6848 = vadd.f32 %v6588, %v6790
      %v6849 = vadd.f32 %v6589, %v6793
      %v6850 = vadd.f32 %v6590, %v6795
      %v6851 = vadd.f32 %v6591, %v6798
      %v6852 = vadd.f32 %v6592, %v6800
      %v6853 = vadd.f32 %v6593, %v6803
      %v6854 = vadd.f32 %v6594, %v6805
      %v6855 = vadd.f32 %v6595, %v6808
      %v6856 = vadd.f32 %v6596, %v6810
      %v6857 = vadd.f32 %v6597, %v6813
      %v6858 = vadd.f32 %v6598, %v6815
      %v6859 = vadd.f32 %v6599, %v6818
      %v6860 = vadd.f32 %v6600, %v6820
      %v6861 = vadd.f32 %v6601, %v6823
      %v6862 = vadd.f32 %v6602, %v6825
      %v6863 = vld [vmem:[%s409 + $0x25] sm:$0xff]
      %v6864 = vld [vmem:[%s409 + $0x2d] sm:$0xff]
      %v6865 = vld [vmem:[%s409 + $0x35] sm:$0xff]
      %v6866 = vld [vmem:[%s409 + $0x3d] sm:$0xff]
      %v6867 = vld [vmem:[%s409 + $0x45] sm:$0xff]
      %v6868 = vld [vmem:[%s409 + $0x4d] sm:$0xff]
      %v6869 = vld [vmem:[%s409 + $0x55] sm:$0xff]
      %v6870 = vld [vmem:[%s409 + $0x5d] sm:$0xff]
      %v6871 = vld [vmem:[%s409 + $0x65] sm:$0xff]
      %v6872 = vld [vmem:[%s409 + $0x6d] sm:$0xff]
      %v6873 = vld [vmem:[%s409 + $0x75] sm:$0xff]
      %v6874 = vld [vmem:[%s409 + $0x7d] sm:$0xff]
      %v6875 = vld [vmem:[%s409 + $0x85] sm:$0xff]
      %v6876 = vld [vmem:[%s409 + $0x8d] sm:$0xff]
      %v6877 = vld [vmem:[%s409 + $0x95] sm:$0xff]
      %v6878 = vld [vmem:[%s409 + $0x9d] sm:$0xff]
      %v6879 = vld [vmem:[%s409 + $0xa5] sm:$0xff]
      %v6880 = vld [vmem:[%s409 + $0xad] sm:$0xff]
      %v6881 = vld [vmem:[%s409 + $0xb5] sm:$0xff]
      %v6882 = vld [vmem:[%s409 + $0xbd] sm:$0xff]
      %v6883 = vld [vmem:[%s409 + $0xc5] sm:$0xff]
      %v6884 = vld [vmem:[%s409 + $0xcd] sm:$0xff]
      %v6885 = vld [vmem:[%s409 + $0xd5] sm:$0xff]
      %v6886 = vld [vmem:[%s409 + $0xdd] sm:$0xff]
      %v6887 = vld [vmem:[%s409 + $0xe5] sm:$0xff]
      %v6888 = vld [vmem:[%s409 + $0xed] sm:$0xff]
      %v6889 = vld [vmem:[%s409 + $0xf5] sm:$0xff]
      %v6890 = vld [vmem:[%s409 + $0xfd] sm:$0xff]
      %v6891 = vld [vmem:[%s409 + $0x105] sm:$0xff]
      %v6892 = vld [vmem:[%s409 + $0x10d] sm:$0xff]
      %v6893 = vld [vmem:[%s409 + $0x115] sm:$0xff]
      %v6894 = vld [vmem:[%s409 + $0x11d] sm:$0xff]
      %v6895 = vld [vmem:[%s409 + $0x125] sm:$0xff]
      %v6896 = vld [vmem:[%s409 + $0x12d] sm:$0xff]
      %v6897 = vld [vmem:[%s409 + $0x135] sm:$0xff]
      %v6898 = vld [vmem:[%s409 + $0x13d] sm:$0x3f]
      %v6899 = vpack.c.bf16 %v6864, %v6863
      %v6900 = vpack.c.bf16 %v6866, %v6865
      %v6901 = vpack.c.bf16 %v6868, %v6867
      %v6902 = vpack.c.bf16 %v6870, %v6869
      %v6903 = vpack.c.bf16 %v6872, %v6871
      %v6904 = vpack.c.bf16 %v6874, %v6873
      %v6905 = vpack.c.bf16 %v6876, %v6875
      %v6906 = vpack.c.bf16 %v6878, %v6877
      %v6907 = vpack.c.bf16 %v6880, %v6879
      %v6908 = vpack.c.bf16 %v6882, %v6881
      %v6909 = vpack.c.bf16 %v6884, %v6883
      %v6910 = vpack.c.bf16 %v6886, %v6885
      %v6911 = vpack.c.bf16 %v6888, %v6887
      %v6912 = vpack.c.bf16 %v6890, %v6889
      %v6913 = vpack.c.bf16 %v6892, %v6891
      %v6914 = vpack.c.bf16 %v6894, %v6893
      %v6915 = vpack.c.bf16 %v6896, %v6895
      %v6916 = vpack.c.bf16 %v6898, %v6897
      %s6917 = scalar_lea.vmem %s3, 400
      %v6918 = vld [vmem:[%s6917] sm:$0xf]
      %v6919 = vld [vmem:[%s6917 + $0x4] sm:$0xf]
      %v6920 = vld [vmem:[%s6917 + $0x8] sm:$0xf]
      %v6921 = vld [vmem:[%s6917 + $0xc] sm:$0xf]
      %v6926 = vunpack.c.l.b16 %v6918
      %v6927 = vunpack.c.l.b16 %v6919
      %v6928 = vunpack.c.l.b16 %v6920
      %v6929 = vunpack.c.l.b16 %v6921
      %v6930 = vpack.c.b16 %v6927, %v6926
      %v6931 = vpack.c.b16 %v6929, %v6928
      %v6935 = vsel %vm564, %v6899, 0
      %v6938 = vsel %vm564, %v6900, 0
      %v6941 = vsel %vm564, %v6901, 0
      %v6944 = vsel %vm564, %v6902, 0
      %v6947 = vsel %vm564, %v6903, 0
      %v6950 = vsel %vm564, %v6904, 0
      %v6953 = vsel %vm564, %v6905, 0
      %v6956 = vsel %vm564, %v6906, 0
      %v6959 = vsel %vm564, %v6907, 0
      %v6962 = vsel %vm564, %v6908, 0
      %v6965 = vsel %vm564, %v6909, 0
      %v6968 = vsel %vm564, %v6910, 0
      %v6971 = vsel %vm564, %v6911, 0
      %v6974 = vsel %vm564, %v6912, 0
      %v6977 = vsel %vm564, %v6913, 0
      %v6980 = vsel %vm564, %v6914, 0
      %v6983 = vsel %vm564, %v6915, 0
      %v6986 = vsel %vm564, %v6916, 0
      %6988 = vmatpush.bf16.msra.mxu0 0
      %6989 = vmatpush.bf16.msra.mxu0 0
      %6990 = vmatpush.bf16.msra.mxu0 0
      %6991 = vmatpush.bf16.msra.mxu0 0
      %6992 = vmatpush.bf16.msra.mxu0 0
      %6993 = vmatpush.bf16.msra.mxu0 0
      %6994 = vmatpush.bf16.msra.mxu0 %v6931
      %6995 = vmatpush.bf16.msra.mxu0 %v6930
      %6996 = vmatmul.bf16.gmra.mxu0 %v6935
      %v6997 = vpop.f32.mrf.mxu0
      %v6998 = vadd.f32 0.0, %v6997
      %v6999 = vpop.f32.mrf.mxu0
      %v7000 = vadd.f32 0.0, %v6999
      %7001 = vmatmul.bf16.gmra.mxu0 %v6938
      %v7002 = vpop.f32.mrf.mxu0
      %v7003 = vadd.f32 0.0, %v7002
      %v7004 = vpop.f32.mrf.mxu0
      %v7005 = vadd.f32 0.0, %v7004
      %7006 = vmatmul.bf16.gmra.mxu0 %v6941
      %v7007 = vpop.f32.mrf.mxu0
      %v7008 = vadd.f32 0.0, %v7007
      %v7009 = vpop.f32.mrf.mxu0
      %v7010 = vadd.f32 0.0, %v7009
      %7011 = vmatmul.bf16.gmra.mxu0 %v6944
      %v7012 = vpop.f32.mrf.mxu0
      %v7013 = vadd.f32 0.0, %v7012
      %v7014 = vpop.f32.mrf.mxu0
      %v7015 = vadd.f32 0.0, %v7014
      %7016 = vmatmul.bf16.gmra.mxu0 %v6947
      %v7017 = vpop.f32.mrf.mxu0
      %v7018 = vadd.f32 0.0, %v7017
      %v7019 = vpop.f32.mrf.mxu0
      %v7020 = vadd.f32 0.0, %v7019
      %7021 = vmatmul.bf16.gmra.mxu0 %v6950
      %v7022 = vpop.f32.mrf.mxu0
      %v7023 = vadd.f32 0.0, %v7022
      %v7024 = vpop.f32.mrf.mxu0
      %v7025 = vadd.f32 0.0, %v7024
      %7026 = vmatmul.bf16.gmra.mxu0 %v6953
      %v7027 = vpop.f32.mrf.mxu0
      %v7028 = vadd.f32 0.0, %v7027
      %v7029 = vpop.f32.mrf.mxu0
      %v7030 = vadd.f32 0.0, %v7029
      %7031 = vmatmul.bf16.gmra.mxu0 %v6956
      %v7032 = vpop.f32.mrf.mxu0
      %v7033 = vadd.f32 0.0, %v7032
      %v7034 = vpop.f32.mrf.mxu0
      %v7035 = vadd.f32 0.0, %v7034
      %7036 = vmatmul.bf16.gmra.mxu0 %v6959
      %v7037 = vpop.f32.mrf.mxu0
      %v7038 = vadd.f32 0.0, %v7037
      %v7039 = vpop.f32.mrf.mxu0
      %v7040 = vadd.f32 0.0, %v7039
      %7041 = vmatmul.bf16.gmra.mxu0 %v6962
      %v7042 = vpop.f32.mrf.mxu0
      %v7043 = vadd.f32 0.0, %v7042
      %v7044 = vpop.f32.mrf.mxu0
      %v7045 = vadd.f32 0.0, %v7044
      %7046 = vmatmul.bf16.gmra.mxu0 %v6965
      %v7047 = vpop.f32.mrf.mxu0
      %v7048 = vadd.f32 0.0, %v7047
      %v7049 = vpop.f32.mrf.mxu0
      %v7050 = vadd.f32 0.0, %v7049
      %7051 = vmatmul.bf16.gmra.mxu0 %v6968
      %v7052 = vpop.f32.mrf.mxu0
      %v7053 = vadd.f32 0.0, %v7052
      %v7054 = vpop.f32.mrf.mxu0
      %v7055 = vadd.f32 0.0, %v7054
      %7056 = vmatmul.bf16.gmra.mxu0 %v6971
      %v7057 = vpop.f32.mrf.mxu0
      %v7058 = vadd.f32 0.0, %v7057
      %v7059 = vpop.f32.mrf.mxu0
      %v7060 = vadd.f32 0.0, %v7059
      %7061 = vmatmul.bf16.gmra.mxu0 %v6974
      %v7062 = vpop.f32.mrf.mxu0
      %v7063 = vadd.f32 0.0, %v7062
      %v7064 = vpop.f32.mrf.mxu0
      %v7065 = vadd.f32 0.0, %v7064
      %7066 = vmatmul.bf16.gmra.mxu0 %v6977
      %v7067 = vpop.f32.mrf.mxu0
      %v7068 = vadd.f32 0.0, %v7067
      %v7069 = vpop.f32.mrf.mxu0
      %v7070 = vadd.f32 0.0, %v7069
      %7071 = vmatmul.bf16.gmra.mxu0 %v6980
      %v7072 = vpop.f32.mrf.mxu0
      %v7073 = vadd.f32 0.0, %v7072
      %v7074 = vpop.f32.mrf.mxu0
      %v7075 = vadd.f32 0.0, %v7074
      %7076 = vmatmul.bf16.gmra.mxu0 %v6983
      %v7077 = vpop.f32.mrf.mxu0
      %v7078 = vadd.f32 0.0, %v7077
      %v7079 = vpop.f32.mrf.mxu0
      %v7080 = vadd.f32 0.0, %v7079
      %7081 = vmatmul.bf16.gmra.mxu0 %v6986
      %v7082 = vpop.f32.mrf.mxu0
      %v7083 = vadd.f32 0.0, %v7082
      %v7084 = vpop.f32.mrf.mxu0
      %v7085 = vadd.f32 0.0, %v7084
      %7086 = vdwg.mxu0
      %v7087 = vadd.f32 %v6827, %v6998
      %v7088 = vadd.f32 %v6828, %v7000
      %v7089 = vadd.f32 %v6829, %v7003
      %v7090 = vadd.f32 %v6830, %v7005
      %v7091 = vadd.f32 %v6831, %v7008
      %v7092 = vadd.f32 %v6832, %v7010
      %v7093 = vadd.f32 %v6833, %v7013
      %v7094 = vadd.f32 %v6834, %v7015
      %v7095 = vadd.f32 %v6835, %v7018
      %v7096 = vadd.f32 %v6836, %v7020
      %v7097 = vadd.f32 %v6837, %v7023
      %v7098 = vadd.f32 %v6838, %v7025
      %v7099 = vadd.f32 %v6839, %v7028
      %v7100 = vadd.f32 %v6840, %v7030
      %v7101 = vadd.f32 %v6841, %v7033
      %v7102 = vadd.f32 %v6842, %v7035
      %v7103 = vadd.f32 %v6843, %v7038
      %v7104 = vadd.f32 %v6844, %v7040
      %v7105 = vadd.f32 %v6845, %v7043
      %v7106 = vadd.f32 %v6846, %v7045
      %v7107 = vadd.f32 %v6847, %v7048
      %v7108 = vadd.f32 %v6848, %v7050
      %v7109 = vadd.f32 %v6849, %v7053
      %v7110 = vadd.f32 %v6850, %v7055
      %v7111 = vadd.f32 %v6851, %v7058
      %v7112 = vadd.f32 %v6852, %v7060
      %v7113 = vadd.f32 %v6853, %v7063
      %v7114 = vadd.f32 %v6854, %v7065
      %v7115 = vadd.f32 %v6855, %v7068
      %v7116 = vadd.f32 %v6856, %v7070
      %v7117 = vadd.f32 %v6857, %v7073
      %v7118 = vadd.f32 %v6858, %v7075
      %v7119 = vadd.f32 %v6859, %v7078
      %v7120 = vadd.f32 %v6860, %v7080
      %v7121 = vadd.f32 %v6861, %v7083
      %v7122 = vadd.f32 %v6862, %v7085
      %v7123 = vld [vmem:[%s409 + $0x26] sm:$0xff]
      %v7124 = vld [vmem:[%s409 + $0x2e] sm:$0xff]
      %v7125 = vld [vmem:[%s409 + $0x36] sm:$0xff]
      %v7126 = vld [vmem:[%s409 + $0x3e] sm:$0xff]
      %v7127 = vld [vmem:[%s409 + $0x46] sm:$0xff]
      %v7128 = vld [vmem:[%s409 + $0x4e] sm:$0xff]
      %v7129 = vld [vmem:[%s409 + $0x56] sm:$0xff]
      %v7130 = vld [vmem:[%s409 + $0x5e] sm:$0xff]
      %v7131 = vld [vmem:[%s409 + $0x66] sm:$0xff]
      %v7132 = vld [vmem:[%s409 + $0x6e] sm:$0xff]
      %v7133 = vld [vmem:[%s409 + $0x76] sm:$0xff]
      %v7134 = vld [vmem:[%s409 + $0x7e] sm:$0xff]
      %v7135 = vld [vmem:[%s409 + $0x86] sm:$0xff]
      %v7136 = vld [vmem:[%s409 + $0x8e] sm:$0xff]
      %v7137 = vld [vmem:[%s409 + $0x96] sm:$0xff]
      %v7138 = vld [vmem:[%s409 + $0x9e] sm:$0xff]
      %v7139 = vld [vmem:[%s409 + $0xa6] sm:$0xff]
      %v7140 = vld [vmem:[%s409 + $0xae] sm:$0xff]
      %v7141 = vld [vmem:[%s409 + $0xb6] sm:$0xff]
      %v7142 = vld [vmem:[%s409 + $0xbe] sm:$0xff]
      %v7143 = vld [vmem:[%s409 + $0xc6] sm:$0xff]
      %v7144 = vld [vmem:[%s409 + $0xce] sm:$0xff]
      %v7145 = vld [vmem:[%s409 + $0xd6] sm:$0xff]
      %v7146 = vld [vmem:[%s409 + $0xde] sm:$0xff]
      %v7147 = vld [vmem:[%s409 + $0xe6] sm:$0xff]
      %v7148 = vld [vmem:[%s409 + $0xee] sm:$0xff]
      %v7149 = vld [vmem:[%s409 + $0xf6] sm:$0xff]
      %v7150 = vld [vmem:[%s409 + $0xfe] sm:$0xff]
      %v7151 = vld [vmem:[%s409 + $0x106] sm:$0xff]
      %v7152 = vld [vmem:[%s409 + $0x10e] sm:$0xff]
      %v7153 = vld [vmem:[%s409 + $0x116] sm:$0xff]
      %v7154 = vld [vmem:[%s409 + $0x11e] sm:$0xff]
      %v7155 = vld [vmem:[%s409 + $0x126] sm:$0xff]
      %v7156 = vld [vmem:[%s409 + $0x12e] sm:$0xff]
      %v7157 = vld [vmem:[%s409 + $0x136] sm:$0xff]
      %v7158 = vld [vmem:[%s409 + $0x13e] sm:$0x3f]
      %v7159 = vpack.c.bf16 %v7124, %v7123
      %v7160 = vpack.c.bf16 %v7126, %v7125
      %v7161 = vpack.c.bf16 %v7128, %v7127
      %v7162 = vpack.c.bf16 %v7130, %v7129
      %v7163 = vpack.c.bf16 %v7132, %v7131
      %v7164 = vpack.c.bf16 %v7134, %v7133
      %v7165 = vpack.c.bf16 %v7136, %v7135
      %v7166 = vpack.c.bf16 %v7138, %v7137
      %v7167 = vpack.c.bf16 %v7140, %v7139
      %v7168 = vpack.c.bf16 %v7142, %v7141
      %v7169 = vpack.c.bf16 %v7144, %v7143
      %v7170 = vpack.c.bf16 %v7146, %v7145
      %v7171 = vpack.c.bf16 %v7148, %v7147
      %v7172 = vpack.c.bf16 %v7150, %v7149
      %v7173 = vpack.c.bf16 %v7152, %v7151
      %v7174 = vpack.c.bf16 %v7154, %v7153
      %v7175 = vpack.c.bf16 %v7156, %v7155
      %v7176 = vpack.c.bf16 %v7158, %v7157
      %s7177 = scalar_lea.vmem %s3, 416
      %v7178 = vld [vmem:[%s7177] sm:$0xf]
      %v7179 = vld [vmem:[%s7177 + $0x4] sm:$0xf]
      %v7180 = vld [vmem:[%s7177 + $0x8] sm:$0xf]
      %v7181 = vld [vmem:[%s7177 + $0xc] sm:$0xf]
      %v7186 = vunpack.c.l.b16 %v7178
      %v7187 = vunpack.c.l.b16 %v7179
      %v7188 = vunpack.c.l.b16 %v7180
      %v7189 = vunpack.c.l.b16 %v7181
      %v7190 = vpack.c.b16 %v7187, %v7186
      %v7191 = vpack.c.b16 %v7189, %v7188
      %v7195 = vsel %vm564, %v7159, 0
      %v7198 = vsel %vm564, %v7160, 0
      %v7201 = vsel %vm564, %v7161, 0
      %v7204 = vsel %vm564, %v7162, 0
      %v7207 = vsel %vm564, %v7163, 0
      %v7210 = vsel %vm564, %v7164, 0
      %v7213 = vsel %vm564, %v7165, 0
      %v7216 = vsel %vm564, %v7166, 0
      %v7219 = vsel %vm564, %v7167, 0
      %v7222 = vsel %vm564, %v7168, 0
      %v7225 = vsel %vm564, %v7169, 0
      %v7228 = vsel %vm564, %v7170, 0
      %v7231 = vsel %vm564, %v7171, 0
      %v7234 = vsel %vm564, %v7172, 0
      %v7237 = vsel %vm564, %v7173, 0
      %v7240 = vsel %vm564, %v7174, 0
      %v7243 = vsel %vm564, %v7175, 0
      %v7246 = vsel %vm564, %v7176, 0
      %7248 = vmatpush.bf16.msra.mxu0 0
      %7249 = vmatpush.bf16.msra.mxu0 0
      %7250 = vmatpush.bf16.msra.mxu0 0
      %7251 = vmatpush.bf16.msra.mxu0 0
      %7252 = vmatpush.bf16.msra.mxu0 0
      %7253 = vmatpush.bf16.msra.mxu0 0
      %7254 = vmatpush.bf16.msra.mxu0 %v7191
      %7255 = vmatpush.bf16.msra.mxu0 %v7190
      %7256 = vmatmul.bf16.gmra.mxu0 %v7195
      %v7257 = vpop.f32.mrf.mxu0
      %v7258 = vadd.f32 0.0, %v7257
      %v7259 = vpop.f32.mrf.mxu0
      %v7260 = vadd.f32 0.0, %v7259
      %7261 = vmatmul.bf16.gmra.mxu0 %v7198
      %v7262 = vpop.f32.mrf.mxu0
      %v7263 = vadd.f32 0.0, %v7262
      %v7264 = vpop.f32.mrf.mxu0
      %v7265 = vadd.f32 0.0, %v7264
      %7266 = vmatmul.bf16.gmra.mxu0 %v7201
      %v7267 = vpop.f32.mrf.mxu0
      %v7268 = vadd.f32 0.0, %v7267
      %v7269 = vpop.f32.mrf.mxu0
      %v7270 = vadd.f32 0.0, %v7269
      %7271 = vmatmul.bf16.gmra.mxu0 %v7204
      %v7272 = vpop.f32.mrf.mxu0
      %v7273 = vadd.f32 0.0, %v7272
      %v7274 = vpop.f32.mrf.mxu0
      %v7275 = vadd.f32 0.0, %v7274
      %7276 = vmatmul.bf16.gmra.mxu0 %v7207
      %v7277 = vpop.f32.mrf.mxu0
      %v7278 = vadd.f32 0.0, %v7277
      %v7279 = vpop.f32.mrf.mxu0
      %v7280 = vadd.f32 0.0, %v7279
      %7281 = vmatmul.bf16.gmra.mxu0 %v7210
      %v7282 = vpop.f32.mrf.mxu0
      %v7283 = vadd.f32 0.0, %v7282
      %v7284 = vpop.f32.mrf.mxu0
      %v7285 = vadd.f32 0.0, %v7284
      %7286 = vmatmul.bf16.gmra.mxu0 %v7213
      %v7287 = vpop.f32.mrf.mxu0
      %v7288 = vadd.f32 0.0, %v7287
      %v7289 = vpop.f32.mrf.mxu0
      %v7290 = vadd.f32 0.0, %v7289
      %7291 = vmatmul.bf16.gmra.mxu0 %v7216
      %v7292 = vpop.f32.mrf.mxu0
      %v7293 = vadd.f32 0.0, %v7292
      %v7294 = vpop.f32.mrf.mxu0
      %v7295 = vadd.f32 0.0, %v7294
      %7296 = vmatmul.bf16.gmra.mxu0 %v7219
      %v7297 = vpop.f32.mrf.mxu0
      %v7298 = vadd.f32 0.0, %v7297
      %v7299 = vpop.f32.mrf.mxu0
      %v7300 = vadd.f32 0.0, %v7299
      %7301 = vmatmul.bf16.gmra.mxu0 %v7222
      %v7302 = vpop.f32.mrf.mxu0
      %v7303 = vadd.f32 0.0, %v7302
      %v7304 = vpop.f32.mrf.mxu0
      %v7305 = vadd.f32 0.0, %v7304
      %7306 = vmatmul.bf16.gmra.mxu0 %v7225
      %v7307 = vpop.f32.mrf.mxu0
      %v7308 = vadd.f32 0.0, %v7307
      %v7309 = vpop.f32.mrf.mxu0
      %v7310 = vadd.f32 0.0, %v7309
      %7311 = vmatmul.bf16.gmra.mxu0 %v7228
      %v7312 = vpop.f32.mrf.mxu0
      %v7313 = vadd.f32 0.0, %v7312
      %v7314 = vpop.f32.mrf.mxu0
      %v7315 = vadd.f32 0.0, %v7314
      %7316 = vmatmul.bf16.gmra.mxu0 %v7231
      %v7317 = vpop.f32.mrf.mxu0
      %v7318 = vadd.f32 0.0, %v7317
      %v7319 = vpop.f32.mrf.mxu0
      %v7320 = vadd.f32 0.0, %v7319
      %7321 = vmatmul.bf16.gmra.mxu0 %v7234
      %v7322 = vpop.f32.mrf.mxu0
      %v7323 = vadd.f32 0.0, %v7322
      %v7324 = vpop.f32.mrf.mxu0
      %v7325 = vadd.f32 0.0, %v7324
      %7326 = vmatmul.bf16.gmra.mxu0 %v7237
      %v7327 = vpop.f32.mrf.mxu0
      %v7328 = vadd.f32 0.0, %v7327
      %v7329 = vpop.f32.mrf.mxu0
      %v7330 = vadd.f32 0.0, %v7329
      %7331 = vmatmul.bf16.gmra.mxu0 %v7240
      %v7332 = vpop.f32.mrf.mxu0
      %v7333 = vadd.f32 0.0, %v7332
      %v7334 = vpop.f32.mrf.mxu0
      %v7335 = vadd.f32 0.0, %v7334
      %7336 = vmatmul.bf16.gmra.mxu0 %v7243
      %v7337 = vpop.f32.mrf.mxu0
      %v7338 = vadd.f32 0.0, %v7337
      %v7339 = vpop.f32.mrf.mxu0
      %v7340 = vadd.f32 0.0, %v7339
      %7341 = vmatmul.bf16.gmra.mxu0 %v7246
      %v7342 = vpop.f32.mrf.mxu0
      %v7343 = vadd.f32 0.0, %v7342
      %v7344 = vpop.f32.mrf.mxu0
      %v7345 = vadd.f32 0.0, %v7344
      %7346 = vdwg.mxu0
      %v7347 = vadd.f32 %v7087, %v7258
      %v7348 = vadd.f32 %v7088, %v7260
      %v7349 = vadd.f32 %v7089, %v7263
      %v7350 = vadd.f32 %v7090, %v7265
      %v7351 = vadd.f32 %v7091, %v7268
      %v7352 = vadd.f32 %v7092, %v7270
      %v7353 = vadd.f32 %v7093, %v7273
      %v7354 = vadd.f32 %v7094, %v7275
      %v7355 = vadd.f32 %v7095, %v7278
      %v7356 = vadd.f32 %v7096, %v7280
      %v7357 = vadd.f32 %v7097, %v7283
      %v7358 = vadd.f32 %v7098, %v7285
      %v7359 = vadd.f32 %v7099, %v7288
      %v7360 = vadd.f32 %v7100, %v7290
      %v7361 = vadd.f32 %v7101, %v7293
      %v7362 = vadd.f32 %v7102, %v7295
      %v7363 = vadd.f32 %v7103, %v7298
      %v7364 = vadd.f32 %v7104, %v7300
      %v7365 = vadd.f32 %v7105, %v7303
      %v7366 = vadd.f32 %v7106, %v7305
      %v7367 = vadd.f32 %v7107, %v7308
      %v7368 = vadd.f32 %v7108, %v7310
      %v7369 = vadd.f32 %v7109, %v7313
      %v7370 = vadd.f32 %v7110, %v7315
      %v7371 = vadd.f32 %v7111, %v7318
      %v7372 = vadd.f32 %v7112, %v7320
      %v7373 = vadd.f32 %v7113, %v7323
      %v7374 = vadd.f32 %v7114, %v7325
      %v7375 = vadd.f32 %v7115, %v7328
      %v7376 = vadd.f32 %v7116, %v7330
      %v7377 = vadd.f32 %v7117, %v7333
      %v7378 = vadd.f32 %v7118, %v7335
      %v7379 = vadd.f32 %v7119, %v7338
      %v7380 = vadd.f32 %v7120, %v7340
      %v7381 = vadd.f32 %v7121, %v7343
      %v7382 = vadd.f32 %v7122, %v7345
      %7383 = vst.msk [vmem:[%s419] sm:$0xff] %vm564, %v7347
      %7384 = vst.msk [vmem:[%s419 + $0x8] sm:$0xff] %vm564, %v7348
      %7385 = vst.msk [vmem:[%s419 + $0x10] sm:$0xff] %vm564, %v7349
      %7386 = vst.msk [vmem:[%s419 + $0x18] sm:$0xff] %vm564, %v7350
      %7387 = vst.msk [vmem:[%s419 + $0x20] sm:$0xff] %vm564, %v7351
      %7388 = vst.msk [vmem:[%s419 + $0x28] sm:$0xff] %vm564, %v7352
      %7389 = vst.msk [vmem:[%s419 + $0x30] sm:$0xff] %vm564, %v7353
      %7390 = vst.msk [vmem:[%s419 + $0x38] sm:$0xff] %vm564, %v7354
      %7391 = vst.msk [vmem:[%s419 + $0x40] sm:$0xff] %vm564, %v7355
      %7392 = vst.msk [vmem:[%s419 + $0x48] sm:$0xff] %vm564, %v7356
      %7393 = vst.msk [vmem:[%s419 + $0x50] sm:$0xff] %vm564, %v7357
      %7394 = vst.msk [vmem:[%s419 + $0x58] sm:$0xff] %vm564, %v7358
      %7395 = vst.msk [vmem:[%s419 + $0x60] sm:$0xff] %vm564, %v7359
      %7396 = vst.msk [vmem:[%s419 + $0x68] sm:$0xff] %vm564, %v7360
      %7397 = vst.msk [vmem:[%s419 + $0x70] sm:$0xff] %vm564, %v7361
      %7398 = vst.msk [vmem:[%s419 + $0x78] sm:$0xff] %vm564, %v7362
      %7399 = vst.msk [vmem:[%s419 + $0x80] sm:$0xff] %vm564, %v7363
      %7400 = vst.msk [vmem:[%s419 + $0x88] sm:$0xff] %vm564, %v7364
      %7401 = vst.msk [vmem:[%s419 + $0x90] sm:$0xff] %vm564, %v7365
      %7402 = vst.msk [vmem:[%s419 + $0x98] sm:$0xff] %vm564, %v7366
      %7403 = vst.msk [vmem:[%s419 + $0xa0] sm:$0xff] %vm564, %v7367
      %7404 = vst.msk [vmem:[%s419 + $0xa8] sm:$0xff] %vm564, %v7368
      %7405 = vst.msk [vmem:[%s419 + $0xb0] sm:$0xff] %vm564, %v7369
      %7406 = vst.msk [vmem:[%s419 + $0xb8] sm:$0xff] %vm564, %v7370
      %7407 = vst.msk [vmem:[%s419 + $0xc0] sm:$0xff] %vm564, %v7371
      %7408 = vst.msk [vmem:[%s419 + $0xc8] sm:$0xff] %vm564, %v7372
      %7409 = vst.msk [vmem:[%s419 + $0xd0] sm:$0xff] %vm564, %v7373
      %7410 = vst.msk [vmem:[%s419 + $0xd8] sm:$0xff] %vm564, %v7374
      %7411 = vst.msk [vmem:[%s419 + $0xe0] sm:$0xff] %vm564, %v7375
      %7412 = vst.msk [vmem:[%s419 + $0xe8] sm:$0xff] %vm564, %v7376
      %7413 = vst.msk [vmem:[%s419 + $0xf0] sm:$0xff] %vm564, %v7377
      %7414 = vst.msk [vmem:[%s419 + $0xf8] sm:$0xff] %vm564, %v7378
      %7415 = vst.msk [vmem:[%s419 + $0x100] sm:$0xff] %vm564, %v7379
      %7416 = vst.msk [vmem:[%s419 + $0x108] sm:$0xff] %vm564, %v7380
      %7417 = vst.msk [vmem:[%s419 + $0x110] sm:$0xff] %vm564, %v7381
      %vm7418 = vcmask 259072
      %7419 = vst.msk [vmem:[%s419 + $0x118] sm:$0x3f] %vm7418, %v7382
      %v7420 = vld [vmem:[%s4] sm:$0xff]
      %v7421 = vld [vmem:[%s4 + $0x8] sm:$0xff]
      %v7422 = vld [vmem:[%s4 + $0x10] sm:$0xff]
      %v7423 = vld [vmem:[%s4 + $0x18] sm:$0xff]
      %v7424 = vld [vmem:[%s4 + $0x20] sm:$0xff]
      %v7425 = vld [vmem:[%s4 + $0x28] sm:$0xff]
      %v7426 = vld [vmem:[%s4 + $0x30] sm:$0xff]
      %v7427 = vld [vmem:[%s4 + $0x38] sm:$0xff]
      %v7428 = vld [vmem:[%s4 + $0x40] sm:$0xff]
      %v7429 = vld [vmem:[%s4 + $0x48] sm:$0xff]
      %v7430 = vld [vmem:[%s4 + $0x50] sm:$0xff]
      %v7431 = vld [vmem:[%s4 + $0x58] sm:$0xff]
      %v7432 = vld [vmem:[%s4 + $0x60] sm:$0xff]
      %v7433 = vld [vmem:[%s4 + $0x68] sm:$0xff]
      %v7434 = vld [vmem:[%s4 + $0x70] sm:$0xff]
      %v7435 = vld [vmem:[%s4 + $0x78] sm:$0xff]
      %v7436 = vld [vmem:[%s4 + $0x80] sm:$0xff]
      %v7437 = vld [vmem:[%s4 + $0x88] sm:$0xff]
      %v7438 = vld [vmem:[%s4 + $0x90] sm:$0xff]
      %v7439 = vld [vmem:[%s4 + $0x98] sm:$0xff]
      %v7440 = vld [vmem:[%s4 + $0xa0] sm:$0xff]
      %v7441 = vld [vmem:[%s4 + $0xa8] sm:$0xff]
      %v7442 = vld [vmem:[%s4 + $0xb0] sm:$0xff]
      %v7443 = vld [vmem:[%s4 + $0xb8] sm:$0xff]
      %v7444 = vld [vmem:[%s4 + $0xc0] sm:$0xff]
      %v7445 = vld [vmem:[%s4 + $0xc8] sm:$0xff]
      %v7446 = vld [vmem:[%s4 + $0xd0] sm:$0xff]
      %v7447 = vld [vmem:[%s4 + $0xd8] sm:$0xff]
      %v7448 = vld [vmem:[%s4 + $0xe0] sm:$0xff]
      %v7449 = vld [vmem:[%s4 + $0xe8] sm:$0xff]
      %v7450 = vld [vmem:[%s4 + $0xf0] sm:$0xff]
      %v7451 = vld [vmem:[%s4 + $0xf8] sm:$0xff]
      %v7452 = vld [vmem:[%s4 + $0x100] sm:$0xff]
      %v7453 = vld [vmem:[%s4 + $0x108] sm:$0xff]
      %v7454 = vld [vmem:[%s4 + $0x110] sm:$0xff]
      %v7455 = vld [vmem:[%s4 + $0x118] sm:$0x3f]
      %7457 = vset.pattern.permute.xlu0 0
      %7458 = vperm.xlu0 %7457, %v7420
      %v7459 = vpop.permute.xlu0 %7458
      %7462 = vset.pattern.permute.xlu0 0
      %7463 = vperm.xlu0 %7462, %v7421
      %v7464 = vpop.permute.xlu0 %7463
      %7467 = vset.pattern.permute.xlu0 0
      %7468 = vperm.xlu0 %7467, %v7422
      %v7469 = vpop.permute.xlu0 %7468
      %7472 = vset.pattern.permute.xlu0 0
      %7473 = vperm.xlu0 %7472, %v7423
      %v7474 = vpop.permute.xlu0 %7473
      %7477 = vset.pattern.permute.xlu0 0
      %7478 = vperm.xlu0 %7477, %v7424
      %v7479 = vpop.permute.xlu0 %7478
      %7482 = vset.pattern.permute.xlu0 0
      %7483 = vperm.xlu0 %7482, %v7425
      %v7484 = vpop.permute.xlu0 %7483
      %7487 = vset.pattern.permute.xlu0 0
      %7488 = vperm.xlu0 %7487, %v7426
      %v7489 = vpop.permute.xlu0 %7488
      %7492 = vset.pattern.permute.xlu0 0
      %7493 = vperm.xlu0 %7492, %v7427
      %v7494 = vpop.permute.xlu0 %7493
      %7497 = vset.pattern.permute.xlu0 0
      %7498 = vperm.xlu0 %7497, %v7428
      %v7499 = vpop.permute.xlu0 %7498
      %7502 = vset.pattern.permute.xlu0 0
      %7503 = vperm.xlu0 %7502, %v7429
      %v7504 = vpop.permute.xlu0 %7503
      %7507 = vset.pattern.permute.xlu0 0
      %7508 = vperm.xlu0 %7507, %v7430
      %v7509 = vpop.permute.xlu0 %7508
      %7512 = vset.pattern.permute.xlu0 0
      %7513 = vperm.xlu0 %7512, %v7431
      %v7514 = vpop.permute.xlu0 %7513
      %7517 = vset.pattern.permute.xlu0 0
      %7518 = vperm.xlu0 %7517, %v7432
      %v7519 = vpop.permute.xlu0 %7518
      %7522 = vset.pattern.permute.xlu0 0
      %7523 = vperm.xlu0 %7522, %v7433
      %v7524 = vpop.permute.xlu0 %7523
      %7527 = vset.pattern.permute.xlu0 0
      %7528 = vperm.xlu0 %7527, %v7434
      %v7529 = vpop.permute.xlu0 %7528
      %7532 = vset.pattern.permute.xlu0 0
      %7533 = vperm.xlu0 %7532, %v7435
      %v7534 = vpop.permute.xlu0 %7533
      %7537 = vset.pattern.permute.xlu0 0
      %7538 = vperm.xlu0 %7537, %v7436
      %v7539 = vpop.permute.xlu0 %7538
      %7542 = vset.pattern.permute.xlu0 0
      %7543 = vperm.xlu0 %7542, %v7437
      %v7544 = vpop.permute.xlu0 %7543
      %7547 = vset.pattern.permute.xlu0 0
      %7548 = vperm.xlu0 %7547, %v7438
      %v7549 = vpop.permute.xlu0 %7548
      %7552 = vset.pattern.permute.xlu0 0
      %7553 = vperm.xlu0 %7552, %v7439
      %v7554 = vpop.permute.xlu0 %7553
      %7557 = vset.pattern.permute.xlu0 0
      %7558 = vperm.xlu0 %7557, %v7440
      %v7559 = vpop.permute.xlu0 %7558
      %7562 = vset.pattern.permute.xlu0 0
      %7563 = vperm.xlu0 %7562, %v7441
      %v7564 = vpop.permute.xlu0 %7563
      %7567 = vset.pattern.permute.xlu0 0
      %7568 = vperm.xlu0 %7567, %v7442
      %v7569 = vpop.permute.xlu0 %7568
      %7572 = vset.pattern.permute.xlu0 0
      %7573 = vperm.xlu0 %7572, %v7443
      %v7574 = vpop.permute.xlu0 %7573
      %7577 = vset.pattern.permute.xlu0 0
      %7578 = vperm.xlu0 %7577, %v7444
      %v7579 = vpop.permute.xlu0 %7578
      %7582 = vset.pattern.permute.xlu0 0
      %7583 = vperm.xlu0 %7582, %v7445
      %v7584 = vpop.permute.xlu0 %7583
      %7587 = vset.pattern.permute.xlu0 0
      %7588 = vperm.xlu0 %7587, %v7446
      %v7589 = vpop.permute.xlu0 %7588
      %7592 = vset.pattern.permute.xlu0 0
      %7593 = vperm.xlu0 %7592, %v7447
      %v7594 = vpop.permute.xlu0 %7593
      %7597 = vset.pattern.permute.xlu0 0
      %7598 = vperm.xlu0 %7597, %v7448
      %v7599 = vpop.permute.xlu0 %7598
      %7602 = vset.pattern.permute.xlu0 0
      %7603 = vperm.xlu0 %7602, %v7449
      %v7604 = vpop.permute.xlu0 %7603
      %7607 = vset.pattern.permute.xlu0 0
      %7608 = vperm.xlu0 %7607, %v7450
      %v7609 = vpop.permute.xlu0 %7608
      %7612 = vset.pattern.permute.xlu0 0
      %7613 = vperm.xlu0 %7612, %v7451
      %v7614 = vpop.permute.xlu0 %7613
      %7617 = vset.pattern.permute.xlu0 0
      %7618 = vperm.xlu0 %7617, %v7452
      %v7619 = vpop.permute.xlu0 %7618
      %7622 = vset.pattern.permute.xlu0 0
      %7623 = vperm.xlu0 %7622, %v7453
      %v7624 = vpop.permute.xlu0 %7623
      %7627 = vset.pattern.permute.xlu0 0
      %7628 = vperm.xlu0 %7627, %v7454
      %v7629 = vpop.permute.xlu0 %7628
      %7632 = vset.pattern.permute.xlu0 0
      %7633 = vperm.xlu0 %7632, %v7455
      %v7634 = vpop.permute.xlu0 %7633
      %v7636 = vmul.f32 %v7347, %v7459
      %v7637 = vmul.f32 %v7348, %v7464
      %v7638 = vmul.f32 %v7349, %v7469
      %v7639 = vmul.f32 %v7350, %v7474
      %v7640 = vmul.f32 %v7351, %v7479
      %v7641 = vmul.f32 %v7352, %v7484
      %v7642 = vmul.f32 %v7353, %v7489
      %v7643 = vmul.f32 %v7354, %v7494
      %v7644 = vmul.f32 %v7355, %v7499
      %v7645 = vmul.f32 %v7356, %v7504
      %v7646 = vmul.f32 %v7357, %v7509
      %v7647 = vmul.f32 %v7358, %v7514
      %v7648 = vmul.f32 %v7359, %v7519
      %v7649 = vmul.f32 %v7360, %v7524
      %v7650 = vmul.f32 %v7361, %v7529
      %v7651 = vmul.f32 %v7362, %v7534
      %v7652 = vmul.f32 %v7363, %v7539
      %v7653 = vmul.f32 %v7364, %v7544
      %v7654 = vmul.f32 %v7365, %v7549
      %v7655 = vmul.f32 %v7366, %v7554
      %v7656 = vmul.f32 %v7367, %v7559
      %v7657 = vmul.f32 %v7368, %v7564
      %v7658 = vmul.f32 %v7369, %v7569
      %v7659 = vmul.f32 %v7370, %v7574
      %v7660 = vmul.f32 %v7371, %v7579
      %v7661 = vmul.f32 %v7372, %v7584
      %v7662 = vmul.f32 %v7373, %v7589
      %v7663 = vmul.f32 %v7374, %v7594
      %v7664 = vmul.f32 %v7375, %v7599
      %v7665 = vmul.f32 %v7376, %v7604
      %v7666 = vmul.f32 %v7377, %v7609
      %v7667 = vmul.f32 %v7378, %v7614
      %v7668 = vmul.f32 %v7379, %v7619
      %v7669 = vmul.f32 %v7380, %v7624
      %v7670 = vmul.f32 %v7381, %v7629
      %v7671 = vmul.f32 %v7382, %v7634
      %v7672 = vsel %vm564, %v7636, 0.0
      %v7673 = vsel %vm564, %v7637, 0.0
      %v7674 = vadd.f32 %v7672, %v7673
      %v7675 = vsel %vm564, %v7638, 0.0
      %v7676 = vadd.f32 %v7674, %v7675
      %v7677 = vsel %vm564, %v7639, 0.0
      %v7678 = vadd.f32 %v7676, %v7677
      %v7679 = vsel %vm564, %v7640, 0.0
      %v7680 = vadd.f32 %v7678, %v7679
      %v7681 = vsel %vm564, %v7641, 0.0
      %v7682 = vadd.f32 %v7680, %v7681
      %v7683 = vsel %vm564, %v7642, 0.0
      %v7684 = vadd.f32 %v7682, %v7683
      %v7685 = vsel %vm564, %v7643, 0.0
      %v7686 = vadd.f32 %v7684, %v7685
      %v7687 = vsel %vm564, %v7644, 0.0
      %v7688 = vadd.f32 %v7686, %v7687
      %v7689 = vsel %vm564, %v7645, 0.0
      %v7690 = vadd.f32 %v7688, %v7689
      %v7691 = vsel %vm564, %v7646, 0.0
      %v7692 = vadd.f32 %v7690, %v7691
      %v7693 = vsel %vm564, %v7647, 0.0
      %v7694 = vadd.f32 %v7692, %v7693
      %v7695 = vsel %vm564, %v7648, 0.0
      %v7696 = vadd.f32 %v7694, %v7695
      %v7697 = vsel %vm564, %v7649, 0.0
      %v7698 = vadd.f32 %v7696, %v7697
      %v7699 = vsel %vm564, %v7650, 0.0
      %v7700 = vadd.f32 %v7698, %v7699
      %v7701 = vsel %vm564, %v7651, 0.0
      %v7702 = vadd.f32 %v7700, %v7701
      %v7703 = vsel %vm564, %v7652, 0.0
      %v7704 = vadd.f32 %v7702, %v7703
      %v7705 = vsel %vm564, %v7653, 0.0
      %v7706 = vadd.f32 %v7704, %v7705
      %v7707 = vsel %vm564, %v7654, 0.0
      %v7708 = vadd.f32 %v7706, %v7707
      %v7709 = vsel %vm564, %v7655, 0.0
      %v7710 = vadd.f32 %v7708, %v7709
      %v7711 = vsel %vm564, %v7656, 0.0
      %v7712 = vadd.f32 %v7710, %v7711
      %v7713 = vsel %vm564, %v7657, 0.0
      %v7714 = vadd.f32 %v7712, %v7713
      %v7715 = vsel %vm564, %v7658, 0.0
      %v7716 = vadd.f32 %v7714, %v7715
      %v7717 = vsel %vm564, %v7659, 0.0
      %v7718 = vadd.f32 %v7716, %v7717
      %v7719 = vsel %vm564, %v7660, 0.0
      %v7720 = vadd.f32 %v7718, %v7719
      %v7721 = vsel %vm564, %v7661, 0.0
      %v7722 = vadd.f32 %v7720, %v7721
      %v7723 = vsel %vm564, %v7662, 0.0
      %v7724 = vadd.f32 %v7722, %v7723
      %v7725 = vsel %vm564, %v7663, 0.0
      %v7726 = vadd.f32 %v7724, %v7725
      %v7727 = vsel %vm564, %v7664, 0.0
      %v7728 = vadd.f32 %v7726, %v7727
      %v7729 = vsel %vm564, %v7665, 0.0
      %v7730 = vadd.f32 %v7728, %v7729
      %v7731 = vsel %vm564, %v7666, 0.0
      %v7732 = vadd.f32 %v7730, %v7731
      %v7733 = vsel %vm564, %v7667, 0.0
      %v7734 = vadd.f32 %v7732, %v7733
      %v7735 = vsel %vm564, %v7668, 0.0
      %v7736 = vadd.f32 %v7734, %v7735
      %v7737 = vsel %vm564, %v7669, 0.0
      %v7738 = vadd.f32 %v7736, %v7737
      %v7739 = vsel %vm564, %v7670, 0.0
      %v7740 = vadd.f32 %v7738, %v7739
      %v7741 = vsel %vm7418, %v7671, 0.0
      %v7742 = vadd.f32 %v7740, %v7741
      %v7743 = vrot.slane %v7742, 4
      %v7744 = vadd.f32 %v7742, %v7743
      %v7745 = vrot.slane %v7744, 2
      %v7746 = vadd.f32 %v7744, %v7745
      %v7747 = vrot.slane %v7746, 1
      %v7748 = vadd.f32 %v7746, %v7747
      %vm7749 = vcmask 253952
      %7750 = vst.msk [vmem:[%s426] sm:$0x1] %vm7749, %v7748
      %v7751 = vmul.f32 %v7636, %v7636
      %v7752 = vmul.f32 %v7637, %v7637
      %v7753 = vmul.f32 %v7638, %v7638
      %v7754 = vmul.f32 %v7639, %v7639
      %v7755 = vmul.f32 %v7640, %v7640
      %v7756 = vmul.f32 %v7641, %v7641
      %v7757 = vmul.f32 %v7642, %v7642
      %v7758 = vmul.f32 %v7643, %v7643
      %v7759 = vmul.f32 %v7644, %v7644
      %v7760 = vmul.f32 %v7645, %v7645
      %v7761 = vmul.f32 %v7646, %v7646
      %v7762 = vmul.f32 %v7647, %v7647
      %v7763 = vmul.f32 %v7648, %v7648
      %v7764 = vmul.f32 %v7649, %v7649
      %v7765 = vmul.f32 %v7650, %v7650
      %v7766 = vmul.f32 %v7651, %v7651
      %v7767 = vmul.f32 %v7652, %v7652
      %v7768 = vmul.f32 %v7653, %v7653
      %v7769 = vmul.f32 %v7654, %v7654
      %v7770 = vmul.f32 %v7655, %v7655
      %v7771 = vmul.f32 %v7656, %v7656
      %v7772 = vmul.f32 %v7657, %v7657
      %v7773 = vmul.f32 %v7658, %v7658
      %v7774 = vmul.f32 %v7659, %v7659
      %v7775 = vmul.f32 %v7660, %v7660
      %v7776 = vmul.f32 %v7661, %v7661
      %v7777 = vmul.f32 %v7662, %v7662
      %v7778 = vmul.f32 %v7663, %v7663
      %v7779 = vmul.f32 %v7664, %v7664
      %v7780 = vmul.f32 %v7665, %v7665
      %v7781 = vmul.f32 %v7666, %v7666
      %v7782 = vmul.f32 %v7667, %v7667
      %v7783 = vmul.f32 %v7668, %v7668
      %v7784 = vmul.f32 %v7669, %v7669
      %v7785 = vmul.f32 %v7670, %v7670
      %v7786 = vmul.f32 %v7671, %v7671
      %v7787 = vsel %vm564, %v7751, 0.0
      %v7788 = vsel %vm564, %v7752, 0.0
      %v7789 = vadd.f32 %v7787, %v7788
      %v7790 = vsel %vm564, %v7753, 0.0
      %v7791 = vadd.f32 %v7789, %v7790
      %v7792 = vsel %vm564, %v7754, 0.0
      %v7793 = vadd.f32 %v7791, %v7792
      %v7794 = vsel %vm564, %v7755, 0.0
      %v7795 = vadd.f32 %v7793, %v7794
      %v7796 = vsel %vm564, %v7756, 0.0
      %v7797 = vadd.f32 %v7795, %v7796
      %v7798 = vsel %vm564, %v7757, 0.0
      %v7799 = vadd.f32 %v7797, %v7798
      %v7800 = vsel %vm564, %v7758, 0.0
      %v7801 = vadd.f32 %v7799, %v7800
      %v7802 = vsel %vm564, %v7759, 0.0
      %v7803 = vadd.f32 %v7801, %v7802
      %v7804 = vsel %vm564, %v7760, 0.0
      %v7805 = vadd.f32 %v7803, %v7804
      %v7806 = vsel %vm564, %v7761, 0.0
      %v7807 = vadd.f32 %v7805, %v7806
      %v7808 = vsel %vm564, %v7762, 0.0
      %v7809 = vadd.f32 %v7807, %v7808
      %v7810 = vsel %vm564, %v7763, 0.0
      %v7811 = vadd.f32 %v7809, %v7810
      %v7812 = vsel %vm564, %v7764, 0.0
      %v7813 = vadd.f32 %v7811, %v7812
      %v7814 = vsel %vm564, %v7765, 0.0
      %v7815 = vadd.f32 %v7813, %v7814
      %v7816 = vsel %vm564, %v7766, 0.0
      %v7817 = vadd.f32 %v7815, %v7816
      %v7818 = vsel %vm564, %v7767, 0.0
      %v7819 = vadd.f32 %v7817, %v7818
      %v7820 = vsel %vm564, %v7768, 0.0
      %v7821 = vadd.f32 %v7819, %v7820
      %v7822 = vsel %vm564, %v7769, 0.0
      %v7823 = vadd.f32 %v7821, %v7822
      %v7824 = vsel %vm564, %v7770, 0.0
      %v7825 = vadd.f32 %v7823, %v7824
      %v7826 = vsel %vm564, %v7771, 0.0
      %v7827 = vadd.f32 %v7825, %v7826
      %v7828 = vsel %vm564, %v7772, 0.0
      %v7829 = vadd.f32 %v7827, %v7828
      %v7830 = vsel %vm564, %v7773, 0.0
      %v7831 = vadd.f32 %v7829, %v7830
      %v7832 = vsel %vm564, %v7774, 0.0
      %v7833 = vadd.f32 %v7831, %v7832
      %v7834 = vsel %vm564, %v7775, 0.0
      %v7835 = vadd.f32 %v7833, %v7834
      %v7836 = vsel %vm564, %v7776, 0.0
      %v7837 = vadd.f32 %v7835, %v7836
      %v7838 = vsel %vm564, %v7777, 0.0
      %v7839 = vadd.f32 %v7837, %v7838
      %v7840 = vsel %vm564, %v7778, 0.0
      %v7841 = vadd.f32 %v7839, %v7840
      %v7842 = vsel %vm564, %v7779, 0.0
      %v7843 = vadd.f32 %v7841, %v7842
      %v7844 = vsel %vm564, %v7780, 0.0
      %v7845 = vadd.f32 %v7843, %v7844
      %v7846 = vsel %vm564, %v7781, 0.0
      %v7847 = vadd.f32 %v7845, %v7846
      %v7848 = vsel %vm564, %v7782, 0.0
      %v7849 = vadd.f32 %v7847, %v7848
      %v7850 = vsel %vm564, %v7783, 0.0
      %v7851 = vadd.f32 %v7849, %v7850
      %v7852 = vsel %vm564, %v7784, 0.0
      %v7853 = vadd.f32 %v7851, %v7852
      %v7854 = vsel %vm564, %v7785, 0.0
      %v7855 = vadd.f32 %v7853, %v7854
      %v7856 = vsel %vm7418, %v7786, 0.0
      %v7857 = vadd.f32 %v7855, %v7856
      %v7858 = vrot.slane %v7857, 4
      %v7859 = vadd.f32 %v7857, %v7858
      %v7860 = vrot.slane %v7859, 2
      %v7861 = vadd.f32 %v7859, %v7860
      %v7862 = vrot.slane %v7861, 1
      %v7863 = vadd.f32 %v7861, %v7862
      %7864 = vst.msk [vmem:[%s433] sm:$0x1] %vm7749, %v7863
      %p7865 = scmp.lt.s32.totalorder %s23, 1
      %s7866 = scalar_select %p7865, %s23, 1
      %p7867 = scmp.lt.s32.totalorder %s24, 3
      %s7868 = scalar_select %p7867, %s24, 3
      %s7869 = smul.addr %s7868, 36
      %s7870 = smul.addr %s7866, 144
      %s7871 = sadd.s32 %s7869, %s7870
      %s7872 = smul.addr %s7871, 8
      %s7873 = scalar_lea.vmem %s5, %s7872
      %p7874 = scmp.lt.s32.totalorder %s23, 1
      %s7875 = scalar_select %p7874, %s23, 1
      %p7876 = scmp.lt.s32.totalorder %s24, 3
      %s7877 = scalar_select %p7876, %s24, 3
      %s7878 = smul.addr %s7875, 4
      %s7879 = sadd.s32 %s7877, %s7878
      %s7880 = scalar_lea.vmem %s6, %s7879
      %p7881 = scmp.lt.s32.totalorder %s23, 1
      %s7882 = scalar_select %p7881, %s23, 1
      %p7883 = scmp.lt.s32.totalorder %s24, 3
      %s7884 = scalar_select %p7883, %s24, 3
      %s7885 = smul.addr %s7882, 4
      %s7886 = sadd.s32 %s7884, %s7885
      %s7887 = scalar_lea.vmem %s7, %s7886
      // Predicated region
      $region41: #{basic_block_forward.4} parent=39 // pred_check
        %p7888 = pneg %p181
      $region42: #{basic_block_forward.4} parent=39 // pred_check_branch
        %7890 = sbr.rel (%p7888) target = $region44
      $region43: #{basic_block_forward.4} parent=39 // pred_region
        _
      $region44: #{basic_block_forward.4} parent=39 // pred_fallthru
        _
      // Predicated region
      $region45: #{basic_block_forward.4} parent=39 // pred_check
        %p7891 = pneg %p209
      $region46: #{basic_block_forward.4} parent=39 // pred_check_branch
        %7893 = sbr.rel (%p7891) target = $region48
      $region47: #{basic_block_forward.4} parent=39 // pred_region
        _
      $region48: #{basic_block_forward.4} parent=39 // pred_fallthru
        _
      // Predicated region
      $region49: #{basic_block_forward.4} parent=39 // pred_check
        %p7894 = pneg %p237
      $region50: #{basic_block_forward.4} parent=39 // pred_check_branch
        %7896 = sbr.rel (%p7894) target = $region52
      $region51: #{basic_block_forward.4} parent=39 // pred_region
        _
      $region52: #{basic_block_forward.4} parent=39 // pred_fallthru
        _
    $region40: #{basic_block_forward.4} parent=5 // pred_fallthru
      _
    %p7897 = scmp.le.s32.totalorder 2, %s14
    // Predicated region
    $region53: #{basic_block_forward.4} parent=5 // pred_check
      %p7898 = pneg %p7897
    $region54: #{basic_block_forward.4} parent=5 // pred_check_branch
      %7900 = sbr.rel (%p7898) target = $region56
    $region55: #{basic_block_forward.4} parent=5 // pred_region
      %s7901 = ssub.s32 %s14, 2
      // Predicated region
      $region57: #{basic_block_forward.4} parent=55 // pred_check
        %p7902 = pneg %p187
      $region58: #{basic_block_forward.4} parent=55 // pred_check_branch
        %7904 = sbr.rel (%p7902) target = $region60
      $region59: #{basic_block_forward.4} parent=55 // pred_region
        %p7905 = scmp.lt.s32.totalorder %s25, 1
        %s7906 = scalar_select %p7905, %s25, 1
        %p7907 = scmp.lt.s32.totalorder %s26, 3
        %s7908 = scalar_select %p7907, %s26, 3
        %s7909 = smul.addr %s7908, 36
        %s7910 = smul.addr %s7906, 144
        %s7911 = sadd.s32 %s7909, %s7910
        %s7912 = smul.addr %s7911, 8
        %s7913 = scalar_lea.vmem %s5, %s7912
      $region60: #{basic_block_forward.4} parent=55 // pred_fallthru
        _
      // Predicated region
      $region61: #{basic_block_forward.4} parent=55 // pred_check
        %p7914 = pneg %p215
      $region62: #{basic_block_forward.4} parent=55 // pred_check_branch
        %7916 = sbr.rel (%p7914) target = $region64
      $region63: #{basic_block_forward.4} parent=55 // pred_region
        %p7917 = scmp.lt.s32.totalorder %s25, 1
        %s7918 = scalar_select %p7917, %s25, 1
        %p7919 = scmp.lt.s32.totalorder %s26, 3
        %s7920 = scalar_select %p7919, %s26, 3
        %s7921 = smul.addr %s7918, 4
        %s7922 = sadd.s32 %s7920, %s7921
        %s7923 = scalar_lea.vmem %s6, %s7922
      $region64: #{basic_block_forward.4} parent=55 // pred_fallthru
        _
      // Predicated region
      $region65: #{basic_block_forward.4} parent=55 // pred_check
        %p7924 = pneg %p243
      $region66: #{basic_block_forward.4} parent=55 // pred_check_branch
        %7926 = sbr.rel (%p7924) target = $region68
      $region67: #{basic_block_forward.4} parent=55 // pred_region
        %p7927 = scmp.lt.s32.totalorder %s25, 1
        %s7928 = scalar_select %p7927, %s25, 1
        %p7929 = scmp.lt.s32.totalorder %s26, 3
        %s7930 = scalar_select %p7929, %s26, 3
        %s7931 = smul.addr %s7928, 4
        %s7932 = sadd.s32 %s7930, %s7931
        %s7933 = scalar_lea.vmem %s7, %s7932
      $region68: #{basic_block_forward.4} parent=55 // pred_fallthru
        _
    $region56: #{basic_block_forward.4} parent=5 // pred_fallthru
      _
  $region6: #{basic_block_forward.4} parent=0 // loop_footer
    %s18 = sadd.s32 1, %s14
  $region7: #{basic_block_forward.4} parent=0 // loop_footer_branch
    %13 = sbr.rel target = $region3
  $region8: #{basic_block_forward.4} parent=0 // loop_exit
    _

// kernel: basic_block_forward.7
$region0: #{basic_block_forward.7}
  #allocation0 [shape = 'u32[]', space=smem, size = 0x4, offset = 0x4, fixed_abs, tag = 'smem constant byte address 0x4 - core index']
  #allocation1 [shape = 'u32[72,128]{1,0:T(1,128)}', space=vmem, size = 0x9000, scoped, tag = 'internal scratch']
  %s0 = inlined_call_operand.vmem [shape: f32[2,4,286,32], index: 0, kind: input, shape index: {}]
  %s1 = inlined_call_operand.vmem [shape: f32[1,32], index: 1, kind: input, shape index: {}]
  %s2 = inlined_call_operand.vmem [shape: f32[1,32], index: 2, kind: input, shape index: {}]
  %s3 = inlined_call_operand.vmem [shape: f32[2,4,286,32], index: 3, kind: input, shape index: {}]
  %s4 = inlined_call_operand.vmem [shape: f32[2,4,286,32], index: 4, kind: output, shape index: {}]
  %s5 = sld [smem:[#allocation0]]
  $region49: #{basic_block_forward.7} parent=0
    _
  %s7 = ssub.s32 1, %s5
  %s8 = scalar_select 0, %s7, %s5
  loop: start=0, step=1, limit=10
  $region2: #{basic_block_forward.7} parent=0 // loop_pre_header
    _
  $region3: #{basic_block_forward.7} parent=0 // loop_header
    %s10 = sphi 0, %s14
    %p11 = scmp.ge.s32.totalorder %s10, 10
    %s17 = sphi 0, %s29
    %s18 = sphi 0, %s25
    %s19 = sphi 0, %s17
    %s20 = sphi 0, %s18
    %s21 = sphi 0, %s19
    %s22 = sphi 0, %s20
    %s34 = sphi 0, %s36
    %s37 = sphi 0, %s34
    %s38 = sphi 0, %s37
    %s54 = sphi 0, %s38
    %s58 = sphi 0, %s58
    %s60 = sphi 0, %s58
    %s61 = sphi 0, %s60
    %s75 = sphi 0, %s61
    %s79 = sphi 0, %s79
    %s81 = sphi 0, %s79
    %s82 = sphi 0, %s81
    %s96 = sphi 0, %s82
    %s104 = sphi 0, %s106
    %s107 = sphi 0, %s104
    %s108 = sphi 0, %s107
    %s124 = sphi 0, %s108
    %s132 = sphi 0, %s134
    %s135 = sphi 0, %s132
    %s136 = sphi 0, %s135
    %s152 = sphi 0, %s136
  $region4: #{basic_block_forward.7} parent=0 // loop_header_branch
    %13 = sbr.rel (%p11) target = $region8
  $region5: #{basic_block_forward.7} parent=0 // loop_body
    %s15 = ssub.s32 %s10, 1
    %s16 = ssub.s32 %s10, 2
    %s23 = sadd.s32 1, %s18
    %p24 = scmp.ge.s32.totalorder %s23, 4
    %s25 = scalar_select %p24, 0, %s23
    %s26 = sadd.s32 1, %s17
    %s27 = scalar_select %p24, %s26, %s17
    %p28 = scmp.ge.s32.totalorder %s27, 2
    %s29 = scalar_select %p28, 0, %s27
    %s30 = ssub.s32 %s17, %s29
    %s31 = ssub.s32 %s18, %s25
    %s32 = sor.u32 %s30, %s31
    %p33 = scmp.eq.s32.totalorder %s32, 0
    %s35 = sadd.s32 %s34, 1
    %s36 = scalar_select %p33, %s34, %s35
    %p39 = pneg %p33
    %p40 = scmp.eq.s32.totalorder %s10, 7
    %p41 = por %p39, %p40
    %p42 = scmp.ne.s32.totalorder %s34, %s37
    %p43 = scmp.eq.s32.totalorder %s10, 0
    %p44 = por %p42, %p43
    %p45 = scmp.ne.s32.totalorder %s34, %s37
    %p46 = scmp.eq.s32.totalorder %s15, 7
    %p47 = por %p45, %p46
    %p48 = scmp.ne.s32.totalorder %s37, %s38
    %p49 = scmp.eq.s32.totalorder %s15, 0
    %p50 = por %p48, %p49
    %p51 = scmp.ne.s32.totalorder %s37, %s38
    %p52 = scmp.eq.s32.totalorder %s16, 7
    %p53 = por %p51, %p52
    %p55 = scmp.ne.s32.totalorder %s38, %s54
    %p56 = scmp.eq.s32.totalorder %s16, 0
    %p57 = por %p55, %p56
    %s59 = sadd.s32 %s58, 1
    %p62 = scmp.eq.s32.totalorder %s10, 7
    %p63 = scmp.ne.s32.totalorder %s58, %s60
    %p64 = scmp.eq.s32.totalorder %s10, 0
    %p65 = por %p63, %p64
    %p66 = scmp.ne.s32.totalorder %s58, %s60
    %p67 = scmp.eq.s32.totalorder %s15, 7
    %p68 = por %p66, %p67
    %p69 = scmp.ne.s32.totalorder %s60, %s61
    %p70 = scmp.eq.s32.totalorder %s15, 0
    %p71 = por %p69, %p70
    %p72 = scmp.ne.s32.totalorder %s60, %s61
    %p73 = scmp.eq.s32.totalorder %s16, 7
    %p74 = por %p72, %p73
    %p76 = scmp.ne.s32.totalorder %s61, %s75
    %p77 = scmp.eq.s32.totalorder %s16, 0
    %p78 = por %p76, %p77
    %s80 = sadd.s32 %s79, 1
    %p83 = scmp.eq.s32.totalorder %s10, 7
    %p84 = scmp.ne.s32.totalorder %s79, %s81
    %p85 = scmp.eq.s32.totalorder %s10, 0
    %p86 = por %p84, %p85
    %p87 = scmp.ne.s32.totalorder %s79, %s81
    %p88 = scmp.eq.s32.totalorder %s15, 7
    %p89 = por %p87, %p88
    %p90 = scmp.ne.s32.totalorder %s81, %s82
    %p91 = scmp.eq.s32.totalorder %s15, 0
    %p92 = por %p90, %p91
    %p93 = scmp.ne.s32.totalorder %s81, %s82
    %p94 = scmp.eq.s32.totalorder %s16, 7
    %p95 = por %p93, %p94
    %p97 = scmp.ne.s32.totalorder %s82, %s96
    %p98 = scmp.eq.s32.totalorder %s16, 0
    %p99 = por %p97, %p98
    %s100 = ssub.s32 %s17, %s29
    %s101 = ssub.s32 %s18, %s25
    %s102 = sor.u32 %s100, %s101
    %p103 = scmp.eq.s32.totalorder %s102, 0
    %s105 = sadd.s32 %s104, 1
    %s106 = scalar_select %p103, %s104, %s105
    %p109 = pneg %p103
    %p110 = scmp.eq.s32.totalorder %s10, 7
    %p111 = por %p109, %p110
    %p112 = scmp.ne.s32.totalorder %s104, %s107
    %p113 = scmp.eq.s32.totalorder %s10, 0
    %p114 = por %p112, %p113
    %p115 = scmp.ne.s32.totalorder %s104, %s107
    %p116 = scmp.eq.s32.totalorder %s15, 7
    %p117 = por %p115, %p116
    %p118 = scmp.ne.s32.totalorder %s107, %s108
    %p119 = scmp.eq.s32.totalorder %s15, 0
    %p120 = por %p118, %p119
    %p121 = scmp.ne.s32.totalorder %s107, %s108
    %p122 = scmp.eq.s32.totalorder %s16, 7
    %p123 = por %p121, %p122
    %p125 = scmp.ne.s32.totalorder %s108, %s124
    %p126 = scmp.eq.s32.totalorder %s16, 0
    %p127 = por %p125, %p126
    %s128 = ssub.s32 %s17, %s29
    %s129 = ssub.s32 %s18, %s25
    %s130 = sor.u32 %s128, %s129
    %p131 = scmp.eq.s32.totalorder %s130, 0
    %s133 = sadd.s32 %s132, 1
    %s134 = scalar_select %p131, %s132, %s133
    %p137 = pneg %p131
    %p138 = scmp.eq.s32.totalorder %s10, 7
    %p139 = por %p137, %p138
    %p140 = scmp.ne.s32.totalorder %s132, %s135
    %p141 = scmp.eq.s32.totalorder %s10, 0
    %p142 = por %p140, %p141
    %p143 = scmp.ne.s32.totalorder %s132, %s135
    %p144 = scmp.eq.s32.totalorder %s15, 7
    %p145 = por %p143, %p144
    %p146 = scmp.ne.s32.totalorder %s135, %s136
    %p147 = scmp.eq.s32.totalorder %s15, 0
    %p148 = por %p146, %p147
    %p149 = scmp.ne.s32.totalorder %s135, %s136
    %p150 = scmp.eq.s32.totalorder %s16, 7
    %p151 = por %p149, %p150
    %p153 = scmp.ne.s32.totalorder %s136, %s152
    %p154 = scmp.eq.s32.totalorder %s16, 0
    %p155 = por %p153, %p154
    %p156 = scmp.le.s32.totalorder 1, %s10
    %p157 = scmp.lt.s32.totalorder %s10, 9
    %p158 = pnand %p156, %p157
    %p159 = pneg %p158
    // Predicated region
    $region9: #{basic_block_forward.7} parent=5 // pred_check
      _
    $region10: #{basic_block_forward.7} parent=5 // pred_check_branch
      %161 = sbr.rel (%p158) target = $region12
    $region11: #{basic_block_forward.7} parent=5 // pred_region
      %s162 = ssub.s32 %s10, 1
      // Predicated region
      $region13: #{basic_block_forward.7} parent=11 // pred_check
        %p163 = pneg %p71
      $region14: #{basic_block_forward.7} parent=11 // pred_check_branch
        %165 = sbr.rel (%p163) target = $region16
      $region15: #{basic_block_forward.7} parent=11 // pred_region
        _
      $region16: #{basic_block_forward.7} parent=11 // pred_fallthru
        _
      // Predicated region
      $region17: #{basic_block_forward.7} parent=11 // pred_check
        %p166 = pneg %p92
      $region18: #{basic_block_forward.7} parent=11 // pred_check_branch
        %168 = sbr.rel (%p166) target = $region20
      $region19: #{basic_block_forward.7} parent=11 // pred_region
        _
      $region20: #{basic_block_forward.7} parent=11 // pred_fallthru
        _
    $region12: #{basic_block_forward.7} parent=5 // pred_fallthru
      _
    %p169 = scmp.lt.s32.totalorder %s10, 8
    // Predicated region
    $region21: #{basic_block_forward.7} parent=5 // pred_check
      %p170 = pneg %p169
    $region22: #{basic_block_forward.7} parent=5 // pred_check_branch
      %172 = sbr.rel (%p170) target = $region24
    $region23: #{basic_block_forward.7} parent=5 // pred_region
      // Predicated region
      $region25: #{basic_block_forward.7} parent=23 // pred_check
        %p173 = pneg %p44
      $region26: #{basic_block_forward.7} parent=23 // pred_check_branch
        %175 = sbr.rel (%p173) target = $region28
      $region27: #{basic_block_forward.7} parent=23 // pred_region
        %p176 = scmp.lt.s32.totalorder %s17, 1
        %s177 = scalar_select %p176, %s17, 1
        %p178 = scmp.lt.s32.totalorder %s18, 3
        %s179 = scalar_select %p178, %s18, 3
        %s180 = smul.addr %s179, 36
        %s181 = smul.addr %s177, 144
        %s182 = sadd.s32 %s180, %s181
        %s183 = smul.addr %s182, 8
        %s184 = scalar_lea.vmem %s0, %s183
      $region28: #{basic_block_forward.7} parent=23 // pred_fallthru
        _
      // Predicated region
      $region29: #{basic_block_forward.7} parent=23 // pred_check
        %p185 = pneg %p114
      $region30: #{basic_block_forward.7} parent=23 // pred_check_branch
        %187 = sbr.rel (%p185) target = $region32
      $region31: #{basic_block_forward.7} parent=23 // pred_region
        %p188 = scmp.lt.s32.totalorder %s17, 1
        %s189 = scalar_select %p188, %s17, 1
        %p190 = scmp.lt.s32.totalorder %s18, 3
        %s191 = scalar_select %p190, %s18, 3
        %s192 = smul.addr %s191, 36
        %s193 = smul.addr %s189, 144
        %s194 = sadd.s32 %s192, %s193
        %s195 = smul.addr %s194, 8
        %s196 = scalar_lea.vmem %s3, %s195
      $region32: #{basic_block_forward.7} parent=23 // pred_fallthru
        _
    $region24: #{basic_block_forward.7} parent=5 // pred_fallthru
      _
    %p197 = scmp.le.s32.totalorder 1, %s10
    %p198 = scmp.lt.s32.totalorder %s10, 9
    %p199 = pnand %p197, %p198
    %p200 = pneg %p199
    // Predicated region
    $region33: #{basic_block_forward.7} parent=5 // pred_check
      _
    $region34: #{basic_block_forward.7} parent=5 // pred_check_branch
      %202 = sbr.rel (%p199) target = $region36
    $region35: #{basic_block_forward.7} parent=5 // pred_region
      %s203 = ssub.s32 %s10, 1
      %p204 = scmp.lt.s32.totalorder %s19, 1
      %s205 = scalar_select %p204, %s19, 1
      %p206 = scmp.lt.s32.totalorder %s20, 3
      %s207 = scalar_select %p206, %s20, 3
      %s208 = smul.addr %s207, 36
      %s209 = smul.addr %s205, 144
      %s210 = sadd.s32 %s208, %s209
      %s211 = smul.addr %s210, 8
      %s212 = scalar_lea.vmem %s0, %s211
      %p213 = pneg %p50
      %p214 = pneg %p47
      %p215 = pneg %p71
      %p216 = pneg %p68
      %p217 = pneg %p92
      %p218 = pneg %p89
      %p219 = scmp.lt.s32.totalorder %s19, 1
      %s220 = scalar_select %p219, %s19, 1
      %p221 = scmp.lt.s32.totalorder %s20, 3
      %s222 = scalar_select %p221, %s20, 3
      %s223 = smul.addr %s222, 36
      %s224 = smul.addr %s220, 144
      %s225 = sadd.s32 %s223, %s224
      %s226 = smul.addr %s225, 8
      %s227 = scalar_lea.vmem %s3, %s226
      %p228 = pneg %p120
      %p229 = pneg %p117
      %p230 = pneg %p148
      %p231 = pneg %p145
      %p232 = scmp.lt.s32.totalorder %s19, 1
      %s233 = scalar_select %p232, %s19, 1
      %p234 = scmp.lt.s32.totalorder %s20, 3
      %s235 = scalar_select %p234, %s20, 3
      %s236 = smul.addr %s235, 36
      %s237 = smul.addr %s233, 144
      %s238 = sadd.s32 %s236, %s237
      %s239 = smul.addr %s238, 8
      %s240 = scalar_lea.vmem %s4, %s239
      %p241 = scmp.lt.s32.totalorder %s19, 1
      %s242 = scalar_select %p241, %s19, 1
      %p243 = scmp.lt.s32.totalorder %s20, 3
      %s244 = scalar_select %p243, %s20, 3
      %s245 = smul.addr %s244, 36
      %s246 = smul.addr %s242, 144
      %s247 = sadd.s32 %s245, %s246
      %s248 = smul.addr %s247, 8
      %s249 = scalar_lea.vmem %s0, %s248
      %p250 = scmp.lt.s32.totalorder %s19, 1
      %s251 = scalar_select %p250, %s19, 1
      %p252 = scmp.lt.s32.totalorder %s20, 3
      %s253 = scalar_select %p252, %s20, 3
      %s254 = smul.addr %s253, 36
      %s255 = smul.addr %s251, 144
      %s256 = sadd.s32 %s254, %s255
      %s257 = smul.addr %s256, 8
      %s258 = scalar_lea.vmem %s3, %s257
      %p259 = scmp.lt.s32.totalorder %s19, 1
      %s260 = scalar_select %p259, %s19, 1
      %p261 = scmp.lt.s32.totalorder %s20, 3
      %s262 = scalar_select %p261, %s20, 3
      %s263 = smul.addr %s262, 36
      %s264 = smul.addr %s260, 144
      %s265 = sadd.s32 %s263, %s264
      %s266 = smul.addr %s265, 8
      %s267 = scalar_lea.vmem %s4, %s266
      %v268 = vld [vmem:[%s249] sm:$0xff]
      %v269 = vld [vmem:[%s249 + $0x8] sm:$0xff]
      %v270 = vld [vmem:[%s249 + $0x10] sm:$0xff]
      %v271 = vld [vmem:[%s249 + $0x18] sm:$0xff]
      %v272 = vld [vmem:[%s249 + $0x20] sm:$0xff]
      %v273 = vld [vmem:[%s249 + $0x28] sm:$0xff]
      %v274 = vld [vmem:[%s249 + $0x30] sm:$0xff]
      %v275 = vld [vmem:[%s249 + $0x38] sm:$0xff]
      %v276 = vld [vmem:[%s249 + $0x40] sm:$0xff]
      %v277 = vld [vmem:[%s249 + $0x48] sm:$0xff]
      %v278 = vld [vmem:[%s249 + $0x50] sm:$0xff]
      %v279 = vld [vmem:[%s249 + $0x58] sm:$0xff]
      %v280 = vld [vmem:[%s249 + $0x60] sm:$0xff]
      %v281 = vld [vmem:[%s249 + $0x68] sm:$0xff]
      %v282 = vld [vmem:[%s249 + $0x70] sm:$0xff]
      %v283 = vld [vmem:[%s249 + $0x78] sm:$0xff]
      %v284 = vld [vmem:[%s249 + $0x80] sm:$0xff]
      %v285 = vld [vmem:[%s249 + $0x88] sm:$0xff]
      %v286 = vld [vmem:[%s249 + $0x90] sm:$0xff]
      %v287 = vld [vmem:[%s249 + $0x98] sm:$0xff]
      %v288 = vld [vmem:[%s249 + $0xa0] sm:$0xff]
      %v289 = vld [vmem:[%s249 + $0xa8] sm:$0xff]
      %v290 = vld [vmem:[%s249 + $0xb0] sm:$0xff]
      %v291 = vld [vmem:[%s249 + $0xb8] sm:$0xff]
      %v292 = vld [vmem:[%s249 + $0xc0] sm:$0xff]
      %v293 = vld [vmem:[%s249 + $0xc8] sm:$0xff]
      %v294 = vld [vmem:[%s249 + $0xd0] sm:$0xff]
      %v295 = vld [vmem:[%s249 + $0xd8] sm:$0xff]
      %v296 = vld [vmem:[%s249 + $0xe0] sm:$0xff]
      %v297 = vld [vmem:[%s249 + $0xe8] sm:$0xff]
      %v298 = vld [vmem:[%s249 + $0xf0] sm:$0xff]
      %v299 = vld [vmem:[%s249 + $0xf8] sm:$0xff]
      %v300 = vld [vmem:[%s249 + $0x100] sm:$0xff]
      %v301 = vld [vmem:[%s249 + $0x108] sm:$0xff]
      %v302 = vld [vmem:[%s249 + $0x110] sm:$0xff]
      %v303 = vld [vmem:[%s249 + $0x118] sm:$0x3f]
      %v304 = vld [vmem:[%s1] sm:$0x1]
      %v306 = vperm.slane %v304, 0
      %v308 = vmul.f32 %v268, %v306
      %v309 = vmul.f32 %v269, %v306
      %v310 = vmul.f32 %v270, %v306
      %v311 = vmul.f32 %v271, %v306
      %v312 = vmul.f32 %v272, %v306
      %v313 = vmul.f32 %v273, %v306
      %v314 = vmul.f32 %v274, %v306
      %v315 = vmul.f32 %v275, %v306
      %v316 = vmul.f32 %v276, %v306
      %v317 = vmul.f32 %v277, %v306
      %v318 = vmul.f32 %v278, %v306
      %v319 = vmul.f32 %v279, %v306
      %v320 = vmul.f32 %v280, %v306
      %v321 = vmul.f32 %v281, %v306
      %v322 = vmul.f32 %v282, %v306
      %v323 = vmul.f32 %v283, %v306
      %v324 = vmul.f32 %v284, %v306
      %v325 = vmul.f32 %v285, %v306
      %v326 = vmul.f32 %v286, %v306
      %v327 = vmul.f32 %v287, %v306
      %v328 = vmul.f32 %v288, %v306
      %v329 = vmul.f32 %v289, %v306
      %v330 = vmul.f32 %v290, %v306
      %v331 = vmul.f32 %v291, %v306
      %v332 = vmul.f32 %v292, %v306
      %v333 = vmul.f32 %v293, %v306
      %v334 = vmul.f32 %v294, %v306
      %v335 = vmul.f32 %v295, %v306
      %v336 = vmul.f32 %v296, %v306
      %v337 = vmul.f32 %v297, %v306
      %v338 = vmul.f32 %v298, %v306
      %v339 = vmul.f32 %v299, %v306
      %v340 = vmul.f32 %v300, %v306
      %v341 = vmul.f32 %v301, %v306
      %v342 = vmul.f32 %v302, %v306
      %v343 = vmul.f32 %v303, %v306
      %v344 = vld [vmem:[%s2] sm:$0x1]
      %v346 = vperm.slane %v344, 0
      %v348 = vadd.f32 %v308, %v346
      %v349 = vadd.f32 %v309, %v346
      %v350 = vadd.f32 %v310, %v346
      %v351 = vadd.f32 %v311, %v346
      %v352 = vadd.f32 %v312, %v346
      %v353 = vadd.f32 %v313, %v346
      %v354 = vadd.f32 %v314, %v346
      %v355 = vadd.f32 %v315, %v346
      %v356 = vadd.f32 %v316, %v346
      %v357 = vadd.f32 %v317, %v346
      %v358 = vadd.f32 %v318, %v346
      %v359 = vadd.f32 %v319, %v346
      %v360 = vadd.f32 %v320, %v346
      %v361 = vadd.f32 %v321, %v346
      %v362 = vadd.f32 %v322, %v346
      %v363 = vadd.f32 %v323, %v346
      %v364 = vadd.f32 %v324, %v346
      %v365 = vadd.f32 %v325, %v346
      %v366 = vadd.f32 %v326, %v346
      %v367 = vadd.f32 %v327, %v346
      %v368 = vadd.f32 %v328, %v346
      %v369 = vadd.f32 %v329, %v346
      %v370 = vadd.f32 %v330, %v346
      %v371 = vadd.f32 %v331, %v346
      %v372 = vadd.f32 %v332, %v346
      %v373 = vadd.f32 %v333, %v346
      %v374 = vadd.f32 %v334, %v346
      %v375 = vadd.f32 %v335, %v346
      %v376 = vadd.f32 %v336, %v346
      %v377 = vadd.f32 %v337, %v346
      %v378 = vadd.f32 %v338, %v346
      %v379 = vadd.f32 %v339, %v346
      %v380 = vadd.f32 %v340, %v346
      %v381 = vadd.f32 %v341, %v346
      %v382 = vadd.f32 %v342, %v346
      %v383 = vadd.f32 %v343, %v346
      %v384 = vld [vmem:[%s258] sm:$0xff]
      %v385 = vld [vmem:[%s258 + $0x8] sm:$0xff]
      %v386 = vld [vmem:[%s258 + $0x10] sm:$0xff]
      %v387 = vld [vmem:[%s258 + $0x18] sm:$0xff]
      %v388 = vld [vmem:[%s258 + $0x20] sm:$0xff]
      %v389 = vld [vmem:[%s258 + $0x28] sm:$0xff]
      %v390 = vld [vmem:[%s258 + $0x30] sm:$0xff]
      %v391 = vld [vmem:[%s258 + $0x38] sm:$0xff]
      %v392 = vld [vmem:[%s258 + $0x40] sm:$0xff]
      %v393 = vld [vmem:[%s258 + $0x48] sm:$0xff]
      %v394 = vld [vmem:[%s258 + $0x50] sm:$0xff]
      %v395 = vld [vmem:[%s258 + $0x58] sm:$0xff]
      %v396 = vld [vmem:[%s258 + $0x60] sm:$0xff]
      %v397 = vld [vmem:[%s258 + $0x68] sm:$0xff]
      %v398 = vld [vmem:[%s258 + $0x70] sm:$0xff]
      %v399 = vld [vmem:[%s258 + $0x78] sm:$0xff]
      %v400 = vld [vmem:[%s258 + $0x80] sm:$0xff]
      %v401 = vld [vmem:[%s258 + $0x88] sm:$0xff]
      %v402 = vld [vmem:[%s258 + $0x90] sm:$0xff]
      %v403 = vld [vmem:[%s258 + $0x98] sm:$0xff]
      %v404 = vld [vmem:[%s258 + $0xa0] sm:$0xff]
      %v405 = vld [vmem:[%s258 + $0xa8] sm:$0xff]
      %v406 = vld [vmem:[%s258 + $0xb0] sm:$0xff]
      %v407 = vld [vmem:[%s258 + $0xb8] sm:$0xff]
      %v408 = vld [vmem:[%s258 + $0xc0] sm:$0xff]
      %v409 = vld [vmem:[%s258 + $0xc8] sm:$0xff]
      %v410 = vld [vmem:[%s258 + $0xd0] sm:$0xff]
      %v411 = vld [vmem:[%s258 + $0xd8] sm:$0xff]
      %v412 = vld [vmem:[%s258 + $0xe0] sm:$0xff]
      %v413 = vld [vmem:[%s258 + $0xe8] sm:$0xff]
      %v414 = vld [vmem:[%s258 + $0xf0] sm:$0xff]
      %v415 = vld [vmem:[%s258 + $0xf8] sm:$0xff]
      %v416 = vld [vmem:[%s258 + $0x100] sm:$0xff]
      %v417 = vld [vmem:[%s258 + $0x108] sm:$0xff]
      %v418 = vld [vmem:[%s258 + $0x110] sm:$0xff]
      %v419 = vld [vmem:[%s258 + $0x118] sm:$0x3f]
      %v420 = vadd.f32 %v348, %v384
      %v421 = vadd.f32 %v349, %v385
      %v422 = vadd.f32 %v350, %v386
      %v423 = vadd.f32 %v351, %v387
      %v424 = vadd.f32 %v352, %v388
      %v425 = vadd.f32 %v353, %v389
      %v426 = vadd.f32 %v354, %v390
      %v427 = vadd.f32 %v355, %v391
      %v428 = vadd.f32 %v356, %v392
      %v429 = vadd.f32 %v357, %v393
      %v430 = vadd.f32 %v358, %v394
      %v431 = vadd.f32 %v359, %v395
      %v432 = vadd.f32 %v360, %v396
      %v433 = vadd.f32 %v361, %v397
      %v434 = vadd.f32 %v362, %v398
      %v435 = vadd.f32 %v363, %v399
      %v436 = vadd.f32 %v364, %v400
      %v437 = vadd.f32 %v365, %v401
      %v438 = vadd.f32 %v366, %v402
      %v439 = vadd.f32 %v367, %v403
      %v440 = vadd.f32 %v368, %v404
      %v441 = vadd.f32 %v369, %v405
      %v442 = vadd.f32 %v370, %v406
      %v443 = vadd.f32 %v371, %v407
      %v444 = vadd.f32 %v372, %v408
      %v445 = vadd.f32 %v373, %v409
      %v446 = vadd.f32 %v374, %v410
      %v447 = vadd.f32 %v375, %v411
      %v448 = vadd.f32 %v376, %v412
      %v449 = vadd.f32 %v377, %v413
      %v450 = vadd.f32 %v378, %v414
      %v451 = vadd.f32 %v379, %v415
      %v452 = vadd.f32 %v380, %v416
      %v453 = vadd.f32 %v381, %v417
      %v454 = vadd.f32 %v382, %v418
      %v455 = vadd.f32 %v383, %v419
      %v456 = vmax.f32 %v420, 0.0
      %v457 = vmax.f32 %v421, 0.0
      %v458 = vmax.f32 %v422, 0.0
      %v459 = vmax.f32 %v423, 0.0
      %v460 = vmax.f32 %v424, 0.0
      %v461 = vmax.f32 %v425, 0.0
      %v462 = vmax.f32 %v426, 0.0
      %v463 = vmax.f32 %v427, 0.0
      %v464 = vmax.f32 %v428, 0.0
      %v465 = vmax.f32 %v429, 0.0
      %v466 = vmax.f32 %v430, 0.0
      %v467 = vmax.f32 %v431, 0.0
      %v468 = vmax.f32 %v432, 0.0
      %v469 = vmax.f32 %v433, 0.0
      %v470 = vmax.f32 %v434, 0.0
      %v471 = vmax.f32 %v435, 0.0
      %v472 = vmax.f32 %v436, 0.0
      %v473 = vmax.f32 %v437, 0.0
      %v474 = vmax.f32 %v438, 0.0
      %v475 = vmax.f32 %v439, 0.0
      %v476 = vmax.f32 %v440, 0.0
      %v477 = vmax.f32 %v441, 0.0
      %v478 = vmax.f32 %v442, 0.0
      %v479 = vmax.f32 %v443, 0.0
      %v480 = vmax.f32 %v444, 0.0
      %v481 = vmax.f32 %v445, 0.0
      %v482 = vmax.f32 %v446, 0.0
      %v483 = vmax.f32 %v447, 0.0
      %v484 = vmax.f32 %v448, 0.0
      %v485 = vmax.f32 %v449, 0.0
      %v486 = vmax.f32 %v450, 0.0
      %v487 = vmax.f32 %v451, 0.0
      %v488 = vmax.f32 %v452, 0.0
      %v489 = vmax.f32 %v453, 0.0
      %v490 = vmax.f32 %v454, 0.0
      %v491 = vmax.f32 %v455, 0.0
      %vm492 = vcmask 261120
      %493 = vst.msk [vmem:[%s267] sm:$0xff] %vm492, %v456
      %494 = vst.msk [vmem:[%s267 + $0x8] sm:$0xff] %vm492, %v457
      %495 = vst.msk [vmem:[%s267 + $0x10] sm:$0xff] %vm492, %v458
      %496 = vst.msk [vmem:[%s267 + $0x18] sm:$0xff] %vm492, %v459
      %497 = vst.msk [vmem:[%s267 + $0x20] sm:$0xff] %vm492, %v460
      %498 = vst.msk [vmem:[%s267 + $0x28] sm:$0xff] %vm492, %v461
      %499 = vst.msk [vmem:[%s267 + $0x30] sm:$0xff] %vm492, %v462
      %500 = vst.msk [vmem:[%s267 + $0x38] sm:$0xff] %vm492, %v463
      %501 = vst.msk [vmem:[%s267 + $0x40] sm:$0xff] %vm492, %v464
      %502 = vst.msk [vmem:[%s267 + $0x48] sm:$0xff] %vm492, %v465
      %503 = vst.msk [vmem:[%s267 + $0x50] sm:$0xff] %vm492, %v466
      %504 = vst.msk [vmem:[%s267 + $0x58] sm:$0xff] %vm492, %v467
      %505 = vst.msk [vmem:[%s267 + $0x60] sm:$0xff] %vm492, %v468
      %506 = vst.msk [vmem:[%s267 + $0x68] sm:$0xff] %vm492, %v469
      %507 = vst.msk [vmem:[%s267 + $0x70] sm:$0xff] %vm492, %v470
      %508 = vst.msk [vmem:[%s267 + $0x78] sm:$0xff] %vm492, %v471
      %509 = vst.msk [vmem:[%s267 + $0x80] sm:$0xff] %vm492, %v472
      %510 = vst.msk [vmem:[%s267 + $0x88] sm:$0xff] %vm492, %v473
      %511 = vst.msk [vmem:[%s267 + $0x90] sm:$0xff] %vm492, %v474
      %512 = vst.msk [vmem:[%s267 + $0x98] sm:$0xff] %vm492, %v475
      %513 = vst.msk [vmem:[%s267 + $0xa0] sm:$0xff] %vm492, %v476
      %514 = vst.msk [vmem:[%s267 + $0xa8] sm:$0xff] %vm492, %v477
      %515 = vst.msk [vmem:[%s267 + $0xb0] sm:$0xff] %vm492, %v478
      %516 = vst.msk [vmem:[%s267 + $0xb8] sm:$0xff] %vm492, %v479
      %517 = vst.msk [vmem:[%s267 + $0xc0] sm:$0xff] %vm492, %v480
      %518 = vst.msk [vmem:[%s267 + $0xc8] sm:$0xff] %vm492, %v481
      %519 = vst.msk [vmem:[%s267 + $0xd0] sm:$0xff] %vm492, %v482
      %520 = vst.msk [vmem:[%s267 + $0xd8] sm:$0xff] %vm492, %v483
      %521 = vst.msk [vmem:[%s267 + $0xe0] sm:$0xff] %vm492, %v484
      %522 = vst.msk [vmem:[%s267 + $0xe8] sm:$0xff] %vm492, %v485
      %523 = vst.msk [vmem:[%s267 + $0xf0] sm:$0xff] %vm492, %v486
      %524 = vst.msk [vmem:[%s267 + $0xf8] sm:$0xff] %vm492, %v487
      %525 = vst.msk [vmem:[%s267 + $0x100] sm:$0xff] %vm492, %v488
      %526 = vst.msk [vmem:[%s267 + $0x108] sm:$0xff] %vm492, %v489
      %527 = vst.msk [vmem:[%s267 + $0x110] sm:$0xff] %vm492, %v490
      %vm528 = vcmask 259072
      %529 = vst.msk [vmem:[%s267 + $0x118] sm:$0x3f] %vm528, %v491
      %p530 = scmp.lt.s32.totalorder %s19, 1
      %s531 = scalar_select %p530, %s19, 1
      %p532 = scmp.lt.s32.totalorder %s20, 3
      %s533 = scalar_select %p532, %s20, 3
      %s534 = smul.addr %s533, 36
      %s535 = smul.addr %s531, 144
      %s536 = sadd.s32 %s534, %s535
      %s537 = smul.addr %s536, 8
      %s538 = scalar_lea.vmem %s4, %s537
      // Predicated region
      $region37: #{basic_block_forward.7} parent=35 // pred_check
        %p539 = pneg %p145
      $region38: #{basic_block_forward.7} parent=35 // pred_check_branch
        %541 = sbr.rel (%p539) target = $region40
      $region39: #{basic_block_forward.7} parent=35 // pred_region
        _
      $region40: #{basic_block_forward.7} parent=35 // pred_fallthru
        _
    $region36: #{basic_block_forward.7} parent=5 // pred_fallthru
      _
    %p542 = scmp.le.s32.totalorder 2, %s10
    // Predicated region
    $region41: #{basic_block_forward.7} parent=5 // pred_check
      %p543 = pneg %p542
    $region42: #{basic_block_forward.7} parent=5 // pred_check_branch
      %545 = sbr.rel (%p543) target = $region44
    $region43: #{basic_block_forward.7} parent=5 // pred_region
      %s546 = ssub.s32 %s10, 2
      // Predicated region
      $region45: #{basic_block_forward.7} parent=43 // pred_check
        %p547 = pneg %p151
      $region46: #{basic_block_forward.7} parent=43 // pred_check_branch
        %549 = sbr.rel (%p547) target = $region48
      $region47: #{basic_block_forward.7} parent=43 // pred_region
        %p550 = scmp.lt.s32.totalorder %s21, 1
        %s551 = scalar_select %p550, %s21, 1
        %p552 = scmp.lt.s32.totalorder %s22, 3
        %s553 = scalar_select %p552, %s22, 3
        %s554 = smul.addr %s553, 36
        %s555 = smul.addr %s551, 144
        %s556 = sadd.s32 %s554, %s555
        %s557 = smul.addr %s556, 8
        %s558 = scalar_lea.vmem %s4, %s557
      $region48: #{basic_block_forward.7} parent=43 // pred_fallthru
        _
    $region44: #{basic_block_forward.7} parent=5 // pred_fallthru
      _
  $region6: #{basic_block_forward.7} parent=0 // loop_footer
    %s14 = sadd.s32 1, %s10
  $region7: #{basic_block_forward.7} parent=0 // loop_footer_branch
    %9 = sbr.rel target = $region3
  $region8: #{basic_block_forward.7} parent=0 // loop_exit
    _

</llo_original>
